<compile_context>
chip_gen: v6e
topology: v6e:2x2x1
jax: 0.10.0
libtpu: 0.0.40
codegen_flags: <defaults>
</compile_context>

<pallas_src>
import functools

import jax
import jax.numpy as jnp
from jax.experimental import pallas as pl
from jax.experimental.pallas import tpu as pltpu

NEG_SLOPE = 0.33


def _leaky(v):
    return jnp.where(v >= 0, v, NEG_SLOPE * v)


def _pick_batch_block(n, d):
    """Batch elements per grid step: grow the matmul M (= tb*d) toward the MXU's
    native row count, but keep >= 2 grid steps when possible (v7x has 2 TCs and
    'parallel' axes shard across them)."""
    tb = max(1, min(n, -(-128 // d)))
    if n >= 2:
        tb = min(tb, max(1, n // 2))
    while n % tb:
        tb -= 1
    return tb


# ---------------------------------------------------------------------------
# E2E block kernel
# ---------------------------------------------------------------------------
def _e2e_kernel(x_ref, w_ref, bias_ref, o_ref, *, d, planes, two_views):
    """x_ref : (tb, d, 2*C*d)   fused [row-view | col-view] activation stream
       w_ref : (2*C*d, 2*P)     block-diag(w1f, w2f)
       bias  : (1, P)           (= b1 + b2, folded exactly once)
       o_ref : (tb, d, 2*P*d) if two_views else (tb, d, P*d)    (lane-dense)
    """
    tb = x_ref.shape[0]
    x = x_ref[...].reshape(tb * d, x_ref.shape[2])                      # (M, 2CD)
    ab = jnp.dot(x, w_ref[...], preferred_element_type=jnp.float32)     # (M, 2P)
    a = (ab[:, :planes] + bias_ref[...]).reshape(tb, d, planes)         # [t, i, p]
    b = ab[:, planes:].reshape(tb, d, planes)                           # [t, j, p]

    # row view: ya[t, i, p*d + j] = a[t,i,p] + b[t,j,p]
    bt = jnp.swapaxes(b, 1, 2)                                          # [t, p, j]
    ya = (a[:, :, :, None] + bt[:, None, :, :]).reshape(tb, d, planes * d)
    ya = _leaky(ya)

    if two_views:
        # col view: yb[t, j, p*d + i] = a[t,i,p] + b[t,j,p]
        at = jnp.swapaxes(a, 1, 2)                                      # [t, p, i]
        yb = (b[:, :, :, None] + at[:, None, :, :]).reshape(tb, d, planes * d)
        yb = _leaky(yb)
        out = jnp.concatenate([ya, yb], axis=2)
    else:
        out = ya
    o_ref[...] = out.astype(o_ref.dtype)


def e2e_block(x_fused, w1, b1, w2, b2, *, d, two_views):
    """x_fused: (N, d, 2*C*d) fused [row|col] views of the (N, C, d, d) activations.
    w1: (P, C, 1, d), b1: (P,);  w2: (P, C, d, 1), b2: (P,).
    Returns (N, d, 2*P*d) fused views (two_views) or (N, d, P*d) row view only,
    with leaky_relu already applied."""
    n = x_fused.shape[0]
    p_out, c_in = w1.shape[0], w1.shape[1]
    cd = c_in * d
    assert x_fused.shape == (n, d, 2 * cd)

    # Trace-time weight glue (tiny): flatten and block-diagonalize.
    w1f = w1.reshape(p_out, cd).T                    # rows indexed c*d + j
    w2f = w2.reshape(p_out, cd).T                    # rows indexed c*d + i
    wbd = jnp.zeros((2 * cd, 2 * p_out), jnp.float32)
    wbd = wbd.at[:cd, :p_out].set(w1f).at[cd:, p_out:].set(w2f)
    bias = (b1 + b2).reshape(1, p_out).astype(jnp.float32)

    tb = _pick_batch_block(n, d)
    out_w = (2 if two_views else 1) * p_out * d

    kernel = functools.partial(_e2e_kernel, d=d, planes=p_out, two_views=two_views)
    return pl.pallas_call(
        kernel,
        out_shape=jax.ShapeDtypeStruct((n, d, out_w), jnp.float32),
        grid_spec=pltpu.PrefetchScalarGridSpec(
            num_scalar_prefetch=0,
            grid=(n // tb,),
            in_specs=[
                pl.BlockSpec((tb, d, 2 * cd), lambda g: (g, 0, 0)),
                pl.BlockSpec((2 * cd, 2 * p_out), lambda g: (0, 0)),
                pl.BlockSpec((1, p_out), lambda g: (0, 0)),
            ],
            out_specs=pl.BlockSpec((tb, d, out_w), lambda g: (g, 0, 0)),
        ),
        compiler_params=pltpu.CompilerParams(
            dimension_semantics=("parallel",)),
    )(x_fused, wbd, bias)


# ---------------------------------------------------------------------------
# Fused head kernel: E2N -> N2G -> dense1 -> dense2 -> dense3 (all leaky_relu)
# ---------------------------------------------------------------------------
def _head_kernel(x_ref, we_ref, be_ref, wn_ref, bn_ref,
                 w1_ref, b1_ref, w2_ref, b2_ref, w3_ref, b3_ref, o_ref):
    x = x_ref[...]                                                       # (N, d, 64*d)
    # E2N (conv (1,d)) as a lane reduction: z[n,i] = sum_{c,j} x * wE + bE
    z = _leaky(jnp.sum(x * we_ref[...], axis=2) + be_ref[...])           # (N, d)
    # N2G (conv (d,1)): g[n,k] = sum_i z[n,i] * wN[i,k] + bN[k]
    g = _leaky(jnp.dot(z, wn_ref[...], preferred_element_type=jnp.float32)
               + bn_ref[...])                                            # (N, 256)
    h = _leaky(jnp.dot(g, w1_ref[...], preferred_element_type=jnp.float32)
               + b1_ref[...])                                            # (N, 128)
    h = _leaky(jnp.dot(h, w2_ref[...], preferred_element_type=jnp.float32)
               + b2_ref[...])                                            # (N, 30)
    h = _leaky(jnp.dot(h, w3_ref[...], preferred_element_type=jnp.float32)
               + b3_ref[...])                                            # (N, 2)
    o_ref[...] = h.astype(o_ref.dtype)


def brainnet_head(x_row, p, *, d):
    """x_row: (N, d, 64*d) row view of leaky(e2econv2) output. Returns (N, 2)."""
    n = x_row.shape[0]
    cd = 64 * d
    wef = p["E2N_w"].reshape(1, cd)                  # index c*d + j
    bef = p["E2N_b"].reshape(1, 1)
    wnf = p["N2G_w"].reshape(256, d).T               # (d, 256)
    bnf = p["N2G_b"].reshape(1, 256)
    w1f, b1f = p["d1_w"].T, p["d1_b"].reshape(1, -1)
    w2f, b2f = p["d2_w"].T, p["d2_b"].reshape(1, -1)
    w3f, b3f = p["d3_w"].T, p["d3_b"].reshape(1, -1)

    args = (x_row, wef, bef, wnf, bnf, w1f, b1f, w2f, b2f, w3f, b3f)

    def _full(a):
        return pl.BlockSpec(a.shape, lambda g, nd=a.ndim: (0,) * nd)

    return pl.pallas_call(
        _head_kernel,
        out_shape=jax.ShapeDtypeStruct((n, 2), jnp.float32),
        grid_spec=pltpu.PrefetchScalarGridSpec(
            num_scalar_prefetch=0,
            grid=(1,),
            in_specs=[_full(a) for a in args],
            out_specs=pl.BlockSpec((n, 2), lambda g: (0, 0)),
        ),
        compiler_params=pltpu.CompilerParams(
            dimension_semantics=("arbitrary",)),
    )(*args)


# ---------------------------------------------------------------------------
# Full model forward
# ---------------------------------------------------------------------------
def brainnetcnn_forward(x, params):
    """x: (N, d, d) float32. Returns (N, 2). Dropout = identity (inference)."""
    n, d, _ = x.shape
    # First-layer fused stream (C = 1): row view is x itself, col view is x^T.
    # This tiny (N, d, 2d) concat is the only wrapper-side activation relayout.
    x0 = jnp.concatenate([x, jnp.swapaxes(x, 1, 2)], axis=2).astype(jnp.float32)

    y1 = e2e_block(x0, params["e2e1_w1"], params["e2e1_b1"],
                   params["e2e1_w2"], params["e2e1_b2"], d=d, two_views=True)
    y2 = e2e_block(y1, params["e2e2_w1"], params["e2e2_b1"],
                   params["e2e2_w2"], params["e2e2_b2"], d=d, two_views=False)
    return brainnet_head(y2, params, d=d)


# ---------------------------------------------------------------------------
# Pure-JAX reference (exact PyTorch math, dropout omitted in both paths)
# ---------------------------------------------------------------------------
def brainnetcnn_reference(x, p):
    def e2e(x4, w1, b1, w2, b2):
        a = jnp.einsum("ncij,pcj->npi", x4, w1[:, :, 0, :]) + b1[None, :, None]
        b = jnp.einsum("ncij,pci->npj", x4, w2[:, :, :, 0]) + b2[None, :, None]
        return a[:, :, :, None] + b[:, :, None, :]

    x4 = x[:, None, :, :]
    y1 = _leaky(e2e(x4, p["e2e1_w1"], p["e2e1_b1"], p["e2e1_w2"], p["e2e1_b2"]))
    y2 = _leaky(e2e(y1, p["e2e2_w1"], p["e2e2_b1"], p["e2e2_w2"], p["e2e2_b2"]))
    z = _leaky(jnp.einsum("ncij,cj->ni", y2, p["E2N_w"][0, :, 0, :]) + p["E2N_b"][0])
    g = _leaky(jnp.einsum("ni,ki->nk", z, p["N2G_w"][:, 0, :, 0]) + p["N2G_b"][None, :])
    h = _leaky(g @ p["d1_w"].T + p["d1_b"][None, :])
    h = _leaky(h @ p["d2_w"].T + p["d2_b"][None, :])
    h = _leaky(h @ p["d3_w"].T + p["d3_b"][None, :])
    return h


# ---------------------------------------------------------------------------
# Deterministic parameter init (shapes follow the nn.Module __init__)
# ---------------------------------------------------------------------------
def init_params(key, d):
    ks = jax.random.split(key, 18)

    def conv_init(kw, kb, shape):
        fan_in = shape[1] * shape[2] * shape[3]
        bound = 1.0 / jnp.sqrt(jnp.float32(fan_in))
        w = jax.random.uniform(kw, shape, jnp.float32, -bound, bound)
        b = jax.random.uniform(kb, (shape[0],), jnp.float32, -bound, bound)
        return w, b

    def linear_init(kw, kb, out_f, in_f):
        bound = 1.0 / jnp.sqrt(jnp.float32(in_f))
        w = jax.random.uniform(kw, (out_f, in_f), jnp.float32, -bound, bound)
        b = jax.random.uniform(kb, (out_f,), jnp.float32, -bound, bound)
        return w, b

    p = {}
    p["e2e1_w1"], p["e2e1_b1"] = conv_init(ks[0], ks[1], (32, 1, 1, d))
    p["e2e1_w2"], p["e2e1_b2"] = conv_init(ks[2], ks[3], (32, 1, d, 1))
    p["e2e2_w1"], p["e2e2_b1"] = conv_init(ks[4], ks[5], (64, 32, 1, d))
    p["e2e2_w2"], p["e2e2_b2"] = conv_init(ks[6], ks[7], (64, 32, d, 1))
    p["E2N_w"], p["E2N_b"] = conv_init(ks[8], ks[9], (1, 64, 1, d))
    p["N2G_w"], p["N2G_b"] = conv_init(ks[10], ks[11], (256, 1, d, 1))
    p["d1_w"], p["d1_b"] = linear_init(ks[12], ks[13], 128, 256)
    p["d2_w"], p["d2_b"] = linear_init(ks[14], ks[15], 30, 128)
    p["d3_w"], p["d3_b"] = linear_init(ks[16], ks[17], 2, 30)
    return p


if __name__ == "__main__":
    N, d = 2, 16   # small roi_num consistent with the module

    key = jax.random.PRNGKey(0)
    kx, kp = jax.random.split(key)
    x = jax.random.normal(kx, (N, d, d), dtype=jnp.float32)
    params = init_params(kp, d)

    forward = jax.jit(brainnetcnn_forward)
    out = jax.block_until_ready(forward(x, params))

    ref = brainnetcnn_reference(x, params)
    assert out.shape == (N, 2)
    max_diff = float(jnp.max(jnp.abs(out - ref)))
    assert jnp.allclose(out, ref, atol=2e-3, rtol=2e-3), (
        f"mismatch vs reference, max abs diff = {max_diff}")

    print("KERNEL_OK")
</pallas_src>

<mosaic_0001>
module attributes {stable_mosaic.version = 11 : i64} {
  func.func @_e2e_kernel(%arg0: i32, %arg1: memref<1x16x32xf32, #tpu.memory_space<vmem>>, %arg2: memref<32x64xf32, #tpu.memory_space<vmem>>, %arg3: memref<1x32xf32, #tpu.memory_space<vmem>>, %arg4: memref<1x16x1024xf32, #tpu.memory_space<vmem>>) attributes {dimension_semantics = [#tpu.dimension_semantics<parallel>], iteration_bounds = array<i64: 2>, scalar_prefetch = 0 : i64, scratch_operands = 0 : i64, tpu.core_type = #tpu.core_type<tc>, window_params = [{transform_indices = @transform_0, window_bounds = array<i64: 1, 16, 32>}, {pipeline_mode = #tpu.pipeline_mode<synchronous>, transform_indices = @transform_1, window_bounds = array<i64: 32, 64>}, {pipeline_mode = #tpu.pipeline_mode<synchronous>, transform_indices = @transform_2, window_bounds = array<i64: 1, 32>}, {transform_indices = @transform_3, window_bounds = array<i64: 1, 16, 1024>}]} {
    %c0 = arith.constant 0 : index
    %c0_0 = arith.constant 0 : index
    %c0_1 = arith.constant 0 : index
    %0 = vector.load %arg1[%c0, %c0_0, %c0_1] : memref<1x16x32xf32, #tpu.memory_space<vmem>>, vector<1x16x32xf32>
    %1 = vector.shape_cast %0 : vector<1x16x32xf32> to vector<16x32xf32>
    %c0_2 = arith.constant 0 : index
    %c0_3 = arith.constant 0 : index
    %2 = vector.load %arg2[%c0_2, %c0_3] : memref<32x64xf32, #tpu.memory_space<vmem>>, vector<32x64xf32>
    %cst = arith.constant dense<0.000000e+00> : vector<16x64xf32>
    %3 = tpu.matmul %1, %2, %cst {dimension_numbers = #tpu.dot_dimension_numbers<[1], [0], [0], [1], [0, 0, 1, 1], [], []>} : vector<16x32xf32>, vector<32x64xf32>, vector<16x64xf32> -> vector<16x64xf32>
    %4 = vector.extract_strided_slice %3 {offsets = [0, 0], sizes = [16, 32], strides = [1, 1]} : vector<16x64xf32> to vector<16x32xf32>
    %c0_4 = arith.constant 0 : index
    %c0_5 = arith.constant 0 : index
    %5 = vector.load %arg3[%c0_4, %c0_5] : memref<1x32xf32, #tpu.memory_space<vmem>>, vector<1x32xf32>
    %6 = vector.broadcast %5 : vector<1x32xf32> to vector<16x32xf32>
    %7 = arith.addf %4, %6 : vector<16x32xf32>
    %8 = vector.shape_cast %7 : vector<16x32xf32> to vector<1x16x32xf32>
    %9 = vector.extract_strided_slice %3 {offsets = [0, 32], sizes = [16, 32], strides = [1, 1]} : vector<16x64xf32> to vector<16x32xf32>
    %10 = vector.shape_cast %9 : vector<16x32xf32> to vector<1x16x32xf32>
    %11 = tpu.transpose %10, [0, 2, 1] : vector<1x16x32xf32> -> vector<1x32x16xf32>
    %12 = vector.shape_cast %8 : vector<1x16x32xf32> to vector<1x16x32x1xf32>
    %13 = vector.shape_cast %11 : vector<1x32x16xf32> to vector<1x1x32x16xf32>
    %14 = vector.broadcast %12 : vector<1x16x32x1xf32> to vector<1x16x32x16xf32>
    %15 = vector.broadcast %13 : vector<1x1x32x16xf32> to vector<1x16x32x16xf32>
    %16 = arith.addf %14, %15 : vector<1x16x32x16xf32>
    %17 = vector.shape_cast %16 : vector<1x16x32x16xf32> to vector<1x16x512xf32>
    %cst_6 = arith.constant 0.000000e+00 : f32
    %18 = vector.broadcast %cst_6 : f32 to vector<1x16x512xf32>
    %19 = arith.cmpf oge, %17, %18 : vector<1x16x512xf32>
    %cst_7 = arith.constant 3.300000e-01 : f32
    %20 = vector.broadcast %cst_7 : f32 to vector<1x16x512xf32>
    %21 = arith.mulf %20, %17 : vector<1x16x512xf32>
    %22 = arith.select %19, %17, %21 : vector<1x16x512xi1>, vector<1x16x512xf32>
    %23 = tpu.transpose %8, [0, 2, 1] : vector<1x16x32xf32> -> vector<1x32x16xf32>
    %24 = vector.shape_cast %10 : vector<1x16x32xf32> to vector<1x16x32x1xf32>
    %25 = vector.shape_cast %23 : vector<1x32x16xf32> to vector<1x1x32x16xf32>
    %26 = vector.broadcast %24 : vector<1x16x32x1xf32> to vector<1x16x32x16xf32>
    %27 = vector.broadcast %25 : vector<1x1x32x16xf32> to vector<1x16x32x16xf32>
    %28 = arith.addf %26, %27 : vector<1x16x32x16xf32>
    %29 = vector.shape_cast %28 : vector<1x16x32x16xf32> to vector<1x16x512xf32>
    %cst_8 = arith.constant 0.000000e+00 : f32
    %30 = vector.broadcast %cst_8 : f32 to vector<1x16x512xf32>
    %31 = arith.cmpf oge, %29, %30 : vector<1x16x512xf32>
    %cst_9 = arith.constant 3.300000e-01 : f32
    %32 = vector.broadcast %cst_9 : f32 to vector<1x16x512xf32>
    %33 = arith.mulf %32, %29 : vector<1x16x512xf32>
    %34 = arith.select %31, %29, %33 : vector<1x16x512xi1>, vector<1x16x512xf32>
    %35 = tpu.concatenate %22, %34 in 2 : vector<1x16x512xf32>, vector<1x16x512xf32> -> vector<1x16x1024xf32>
    %c0_10 = arith.constant 0 : index
    %c0_11 = arith.constant 0 : index
    %c0_12 = arith.constant 0 : index
    %36 = vector.load %arg4[%c0_10, %c0_11, %c0_12] : memref<1x16x1024xf32, #tpu.memory_space<vmem>>, vector<1x16x1024xf32>
    tpu.vector_store %arg4[%c0_10, %c0_11, %c0_12], %35 {strides = array<i32>} : memref<1x16x1024xf32, #tpu.memory_space<vmem>>, vector<1x16x1024xf32>,
    return
  }
  func.func @transform_0(%arg0: i32) -> (i32, i32, i32) {
    %c0_i32 = arith.constant 0 : i32
    %c0_i32_0 = arith.constant 0 : i32
    %c0_i32_1 = arith.constant 0 : i32
    return %arg0, %c0_i32, %c0_i32_0 : i32, i32, i32
  }
  func.func @transform_1(%arg0: i32) -> (i32, i32) {
    %c0_i32 = arith.constant 0 : i32
    %c0_i32_0 = arith.constant 0 : i32
    %c0_i32_1 = arith.constant 0 : i32
    return %c0_i32, %c0_i32_0 : i32, i32
  }
  func.func @transform_2(%arg0: i32) -> (i32, i32) {
    %c0_i32 = arith.constant 0 : i32
    %c0_i32_0 = arith.constant 0 : i32
    %c0_i32_1 = arith.constant 0 : i32
    return %c0_i32, %c0_i32_0 : i32, i32
  }
  func.func @transform_3(%arg0: i32) -> (i32, i32, i32) {
    %c0_i32 = arith.constant 0 : i32
    %c0_i32_0 = arith.constant 0 : i32
    %c0_i32_1 = arith.constant 0 : i32
    return %arg0, %c0_i32, %c0_i32_0 : i32, i32, i32
  }
}

module attributes {stable_mosaic.version = 11 : i64} {
  func.func @_e2e_kernel(%arg0: i32, %arg1: memref<1x16x1024xf32, #tpu.memory_space<vmem>>, %arg2: memref<1024x128xf32, #tpu.memory_space<vmem>>, %arg3: memref<1x64xf32, #tpu.memory_space<vmem>>, %arg4: memref<1x16x1024xf32, #tpu.memory_space<vmem>>) attributes {dimension_semantics = [#tpu.dimension_semantics<parallel>], iteration_bounds = array<i64: 2>, scalar_prefetch = 0 : i64, scratch_operands = 0 : i64, tpu.core_type = #tpu.core_type<tc>, window_params = [{transform_indices = @transform_0, window_bounds = array<i64: 1, 16, 1024>}, {pipeline_mode = #tpu.pipeline_mode<synchronous>, transform_indices = @transform_1, window_bounds = array<i64: 1024, 128>}, {pipeline_mode = #tpu.pipeline_mode<synchronous>, transform_indices = @transform_2, window_bounds = array<i64: 1, 64>}, {transform_indices = @transform_3, window_bounds = array<i64: 1, 16, 1024>}]} {
    %c0 = arith.constant 0 : index
    %c0_0 = arith.constant 0 : index
    %c0_1 = arith.constant 0 : index
    %0 = vector.load %arg1[%c0, %c0_0, %c0_1] : memref<1x16x1024xf32, #tpu.memory_space<vmem>>, vector<1x16x1024xf32>
    %1 = vector.shape_cast %0 : vector<1x16x1024xf32> to vector<16x1024xf32>
    %c0_2 = arith.constant 0 : index
    %c0_3 = arith.constant 0 : index
    %2 = vector.load %arg2[%c0_2, %c0_3] : memref<1024x128xf32, #tpu.memory_space<vmem>>, vector<1024x128xf32>
    %cst = arith.constant dense<0.000000e+00> : vector<16x128xf32>
    %3 = tpu.matmul %1, %2, %cst {dimension_numbers = #tpu.dot_dimension_numbers<[1], [0], [0], [1], [0, 0, 1, 1], [], []>} : vector<16x1024xf32>, vector<1024x128xf32>, vector<16x128xf32> -> vector<16x128xf32>
    %4 = vector.extract_strided_slice %3 {offsets = [0, 0], sizes = [16, 64], strides = [1, 1]} : vector<16x128xf32> to vector<16x64xf32>
    %c0_4 = arith.constant 0 : index
    %c0_5 = arith.constant 0 : index
    %5 = vector.load %arg3[%c0_4, %c0_5] : memref<1x64xf32, #tpu.memory_space<vmem>>, vector<1x64xf32>
    %6 = vector.broadcast %5 : vector<1x64xf32> to vector<16x64xf32>
    %7 = arith.addf %4, %6 : vector<16x64xf32>
    %8 = vector.shape_cast %7 : vector<16x64xf32> to vector<1x16x64xf32>
    %9 = vector.extract_strided_slice %3 {offsets = [0, 64], sizes = [16, 64], strides = [1, 1]} : vector<16x128xf32> to vector<16x64xf32>
    %10 = vector.shape_cast %9 : vector<16x64xf32> to vector<1x16x64xf32>
    %11 = tpu.transpose %10, [0, 2, 1] : vector<1x16x64xf32> -> vector<1x64x16xf32>
    %12 = vector.shape_cast %8 : vector<1x16x64xf32> to vector<1x16x64x1xf32>
    %13 = vector.shape_cast %11 : vector<1x64x16xf32> to vector<1x1x64x16xf32>
    %14 = vector.broadcast %12 : vector<1x16x64x1xf32> to vector<1x16x64x16xf32>
    %15 = vector.broadcast %13 : vector<1x1x64x16xf32> to vector<1x16x64x16xf32>
    %16 = arith.addf %14, %15 : vector<1x16x64x16xf32>
    %17 = vector.shape_cast %16 : vector<1x16x64x16xf32> to vector<1x16x1024xf32>
    %cst_6 = arith.constant 0.000000e+00 : f32
    %18 = vector.broadcast %cst_6 : f32 to vector<1x16x1024xf32>
    %19 = arith.cmpf oge, %17, %18 : vector<1x16x1024xf32>
    %cst_7 = arith.constant 3.300000e-01 : f32
    %20 = vector.broadcast %cst_7 : f32 to vector<1x16x1024xf32>
    %21 = arith.mulf %20, %17 : vector<1x16x1024xf32>
    %22 = arith.select %19, %17, %21 : vector<1x16x1024xi1>, vector<1x16x1024xf32>
    %c0_8 = arith.constant 0 : index
    %c0_9 = arith.constant 0 : index
    %c0_10 = arith.constant 0 : index
    %23 = vector.load %arg4[%c0_8, %c0_9, %c0_10] : memref<1x16x1024xf32, #tpu.memory_space<vmem>>, vector<1x16x1024xf32>
    tpu.vector_store %arg4[%c0_8, %c0_9, %c0_10], %22 {strides = array<i32>} : memref<1x16x1024xf32, #tpu.memory_space<vmem>>, vector<1x16x1024xf32>,
    return
  }
  func.func @transform_0(%arg0: i32) -> (i32, i32, i32) {
    %c0_i32 = arith.constant 0 : i32
    %c0_i32_0 = arith.constant 0 : i32
    %c0_i32_1 = arith.constant 0 : i32
    return %arg0, %c0_i32, %c0_i32_0 : i32, i32, i32
  }
  func.func @transform_1(%arg0: i32) -> (i32, i32) {
    %c0_i32 = arith.constant 0 : i32
    %c0_i32_0 = arith.constant 0 : i32
    %c0_i32_1 = arith.constant 0 : i32
    return %c0_i32, %c0_i32_0 : i32, i32
  }
  func.func @transform_2(%arg0: i32) -> (i32, i32) {
    %c0_i32 = arith.constant 0 : i32
    %c0_i32_0 = arith.constant 0 : i32
    %c0_i32_1 = arith.constant 0 : i32
    return %c0_i32, %c0_i32_0 : i32, i32
  }
  func.func @transform_3(%arg0: i32) -> (i32, i32, i32) {
    %c0_i32 = arith.constant 0 : i32
    %c0_i32_0 = arith.constant 0 : i32
    %c0_i32_1 = arith.constant 0 : i32
    return %arg0, %c0_i32, %c0_i32_0 : i32, i32, i32
  }
}

module attributes {stable_mosaic.version = 11 : i64} {
  func.func @_head_kernel(%arg0: i32, %arg1: memref<2x16x1024xf32, #tpu.memory_space<vmem>>, %arg2: memref<1x1024xf32, #tpu.memory_space<vmem>>, %arg3: memref<1x1xf32, #tpu.memory_space<vmem>>, %arg4: memref<16x256xf32, #tpu.memory_space<vmem>>, %arg5: memref<1x256xf32, #tpu.memory_space<vmem>>, %arg6: memref<256x128xf32, #tpu.memory_space<vmem>>, %arg7: memref<1x128xf32, #tpu.memory_space<vmem>>, %arg8: memref<128x30xf32, #tpu.memory_space<vmem>>, %arg9: memref<1x30xf32, #tpu.memory_space<vmem>>, %arg10: memref<30x2xf32, #tpu.memory_space<vmem>>, %arg11: memref<1x2xf32, #tpu.memory_space<vmem>>, %arg12: memref<2x2xf32, #tpu.memory_space<vmem>>) attributes {dimension_semantics = [#tpu.dimension_semantics<arbitrary>], iteration_bounds = array<i64: 1>, scalar_prefetch = 0 : i64, scratch_operands = 0 : i64, tpu.core_type = #tpu.core_type<tc>, window_params = [{pipeline_mode = #tpu.pipeline_mode<synchronous>, transform_indices = @transform_0, window_bounds = array<i64: 2, 16, 1024>}, {pipeline_mode = #tpu.pipeline_mode<synchronous>, transform_indices = @transform_1, window_bounds = array<i64: 1, 1024>}, {pipeline_mode = #tpu.pipeline_mode<synchronous>, transform_indices = @transform_2, window_bounds = array<i64: 1, 1>}, {pipeline_mode = #tpu.pipeline_mode<synchronous>, transform_indices = @transform_3, window_bounds = array<i64: 16, 256>}, {pipeline_mode = #tpu.pipeline_mode<synchronous>, transform_indices = @transform_4, window_bounds = array<i64: 1, 256>}, {pipeline_mode = #tpu.pipeline_mode<synchronous>, transform_indices = @transform_5, window_bounds = array<i64: 256, 128>}, {pipeline_mode = #tpu.pipeline_mode<synchronous>, transform_indices = @transform_6, window_bounds = array<i64: 1, 128>}, {pipeline_mode = #tpu.pipeline_mode<synchronous>, transform_indices = @transform_7, window_bounds = array<i64: 128, 30>}, {pipeline_mode = #tpu.pipeline_mode<synchronous>, transform_indices = @transform_8, window_bounds = array<i64: 1, 30>}, {pipeline_mode = #tpu.pipeline_mode<synchronous>, transform_indices = @transform_9, window_bounds = array<i64: 30, 2>}, {pipeline_mode = #tpu.pipeline_mode<synchronous>, transform_indices = @transform_10, window_bounds = array<i64: 1, 2>}, {pipeline_mode = #tpu.pipeline_mode<synchronous>, transform_indices = @transform_11, window_bounds = array<i64: 2, 2>}]} {
    %c0 = arith.constant 0 : index
    %c0_0 = arith.constant 0 : index
    %c0_1 = arith.constant 0 : index
    %0 = vector.load %arg1[%c0, %c0_0, %c0_1] : memref<2x16x1024xf32, #tpu.memory_space<vmem>>, vector<2x16x1024xf32>
    %c0_2 = arith.constant 0 : index
    %c0_3 = arith.constant 0 : index
    %1 = vector.load %arg2[%c0_2, %c0_3] : memref<1x1024xf32, #tpu.memory_space<vmem>>, vector<1x1024xf32>
    %2 = vector.shape_cast %1 : vector<1x1024xf32> to vector<1x1x1024xf32>
    %3 = vector.broadcast %2 : vector<1x1x1024xf32> to vector<2x16x1024xf32>
    %4 = arith.mulf %0, %3 : vector<2x16x1024xf32>
    %cst = arith.constant dense<0.000000e+00> : vector<2x16xf32>
    %5 = vector.multi_reduction <add>, %4, %cst [2] : vector<2x16x1024xf32> to vector<2x16xf32>
    %c0_4 = arith.constant 0 : index
    %c0_5 = arith.constant 0 : index
    %6 = vector.load %arg3[%c0_4, %c0_5] : memref<1x1xf32, #tpu.memory_space<vmem>>, vector<1x1xf32>
    %7 = vector.broadcast %6 : vector<1x1xf32> to vector<2x16xf32>
    %8 = arith.addf %5, %7 : vector<2x16xf32>
    %cst_6 = arith.constant 0.000000e+00 : f32
    %9 = vector.broadcast %cst_6 : f32 to vector<2x16xf32>
    %10 = arith.cmpf oge, %8, %9 : vector<2x16xf32>
    %cst_7 = arith.constant 3.300000e-01 : f32
    %11 = vector.broadcast %cst_7 : f32 to vector<2x16xf32>
    %12 = arith.mulf %11, %8 : vector<2x16xf32>
    %13 = arith.select %10, %8, %12 : vector<2x16xi1>, vector<2x16xf32>
    %c0_8 = arith.constant 0 : index
    %c0_9 = arith.constant 0 : index
    %14 = vector.load %arg4[%c0_8, %c0_9] : memref<16x256xf32, #tpu.memory_space<vmem>>, vector<16x256xf32>
    %cst_10 = arith.constant dense<0.000000e+00> : vector<2x256xf32>
    %15 = tpu.matmul %13, %14, %cst_10 {dimension_numbers = #tpu.dot_dimension_numbers<[1], [0], [0], [1], [0, 0, 1, 1], [], []>} : vector<2x16xf32>, vector<16x256xf32>, vector<2x256xf32> -> vector<2x256xf32>
    %c0_11 = arith.constant 0 : index
    %c0_12 = arith.constant 0 : index
    %16 = vector.load %arg5[%c0_11, %c0_12] : memref<1x256xf32, #tpu.memory_space<vmem>>, vector<1x256xf32>
    %17 = vector.broadcast %16 : vector<1x256xf32> to vector<2x256xf32>
    %18 = arith.addf %15, %17 : vector<2x256xf32>
    %cst_13 = arith.constant 0.000000e+00 : f32
    %19 = vector.broadcast %cst_13 : f32 to vector<2x256xf32>
    %20 = arith.cmpf oge, %18, %19 : vector<2x256xf32>
    %cst_14 = arith.constant 3.300000e-01 : f32
    %21 = vector.broadcast %cst_14 : f32 to vector<2x256xf32>
    %22 = arith.mulf %21, %18 : vector<2x256xf32>
    %23 = arith.select %20, %18, %22 : vector<2x256xi1>, vector<2x256xf32>
    %c0_15 = arith.constant 0 : index
    %c0_16 = arith.constant 0 : index
    %24 = vector.load %arg6[%c0_15, %c0_16] : memref<256x128xf32, #tpu.memory_space<vmem>>, vector<256x128xf32>
    %cst_17 = arith.constant dense<0.000000e+00> : vector<2x128xf32>
    %25 = tpu.matmul %23, %24, %cst_17 {dimension_numbers = #tpu.dot_dimension_numbers<[1], [0], [0], [1], [0, 0, 1, 1], [], []>} : vector<2x256xf32>, vector<256x128xf32>, vector<2x128xf32> -> vector<2x128xf32>
    %c0_18 = arith.constant 0 : index
    %c0_19 = arith.constant 0 : index
    %26 = vector.load %arg7[%c0_18, %c0_19] : memref<1x128xf32, #tpu.memory_space<vmem>>, vector<1x128xf32>
    %27 = vector.broadcast %26 : vector<1x128xf32> to vector<2x128xf32>
    %28 = arith.addf %25, %27 : vector<2x128xf32>
    %cst_20 = arith.constant 0.000000e+00 : f32
    %29 = vector.broadcast %cst_20 : f32 to vector<2x128xf32>
    %30 = arith.cmpf oge, %28, %29 : vector<2x128xf32>
    %cst_21 = arith.constant 3.300000e-01 : f32
    %31 = vector.broadcast %cst_21 : f32 to vector<2x128xf32>
    %32 = arith.mulf %31, %28 : vector<2x128xf32>
    %33 = arith.select %30, %28, %32 : vector<2x128xi1>, vector<2x128xf32>
    %c0_22 = arith.constant 0 : index
    %c0_23 = arith.constant 0 : index
    %34 = vector.load %arg8[%c0_22, %c0_23] : memref<128x30xf32, #tpu.memory_space<vmem>>, vector<128x30xf32>
    %cst_24 = arith.constant dense<0.000000e+00> : vector<2x30xf32>
    %35 = tpu.matmul %33, %34, %cst_24 {dimension_numbers = #tpu.dot_dimension_numbers<[1], [0], [0], [1], [0, 0, 1, 1], [], []>} : vector<2x128xf32>, vector<128x30xf32>, vector<2x30xf32> -> vector<2x30xf32>
    %c0_25 = arith.constant 0 : index
    %c0_26 = arith.constant 0 : index
    %36 = vector.load %arg9[%c0_25, %c0_26] : memref<1x30xf32, #tpu.memory_space<vmem>>, vector<1x30xf32>
    %37 = vector.broadcast %36 : vector<1x30xf32> to vector<2x30xf32>
    %38 = arith.addf %35, %37 : vector<2x30xf32>
    %cst_27 = arith.constant 0.000000e+00 : f32
    %39 = vector.broadcast %cst_27 : f32 to vector<2x30xf32>
    %40 = arith.cmpf oge, %38, %39 : vector<2x30xf32>
    %cst_28 = arith.constant 3.300000e-01 : f32
    %41 = vector.broadcast %cst_28 : f32 to vector<2x30xf32>
    %42 = arith.mulf %41, %38 : vector<2x30xf32>
    %43 = arith.select %40, %38, %42 : vector<2x30xi1>, vector<2x30xf32>
    %c0_29 = arith.constant 0 : index
    %c0_30 = arith.constant 0 : index
    %44 = vector.load %arg10[%c0_29, %c0_30] : memref<30x2xf32, #tpu.memory_space<vmem>>, vector<30x2xf32>
    %cst_31 = arith.constant dense<0.000000e+00> : vector<2x2xf32>
    %45 = tpu.matmul %43, %44, %cst_31 {dimension_numbers = #tpu.dot_dimension_numbers<[1], [0], [0], [1], [0, 0, 1, 1], [], []>} : vector<2x30xf32>, vector<30x2xf32>, vector<2x2xf32> -> vector<2x2xf32>
    %c0_32 = arith.constant 0 : index
    %c0_33 = arith.constant 0 : index
    %46 = vector.load %arg11[%c0_32, %c0_33] : memref<1x2xf32, #tpu.memory_space<vmem>>, vector<1x2xf32>
    %47 = vector.broadcast %46 : vector<1x2xf32> to vector<2x2xf32>
    %48 = arith.addf %45, %47 : vector<2x2xf32>
    %cst_34 = arith.constant 0.000000e+00 : f32
    %49 = vector.broadcast %cst_34 : f32 to vector<2x2xf32>
    %50 = arith.cmpf oge, %48, %49 : vector<2x2xf32>
    %cst_35 = arith.constant 3.300000e-01 : f32
    %51 = vector.broadcast %cst_35 : f32 to vector<2x2xf32>
    %52 = arith.mulf %51, %48 : vector<2x2xf32>
    %53 = arith.select %50, %48, %52 : vector<2x2xi1>, vector<2x2xf32>
    %c0_36 = arith.constant 0 : index
    %c0_37 = arith.constant 0 : index
    %54 = vector.load %arg12[%c0_36, %c0_37] : memref<2x2xf32, #tpu.memory_space<vmem>>, vector<2x2xf32>
    tpu.vector_store %arg12[%c0_36, %c0_37], %53 {strides = array<i32>} : memref<2x2xf32, #tpu.memory_space<vmem>>, vector<2x2xf32>,
    return
  }
  func.func @transform_0(%arg0: i32) -> (i32, i32, i32) {
    %c0_i32 = arith.constant 0 : i32
    %c0_i32_0 = arith.constant 0 : i32
    %c0_i32_1 = arith.constant 0 : i32
    %c0_i32_2 = arith.constant 0 : i32
    return %c0_i32, %c0_i32_0, %c0_i32_1 : i32, i32, i32
  }
  func.func @transform_1(%arg0: i32) -> (i32, i32) {
    %c0_i32 = arith.constant 0 : i32
    %c0_i32_0 = arith.constant 0 : i32
    %c0_i32_1 = arith.constant 0 : i32
    return %c0_i32, %c0_i32_0 : i32, i32
  }
  func.func @transform_2(%arg0: i32) -> (i32, i32) {
    %c0_i32 = arith.constant 0 : i32
    %c0_i32_0 = arith.constant 0 : i32
    %c0_i32_1 = arith.constant 0 : i32
    return %c0_i32, %c0_i32_0 : i32, i32
  }
  func.func @transform_3(%arg0: i32) -> (i32, i32) {
    %c0_i32 = arith.constant 0 : i32
    %c0_i32_0 = arith.constant 0 : i32
    %c0_i32_1 = arith.constant 0 : i32
    return %c0_i32, %c0_i32_0 : i32, i32
  }
  func.func @transform_4(%arg0: i32) -> (i32, i32) {
    %c0_i32 = arith.constant 0 : i32
    %c0_i32_0 = arith.constant 0 : i32
    %c0_i32_1 = arith.constant 0 : i32
    return %c0_i32, %c0_i32_0 : i32, i32
  }
  func.func @transform_5(%arg0: i32) -> (i32, i32) {
    %c0_i32 = arith.constant 0 : i32
    %c0_i32_0 = arith.constant 0 : i32
    %c0_i32_1 = arith.constant 0 : i32
    return %c0_i32, %c0_i32_0 : i32, i32
  }
  func.func @transform_6(%arg0: i32) -> (i32, i32) {
    %c0_i32 = arith.constant 0 : i32
    %c0_i32_0 = arith.constant 0 : i32
    %c0_i32_1 = arith.constant 0 : i32
    return %c0_i32, %c0_i32_0 : i32, i32
  }
  func.func @transform_7(%arg0: i32) -> (i32, i32) {
    %c0_i32 = arith.constant 0 : i32
    %c0_i32_0 = arith.constant 0 : i32
    %c0_i32_1 = arith.constant 0 : i32
    return %c0_i32, %c0_i32_0 : i32, i32
  }
  func.func @transform_8(%arg0: i32) -> (i32, i32) {
    %c0_i32 = arith.constant 0 : i32
    %c0_i32_0 = arith.constant 0 : i32
    %c0_i32_1 = arith.constant 0 : i32
    return %c0_i32, %c0_i32_0 : i32, i32
  }
  func.func @transform_9(%arg0: i32) -> (i32, i32) {
    %c0_i32 = arith.constant 0 : i32
    %c0_i32_0 = arith.constant 0 : i32
    %c0_i32_1 = arith.constant 0 : i32
    return %c0_i32, %c0_i32_0 : i32, i32
  }
  func.func @transform_10(%arg0: i32) -> (i32, i32) {
    %c0_i32 = arith.constant 0 : i32
    %c0_i32_0 = arith.constant 0 : i32
    %c0_i32_1 = arith.constant 0 : i32
    return %c0_i32, %c0_i32_0 : i32, i32
  }
  func.func @transform_11(%arg0: i32) -> (i32, i32) {
    %c0_i32 = arith.constant 0 : i32
    %c0_i32_0 = arith.constant 0 : i32
    %c0_i32_1 = arith.constant 0 : i32
    return %c0_i32, %c0_i32_0 : i32, i32
  }
}

</mosaic_0001>

<llo_original>
// kernel: brainnetcnn_forward.4
$region0: #{brainnetcnn_forward.4}
  #allocation0 [shape = 'u32[]', space=smem, size = 0x4, offset = 0x4, fixed_abs, tag = 'smem constant byte address 0x4 - core index']
  #allocation1 [shape = 'u32[144,128]{1,0:T(1,128)}', space=vmem, size = 0x12000, scoped, tag = 'internal scratch']
  %s0 = inlined_call_operand.vmem [shape: f32[2,16,1024], index: 0, kind: input, shape index: {}]
  %s1 = inlined_call_operand.vmem [shape: f32[1024,128], index: 1, kind: input, shape index: {}]
  %s2 = inlined_call_operand.vmem [shape: f32[1,64], index: 2, kind: input, shape index: {}]
  %s3 = inlined_call_operand.vmem [shape: f32[2,16,1024], index: 3, kind: output, shape index: {}]
  %s4 = sld [smem:[#allocation0]]
  $region45: #{brainnetcnn_forward.4} parent=0
    _
  %s6 = ssub.s32 1, %s4
  %s7 = scalar_select 0, %s6, %s4
  loop: start=0, step=1, limit=4
  $region2: #{brainnetcnn_forward.4} parent=0 // loop_pre_header
    _
  $region3: #{brainnetcnn_forward.4} parent=0 // loop_header
    %s9 = sphi 0, %s13
    %p10 = scmp.ge.s32.totalorder %s9, 4
    %s19 = sphi 0, %s21
    %s22 = sphi 0, %s19
    %s23 = sphi 0, %s22
    %s39 = sphi 0, %s23
    %s43 = sphi 0, %s43
    %s45 = sphi 0, %s43
    %s46 = sphi 0, %s45
    %s60 = sphi 0, %s46
    %s64 = sphi 0, %s64
    %s66 = sphi 0, %s64
    %s67 = sphi 0, %s66
    %s81 = sphi 0, %s67
    %s87 = sphi 0, %s89
    %s90 = sphi 0, %s87
    %s91 = sphi 0, %s90
    %s107 = sphi 0, %s91
  $region4: #{brainnetcnn_forward.4} parent=0 // loop_header_branch
    %12 = sbr.rel (%p10) target = $region8
  $region5: #{brainnetcnn_forward.4} parent=0 // loop_body
    %s14 = ssub.s32 %s9, 1
    %s15 = ssub.s32 %s9, 2
    %s16 = sadd.s32 %s9, 1
    %s17 = ssub.s32 %s9, %s16
    %p18 = scmp.eq.s32.totalorder %s17, 0
    %s20 = sadd.s32 %s19, 1
    %s21 = scalar_select %p18, %s19, %s20
    %p24 = pneg %p18
    %p25 = scmp.eq.s32.totalorder %s9, 1
    %p26 = por %p24, %p25
    %p27 = scmp.ne.s32.totalorder %s19, %s22
    %p28 = scmp.eq.s32.totalorder %s9, 0
    %p29 = por %p27, %p28
    %p30 = scmp.ne.s32.totalorder %s19, %s22
    %p31 = scmp.eq.s32.totalorder %s14, 1
    %p32 = por %p30, %p31
    %p33 = scmp.ne.s32.totalorder %s22, %s23
    %p34 = scmp.eq.s32.totalorder %s14, 0
    %p35 = por %p33, %p34
    %p36 = scmp.ne.s32.totalorder %s22, %s23
    %p37 = scmp.eq.s32.totalorder %s15, 1
    %p38 = por %p36, %p37
    %p40 = scmp.ne.s32.totalorder %s23, %s39
    %p41 = scmp.eq.s32.totalorder %s15, 0
    %p42 = por %p40, %p41
    %s44 = sadd.s32 %s43, 1
    %p47 = scmp.eq.s32.totalorder %s9, 1
    %p48 = scmp.ne.s32.totalorder %s43, %s45
    %p49 = scmp.eq.s32.totalorder %s9, 0
    %p50 = por %p48, %p49
    %p51 = scmp.ne.s32.totalorder %s43, %s45
    %p52 = scmp.eq.s32.totalorder %s14, 1
    %p53 = por %p51, %p52
    %p54 = scmp.ne.s32.totalorder %s45, %s46
    %p55 = scmp.eq.s32.totalorder %s14, 0
    %p56 = por %p54, %p55
    %p57 = scmp.ne.s32.totalorder %s45, %s46
    %p58 = scmp.eq.s32.totalorder %s15, 1
    %p59 = por %p57, %p58
    %p61 = scmp.ne.s32.totalorder %s46, %s60
    %p62 = scmp.eq.s32.totalorder %s15, 0
    %p63 = por %p61, %p62
    %s65 = sadd.s32 %s64, 1
    %p68 = scmp.eq.s32.totalorder %s9, 1
    %p69 = scmp.ne.s32.totalorder %s64, %s66
    %p70 = scmp.eq.s32.totalorder %s9, 0
    %p71 = por %p69, %p70
    %p72 = scmp.ne.s32.totalorder %s64, %s66
    %p73 = scmp.eq.s32.totalorder %s14, 1
    %p74 = por %p72, %p73
    %p75 = scmp.ne.s32.totalorder %s66, %s67
    %p76 = scmp.eq.s32.totalorder %s14, 0
    %p77 = por %p75, %p76
    %p78 = scmp.ne.s32.totalorder %s66, %s67
    %p79 = scmp.eq.s32.totalorder %s15, 1
    %p80 = por %p78, %p79
    %p82 = scmp.ne.s32.totalorder %s67, %s81
    %p83 = scmp.eq.s32.totalorder %s15, 0
    %p84 = por %p82, %p83
    %s85 = ssub.s32 %s9, %s16
    %p86 = scmp.eq.s32.totalorder %s85, 0
    %s88 = sadd.s32 %s87, 1
    %s89 = scalar_select %p86, %s87, %s88
    %p92 = pneg %p86
    %p93 = scmp.eq.s32.totalorder %s9, 1
    %p94 = por %p92, %p93
    %p95 = scmp.ne.s32.totalorder %s87, %s90
    %p96 = scmp.eq.s32.totalorder %s9, 0
    %p97 = por %p95, %p96
    %p98 = scmp.ne.s32.totalorder %s87, %s90
    %p99 = scmp.eq.s32.totalorder %s14, 1
    %p100 = por %p98, %p99
    %p101 = scmp.ne.s32.totalorder %s90, %s91
    %p102 = scmp.eq.s32.totalorder %s14, 0
    %p103 = por %p101, %p102
    %p104 = scmp.ne.s32.totalorder %s90, %s91
    %p105 = scmp.eq.s32.totalorder %s15, 1
    %p106 = por %p104, %p105
    %p108 = scmp.ne.s32.totalorder %s91, %s107
    %p109 = scmp.eq.s32.totalorder %s15, 0
    %p110 = por %p108, %p109
    %p111 = scmp.le.s32.totalorder 1, %s9
    %p112 = scmp.lt.s32.totalorder %s9, 3
    %p113 = pnand %p111, %p112
    %p114 = pneg %p113
    // Predicated region
    $region9: #{brainnetcnn_forward.4} parent=5 // pred_check
      _
    $region10: #{brainnetcnn_forward.4} parent=5 // pred_check_branch
      %116 = sbr.rel (%p113) target = $region12
    $region11: #{brainnetcnn_forward.4} parent=5 // pred_region
      %s117 = ssub.s32 %s9, 1
      // Predicated region
      $region13: #{brainnetcnn_forward.4} parent=11 // pred_check
        %p118 = pneg %p56
      $region14: #{brainnetcnn_forward.4} parent=11 // pred_check_branch
        %120 = sbr.rel (%p118) target = $region16
      $region15: #{brainnetcnn_forward.4} parent=11 // pred_region
        _
      $region16: #{brainnetcnn_forward.4} parent=11 // pred_fallthru
        _
      // Predicated region
      $region17: #{brainnetcnn_forward.4} parent=11 // pred_check
        %p121 = pneg %p77
      $region18: #{brainnetcnn_forward.4} parent=11 // pred_check_branch
        %123 = sbr.rel (%p121) target = $region20
      $region19: #{brainnetcnn_forward.4} parent=11 // pred_region
        _
      $region20: #{brainnetcnn_forward.4} parent=11 // pred_fallthru
        _
    $region12: #{brainnetcnn_forward.4} parent=5 // pred_fallthru
      _
    %p124 = scmp.lt.s32.totalorder %s9, 2
    // Predicated region
    $region21: #{brainnetcnn_forward.4} parent=5 // pred_check
      %p125 = pneg %p124
    $region22: #{brainnetcnn_forward.4} parent=5 // pred_check_branch
      %127 = sbr.rel (%p125) target = $region24
    $region23: #{brainnetcnn_forward.4} parent=5 // pred_region
      // Predicated region
      $region25: #{brainnetcnn_forward.4} parent=23 // pred_check
        %p128 = pneg %p29
      $region26: #{brainnetcnn_forward.4} parent=23 // pred_check_branch
        %130 = sbr.rel (%p128) target = $region28
      $region27: #{brainnetcnn_forward.4} parent=23 // pred_region
        %p131 = scmp.lt.s32.totalorder %s9, 1
        %s132 = scalar_select %p131, %s9, 1
        %s133 = smul.addr %s132, 16
        %s134 = smul.addr %s133, 8
        %s135 = scalar_lea.vmem %s0, %s134
      $region28: #{brainnetcnn_forward.4} parent=23 // pred_fallthru
        _
    $region24: #{brainnetcnn_forward.4} parent=5 // pred_fallthru
      _
    %p136 = scmp.le.s32.totalorder 1, %s9
    %p137 = scmp.lt.s32.totalorder %s9, 3
    %p138 = pnand %p136, %p137
    %p139 = pneg %p138
    // Predicated region
    $region29: #{brainnetcnn_forward.4} parent=5 // pred_check
      _
    $region30: #{brainnetcnn_forward.4} parent=5 // pred_check_branch
      %141 = sbr.rel (%p138) target = $region32
    $region31: #{brainnetcnn_forward.4} parent=5 // pred_region
      %s142 = ssub.s32 %s9, 1
      %p143 = scmp.lt.s32.totalorder %s14, 1
      %s144 = scalar_select %p143, %s14, 1
      %s145 = smul.addr %s144, 16
      %s146 = smul.addr %s145, 8
      %s147 = scalar_lea.vmem %s0, %s146
      %p148 = pneg %p35
      %p149 = pneg %p32
      %p150 = pneg %p56
      %p151 = pneg %p53
      %p152 = pneg %p77
      %p153 = pneg %p74
      %p154 = pneg %p103
      %p155 = pneg %p100
      %p156 = scmp.lt.s32.totalorder %s14, 1
      %s157 = scalar_select %p156, %s14, 1
      %s158 = smul.addr %s157, 16
      %s159 = smul.addr %s158, 8
      %s160 = scalar_lea.vmem %s3, %s159
      %p161 = scmp.lt.s32.totalorder %s14, 1
      %s162 = scalar_select %p161, %s14, 1
      %s163 = smul.addr %s162, 16
      %s164 = smul.addr %s163, 8
      %s165 = scalar_lea.vmem %s0, %s164
      %p166 = scmp.lt.s32.totalorder %s14, 1
      %s167 = scalar_select %p166, %s14, 1
      %s168 = smul.addr %s167, 16
      %s169 = smul.addr %s168, 8
      %s170 = scalar_lea.vmem %s3, %s169
      %v171 = vld [vmem:[%s165] sm:$0xff]
      %v172 = vld [vmem:[%s165 + $0x8] sm:$0xff]
      %v173 = vld [vmem:[%s165 + $0x10] sm:$0xff]
      %v174 = vld [vmem:[%s165 + $0x18] sm:$0xff]
      %v175 = vld [vmem:[%s165 + $0x20] sm:$0xff]
      %v176 = vld [vmem:[%s165 + $0x28] sm:$0xff]
      %v177 = vld [vmem:[%s165 + $0x30] sm:$0xff]
      %v178 = vld [vmem:[%s165 + $0x38] sm:$0xff]
      %v179 = vld [vmem:[%s165 + $0x40] sm:$0xff]
      %v180 = vld [vmem:[%s165 + $0x48] sm:$0xff]
      %v181 = vld [vmem:[%s165 + $0x50] sm:$0xff]
      %v182 = vld [vmem:[%s165 + $0x58] sm:$0xff]
      %v183 = vld [vmem:[%s165 + $0x60] sm:$0xff]
      %v184 = vld [vmem:[%s165 + $0x68] sm:$0xff]
      %v185 = vld [vmem:[%s165 + $0x70] sm:$0xff]
      %v186 = vld [vmem:[%s165 + $0x78] sm:$0xff]
      %v187 = vld [vmem:[%s1] sm:$0xff]
      %v188 = vld [vmem:[%s1 + $0x8] sm:$0xff]
      %v189 = vld [vmem:[%s1 + $0x10] sm:$0xff]
      %v190 = vld [vmem:[%s1 + $0x18] sm:$0xff]
      %v191 = vld [vmem:[%s1 + $0x20] sm:$0xff]
      %v192 = vld [vmem:[%s1 + $0x28] sm:$0xff]
      %v193 = vld [vmem:[%s1 + $0x30] sm:$0xff]
      %v194 = vld [vmem:[%s1 + $0x38] sm:$0xff]
      %v195 = vld [vmem:[%s1 + $0x40] sm:$0xff]
      %v196 = vld [vmem:[%s1 + $0x48] sm:$0xff]
      %v197 = vld [vmem:[%s1 + $0x50] sm:$0xff]
      %v198 = vld [vmem:[%s1 + $0x58] sm:$0xff]
      %v199 = vld [vmem:[%s1 + $0x60] sm:$0xff]
      %v200 = vld [vmem:[%s1 + $0x68] sm:$0xff]
      %v201 = vld [vmem:[%s1 + $0x70] sm:$0xff]
      %v202 = vld [vmem:[%s1 + $0x78] sm:$0xff]
      %v203 = vld [vmem:[%s1 + $0x80] sm:$0xff]
      %v204 = vld [vmem:[%s1 + $0x88] sm:$0xff]
      %v205 = vld [vmem:[%s1 + $0x90] sm:$0xff]
      %v206 = vld [vmem:[%s1 + $0x98] sm:$0xff]
      %v207 = vld [vmem:[%s1 + $0xa0] sm:$0xff]
      %v208 = vld [vmem:[%s1 + $0xa8] sm:$0xff]
      %v209 = vld [vmem:[%s1 + $0xb0] sm:$0xff]
      %v210 = vld [vmem:[%s1 + $0xb8] sm:$0xff]
      %v211 = vld [vmem:[%s1 + $0xc0] sm:$0xff]
      %v212 = vld [vmem:[%s1 + $0xc8] sm:$0xff]
      %v213 = vld [vmem:[%s1 + $0xd0] sm:$0xff]
      %v214 = vld [vmem:[%s1 + $0xd8] sm:$0xff]
      %v215 = vld [vmem:[%s1 + $0xe0] sm:$0xff]
      %v216 = vld [vmem:[%s1 + $0xe8] sm:$0xff]
      %v217 = vld [vmem:[%s1 + $0xf0] sm:$0xff]
      %v218 = vld [vmem:[%s1 + $0xf8] sm:$0xff]
      %v219 = vld [vmem:[%s1 + $0x100] sm:$0xff]
      %v220 = vld [vmem:[%s1 + $0x108] sm:$0xff]
      %v221 = vld [vmem:[%s1 + $0x110] sm:$0xff]
      %v222 = vld [vmem:[%s1 + $0x118] sm:$0xff]
      %v223 = vld [vmem:[%s1 + $0x120] sm:$0xff]
      %v224 = vld [vmem:[%s1 + $0x128] sm:$0xff]
      %v225 = vld [vmem:[%s1 + $0x130] sm:$0xff]
      %v226 = vld [vmem:[%s1 + $0x138] sm:$0xff]
      %v227 = vld [vmem:[%s1 + $0x140] sm:$0xff]
      %v228 = vld [vmem:[%s1 + $0x148] sm:$0xff]
      %v229 = vld [vmem:[%s1 + $0x150] sm:$0xff]
      %v230 = vld [vmem:[%s1 + $0x158] sm:$0xff]
      %v231 = vld [vmem:[%s1 + $0x160] sm:$0xff]
      %v232 = vld [vmem:[%s1 + $0x168] sm:$0xff]
      %v233 = vld [vmem:[%s1 + $0x170] sm:$0xff]
      %v234 = vld [vmem:[%s1 + $0x178] sm:$0xff]
      %v235 = vld [vmem:[%s1 + $0x180] sm:$0xff]
      %v236 = vld [vmem:[%s1 + $0x188] sm:$0xff]
      %v237 = vld [vmem:[%s1 + $0x190] sm:$0xff]
      %v238 = vld [vmem:[%s1 + $0x198] sm:$0xff]
      %v239 = vld [vmem:[%s1 + $0x1a0] sm:$0xff]
      %v240 = vld [vmem:[%s1 + $0x1a8] sm:$0xff]
      %v241 = vld [vmem:[%s1 + $0x1b0] sm:$0xff]
      %v242 = vld [vmem:[%s1 + $0x1b8] sm:$0xff]
      %v243 = vld [vmem:[%s1 + $0x1c0] sm:$0xff]
      %v244 = vld [vmem:[%s1 + $0x1c8] sm:$0xff]
      %v245 = vld [vmem:[%s1 + $0x1d0] sm:$0xff]
      %v246 = vld [vmem:[%s1 + $0x1d8] sm:$0xff]
      %v247 = vld [vmem:[%s1 + $0x1e0] sm:$0xff]
      %v248 = vld [vmem:[%s1 + $0x1e8] sm:$0xff]
      %v249 = vld [vmem:[%s1 + $0x1f0] sm:$0xff]
      %v250 = vld [vmem:[%s1 + $0x1f8] sm:$0xff]
      %v251 = vld [vmem:[%s1 + $0x200] sm:$0xff]
      %v252 = vld [vmem:[%s1 + $0x208] sm:$0xff]
      %v253 = vld [vmem:[%s1 + $0x210] sm:$0xff]
      %v254 = vld [vmem:[%s1 + $0x218] sm:$0xff]
      %v255 = vld [vmem:[%s1 + $0x220] sm:$0xff]
      %v256 = vld [vmem:[%s1 + $0x228] sm:$0xff]
      %v257 = vld [vmem:[%s1 + $0x230] sm:$0xff]
      %v258 = vld [vmem:[%s1 + $0x238] sm:$0xff]
      %v259 = vld [vmem:[%s1 + $0x240] sm:$0xff]
      %v260 = vld [vmem:[%s1 + $0x248] sm:$0xff]
      %v261 = vld [vmem:[%s1 + $0x250] sm:$0xff]
      %v262 = vld [vmem:[%s1 + $0x258] sm:$0xff]
      %v263 = vld [vmem:[%s1 + $0x260] sm:$0xff]
      %v264 = vld [vmem:[%s1 + $0x268] sm:$0xff]
      %v265 = vld [vmem:[%s1 + $0x270] sm:$0xff]
      %v266 = vld [vmem:[%s1 + $0x278] sm:$0xff]
      %v267 = vld [vmem:[%s1 + $0x280] sm:$0xff]
      %v268 = vld [vmem:[%s1 + $0x288] sm:$0xff]
      %v269 = vld [vmem:[%s1 + $0x290] sm:$0xff]
      %v270 = vld [vmem:[%s1 + $0x298] sm:$0xff]
      %v271 = vld [vmem:[%s1 + $0x2a0] sm:$0xff]
      %v272 = vld [vmem:[%s1 + $0x2a8] sm:$0xff]
      %v273 = vld [vmem:[%s1 + $0x2b0] sm:$0xff]
      %v274 = vld [vmem:[%s1 + $0x2b8] sm:$0xff]
      %v275 = vld [vmem:[%s1 + $0x2c0] sm:$0xff]
      %v276 = vld [vmem:[%s1 + $0x2c8] sm:$0xff]
      %v277 = vld [vmem:[%s1 + $0x2d0] sm:$0xff]
      %v278 = vld [vmem:[%s1 + $0x2d8] sm:$0xff]
      %v279 = vld [vmem:[%s1 + $0x2e0] sm:$0xff]
      %v280 = vld [vmem:[%s1 + $0x2e8] sm:$0xff]
      %v281 = vld [vmem:[%s1 + $0x2f0] sm:$0xff]
      %v282 = vld [vmem:[%s1 + $0x2f8] sm:$0xff]
      %v283 = vld [vmem:[%s1 + $0x300] sm:$0xff]
      %v284 = vld [vmem:[%s1 + $0x308] sm:$0xff]
      %v285 = vld [vmem:[%s1 + $0x310] sm:$0xff]
      %v286 = vld [vmem:[%s1 + $0x318] sm:$0xff]
      %v287 = vld [vmem:[%s1 + $0x320] sm:$0xff]
      %v288 = vld [vmem:[%s1 + $0x328] sm:$0xff]
      %v289 = vld [vmem:[%s1 + $0x330] sm:$0xff]
      %v290 = vld [vmem:[%s1 + $0x338] sm:$0xff]
      %v291 = vld [vmem:[%s1 + $0x340] sm:$0xff]
      %v292 = vld [vmem:[%s1 + $0x348] sm:$0xff]
      %v293 = vld [vmem:[%s1 + $0x350] sm:$0xff]
      %v294 = vld [vmem:[%s1 + $0x358] sm:$0xff]
      %v295 = vld [vmem:[%s1 + $0x360] sm:$0xff]
      %v296 = vld [vmem:[%s1 + $0x368] sm:$0xff]
      %v297 = vld [vmem:[%s1 + $0x370] sm:$0xff]
      %v298 = vld [vmem:[%s1 + $0x378] sm:$0xff]
      %v299 = vld [vmem:[%s1 + $0x380] sm:$0xff]
      %v300 = vld [vmem:[%s1 + $0x388] sm:$0xff]
      %v301 = vld [vmem:[%s1 + $0x390] sm:$0xff]
      %v302 = vld [vmem:[%s1 + $0x398] sm:$0xff]
      %v303 = vld [vmem:[%s1 + $0x3a0] sm:$0xff]
      %v304 = vld [vmem:[%s1 + $0x3a8] sm:$0xff]
      %v305 = vld [vmem:[%s1 + $0x3b0] sm:$0xff]
      %v306 = vld [vmem:[%s1 + $0x3b8] sm:$0xff]
      %v307 = vld [vmem:[%s1 + $0x3c0] sm:$0xff]
      %v308 = vld [vmem:[%s1 + $0x3c8] sm:$0xff]
      %v309 = vld [vmem:[%s1 + $0x3d0] sm:$0xff]
      %v310 = vld [vmem:[%s1 + $0x3d8] sm:$0xff]
      %v311 = vld [vmem:[%s1 + $0x3e0] sm:$0xff]
      %v312 = vld [vmem:[%s1 + $0x3e8] sm:$0xff]
      %v313 = vld [vmem:[%s1 + $0x3f0] sm:$0xff]
      %v314 = vld [vmem:[%s1 + $0x3f8] sm:$0xff]
      %315 = vmatprep.subr.mxu0 0.0
      %316 = vmatpush1.msra.mxu0 %v202
      %317 = vmatprep.subr.mxu0 0.0
      %318 = vmatpush1.msra.mxu0 %v201
      %319 = vmatprep.subr.mxu0 0.0
      %320 = vmatpush1.msra.mxu0 %v200
      %321 = vmatprep.subr.mxu0 0.0
      %322 = vmatpush1.msra.mxu0 %v199
      %323 = vmatprep.subr.mxu0 0.0
      %324 = vmatpush1.msra.mxu0 %v198
      %325 = vmatprep.subr.mxu0 0.0
      %326 = vmatpush1.msra.mxu0 %v197
      %327 = vmatprep.subr.mxu0 0.0
      %328 = vmatpush1.msra.mxu0 %v196
      %329 = vmatprep.subr.mxu0 0.0
      %330 = vmatpush1.msra.mxu0 %v195
      %331 = vmatprep.subr.mxu0 0.0
      %332 = vmatpush1.msra.mxu0 %v194
      %333 = vmatprep.subr.mxu0 0.0
      %334 = vmatpush1.msra.mxu0 %v193
      %335 = vmatprep.subr.mxu0 0.0
      %336 = vmatpush1.msra.mxu0 %v192
      %337 = vmatprep.subr.mxu0 0.0
      %338 = vmatpush1.msra.mxu0 %v191
      %339 = vmatprep.subr.mxu0 0.0
      %340 = vmatpush1.msra.mxu0 %v190
      %341 = vmatprep.subr.mxu0 0.0
      %342 = vmatpush1.msra.mxu0 %v189
      %343 = vmatprep.subr.mxu0 0.0
      %344 = vmatpush1.msra.mxu0 %v188
      %345 = vmatprep.subr.mxu0 0.0
      %346 = vmatpush1.msra.mxu0 %v187
      %347 = vmatprep.subr.mxu0 0.0
      %348 = vmatpush2.msra.mxu0 %v218
      %349 = vmatprep.subr.mxu0 0.0
      %350 = vmatpush2.msra.mxu0 %v217
      %351 = vmatprep.subr.mxu0 0.0
      %352 = vmatpush2.msra.mxu0 %v216
      %353 = vmatprep.subr.mxu0 0.0
      %354 = vmatpush2.msra.mxu0 %v215
      %355 = vmatprep.subr.mxu0 0.0
      %356 = vmatpush2.msra.mxu0 %v214
      %357 = vmatprep.subr.mxu0 0.0
      %358 = vmatpush2.msra.mxu0 %v213
      %359 = vmatprep.subr.mxu0 0.0
      %360 = vmatpush2.msra.mxu0 %v212
      %361 = vmatprep.subr.mxu0 0.0
      %362 = vmatpush2.msra.mxu0 %v211
      %363 = vmatprep.subr.mxu0 0.0
      %364 = vmatpush2.msra.mxu0 %v210
      %365 = vmatprep.subr.mxu0 0.0
      %366 = vmatpush2.msra.mxu0 %v209
      %367 = vmatprep.subr.mxu0 0.0
      %368 = vmatpush2.msra.mxu0 %v208
      %369 = vmatprep.subr.mxu0 0.0
      %370 = vmatpush2.msra.mxu0 %v207
      %371 = vmatprep.subr.mxu0 0.0
      %372 = vmatpush2.msra.mxu0 %v206
      %373 = vmatprep.subr.mxu0 0.0
      %374 = vmatpush2.msra.mxu0 %v205
      %375 = vmatprep.subr.mxu0 0.0
      %376 = vmatpush2.msra.mxu0 %v204
      %377 = vmatprep.subr.mxu0 0.0
      %378 = vmatpush2.msra.mxu0 %v203
      %379 = vmatprep.mubr.f32.mxu0 %v172
      %380 = vmatmul.mubr.f32.gmra.mxu0 %v171
      %v381 = vpop.f32.mrf.mxu0
      %v382 = vadd.f32 0.0, %v381
      %v383 = vpop.f32.mrf.mxu0
      %384 = vmatprep.mubr.f32.mxu0 %v180
      %385 = vmatmul.mubr.f32.gmra.mxu0 %v179
      %v386 = vpop.f32.mrf.mxu0
      %v387 = vadd.f32 0.0, %v386
      %v388 = vpop.f32.mrf.mxu0
      %389 = vdwg.mxu0
      %390 = vmatprep.subr.mxu0 0.0
      %391 = vmatpush1.msra.mxu0 %v234
      %392 = vmatprep.subr.mxu0 0.0
      %393 = vmatpush1.msra.mxu0 %v233
      %394 = vmatprep.subr.mxu0 0.0
      %395 = vmatpush1.msra.mxu0 %v232
      %396 = vmatprep.subr.mxu0 0.0
      %397 = vmatpush1.msra.mxu0 %v231
      %398 = vmatprep.subr.mxu0 0.0
      %399 = vmatpush1.msra.mxu0 %v230
      %400 = vmatprep.subr.mxu0 0.0
      %401 = vmatpush1.msra.mxu0 %v229
      %402 = vmatprep.subr.mxu0 0.0
      %403 = vmatpush1.msra.mxu0 %v228
      %404 = vmatprep.subr.mxu0 0.0
      %405 = vmatpush1.msra.mxu0 %v227
      %406 = vmatprep.subr.mxu0 0.0
      %407 = vmatpush1.msra.mxu0 %v226
      %408 = vmatprep.subr.mxu0 0.0
      %409 = vmatpush1.msra.mxu0 %v225
      %410 = vmatprep.subr.mxu0 0.0
      %411 = vmatpush1.msra.mxu0 %v224
      %412 = vmatprep.subr.mxu0 0.0
      %413 = vmatpush1.msra.mxu0 %v223
      %414 = vmatprep.subr.mxu0 0.0
      %415 = vmatpush1.msra.mxu0 %v222
      %416 = vmatprep.subr.mxu0 0.0
      %417 = vmatpush1.msra.mxu0 %v221
      %418 = vmatprep.subr.mxu0 0.0
      %419 = vmatpush1.msra.mxu0 %v220
      %420 = vmatprep.subr.mxu0 0.0
      %421 = vmatpush1.msra.mxu0 %v219
      %422 = vmatprep.subr.mxu0 0.0
      %423 = vmatpush2.msra.mxu0 %v250
      %424 = vmatprep.subr.mxu0 0.0
      %425 = vmatpush2.msra.mxu0 %v249
      %426 = vmatprep.subr.mxu0 0.0
      %427 = vmatpush2.msra.mxu0 %v248
      %428 = vmatprep.subr.mxu0 0.0
      %429 = vmatpush2.msra.mxu0 %v247
      %430 = vmatprep.subr.mxu0 0.0
      %431 = vmatpush2.msra.mxu0 %v246
      %432 = vmatprep.subr.mxu0 0.0
      %433 = vmatpush2.msra.mxu0 %v245
      %434 = vmatprep.subr.mxu0 0.0
      %435 = vmatpush2.msra.mxu0 %v244
      %436 = vmatprep.subr.mxu0 0.0
      %437 = vmatpush2.msra.mxu0 %v243
      %438 = vmatprep.subr.mxu0 0.0
      %439 = vmatpush2.msra.mxu0 %v242
      %440 = vmatprep.subr.mxu0 0.0
      %441 = vmatpush2.msra.mxu0 %v241
      %442 = vmatprep.subr.mxu0 0.0
      %443 = vmatpush2.msra.mxu0 %v240
      %444 = vmatprep.subr.mxu0 0.0
      %445 = vmatpush2.msra.mxu0 %v239
      %446 = vmatprep.subr.mxu0 0.0
      %447 = vmatpush2.msra.mxu0 %v238
      %448 = vmatprep.subr.mxu0 0.0
      %449 = vmatpush2.msra.mxu0 %v237
      %450 = vmatprep.subr.mxu0 0.0
      %451 = vmatpush2.msra.mxu0 %v236
      %452 = vmatprep.subr.mxu0 0.0
      %453 = vmatpush2.msra.mxu0 %v235
      %454 = vmatprep.mubr.f32.mxu0 %v174
      %455 = vmatmul.mubr.f32.gmra.mxu0 %v173
      %v456 = vpop.f32.mrf.mxu0
      %v457 = vadd.f32 %v382, %v456
      %v458 = vpop.f32.mrf.mxu0
      %459 = vmatprep.mubr.f32.mxu0 %v182
      %460 = vmatmul.mubr.f32.gmra.mxu0 %v181
      %v461 = vpop.f32.mrf.mxu0
      %v462 = vadd.f32 %v387, %v461
      %v463 = vpop.f32.mrf.mxu0
      %464 = vdwg.mxu0
      %465 = vmatprep.subr.mxu0 0.0
      %466 = vmatpush1.msra.mxu0 %v266
      %467 = vmatprep.subr.mxu0 0.0
      %468 = vmatpush1.msra.mxu0 %v265
      %469 = vmatprep.subr.mxu0 0.0
      %470 = vmatpush1.msra.mxu0 %v264
      %471 = vmatprep.subr.mxu0 0.0
      %472 = vmatpush1.msra.mxu0 %v263
      %473 = vmatprep.subr.mxu0 0.0
      %474 = vmatpush1.msra.mxu0 %v262
      %475 = vmatprep.subr.mxu0 0.0
      %476 = vmatpush1.msra.mxu0 %v261
      %477 = vmatprep.subr.mxu0 0.0
      %478 = vmatpush1.msra.mxu0 %v260
      %479 = vmatprep.subr.mxu0 0.0
      %480 = vmatpush1.msra.mxu0 %v259
      %481 = vmatprep.subr.mxu0 0.0
      %482 = vmatpush1.msra.mxu0 %v258
      %483 = vmatprep.subr.mxu0 0.0
      %484 = vmatpush1.msra.mxu0 %v257
      %485 = vmatprep.subr.mxu0 0.0
      %486 = vmatpush1.msra.mxu0 %v256
      %487 = vmatprep.subr.mxu0 0.0
      %488 = vmatpush1.msra.mxu0 %v255
      %489 = vmatprep.subr.mxu0 0.0
      %490 = vmatpush1.msra.mxu0 %v254
      %491 = vmatprep.subr.mxu0 0.0
      %492 = vmatpush1.msra.mxu0 %v253
      %493 = vmatprep.subr.mxu0 0.0
      %494 = vmatpush1.msra.mxu0 %v252
      %495 = vmatprep.subr.mxu0 0.0
      %496 = vmatpush1.msra.mxu0 %v251
      %497 = vmatprep.subr.mxu0 0.0
      %498 = vmatpush2.msra.mxu0 %v282
      %499 = vmatprep.subr.mxu0 0.0
      %500 = vmatpush2.msra.mxu0 %v281
      %501 = vmatprep.subr.mxu0 0.0
      %502 = vmatpush2.msra.mxu0 %v280
      %503 = vmatprep.subr.mxu0 0.0
      %504 = vmatpush2.msra.mxu0 %v279
      %505 = vmatprep.subr.mxu0 0.0
      %506 = vmatpush2.msra.mxu0 %v278
      %507 = vmatprep.subr.mxu0 0.0
      %508 = vmatpush2.msra.mxu0 %v277
      %509 = vmatprep.subr.mxu0 0.0
      %510 = vmatpush2.msra.mxu0 %v276
      %511 = vmatprep.subr.mxu0 0.0
      %512 = vmatpush2.msra.mxu0 %v275
      %513 = vmatprep.subr.mxu0 0.0
      %514 = vmatpush2.msra.mxu0 %v274
      %515 = vmatprep.subr.mxu0 0.0
      %516 = vmatpush2.msra.mxu0 %v273
      %517 = vmatprep.subr.mxu0 0.0
      %518 = vmatpush2.msra.mxu0 %v272
      %519 = vmatprep.subr.mxu0 0.0
      %520 = vmatpush2.msra.mxu0 %v271
      %521 = vmatprep.subr.mxu0 0.0
      %522 = vmatpush2.msra.mxu0 %v270
      %523 = vmatprep.subr.mxu0 0.0
      %524 = vmatpush2.msra.mxu0 %v269
      %525 = vmatprep.subr.mxu0 0.0
      %526 = vmatpush2.msra.mxu0 %v268
      %527 = vmatprep.subr.mxu0 0.0
      %528 = vmatpush2.msra.mxu0 %v267
      %529 = vmatprep.mubr.f32.mxu0 %v176
      %530 = vmatmul.mubr.f32.gmra.mxu0 %v175
      %v531 = vpop.f32.mrf.mxu0
      %v532 = vadd.f32 %v457, %v531
      %v533 = vpop.f32.mrf.mxu0
      %534 = vmatprep.mubr.f32.mxu0 %v184
      %535 = vmatmul.mubr.f32.gmra.mxu0 %v183
      %v536 = vpop.f32.mrf.mxu0
      %v537 = vadd.f32 %v462, %v536
      %v538 = vpop.f32.mrf.mxu0
      %539 = vdwg.mxu0
      %540 = vmatprep.subr.mxu0 0.0
      %541 = vmatpush1.msra.mxu0 %v298
      %542 = vmatprep.subr.mxu0 0.0
      %543 = vmatpush1.msra.mxu0 %v297
      %544 = vmatprep.subr.mxu0 0.0
      %545 = vmatpush1.msra.mxu0 %v296
      %546 = vmatprep.subr.mxu0 0.0
      %547 = vmatpush1.msra.mxu0 %v295
      %548 = vmatprep.subr.mxu0 0.0
      %549 = vmatpush1.msra.mxu0 %v294
      %550 = vmatprep.subr.mxu0 0.0
      %551 = vmatpush1.msra.mxu0 %v293
      %552 = vmatprep.subr.mxu0 0.0
      %553 = vmatpush1.msra.mxu0 %v292
      %554 = vmatprep.subr.mxu0 0.0
      %555 = vmatpush1.msra.mxu0 %v291
      %556 = vmatprep.subr.mxu0 0.0
      %557 = vmatpush1.msra.mxu0 %v290
      %558 = vmatprep.subr.mxu0 0.0
      %559 = vmatpush1.msra.mxu0 %v289
      %560 = vmatprep.subr.mxu0 0.0
      %561 = vmatpush1.msra.mxu0 %v288
      %562 = vmatprep.subr.mxu0 0.0
      %563 = vmatpush1.msra.mxu0 %v287
      %564 = vmatprep.subr.mxu0 0.0
      %565 = vmatpush1.msra.mxu0 %v286
      %566 = vmatprep.subr.mxu0 0.0
      %567 = vmatpush1.msra.mxu0 %v285
      %568 = vmatprep.subr.mxu0 0.0
      %569 = vmatpush1.msra.mxu0 %v284
      %570 = vmatprep.subr.mxu0 0.0
      %571 = vmatpush1.msra.mxu0 %v283
      %572 = vmatprep.subr.mxu0 0.0
      %573 = vmatpush2.msra.mxu0 %v314
      %574 = vmatprep.subr.mxu0 0.0
      %575 = vmatpush2.msra.mxu0 %v313
      %576 = vmatprep.subr.mxu0 0.0
      %577 = vmatpush2.msra.mxu0 %v312
      %578 = vmatprep.subr.mxu0 0.0
      %579 = vmatpush2.msra.mxu0 %v311
      %580 = vmatprep.subr.mxu0 0.0
      %581 = vmatpush2.msra.mxu0 %v310
      %582 = vmatprep.subr.mxu0 0.0
      %583 = vmatpush2.msra.mxu0 %v309
      %584 = vmatprep.subr.mxu0 0.0
      %585 = vmatpush2.msra.mxu0 %v308
      %586 = vmatprep.subr.mxu0 0.0
      %587 = vmatpush2.msra.mxu0 %v307
      %588 = vmatprep.subr.mxu0 0.0
      %589 = vmatpush2.msra.mxu0 %v306
      %590 = vmatprep.subr.mxu0 0.0
      %591 = vmatpush2.msra.mxu0 %v305
      %592 = vmatprep.subr.mxu0 0.0
      %593 = vmatpush2.msra.mxu0 %v304
      %594 = vmatprep.subr.mxu0 0.0
      %595 = vmatpush2.msra.mxu0 %v303
      %596 = vmatprep.subr.mxu0 0.0
      %597 = vmatpush2.msra.mxu0 %v302
      %598 = vmatprep.subr.mxu0 0.0
      %599 = vmatpush2.msra.mxu0 %v301
      %600 = vmatprep.subr.mxu0 0.0
      %601 = vmatpush2.msra.mxu0 %v300
      %602 = vmatprep.subr.mxu0 0.0
      %603 = vmatpush2.msra.mxu0 %v299
      %604 = vmatprep.mubr.f32.mxu0 %v178
      %605 = vmatmul.mubr.f32.gmra.mxu0 %v177
      %v606 = vpop.f32.mrf.mxu0
      %v607 = vadd.f32 %v532, %v606
      %v608 = vpop.f32.mrf.mxu0
      %609 = vmatprep.mubr.f32.mxu0 %v186
      %610 = vmatmul.mubr.f32.gmra.mxu0 %v185
      %v611 = vpop.f32.mrf.mxu0
      %v612 = vadd.f32 %v537, %v611
      %v613 = vpop.f32.mrf.mxu0
      %614 = vdwg.mxu0
      %v615 = vld [vmem:[%s2] sm:$0x1]
      %v617 = vlaneseq
      %v618 = vshrl.u32 %v617, 7
      %v619 = vsub.s32 0, %v618
      %v620 = vrot.slane %v615, %v619
      %v622 = vadd.f32 %v607, %v620
      %v623 = vadd.f32 %v612, %v620
      %626 = vrot.lane.b32.xlu0 %v607, 64
      %v627 = vpop.permute.xlu0 %626
      %628 = vrot.lane.b32.xlu0 %v612, 64
      %v629 = vpop.permute.xlu0 %628
      %632 = vxpose.xlu0.b32.start [1/16] %v627, 128
      %633 = vxpose.xlu0.b32.cont [2/16] %v629, 128
      %634 = vxpose.xlu0.b32.cont [3/16] 0.0, 128
      %635 = vxpose.xlu0.b32.cont [4/16] 0.0, 128
      %636 = vxpose.xlu0.b32.cont [5/16] 0.0, 128
      %637 = vxpose.xlu0.b32.cont [6/16] 0.0, 128
      %638 = vxpose.xlu0.b32.cont [7/16] 0.0, 128
      %639 = vxpose.xlu0.b32.cont [8/16] 0.0, 128
      %640 = vxpose.xlu0.b32.cont [9/16] 0.0, 128
      %641 = vxpose.xlu0.b32.cont [10/16] 0.0, 128
      %642 = vxpose.xlu0.b32.cont [11/16] 0.0, 128
      %643 = vxpose.xlu0.b32.cont [12/16] 0.0, 128
      %644 = vxpose.xlu0.b32.cont [13/16] 0.0, 128
      %645 = vxpose.xlu0.b32.cont [14/16] 0.0, 128
      %646 = vxpose.xlu0.b32.cont [15/16] 0.0, 128
      %647 = vxpose.xlu0.b32.end [16/16] 0.0, 128
      %v648 = vpop.trf.xlu0
      %v649 = vpop.trf.xlu0
      %v650 = vpop.trf.xlu0
      %v651 = vpop.trf.xlu0
      %v652 = vpop.trf.xlu0
      %v653 = vpop.trf.xlu0
      %v654 = vpop.trf.xlu0
      %v655 = vpop.trf.xlu0
      %v656 = vpop.trf.xlu0
      %v657 = vpop.trf.xlu0
      %v658 = vpop.trf.xlu0
      %v659 = vpop.trf.xlu0
      %v660 = vpop.trf.xlu0
      %v661 = vpop.trf.xlu0
      %v662 = vpop.trf.xlu0
      %v663 = vpop.trf.xlu0
      %v664 = vlaneseq
      %v665 = vshrl.u32 %v664, 7
      %v666 = vsub.s32 0, %v665
      %v667 = vrot.slane %v622, %v666
      %669 = vbcast.lane.b32.xlu0 %v667, 256
      %v670 = vpop.permute.xlu0 %669
      %s672 = sor.u32 256, 8
      %673 = vbcast.lane.b32.xlu0 %v667, %s672
      %v674 = vpop.permute.xlu0 %673
      %s676 = sor.u32 256, 16
      %677 = vbcast.lane.b32.xlu0 %v667, %s676
      %v678 = vpop.permute.xlu0 %677
      %s680 = sor.u32 256, 24
      %681 = vbcast.lane.b32.xlu0 %v667, %s680
      %v682 = vpop.permute.xlu0 %681
      %s684 = sor.u32 256, 32
      %685 = vbcast.lane.b32.xlu0 %v667, %s684
      %v686 = vpop.permute.xlu0 %685
      %s688 = sor.u32 256, 40
      %689 = vbcast.lane.b32.xlu0 %v667, %s688
      %v690 = vpop.permute.xlu0 %689
      %s692 = sor.u32 256, 48
      %693 = vbcast.lane.b32.xlu0 %v667, %s692
      %v694 = vpop.permute.xlu0 %693
      %s696 = sor.u32 256, 56
      %697 = vbcast.lane.b32.xlu0 %v667, %s696
      %v698 = vpop.permute.xlu0 %697
      %v699 = vlaneseq
      %v700 = vshrl.u32 %v699, 7
      %v701 = vsub.s32 1, %v700
      %v702 = vrot.slane %v622, %v701
      %704 = vbcast.lane.b32.xlu0 %v702, 256
      %v705 = vpop.permute.xlu0 %704
      %s707 = sor.u32 256, 8
      %708 = vbcast.lane.b32.xlu0 %v702, %s707
      %v709 = vpop.permute.xlu0 %708
      %s711 = sor.u32 256, 16
      %712 = vbcast.lane.b32.xlu0 %v702, %s711
      %v713 = vpop.permute.xlu0 %712
      %s715 = sor.u32 256, 24
      %716 = vbcast.lane.b32.xlu0 %v702, %s715
      %v717 = vpop.permute.xlu0 %716
      %s719 = sor.u32 256, 32
      %720 = vbcast.lane.b32.xlu0 %v702, %s719
      %v721 = vpop.permute.xlu0 %720
      %s723 = sor.u32 256, 40
      %724 = vbcast.lane.b32.xlu0 %v702, %s723
      %v725 = vpop.permute.xlu0 %724
      %s727 = sor.u32 256, 48
      %728 = vbcast.lane.b32.xlu0 %v702, %s727
      %v729 = vpop.permute.xlu0 %728
      %s731 = sor.u32 256, 56
      %732 = vbcast.lane.b32.xlu0 %v702, %s731
      %v733 = vpop.permute.xlu0 %732
      %v734 = vlaneseq
      %v735 = vshrl.u32 %v734, 7
      %v736 = vsub.s32 2, %v735
      %v737 = vrot.slane %v622, %v736
      %739 = vbcast.lane.b32.xlu0 %v737, 256
      %v740 = vpop.permute.xlu0 %739
      %s742 = sor.u32 256, 8
      %743 = vbcast.lane.b32.xlu0 %v737, %s742
      %v744 = vpop.permute.xlu0 %743
      %s746 = sor.u32 256, 16
      %747 = vbcast.lane.b32.xlu0 %v737, %s746
      %v748 = vpop.permute.xlu0 %747
      %s750 = sor.u32 256, 24
      %751 = vbcast.lane.b32.xlu0 %v737, %s750
      %v752 = vpop.permute.xlu0 %751
      %s754 = sor.u32 256, 32
      %755 = vbcast.lane.b32.xlu0 %v737, %s754
      %v756 = vpop.permute.xlu0 %755
      %s758 = sor.u32 256, 40
      %759 = vbcast.lane.b32.xlu0 %v737, %s758
      %v760 = vpop.permute.xlu0 %759
      %s762 = sor.u32 256, 48
      %763 = vbcast.lane.b32.xlu0 %v737, %s762
      %v764 = vpop.permute.xlu0 %763
      %s766 = sor.u32 256, 56
      %767 = vbcast.lane.b32.xlu0 %v737, %s766
      %v768 = vpop.permute.xlu0 %767
      %v769 = vlaneseq
      %v770 = vshrl.u32 %v769, 7
      %v771 = vsub.s32 3, %v770
      %v772 = vrot.slane %v622, %v771
      %774 = vbcast.lane.b32.xlu0 %v772, 256
      %v775 = vpop.permute.xlu0 %774
      %s777 = sor.u32 256, 8
      %778 = vbcast.lane.b32.xlu0 %v772, %s777
      %v779 = vpop.permute.xlu0 %778
      %s781 = sor.u32 256, 16
      %782 = vbcast.lane.b32.xlu0 %v772, %s781
      %v783 = vpop.permute.xlu0 %782
      %s785 = sor.u32 256, 24
      %786 = vbcast.lane.b32.xlu0 %v772, %s785
      %v787 = vpop.permute.xlu0 %786
      %s789 = sor.u32 256, 32
      %790 = vbcast.lane.b32.xlu0 %v772, %s789
      %v791 = vpop.permute.xlu0 %790
      %s793 = sor.u32 256, 40
      %794 = vbcast.lane.b32.xlu0 %v772, %s793
      %v795 = vpop.permute.xlu0 %794
      %s797 = sor.u32 256, 48
      %798 = vbcast.lane.b32.xlu0 %v772, %s797
      %v799 = vpop.permute.xlu0 %798
      %s801 = sor.u32 256, 56
      %802 = vbcast.lane.b32.xlu0 %v772, %s801
      %v803 = vpop.permute.xlu0 %802
      %v804 = vlaneseq
      %v805 = vshrl.u32 %v804, 7
      %v806 = vsub.s32 4, %v805
      %v807 = vrot.slane %v622, %v806
      %809 = vbcast.lane.b32.xlu0 %v807, 256
      %v810 = vpop.permute.xlu0 %809
      %s812 = sor.u32 256, 8
      %813 = vbcast.lane.b32.xlu0 %v807, %s812
      %v814 = vpop.permute.xlu0 %813
      %s816 = sor.u32 256, 16
      %817 = vbcast.lane.b32.xlu0 %v807, %s816
      %v818 = vpop.permute.xlu0 %817
      %s820 = sor.u32 256, 24
      %821 = vbcast.lane.b32.xlu0 %v807, %s820
      %v822 = vpop.permute.xlu0 %821
      %s824 = sor.u32 256, 32
      %825 = vbcast.lane.b32.xlu0 %v807, %s824
      %v826 = vpop.permute.xlu0 %825
      %s828 = sor.u32 256, 40
      %829 = vbcast.lane.b32.xlu0 %v807, %s828
      %v830 = vpop.permute.xlu0 %829
      %s832 = sor.u32 256, 48
      %833 = vbcast.lane.b32.xlu0 %v807, %s832
      %v834 = vpop.permute.xlu0 %833
      %s836 = sor.u32 256, 56
      %837 = vbcast.lane.b32.xlu0 %v807, %s836
      %v838 = vpop.permute.xlu0 %837
      %v839 = vlaneseq
      %v840 = vshrl.u32 %v839, 7
      %v841 = vsub.s32 5, %v840
      %v842 = vrot.slane %v622, %v841
      %844 = vbcast.lane.b32.xlu0 %v842, 256
      %v845 = vpop.permute.xlu0 %844
      %s847 = sor.u32 256, 8
      %848 = vbcast.lane.b32.xlu0 %v842, %s847
      %v849 = vpop.permute.xlu0 %848
      %s851 = sor.u32 256, 16
      %852 = vbcast.lane.b32.xlu0 %v842, %s851
      %v853 = vpop.permute.xlu0 %852
      %s855 = sor.u32 256, 24
      %856 = vbcast.lane.b32.xlu0 %v842, %s855
      %v857 = vpop.permute.xlu0 %856
      %s859 = sor.u32 256, 32
      %860 = vbcast.lane.b32.xlu0 %v842, %s859
      %v861 = vpop.permute.xlu0 %860
      %s863 = sor.u32 256, 40
      %864 = vbcast.lane.b32.xlu0 %v842, %s863
      %v865 = vpop.permute.xlu0 %864
      %s867 = sor.u32 256, 48
      %868 = vbcast.lane.b32.xlu0 %v842, %s867
      %v869 = vpop.permute.xlu0 %868
      %s871 = sor.u32 256, 56
      %872 = vbcast.lane.b32.xlu0 %v842, %s871
      %v873 = vpop.permute.xlu0 %872
      %v874 = vlaneseq
      %v875 = vshrl.u32 %v874, 7
      %v876 = vsub.s32 6, %v875
      %v877 = vrot.slane %v622, %v876
      %879 = vbcast.lane.b32.xlu0 %v877, 256
      %v880 = vpop.permute.xlu0 %879
      %s882 = sor.u32 256, 8
      %883 = vbcast.lane.b32.xlu0 %v877, %s882
      %v884 = vpop.permute.xlu0 %883
      %s886 = sor.u32 256, 16
      %887 = vbcast.lane.b32.xlu0 %v877, %s886
      %v888 = vpop.permute.xlu0 %887
      %s890 = sor.u32 256, 24
      %891 = vbcast.lane.b32.xlu0 %v877, %s890
      %v892 = vpop.permute.xlu0 %891
      %s894 = sor.u32 256, 32
      %895 = vbcast.lane.b32.xlu0 %v877, %s894
      %v896 = vpop.permute.xlu0 %895
      %s898 = sor.u32 256, 40
      %899 = vbcast.lane.b32.xlu0 %v877, %s898
      %v900 = vpop.permute.xlu0 %899
      %s902 = sor.u32 256, 48
      %903 = vbcast.lane.b32.xlu0 %v877, %s902
      %v904 = vpop.permute.xlu0 %903
      %s906 = sor.u32 256, 56
      %907 = vbcast.lane.b32.xlu0 %v877, %s906
      %v908 = vpop.permute.xlu0 %907
      %v909 = vlaneseq
      %v910 = vshrl.u32 %v909, 7
      %v911 = vsub.s32 7, %v910
      %v912 = vrot.slane %v622, %v911
      %914 = vbcast.lane.b32.xlu0 %v912, 256
      %v915 = vpop.permute.xlu0 %914
      %s917 = sor.u32 256, 8
      %918 = vbcast.lane.b32.xlu0 %v912, %s917
      %v919 = vpop.permute.xlu0 %918
      %s921 = sor.u32 256, 16
      %922 = vbcast.lane.b32.xlu0 %v912, %s921
      %v923 = vpop.permute.xlu0 %922
      %s925 = sor.u32 256, 24
      %926 = vbcast.lane.b32.xlu0 %v912, %s925
      %v927 = vpop.permute.xlu0 %926
      %s929 = sor.u32 256, 32
      %930 = vbcast.lane.b32.xlu0 %v912, %s929
      %v931 = vpop.permute.xlu0 %930
      %s933 = sor.u32 256, 40
      %934 = vbcast.lane.b32.xlu0 %v912, %s933
      %v935 = vpop.permute.xlu0 %934
      %s937 = sor.u32 256, 48
      %938 = vbcast.lane.b32.xlu0 %v912, %s937
      %v939 = vpop.permute.xlu0 %938
      %s941 = sor.u32 256, 56
      %942 = vbcast.lane.b32.xlu0 %v912, %s941
      %v943 = vpop.permute.xlu0 %942
      %v944 = vlaneseq
      %v945 = vshrl.u32 %v944, 7
      %v946 = vsub.s32 0, %v945
      %v947 = vrot.slane %v623, %v946
      %949 = vbcast.lane.b32.xlu0 %v947, 256
      %v950 = vpop.permute.xlu0 %949
      %s952 = sor.u32 256, 8
      %953 = vbcast.lane.b32.xlu0 %v947, %s952
      %v954 = vpop.permute.xlu0 %953
      %s956 = sor.u32 256, 16
      %957 = vbcast.lane.b32.xlu0 %v947, %s956
      %v958 = vpop.permute.xlu0 %957
      %s960 = sor.u32 256, 24
      %961 = vbcast.lane.b32.xlu0 %v947, %s960
      %v962 = vpop.permute.xlu0 %961
      %s964 = sor.u32 256, 32
      %965 = vbcast.lane.b32.xlu0 %v947, %s964
      %v966 = vpop.permute.xlu0 %965
      %s968 = sor.u32 256, 40
      %969 = vbcast.lane.b32.xlu0 %v947, %s968
      %v970 = vpop.permute.xlu0 %969
      %s972 = sor.u32 256, 48
      %973 = vbcast.lane.b32.xlu0 %v947, %s972
      %v974 = vpop.permute.xlu0 %973
      %s976 = sor.u32 256, 56
      %977 = vbcast.lane.b32.xlu0 %v947, %s976
      %v978 = vpop.permute.xlu0 %977
      %v979 = vlaneseq
      %v980 = vshrl.u32 %v979, 7
      %v981 = vsub.s32 1, %v980
      %v982 = vrot.slane %v623, %v981
      %984 = vbcast.lane.b32.xlu0 %v982, 256
      %v985 = vpop.permute.xlu0 %984
      %s987 = sor.u32 256, 8
      %988 = vbcast.lane.b32.xlu0 %v982, %s987
      %v989 = vpop.permute.xlu0 %988
      %s991 = sor.u32 256, 16
      %992 = vbcast.lane.b32.xlu0 %v982, %s991
      %v993 = vpop.permute.xlu0 %992
      %s995 = sor.u32 256, 24
      %996 = vbcast.lane.b32.xlu0 %v982, %s995
      %v997 = vpop.permute.xlu0 %996
      %s999 = sor.u32 256, 32
      %1000 = vbcast.lane.b32.xlu0 %v982, %s999
      %v1001 = vpop.permute.xlu0 %1000
      %s1003 = sor.u32 256, 40
      %1004 = vbcast.lane.b32.xlu0 %v982, %s1003
      %v1005 = vpop.permute.xlu0 %1004
      %s1007 = sor.u32 256, 48
      %1008 = vbcast.lane.b32.xlu0 %v982, %s1007
      %v1009 = vpop.permute.xlu0 %1008
      %s1011 = sor.u32 256, 56
      %1012 = vbcast.lane.b32.xlu0 %v982, %s1011
      %v1013 = vpop.permute.xlu0 %1012
      %v1014 = vlaneseq
      %v1015 = vshrl.u32 %v1014, 7
      %v1016 = vsub.s32 2, %v1015
      %v1017 = vrot.slane %v623, %v1016
      %1019 = vbcast.lane.b32.xlu0 %v1017, 256
      %v1020 = vpop.permute.xlu0 %1019
      %s1022 = sor.u32 256, 8
      %1023 = vbcast.lane.b32.xlu0 %v1017, %s1022
      %v1024 = vpop.permute.xlu0 %1023
      %s1026 = sor.u32 256, 16
      %1027 = vbcast.lane.b32.xlu0 %v1017, %s1026
      %v1028 = vpop.permute.xlu0 %1027
      %s1030 = sor.u32 256, 24
      %1031 = vbcast.lane.b32.xlu0 %v1017, %s1030
      %v1032 = vpop.permute.xlu0 %1031
      %s1034 = sor.u32 256, 32
      %1035 = vbcast.lane.b32.xlu0 %v1017, %s1034
      %v1036 = vpop.permute.xlu0 %1035
      %s1038 = sor.u32 256, 40
      %1039 = vbcast.lane.b32.xlu0 %v1017, %s1038
      %v1040 = vpop.permute.xlu0 %1039
      %s1042 = sor.u32 256, 48
      %1043 = vbcast.lane.b32.xlu0 %v1017, %s1042
      %v1044 = vpop.permute.xlu0 %1043
      %s1046 = sor.u32 256, 56
      %1047 = vbcast.lane.b32.xlu0 %v1017, %s1046
      %v1048 = vpop.permute.xlu0 %1047
      %v1049 = vlaneseq
      %v1050 = vshrl.u32 %v1049, 7
      %v1051 = vsub.s32 3, %v1050
      %v1052 = vrot.slane %v623, %v1051
      %1054 = vbcast.lane.b32.xlu0 %v1052, 256
      %v1055 = vpop.permute.xlu0 %1054
      %s1057 = sor.u32 256, 8
      %1058 = vbcast.lane.b32.xlu0 %v1052, %s1057
      %v1059 = vpop.permute.xlu0 %1058
      %s1061 = sor.u32 256, 16
      %1062 = vbcast.lane.b32.xlu0 %v1052, %s1061
      %v1063 = vpop.permute.xlu0 %1062
      %s1065 = sor.u32 256, 24
      %1066 = vbcast.lane.b32.xlu0 %v1052, %s1065
      %v1067 = vpop.permute.xlu0 %1066
      %s1069 = sor.u32 256, 32
      %1070 = vbcast.lane.b32.xlu0 %v1052, %s1069
      %v1071 = vpop.permute.xlu0 %1070
      %s1073 = sor.u32 256, 40
      %1074 = vbcast.lane.b32.xlu0 %v1052, %s1073
      %v1075 = vpop.permute.xlu0 %1074
      %s1077 = sor.u32 256, 48
      %1078 = vbcast.lane.b32.xlu0 %v1052, %s1077
      %v1079 = vpop.permute.xlu0 %1078
      %s1081 = sor.u32 256, 56
      %1082 = vbcast.lane.b32.xlu0 %v1052, %s1081
      %v1083 = vpop.permute.xlu0 %1082
      %v1084 = vlaneseq
      %v1085 = vshrl.u32 %v1084, 7
      %v1086 = vsub.s32 4, %v1085
      %v1087 = vrot.slane %v623, %v1086
      %1089 = vbcast.lane.b32.xlu0 %v1087, 256
      %v1090 = vpop.permute.xlu0 %1089
      %s1092 = sor.u32 256, 8
      %1093 = vbcast.lane.b32.xlu0 %v1087, %s1092
      %v1094 = vpop.permute.xlu0 %1093
      %s1096 = sor.u32 256, 16
      %1097 = vbcast.lane.b32.xlu0 %v1087, %s1096
      %v1098 = vpop.permute.xlu0 %1097
      %s1100 = sor.u32 256, 24
      %1101 = vbcast.lane.b32.xlu0 %v1087, %s1100
      %v1102 = vpop.permute.xlu0 %1101
      %s1104 = sor.u32 256, 32
      %1105 = vbcast.lane.b32.xlu0 %v1087, %s1104
      %v1106 = vpop.permute.xlu0 %1105
      %s1108 = sor.u32 256, 40
      %1109 = vbcast.lane.b32.xlu0 %v1087, %s1108
      %v1110 = vpop.permute.xlu0 %1109
      %s1112 = sor.u32 256, 48
      %1113 = vbcast.lane.b32.xlu0 %v1087, %s1112
      %v1114 = vpop.permute.xlu0 %1113
      %s1116 = sor.u32 256, 56
      %1117 = vbcast.lane.b32.xlu0 %v1087, %s1116
      %v1118 = vpop.permute.xlu0 %1117
      %v1119 = vlaneseq
      %v1120 = vshrl.u32 %v1119, 7
      %v1121 = vsub.s32 5, %v1120
      %v1122 = vrot.slane %v623, %v1121
      %1124 = vbcast.lane.b32.xlu0 %v1122, 256
      %v1125 = vpop.permute.xlu0 %1124
      %s1127 = sor.u32 256, 8
      %1128 = vbcast.lane.b32.xlu0 %v1122, %s1127
      %v1129 = vpop.permute.xlu0 %1128
      %s1131 = sor.u32 256, 16
      %1132 = vbcast.lane.b32.xlu0 %v1122, %s1131
      %v1133 = vpop.permute.xlu0 %1132
      %s1135 = sor.u32 256, 24
      %1136 = vbcast.lane.b32.xlu0 %v1122, %s1135
      %v1137 = vpop.permute.xlu0 %1136
      %s1139 = sor.u32 256, 32
      %1140 = vbcast.lane.b32.xlu0 %v1122, %s1139
      %v1141 = vpop.permute.xlu0 %1140
      %s1143 = sor.u32 256, 40
      %1144 = vbcast.lane.b32.xlu0 %v1122, %s1143
      %v1145 = vpop.permute.xlu0 %1144
      %s1147 = sor.u32 256, 48
      %1148 = vbcast.lane.b32.xlu0 %v1122, %s1147
      %v1149 = vpop.permute.xlu0 %1148
      %s1151 = sor.u32 256, 56
      %1152 = vbcast.lane.b32.xlu0 %v1122, %s1151
      %v1153 = vpop.permute.xlu0 %1152
      %v1154 = vlaneseq
      %v1155 = vshrl.u32 %v1154, 7
      %v1156 = vsub.s32 6, %v1155
      %v1157 = vrot.slane %v623, %v1156
      %1159 = vbcast.lane.b32.xlu0 %v1157, 256
      %v1160 = vpop.permute.xlu0 %1159
      %s1162 = sor.u32 256, 8
      %1163 = vbcast.lane.b32.xlu0 %v1157, %s1162
      %v1164 = vpop.permute.xlu0 %1163
      %s1166 = sor.u32 256, 16
      %1167 = vbcast.lane.b32.xlu0 %v1157, %s1166
      %v1168 = vpop.permute.xlu0 %1167
      %s1170 = sor.u32 256, 24
      %1171 = vbcast.lane.b32.xlu0 %v1157, %s1170
      %v1172 = vpop.permute.xlu0 %1171
      %s1174 = sor.u32 256, 32
      %1175 = vbcast.lane.b32.xlu0 %v1157, %s1174
      %v1176 = vpop.permute.xlu0 %1175
      %s1178 = sor.u32 256, 40
      %1179 = vbcast.lane.b32.xlu0 %v1157, %s1178
      %v1180 = vpop.permute.xlu0 %1179
      %s1182 = sor.u32 256, 48
      %1183 = vbcast.lane.b32.xlu0 %v1157, %s1182
      %v1184 = vpop.permute.xlu0 %1183
      %s1186 = sor.u32 256, 56
      %1187 = vbcast.lane.b32.xlu0 %v1157, %s1186
      %v1188 = vpop.permute.xlu0 %1187
      %v1189 = vlaneseq
      %v1190 = vshrl.u32 %v1189, 7
      %v1191 = vsub.s32 7, %v1190
      %v1192 = vrot.slane %v623, %v1191
      %1194 = vbcast.lane.b32.xlu0 %v1192, 256
      %v1195 = vpop.permute.xlu0 %1194
      %s1197 = sor.u32 256, 8
      %1198 = vbcast.lane.b32.xlu0 %v1192, %s1197
      %v1199 = vpop.permute.xlu0 %1198
      %s1201 = sor.u32 256, 16
      %1202 = vbcast.lane.b32.xlu0 %v1192, %s1201
      %v1203 = vpop.permute.xlu0 %1202
      %s1205 = sor.u32 256, 24
      %1206 = vbcast.lane.b32.xlu0 %v1192, %s1205
      %v1207 = vpop.permute.xlu0 %1206
      %s1209 = sor.u32 256, 32
      %1210 = vbcast.lane.b32.xlu0 %v1192, %s1209
      %v1211 = vpop.permute.xlu0 %1210
      %s1213 = sor.u32 256, 40
      %1214 = vbcast.lane.b32.xlu0 %v1192, %s1213
      %v1215 = vpop.permute.xlu0 %1214
      %s1217 = sor.u32 256, 48
      %1218 = vbcast.lane.b32.xlu0 %v1192, %s1217
      %v1219 = vpop.permute.xlu0 %1218
      %s1221 = sor.u32 256, 56
      %1222 = vbcast.lane.b32.xlu0 %v1192, %s1221
      %v1223 = vpop.permute.xlu0 %1222
      %v1224 = vadd.f32 %v670, %v648
      %v1225 = vadd.f32 %v674, %v649
      %v1226 = vadd.f32 %v678, %v650
      %v1227 = vadd.f32 %v682, %v651
      %v1228 = vadd.f32 %v686, %v652
      %v1229 = vadd.f32 %v690, %v653
      %v1230 = vadd.f32 %v694, %v654
      %v1231 = vadd.f32 %v698, %v655
      %v1232 = vadd.f32 %v705, %v648
      %v1233 = vadd.f32 %v709, %v649
      %v1234 = vadd.f32 %v713, %v650
      %v1235 = vadd.f32 %v717, %v651
      %v1236 = vadd.f32 %v721, %v652
      %v1237 = vadd.f32 %v725, %v653
      %v1238 = vadd.f32 %v729, %v654
      %v1239 = vadd.f32 %v733, %v655
      %v1240 = vadd.f32 %v740, %v648
      %v1241 = vadd.f32 %v744, %v649
      %v1242 = vadd.f32 %v748, %v650
      %v1243 = vadd.f32 %v752, %v651
      %v1244 = vadd.f32 %v756, %v652
      %v1245 = vadd.f32 %v760, %v653
      %v1246 = vadd.f32 %v764, %v654
      %v1247 = vadd.f32 %v768, %v655
      %v1248 = vadd.f32 %v775, %v648
      %v1249 = vadd.f32 %v779, %v649
      %v1250 = vadd.f32 %v783, %v650
      %v1251 = vadd.f32 %v787, %v651
      %v1252 = vadd.f32 %v791, %v652
      %v1253 = vadd.f32 %v795, %v653
      %v1254 = vadd.f32 %v799, %v654
      %v1255 = vadd.f32 %v803, %v655
      %v1256 = vadd.f32 %v810, %v648
      %v1257 = vadd.f32 %v814, %v649
      %v1258 = vadd.f32 %v818, %v650
      %v1259 = vadd.f32 %v822, %v651
      %v1260 = vadd.f32 %v826, %v652
      %v1261 = vadd.f32 %v830, %v653
      %v1262 = vadd.f32 %v834, %v654
      %v1263 = vadd.f32 %v838, %v655
      %v1264 = vadd.f32 %v845, %v648
      %v1265 = vadd.f32 %v849, %v649
      %v1266 = vadd.f32 %v853, %v650
      %v1267 = vadd.f32 %v857, %v651
      %v1268 = vadd.f32 %v861, %v652
      %v1269 = vadd.f32 %v865, %v653
      %v1270 = vadd.f32 %v869, %v654
      %v1271 = vadd.f32 %v873, %v655
      %v1272 = vadd.f32 %v880, %v648
      %v1273 = vadd.f32 %v884, %v649
      %v1274 = vadd.f32 %v888, %v650
      %v1275 = vadd.f32 %v892, %v651
      %v1276 = vadd.f32 %v896, %v652
      %v1277 = vadd.f32 %v900, %v653
      %v1278 = vadd.f32 %v904, %v654
      %v1279 = vadd.f32 %v908, %v655
      %v1280 = vadd.f32 %v915, %v648
      %v1281 = vadd.f32 %v919, %v649
      %v1282 = vadd.f32 %v923, %v650
      %v1283 = vadd.f32 %v927, %v651
      %v1284 = vadd.f32 %v931, %v652
      %v1285 = vadd.f32 %v935, %v653
      %v1286 = vadd.f32 %v939, %v654
      %v1287 = vadd.f32 %v943, %v655
      %v1288 = vadd.f32 %v950, %v648
      %v1289 = vadd.f32 %v954, %v649
      %v1290 = vadd.f32 %v958, %v650
      %v1291 = vadd.f32 %v962, %v651
      %v1292 = vadd.f32 %v966, %v652
      %v1293 = vadd.f32 %v970, %v653
      %v1294 = vadd.f32 %v974, %v654
      %v1295 = vadd.f32 %v978, %v655
      %v1296 = vadd.f32 %v985, %v648
      %v1297 = vadd.f32 %v989, %v649
      %v1298 = vadd.f32 %v993, %v650
      %v1299 = vadd.f32 %v997, %v651
      %v1300 = vadd.f32 %v1001, %v652
      %v1301 = vadd.f32 %v1005, %v653
      %v1302 = vadd.f32 %v1009, %v654
      %v1303 = vadd.f32 %v1013, %v655
      %v1304 = vadd.f32 %v1020, %v648
      %v1305 = vadd.f32 %v1024, %v649
      %v1306 = vadd.f32 %v1028, %v650
      %v1307 = vadd.f32 %v1032, %v651
      %v1308 = vadd.f32 %v1036, %v652
      %v1309 = vadd.f32 %v1040, %v653
      %v1310 = vadd.f32 %v1044, %v654
      %v1311 = vadd.f32 %v1048, %v655
      %v1312 = vadd.f32 %v1055, %v648
      %v1313 = vadd.f32 %v1059, %v649
      %v1314 = vadd.f32 %v1063, %v650
      %v1315 = vadd.f32 %v1067, %v651
      %v1316 = vadd.f32 %v1071, %v652
      %v1317 = vadd.f32 %v1075, %v653
      %v1318 = vadd.f32 %v1079, %v654
      %v1319 = vadd.f32 %v1083, %v655
      %v1320 = vadd.f32 %v1090, %v648
      %v1321 = vadd.f32 %v1094, %v649
      %v1322 = vadd.f32 %v1098, %v650
      %v1323 = vadd.f32 %v1102, %v651
      %v1324 = vadd.f32 %v1106, %v652
      %v1325 = vadd.f32 %v1110, %v653
      %v1326 = vadd.f32 %v1114, %v654
      %v1327 = vadd.f32 %v1118, %v655
      %v1328 = vadd.f32 %v1125, %v648
      %v1329 = vadd.f32 %v1129, %v649
      %v1330 = vadd.f32 %v1133, %v650
      %v1331 = vadd.f32 %v1137, %v651
      %v1332 = vadd.f32 %v1141, %v652
      %v1333 = vadd.f32 %v1145, %v653
      %v1334 = vadd.f32 %v1149, %v654
      %v1335 = vadd.f32 %v1153, %v655
      %v1336 = vadd.f32 %v1160, %v648
      %v1337 = vadd.f32 %v1164, %v649
      %v1338 = vadd.f32 %v1168, %v650
      %v1339 = vadd.f32 %v1172, %v651
      %v1340 = vadd.f32 %v1176, %v652
      %v1341 = vadd.f32 %v1180, %v653
      %v1342 = vadd.f32 %v1184, %v654
      %v1343 = vadd.f32 %v1188, %v655
      %v1344 = vadd.f32 %v1195, %v648
      %v1345 = vadd.f32 %v1199, %v649
      %v1346 = vadd.f32 %v1203, %v650
      %v1347 = vadd.f32 %v1207, %v651
      %v1348 = vadd.f32 %v1211, %v652
      %v1349 = vadd.f32 %v1215, %v653
      %v1350 = vadd.f32 %v1219, %v654
      %v1351 = vadd.f32 %v1223, %v655
      %v1352 = vcombine.low %v1224, %v1240
      %v1353 = vcombine.high %v1224, %v1240
      %v1355 = vunpack.c.l.s4 1983009808
      %v1356 = vunpack.c.0.s8 %v1355
      %v1357 = vlaneseq
      %v1358 = vshrl.u32 %v1357, 7
      %v1359 = vsub.s32 %v1356, %v1358
      %v1360 = vrot.slane %v1352, %v1359
      %v1362 = vunpack.c.l.s4 1983009808
      %v1363 = vunpack.c.0.s8 %v1362
      %v1364 = vlaneseq
      %v1365 = vshrl.u32 %v1364, 7
      %v1366 = vsub.s32 %v1363, %v1365
      %v1367 = vrot.slane %v1353, %v1366
      %v1368 = vcombine.low %v1232, %v1248
      %v1369 = vcombine.high %v1232, %v1248
      %v1371 = vunpack.c.l.s4 1983009808
      %v1372 = vunpack.c.0.s8 %v1371
      %v1373 = vlaneseq
      %v1374 = vshrl.u32 %v1373, 7
      %v1375 = vsub.s32 %v1372, %v1374
      %v1376 = vrot.slane %v1368, %v1375
      %v1378 = vunpack.c.l.s4 1983009808
      %v1379 = vunpack.c.0.s8 %v1378
      %v1380 = vlaneseq
      %v1381 = vshrl.u32 %v1380, 7
      %v1382 = vsub.s32 %v1379, %v1381
      %v1383 = vrot.slane %v1369, %v1382
      %v1384 = vcombine.low %v1256, %v1272
      %v1385 = vcombine.high %v1256, %v1272
      %v1387 = vunpack.c.l.s4 1983009808
      %v1388 = vunpack.c.0.s8 %v1387
      %v1389 = vlaneseq
      %v1390 = vshrl.u32 %v1389, 7
      %v1391 = vsub.s32 %v1388, %v1390
      %v1392 = vrot.slane %v1384, %v1391
      %v1394 = vunpack.c.l.s4 1983009808
      %v1395 = vunpack.c.0.s8 %v1394
      %v1396 = vlaneseq
      %v1397 = vshrl.u32 %v1396, 7
      %v1398 = vsub.s32 %v1395, %v1397
      %v1399 = vrot.slane %v1385, %v1398
      %v1400 = vcombine.low %v1264, %v1280
      %v1401 = vcombine.high %v1264, %v1280
      %v1403 = vunpack.c.l.s4 1983009808
      %v1404 = vunpack.c.0.s8 %v1403
      %v1405 = vlaneseq
      %v1406 = vshrl.u32 %v1405, 7
      %v1407 = vsub.s32 %v1404, %v1406
      %v1408 = vrot.slane %v1400, %v1407
      %v1410 = vunpack.c.l.s4 1983009808
      %v1411 = vunpack.c.0.s8 %v1410
      %v1412 = vlaneseq
      %v1413 = vshrl.u32 %v1412, 7
      %v1414 = vsub.s32 %v1411, %v1413
      %v1415 = vrot.slane %v1401, %v1414
      %v1416 = vcombine.low %v1360, %v1376
      %v1417 = vcombine.high %v1360, %v1376
      %v1419 = vunpack.c.l.s4 1934713408
      %v1420 = vunpack.c.0.s8 %v1419
      %v1421 = vlaneseq
      %v1422 = vshrl.u32 %v1421, 7
      %v1423 = vsub.s32 %v1420, %v1422
      %v1424 = vrot.slane %v1416, %v1423
      %v1426 = vunpack.c.l.s4 1934713408
      %v1427 = vunpack.c.0.s8 %v1426
      %v1428 = vlaneseq
      %v1429 = vshrl.u32 %v1428, 7
      %v1430 = vsub.s32 %v1427, %v1429
      %v1431 = vrot.slane %v1417, %v1430
      %v1432 = vcombine.low %v1367, %v1383
      %v1433 = vcombine.high %v1367, %v1383
      %v1435 = vunpack.c.l.s4 1934713408
      %v1436 = vunpack.c.0.s8 %v1435
      %v1437 = vlaneseq
      %v1438 = vshrl.u32 %v1437, 7
      %v1439 = vsub.s32 %v1436, %v1438
      %v1440 = vrot.slane %v1432, %v1439
      %v1442 = vunpack.c.l.s4 1934713408
      %v1443 = vunpack.c.0.s8 %v1442
      %v1444 = vlaneseq
      %v1445 = vshrl.u32 %v1444, 7
      %v1446 = vsub.s32 %v1443, %v1445
      %v1447 = vrot.slane %v1433, %v1446
      %v1448 = vcombine.low %v1392, %v1408
      %v1449 = vcombine.high %v1392, %v1408
      %v1451 = vunpack.c.l.s4 1934713408
      %v1452 = vunpack.c.0.s8 %v1451
      %v1453 = vlaneseq
      %v1454 = vshrl.u32 %v1453, 7
      %v1455 = vsub.s32 %v1452, %v1454
      %v1456 = vrot.slane %v1448, %v1455
      %v1458 = vunpack.c.l.s4 1934713408
      %v1459 = vunpack.c.0.s8 %v1458
      %v1460 = vlaneseq
      %v1461 = vshrl.u32 %v1460, 7
      %v1462 = vsub.s32 %v1459, %v1461
      %v1463 = vrot.slane %v1449, %v1462
      %v1464 = vcombine.low %v1399, %v1415
      %v1465 = vcombine.high %v1399, %v1415
      %v1467 = vunpack.c.l.s4 1934713408
      %v1468 = vunpack.c.0.s8 %v1467
      %v1469 = vlaneseq
      %v1470 = vshrl.u32 %v1469, 7
      %v1471 = vsub.s32 %v1468, %v1470
      %v1472 = vrot.slane %v1464, %v1471
      %v1474 = vunpack.c.l.s4 1934713408
      %v1475 = vunpack.c.0.s8 %v1474
      %v1476 = vlaneseq
      %v1477 = vshrl.u32 %v1476, 7
      %v1478 = vsub.s32 %v1475, %v1477
      %v1479 = vrot.slane %v1465, %v1478
      %v1480 = vcombine.low %v1424, %v1456
      %v1481 = vcombine.high %v1424, %v1456
      %v1482 = vcombine.low %v1431, %v1463
      %v1483 = vcombine.high %v1431, %v1463
      %v1484 = vcombine.low %v1440, %v1472
      %v1485 = vcombine.high %v1440, %v1472
      %v1486 = vcombine.low %v1447, %v1479
      %v1487 = vcombine.high %v1447, %v1479
      %v1488 = vcombine.low %v1288, %v1304
      %v1489 = vcombine.high %v1288, %v1304
      %v1491 = vunpack.c.l.s4 1983009808
      %v1492 = vunpack.c.0.s8 %v1491
      %v1493 = vlaneseq
      %v1494 = vshrl.u32 %v1493, 7
      %v1495 = vsub.s32 %v1492, %v1494
      %v1496 = vrot.slane %v1488, %v1495
      %v1498 = vunpack.c.l.s4 1983009808
      %v1499 = vunpack.c.0.s8 %v1498
      %v1500 = vlaneseq
      %v1501 = vshrl.u32 %v1500, 7
      %v1502 = vsub.s32 %v1499, %v1501
      %v1503 = vrot.slane %v1489, %v1502
      %v1504 = vcombine.low %v1296, %v1312
      %v1505 = vcombine.high %v1296, %v1312
      %v1507 = vunpack.c.l.s4 1983009808
      %v1508 = vunpack.c.0.s8 %v1507
      %v1509 = vlaneseq
      %v1510 = vshrl.u32 %v1509, 7
      %v1511 = vsub.s32 %v1508, %v1510
      %v1512 = vrot.slane %v1504, %v1511
      %v1514 = vunpack.c.l.s4 1983009808
      %v1515 = vunpack.c.0.s8 %v1514
      %v1516 = vlaneseq
      %v1517 = vshrl.u32 %v1516, 7
      %v1518 = vsub.s32 %v1515, %v1517
      %v1519 = vrot.slane %v1505, %v1518
      %v1520 = vcombine.low %v1320, %v1336
      %v1521 = vcombine.high %v1320, %v1336
      %v1523 = vunpack.c.l.s4 1983009808
      %v1524 = vunpack.c.0.s8 %v1523
      %v1525 = vlaneseq
      %v1526 = vshrl.u32 %v1525, 7
      %v1527 = vsub.s32 %v1524, %v1526
      %v1528 = vrot.slane %v1520, %v1527
      %v1530 = vunpack.c.l.s4 1983009808
      %v1531 = vunpack.c.0.s8 %v1530
      %v1532 = vlaneseq
      %v1533 = vshrl.u32 %v1532, 7
      %v1534 = vsub.s32 %v1531, %v1533
      %v1535 = vrot.slane %v1521, %v1534
      %v1536 = vcombine.low %v1328, %v1344
      %v1537 = vcombine.high %v1328, %v1344
      %v1539 = vunpack.c.l.s4 1983009808
      %v1540 = vunpack.c.0.s8 %v1539
      %v1541 = vlaneseq
      %v1542 = vshrl.u32 %v1541, 7
      %v1543 = vsub.s32 %v1540, %v1542
      %v1544 = vrot.slane %v1536, %v1543
      %v1546 = vunpack.c.l.s4 1983009808
      %v1547 = vunpack.c.0.s8 %v1546
      %v1548 = vlaneseq
      %v1549 = vshrl.u32 %v1548, 7
      %v1550 = vsub.s32 %v1547, %v1549
      %v1551 = vrot.slane %v1537, %v1550
      %v1552 = vcombine.low %v1496, %v1512
      %v1553 = vcombine.high %v1496, %v1512
      %v1555 = vunpack.c.l.s4 1934713408
      %v1556 = vunpack.c.0.s8 %v1555
      %v1557 = vlaneseq
      %v1558 = vshrl.u32 %v1557, 7
      %v1559 = vsub.s32 %v1556, %v1558
      %v1560 = vrot.slane %v1552, %v1559
      %v1562 = vunpack.c.l.s4 1934713408
      %v1563 = vunpack.c.0.s8 %v1562
      %v1564 = vlaneseq
      %v1565 = vshrl.u32 %v1564, 7
      %v1566 = vsub.s32 %v1563, %v1565
      %v1567 = vrot.slane %v1553, %v1566
      %v1568 = vcombine.low %v1503, %v1519
      %v1569 = vcombine.high %v1503, %v1519
      %v1571 = vunpack.c.l.s4 1934713408
      %v1572 = vunpack.c.0.s8 %v1571
      %v1573 = vlaneseq
      %v1574 = vshrl.u32 %v1573, 7
      %v1575 = vsub.s32 %v1572, %v1574
      %v1576 = vrot.slane %v1568, %v1575
      %v1578 = vunpack.c.l.s4 1934713408
      %v1579 = vunpack.c.0.s8 %v1578
      %v1580 = vlaneseq
      %v1581 = vshrl.u32 %v1580, 7
      %v1582 = vsub.s32 %v1579, %v1581
      %v1583 = vrot.slane %v1569, %v1582
      %v1584 = vcombine.low %v1528, %v1544
      %v1585 = vcombine.high %v1528, %v1544
      %v1587 = vunpack.c.l.s4 1934713408
      %v1588 = vunpack.c.0.s8 %v1587
      %v1589 = vlaneseq
      %v1590 = vshrl.u32 %v1589, 7
      %v1591 = vsub.s32 %v1588, %v1590
      %v1592 = vrot.slane %v1584, %v1591
      %v1594 = vunpack.c.l.s4 1934713408
      %v1595 = vunpack.c.0.s8 %v1594
      %v1596 = vlaneseq
      %v1597 = vshrl.u32 %v1596, 7
      %v1598 = vsub.s32 %v1595, %v1597
      %v1599 = vrot.slane %v1585, %v1598
      %v1600 = vcombine.low %v1535, %v1551
      %v1601 = vcombine.high %v1535, %v1551
      %v1603 = vunpack.c.l.s4 1934713408
      %v1604 = vunpack.c.0.s8 %v1603
      %v1605 = vlaneseq
      %v1606 = vshrl.u32 %v1605, 7
      %v1607 = vsub.s32 %v1604, %v1606
      %v1608 = vrot.slane %v1600, %v1607
      %v1610 = vunpack.c.l.s4 1934713408
      %v1611 = vunpack.c.0.s8 %v1610
      %v1612 = vlaneseq
      %v1613 = vshrl.u32 %v1612, 7
      %v1614 = vsub.s32 %v1611, %v1613
      %v1615 = vrot.slane %v1601, %v1614
      %v1616 = vcombine.low %v1560, %v1592
      %v1617 = vcombine.high %v1560, %v1592
      %v1618 = vcombine.low %v1567, %v1599
      %v1619 = vcombine.high %v1567, %v1599
      %v1620 = vcombine.low %v1576, %v1608
      %v1621 = vcombine.high %v1576, %v1608
      %v1622 = vcombine.low %v1583, %v1615
      %v1623 = vcombine.high %v1583, %v1615
      %v1624 = vcombine.low %v1225, %v1241
      %v1625 = vcombine.high %v1225, %v1241
      %v1627 = vunpack.c.l.s4 1983009808
      %v1628 = vunpack.c.0.s8 %v1627
      %v1629 = vlaneseq
      %v1630 = vshrl.u32 %v1629, 7
      %v1631 = vsub.s32 %v1628, %v1630
      %v1632 = vrot.slane %v1624, %v1631
      %v1634 = vunpack.c.l.s4 1983009808
      %v1635 = vunpack.c.0.s8 %v1634
      %v1636 = vlaneseq
      %v1637 = vshrl.u32 %v1636, 7
      %v1638 = vsub.s32 %v1635, %v1637
      %v1639 = vrot.slane %v1625, %v1638
      %v1640 = vcombine.low %v1233, %v1249
      %v1641 = vcombine.high %v1233, %v1249
      %v1643 = vunpack.c.l.s4 1983009808
      %v1644 = vunpack.c.0.s8 %v1643
      %v1645 = vlaneseq
      %v1646 = vshrl.u32 %v1645, 7
      %v1647 = vsub.s32 %v1644, %v1646
      %v1648 = vrot.slane %v1640, %v1647
      %v1650 = vunpack.c.l.s4 1983009808
      %v1651 = vunpack.c.0.s8 %v1650
      %v1652 = vlaneseq
      %v1653 = vshrl.u32 %v1652, 7
      %v1654 = vsub.s32 %v1651, %v1653
      %v1655 = vrot.slane %v1641, %v1654
      %v1656 = vcombine.low %v1257, %v1273
      %v1657 = vcombine.high %v1257, %v1273
      %v1659 = vunpack.c.l.s4 1983009808
      %v1660 = vunpack.c.0.s8 %v1659
      %v1661 = vlaneseq
      %v1662 = vshrl.u32 %v1661, 7
      %v1663 = vsub.s32 %v1660, %v1662
      %v1664 = vrot.slane %v1656, %v1663
      %v1666 = vunpack.c.l.s4 1983009808
      %v1667 = vunpack.c.0.s8 %v1666
      %v1668 = vlaneseq
      %v1669 = vshrl.u32 %v1668, 7
      %v1670 = vsub.s32 %v1667, %v1669
      %v1671 = vrot.slane %v1657, %v1670
      %v1672 = vcombine.low %v1265, %v1281
      %v1673 = vcombine.high %v1265, %v1281
      %v1675 = vunpack.c.l.s4 1983009808
      %v1676 = vunpack.c.0.s8 %v1675
      %v1677 = vlaneseq
      %v1678 = vshrl.u32 %v1677, 7
      %v1679 = vsub.s32 %v1676, %v1678
      %v1680 = vrot.slane %v1672, %v1679
      %v1682 = vunpack.c.l.s4 1983009808
      %v1683 = vunpack.c.0.s8 %v1682
      %v1684 = vlaneseq
      %v1685 = vshrl.u32 %v1684, 7
      %v1686 = vsub.s32 %v1683, %v1685
      %v1687 = vrot.slane %v1673, %v1686
      %v1688 = vcombine.low %v1632, %v1648
      %v1689 = vcombine.high %v1632, %v1648
      %v1691 = vunpack.c.l.s4 1934713408
      %v1692 = vunpack.c.0.s8 %v1691
      %v1693 = vlaneseq
      %v1694 = vshrl.u32 %v1693, 7
      %v1695 = vsub.s32 %v1692, %v1694
      %v1696 = vrot.slane %v1688, %v1695
      %v1698 = vunpack.c.l.s4 1934713408
      %v1699 = vunpack.c.0.s8 %v1698
      %v1700 = vlaneseq
      %v1701 = vshrl.u32 %v1700, 7
      %v1702 = vsub.s32 %v1699, %v1701
      %v1703 = vrot.slane %v1689, %v1702
      %v1704 = vcombine.low %v1639, %v1655
      %v1705 = vcombine.high %v1639, %v1655
      %v1707 = vunpack.c.l.s4 1934713408
      %v1708 = vunpack.c.0.s8 %v1707
      %v1709 = vlaneseq
      %v1710 = vshrl.u32 %v1709, 7
      %v1711 = vsub.s32 %v1708, %v1710
      %v1712 = vrot.slane %v1704, %v1711
      %v1714 = vunpack.c.l.s4 1934713408
      %v1715 = vunpack.c.0.s8 %v1714
      %v1716 = vlaneseq
      %v1717 = vshrl.u32 %v1716, 7
      %v1718 = vsub.s32 %v1715, %v1717
      %v1719 = vrot.slane %v1705, %v1718
      %v1720 = vcombine.low %v1664, %v1680
      %v1721 = vcombine.high %v1664, %v1680
      %v1723 = vunpack.c.l.s4 1934713408
      %v1724 = vunpack.c.0.s8 %v1723
      %v1725 = vlaneseq
      %v1726 = vshrl.u32 %v1725, 7
      %v1727 = vsub.s32 %v1724, %v1726
      %v1728 = vrot.slane %v1720, %v1727
      %v1730 = vunpack.c.l.s4 1934713408
      %v1731 = vunpack.c.0.s8 %v1730
      %v1732 = vlaneseq
      %v1733 = vshrl.u32 %v1732, 7
      %v1734 = vsub.s32 %v1731, %v1733
      %v1735 = vrot.slane %v1721, %v1734
      %v1736 = vcombine.low %v1671, %v1687
      %v1737 = vcombine.high %v1671, %v1687
      %v1739 = vunpack.c.l.s4 1934713408
      %v1740 = vunpack.c.0.s8 %v1739
      %v1741 = vlaneseq
      %v1742 = vshrl.u32 %v1741, 7
      %v1743 = vsub.s32 %v1740, %v1742
      %v1744 = vrot.slane %v1736, %v1743
      %v1746 = vunpack.c.l.s4 1934713408
      %v1747 = vunpack.c.0.s8 %v1746
      %v1748 = vlaneseq
      %v1749 = vshrl.u32 %v1748, 7
      %v1750 = vsub.s32 %v1747, %v1749
      %v1751 = vrot.slane %v1737, %v1750
      %v1752 = vcombine.low %v1696, %v1728
      %v1753 = vcombine.high %v1696, %v1728
      %v1754 = vcombine.low %v1703, %v1735
      %v1755 = vcombine.high %v1703, %v1735
      %v1756 = vcombine.low %v1712, %v1744
      %v1757 = vcombine.high %v1712, %v1744
      %v1758 = vcombine.low %v1719, %v1751
      %v1759 = vcombine.high %v1719, %v1751
      %v1760 = vcombine.low %v1289, %v1305
      %v1761 = vcombine.high %v1289, %v1305
      %v1763 = vunpack.c.l.s4 1983009808
      %v1764 = vunpack.c.0.s8 %v1763
      %v1765 = vlaneseq
      %v1766 = vshrl.u32 %v1765, 7
      %v1767 = vsub.s32 %v1764, %v1766
      %v1768 = vrot.slane %v1760, %v1767
      %v1770 = vunpack.c.l.s4 1983009808
      %v1771 = vunpack.c.0.s8 %v1770
      %v1772 = vlaneseq
      %v1773 = vshrl.u32 %v1772, 7
      %v1774 = vsub.s32 %v1771, %v1773
      %v1775 = vrot.slane %v1761, %v1774
      %v1776 = vcombine.low %v1297, %v1313
      %v1777 = vcombine.high %v1297, %v1313
      %v1779 = vunpack.c.l.s4 1983009808
      %v1780 = vunpack.c.0.s8 %v1779
      %v1781 = vlaneseq
      %v1782 = vshrl.u32 %v1781, 7
      %v1783 = vsub.s32 %v1780, %v1782
      %v1784 = vrot.slane %v1776, %v1783
      %v1786 = vunpack.c.l.s4 1983009808
      %v1787 = vunpack.c.0.s8 %v1786
      %v1788 = vlaneseq
      %v1789 = vshrl.u32 %v1788, 7
      %v1790 = vsub.s32 %v1787, %v1789
      %v1791 = vrot.slane %v1777, %v1790
      %v1792 = vcombine.low %v1321, %v1337
      %v1793 = vcombine.high %v1321, %v1337
      %v1795 = vunpack.c.l.s4 1983009808
      %v1796 = vunpack.c.0.s8 %v1795
      %v1797 = vlaneseq
      %v1798 = vshrl.u32 %v1797, 7
      %v1799 = vsub.s32 %v1796, %v1798
      %v1800 = vrot.slane %v1792, %v1799
      %v1802 = vunpack.c.l.s4 1983009808
      %v1803 = vunpack.c.0.s8 %v1802
      %v1804 = vlaneseq
      %v1805 = vshrl.u32 %v1804, 7
      %v1806 = vsub.s32 %v1803, %v1805
      %v1807 = vrot.slane %v1793, %v1806
      %v1808 = vcombine.low %v1329, %v1345
      %v1809 = vcombine.high %v1329, %v1345
      %v1811 = vunpack.c.l.s4 1983009808
      %v1812 = vunpack.c.0.s8 %v1811
      %v1813 = vlaneseq
      %v1814 = vshrl.u32 %v1813, 7
      %v1815 = vsub.s32 %v1812, %v1814
      %v1816 = vrot.slane %v1808, %v1815
      %v1818 = vunpack.c.l.s4 1983009808
      %v1819 = vunpack.c.0.s8 %v1818
      %v1820 = vlaneseq
      %v1821 = vshrl.u32 %v1820, 7
      %v1822 = vsub.s32 %v1819, %v1821
      %v1823 = vrot.slane %v1809, %v1822
      %v1824 = vcombine.low %v1768, %v1784
      %v1825 = vcombine.high %v1768, %v1784
      %v1827 = vunpack.c.l.s4 1934713408
      %v1828 = vunpack.c.0.s8 %v1827
      %v1829 = vlaneseq
      %v1830 = vshrl.u32 %v1829, 7
      %v1831 = vsub.s32 %v1828, %v1830
      %v1832 = vrot.slane %v1824, %v1831
      %v1834 = vunpack.c.l.s4 1934713408
      %v1835 = vunpack.c.0.s8 %v1834
      %v1836 = vlaneseq
      %v1837 = vshrl.u32 %v1836, 7
      %v1838 = vsub.s32 %v1835, %v1837
      %v1839 = vrot.slane %v1825, %v1838
      %v1840 = vcombine.low %v1775, %v1791
      %v1841 = vcombine.high %v1775, %v1791
      %v1843 = vunpack.c.l.s4 1934713408
      %v1844 = vunpack.c.0.s8 %v1843
      %v1845 = vlaneseq
      %v1846 = vshrl.u32 %v1845, 7
      %v1847 = vsub.s32 %v1844, %v1846
      %v1848 = vrot.slane %v1840, %v1847
      %v1850 = vunpack.c.l.s4 1934713408
      %v1851 = vunpack.c.0.s8 %v1850
      %v1852 = vlaneseq
      %v1853 = vshrl.u32 %v1852, 7
      %v1854 = vsub.s32 %v1851, %v1853
      %v1855 = vrot.slane %v1841, %v1854
      %v1856 = vcombine.low %v1800, %v1816
      %v1857 = vcombine.high %v1800, %v1816
      %v1859 = vunpack.c.l.s4 1934713408
      %v1860 = vunpack.c.0.s8 %v1859
      %v1861 = vlaneseq
      %v1862 = vshrl.u32 %v1861, 7
      %v1863 = vsub.s32 %v1860, %v1862
      %v1864 = vrot.slane %v1856, %v1863
      %v1866 = vunpack.c.l.s4 1934713408
      %v1867 = vunpack.c.0.s8 %v1866
      %v1868 = vlaneseq
      %v1869 = vshrl.u32 %v1868, 7
      %v1870 = vsub.s32 %v1867, %v1869
      %v1871 = vrot.slane %v1857, %v1870
      %v1872 = vcombine.low %v1807, %v1823
      %v1873 = vcombine.high %v1807, %v1823
      %v1875 = vunpack.c.l.s4 1934713408
      %v1876 = vunpack.c.0.s8 %v1875
      %v1877 = vlaneseq
      %v1878 = vshrl.u32 %v1877, 7
      %v1879 = vsub.s32 %v1876, %v1878
      %v1880 = vrot.slane %v1872, %v1879
      %v1882 = vunpack.c.l.s4 1934713408
      %v1883 = vunpack.c.0.s8 %v1882
      %v1884 = vlaneseq
      %v1885 = vshrl.u32 %v1884, 7
      %v1886 = vsub.s32 %v1883, %v1885
      %v1887 = vrot.slane %v1873, %v1886
      %v1888 = vcombine.low %v1832, %v1864
      %v1889 = vcombine.high %v1832, %v1864
      %v1890 = vcombine.low %v1839, %v1871
      %v1891 = vcombine.high %v1839, %v1871
      %v1892 = vcombine.low %v1848, %v1880
      %v1893 = vcombine.high %v1848, %v1880
      %v1894 = vcombine.low %v1855, %v1887
      %v1895 = vcombine.high %v1855, %v1887
      %v1896 = vcombine.low %v1226, %v1242
      %v1897 = vcombine.high %v1226, %v1242
      %v1899 = vunpack.c.l.s4 1983009808
      %v1900 = vunpack.c.0.s8 %v1899
      %v1901 = vlaneseq
      %v1902 = vshrl.u32 %v1901, 7
      %v1903 = vsub.s32 %v1900, %v1902
      %v1904 = vrot.slane %v1896, %v1903
      %v1906 = vunpack.c.l.s4 1983009808
      %v1907 = vunpack.c.0.s8 %v1906
      %v1908 = vlaneseq
      %v1909 = vshrl.u32 %v1908, 7
      %v1910 = vsub.s32 %v1907, %v1909
      %v1911 = vrot.slane %v1897, %v1910
      %v1912 = vcombine.low %v1234, %v1250
      %v1913 = vcombine.high %v1234, %v1250
      %v1915 = vunpack.c.l.s4 1983009808
      %v1916 = vunpack.c.0.s8 %v1915
      %v1917 = vlaneseq
      %v1918 = vshrl.u32 %v1917, 7
      %v1919 = vsub.s32 %v1916, %v1918
      %v1920 = vrot.slane %v1912, %v1919
      %v1922 = vunpack.c.l.s4 1983009808
      %v1923 = vunpack.c.0.s8 %v1922
      %v1924 = vlaneseq
      %v1925 = vshrl.u32 %v1924, 7
      %v1926 = vsub.s32 %v1923, %v1925
      %v1927 = vrot.slane %v1913, %v1926
      %v1928 = vcombine.low %v1258, %v1274
      %v1929 = vcombine.high %v1258, %v1274
      %v1931 = vunpack.c.l.s4 1983009808
      %v1932 = vunpack.c.0.s8 %v1931
      %v1933 = vlaneseq
      %v1934 = vshrl.u32 %v1933, 7
      %v1935 = vsub.s32 %v1932, %v1934
      %v1936 = vrot.slane %v1928, %v1935
      %v1938 = vunpack.c.l.s4 1983009808
      %v1939 = vunpack.c.0.s8 %v1938
      %v1940 = vlaneseq
      %v1941 = vshrl.u32 %v1940, 7
      %v1942 = vsub.s32 %v1939, %v1941
      %v1943 = vrot.slane %v1929, %v1942
      %v1944 = vcombine.low %v1266, %v1282
      %v1945 = vcombine.high %v1266, %v1282
      %v1947 = vunpack.c.l.s4 1983009808
      %v1948 = vunpack.c.0.s8 %v1947
      %v1949 = vlaneseq
      %v1950 = vshrl.u32 %v1949, 7
      %v1951 = vsub.s32 %v1948, %v1950
      %v1952 = vrot.slane %v1944, %v1951
      %v1954 = vunpack.c.l.s4 1983009808
      %v1955 = vunpack.c.0.s8 %v1954
      %v1956 = vlaneseq
      %v1957 = vshrl.u32 %v1956, 7
      %v1958 = vsub.s32 %v1955, %v1957
      %v1959 = vrot.slane %v1945, %v1958
      %v1960 = vcombine.low %v1904, %v1920
      %v1961 = vcombine.high %v1904, %v1920
      %v1963 = vunpack.c.l.s4 1934713408
      %v1964 = vunpack.c.0.s8 %v1963
      %v1965 = vlaneseq
      %v1966 = vshrl.u32 %v1965, 7
      %v1967 = vsub.s32 %v1964, %v1966
      %v1968 = vrot.slane %v1960, %v1967
      %v1970 = vunpack.c.l.s4 1934713408
      %v1971 = vunpack.c.0.s8 %v1970
      %v1972 = vlaneseq
      %v1973 = vshrl.u32 %v1972, 7
      %v1974 = vsub.s32 %v1971, %v1973
      %v1975 = vrot.slane %v1961, %v1974
      %v1976 = vcombine.low %v1911, %v1927
      %v1977 = vcombine.high %v1911, %v1927
      %v1979 = vunpack.c.l.s4 1934713408
      %v1980 = vunpack.c.0.s8 %v1979
      %v1981 = vlaneseq
      %v1982 = vshrl.u32 %v1981, 7
      %v1983 = vsub.s32 %v1980, %v1982
      %v1984 = vrot.slane %v1976, %v1983
      %v1986 = vunpack.c.l.s4 1934713408
      %v1987 = vunpack.c.0.s8 %v1986
      %v1988 = vlaneseq
      %v1989 = vshrl.u32 %v1988, 7
      %v1990 = vsub.s32 %v1987, %v1989
      %v1991 = vrot.slane %v1977, %v1990
      %v1992 = vcombine.low %v1936, %v1952
      %v1993 = vcombine.high %v1936, %v1952
      %v1995 = vunpack.c.l.s4 1934713408
      %v1996 = vunpack.c.0.s8 %v1995
      %v1997 = vlaneseq
      %v1998 = vshrl.u32 %v1997, 7
      %v1999 = vsub.s32 %v1996, %v1998
      %v2000 = vrot.slane %v1992, %v1999
      %v2002 = vunpack.c.l.s4 1934713408
      %v2003 = vunpack.c.0.s8 %v2002
      %v2004 = vlaneseq
      %v2005 = vshrl.u32 %v2004, 7
      %v2006 = vsub.s32 %v2003, %v2005
      %v2007 = vrot.slane %v1993, %v2006
      %v2008 = vcombine.low %v1943, %v1959
      %v2009 = vcombine.high %v1943, %v1959
      %v2011 = vunpack.c.l.s4 1934713408
      %v2012 = vunpack.c.0.s8 %v2011
      %v2013 = vlaneseq
      %v2014 = vshrl.u32 %v2013, 7
      %v2015 = vsub.s32 %v2012, %v2014
      %v2016 = vrot.slane %v2008, %v2015
      %v2018 = vunpack.c.l.s4 1934713408
      %v2019 = vunpack.c.0.s8 %v2018
      %v2020 = vlaneseq
      %v2021 = vshrl.u32 %v2020, 7
      %v2022 = vsub.s32 %v2019, %v2021
      %v2023 = vrot.slane %v2009, %v2022
      %v2024 = vcombine.low %v1968, %v2000
      %v2025 = vcombine.high %v1968, %v2000
      %v2026 = vcombine.low %v1975, %v2007
      %v2027 = vcombine.high %v1975, %v2007
      %v2028 = vcombine.low %v1984, %v2016
      %v2029 = vcombine.high %v1984, %v2016
      %v2030 = vcombine.low %v1991, %v2023
      %v2031 = vcombine.high %v1991, %v2023
      %v2032 = vcombine.low %v1290, %v1306
      %v2033 = vcombine.high %v1290, %v1306
      %v2035 = vunpack.c.l.s4 1983009808
      %v2036 = vunpack.c.0.s8 %v2035
      %v2037 = vlaneseq
      %v2038 = vshrl.u32 %v2037, 7
      %v2039 = vsub.s32 %v2036, %v2038
      %v2040 = vrot.slane %v2032, %v2039
      %v2042 = vunpack.c.l.s4 1983009808
      %v2043 = vunpack.c.0.s8 %v2042
      %v2044 = vlaneseq
      %v2045 = vshrl.u32 %v2044, 7
      %v2046 = vsub.s32 %v2043, %v2045
      %v2047 = vrot.slane %v2033, %v2046
      %v2048 = vcombine.low %v1298, %v1314
      %v2049 = vcombine.high %v1298, %v1314
      %v2051 = vunpack.c.l.s4 1983009808
      %v2052 = vunpack.c.0.s8 %v2051
      %v2053 = vlaneseq
      %v2054 = vshrl.u32 %v2053, 7
      %v2055 = vsub.s32 %v2052, %v2054
      %v2056 = vrot.slane %v2048, %v2055
      %v2058 = vunpack.c.l.s4 1983009808
      %v2059 = vunpack.c.0.s8 %v2058
      %v2060 = vlaneseq
      %v2061 = vshrl.u32 %v2060, 7
      %v2062 = vsub.s32 %v2059, %v2061
      %v2063 = vrot.slane %v2049, %v2062
      %v2064 = vcombine.low %v1322, %v1338
      %v2065 = vcombine.high %v1322, %v1338
      %v2067 = vunpack.c.l.s4 1983009808
      %v2068 = vunpack.c.0.s8 %v2067
      %v2069 = vlaneseq
      %v2070 = vshrl.u32 %v2069, 7
      %v2071 = vsub.s32 %v2068, %v2070
      %v2072 = vrot.slane %v2064, %v2071
      %v2074 = vunpack.c.l.s4 1983009808
      %v2075 = vunpack.c.0.s8 %v2074
      %v2076 = vlaneseq
      %v2077 = vshrl.u32 %v2076, 7
      %v2078 = vsub.s32 %v2075, %v2077
      %v2079 = vrot.slane %v2065, %v2078
      %v2080 = vcombine.low %v1330, %v1346
      %v2081 = vcombine.high %v1330, %v1346
      %v2083 = vunpack.c.l.s4 1983009808
      %v2084 = vunpack.c.0.s8 %v2083
      %v2085 = vlaneseq
      %v2086 = vshrl.u32 %v2085, 7
      %v2087 = vsub.s32 %v2084, %v2086
      %v2088 = vrot.slane %v2080, %v2087
      %v2090 = vunpack.c.l.s4 1983009808
      %v2091 = vunpack.c.0.s8 %v2090
      %v2092 = vlaneseq
      %v2093 = vshrl.u32 %v2092, 7
      %v2094 = vsub.s32 %v2091, %v2093
      %v2095 = vrot.slane %v2081, %v2094
      %v2096 = vcombine.low %v2040, %v2056
      %v2097 = vcombine.high %v2040, %v2056
      %v2099 = vunpack.c.l.s4 1934713408
      %v2100 = vunpack.c.0.s8 %v2099
      %v2101 = vlaneseq
      %v2102 = vshrl.u32 %v2101, 7
      %v2103 = vsub.s32 %v2100, %v2102
      %v2104 = vrot.slane %v2096, %v2103
      %v2106 = vunpack.c.l.s4 1934713408
      %v2107 = vunpack.c.0.s8 %v2106
      %v2108 = vlaneseq
      %v2109 = vshrl.u32 %v2108, 7
      %v2110 = vsub.s32 %v2107, %v2109
      %v2111 = vrot.slane %v2097, %v2110
      %v2112 = vcombine.low %v2047, %v2063
      %v2113 = vcombine.high %v2047, %v2063
      %v2115 = vunpack.c.l.s4 1934713408
      %v2116 = vunpack.c.0.s8 %v2115
      %v2117 = vlaneseq
      %v2118 = vshrl.u32 %v2117, 7
      %v2119 = vsub.s32 %v2116, %v2118
      %v2120 = vrot.slane %v2112, %v2119
      %v2122 = vunpack.c.l.s4 1934713408
      %v2123 = vunpack.c.0.s8 %v2122
      %v2124 = vlaneseq
      %v2125 = vshrl.u32 %v2124, 7
      %v2126 = vsub.s32 %v2123, %v2125
      %v2127 = vrot.slane %v2113, %v2126
      %v2128 = vcombine.low %v2072, %v2088
      %v2129 = vcombine.high %v2072, %v2088
      %v2131 = vunpack.c.l.s4 1934713408
      %v2132 = vunpack.c.0.s8 %v2131
      %v2133 = vlaneseq
      %v2134 = vshrl.u32 %v2133, 7
      %v2135 = vsub.s32 %v2132, %v2134
      %v2136 = vrot.slane %v2128, %v2135
      %v2138 = vunpack.c.l.s4 1934713408
      %v2139 = vunpack.c.0.s8 %v2138
      %v2140 = vlaneseq
      %v2141 = vshrl.u32 %v2140, 7
      %v2142 = vsub.s32 %v2139, %v2141
      %v2143 = vrot.slane %v2129, %v2142
      %v2144 = vcombine.low %v2079, %v2095
      %v2145 = vcombine.high %v2079, %v2095
      %v2147 = vunpack.c.l.s4 1934713408
      %v2148 = vunpack.c.0.s8 %v2147
      %v2149 = vlaneseq
      %v2150 = vshrl.u32 %v2149, 7
      %v2151 = vsub.s32 %v2148, %v2150
      %v2152 = vrot.slane %v2144, %v2151
      %v2154 = vunpack.c.l.s4 1934713408
      %v2155 = vunpack.c.0.s8 %v2154
      %v2156 = vlaneseq
      %v2157 = vshrl.u32 %v2156, 7
      %v2158 = vsub.s32 %v2155, %v2157
      %v2159 = vrot.slane %v2145, %v2158
      %v2160 = vcombine.low %v2104, %v2136
      %v2161 = vcombine.high %v2104, %v2136
      %v2162 = vcombine.low %v2111, %v2143
      %v2163 = vcombine.high %v2111, %v2143
      %v2164 = vcombine.low %v2120, %v2152
      %v2165 = vcombine.high %v2120, %v2152
      %v2166 = vcombine.low %v2127, %v2159
      %v2167 = vcombine.high %v2127, %v2159
      %v2168 = vcombine.low %v1227, %v1243
      %v2169 = vcombine.high %v1227, %v1243
      %v2171 = vunpack.c.l.s4 1983009808
      %v2172 = vunpack.c.0.s8 %v2171
      %v2173 = vlaneseq
      %v2174 = vshrl.u32 %v2173, 7
      %v2175 = vsub.s32 %v2172, %v2174
      %v2176 = vrot.slane %v2168, %v2175
      %v2178 = vunpack.c.l.s4 1983009808
      %v2179 = vunpack.c.0.s8 %v2178
      %v2180 = vlaneseq
      %v2181 = vshrl.u32 %v2180, 7
      %v2182 = vsub.s32 %v2179, %v2181
      %v2183 = vrot.slane %v2169, %v2182
      %v2184 = vcombine.low %v1235, %v1251
      %v2185 = vcombine.high %v1235, %v1251
      %v2187 = vunpack.c.l.s4 1983009808
      %v2188 = vunpack.c.0.s8 %v2187
      %v2189 = vlaneseq
      %v2190 = vshrl.u32 %v2189, 7
      %v2191 = vsub.s32 %v2188, %v2190
      %v2192 = vrot.slane %v2184, %v2191
      %v2194 = vunpack.c.l.s4 1983009808
      %v2195 = vunpack.c.0.s8 %v2194
      %v2196 = vlaneseq
      %v2197 = vshrl.u32 %v2196, 7
      %v2198 = vsub.s32 %v2195, %v2197
      %v2199 = vrot.slane %v2185, %v2198
      %v2200 = vcombine.low %v1259, %v1275
      %v2201 = vcombine.high %v1259, %v1275
      %v2203 = vunpack.c.l.s4 1983009808
      %v2204 = vunpack.c.0.s8 %v2203
      %v2205 = vlaneseq
      %v2206 = vshrl.u32 %v2205, 7
      %v2207 = vsub.s32 %v2204, %v2206
      %v2208 = vrot.slane %v2200, %v2207
      %v2210 = vunpack.c.l.s4 1983009808
      %v2211 = vunpack.c.0.s8 %v2210
      %v2212 = vlaneseq
      %v2213 = vshrl.u32 %v2212, 7
      %v2214 = vsub.s32 %v2211, %v2213
      %v2215 = vrot.slane %v2201, %v2214
      %v2216 = vcombine.low %v1267, %v1283
      %v2217 = vcombine.high %v1267, %v1283
      %v2219 = vunpack.c.l.s4 1983009808
      %v2220 = vunpack.c.0.s8 %v2219
      %v2221 = vlaneseq
      %v2222 = vshrl.u32 %v2221, 7
      %v2223 = vsub.s32 %v2220, %v2222
      %v2224 = vrot.slane %v2216, %v2223
      %v2226 = vunpack.c.l.s4 1983009808
      %v2227 = vunpack.c.0.s8 %v2226
      %v2228 = vlaneseq
      %v2229 = vshrl.u32 %v2228, 7
      %v2230 = vsub.s32 %v2227, %v2229
      %v2231 = vrot.slane %v2217, %v2230
      %v2232 = vcombine.low %v2176, %v2192
      %v2233 = vcombine.high %v2176, %v2192
      %v2235 = vunpack.c.l.s4 1934713408
      %v2236 = vunpack.c.0.s8 %v2235
      %v2237 = vlaneseq
      %v2238 = vshrl.u32 %v2237, 7
      %v2239 = vsub.s32 %v2236, %v2238
      %v2240 = vrot.slane %v2232, %v2239
      %v2242 = vunpack.c.l.s4 1934713408
      %v2243 = vunpack.c.0.s8 %v2242
      %v2244 = vlaneseq
      %v2245 = vshrl.u32 %v2244, 7
      %v2246 = vsub.s32 %v2243, %v2245
      %v2247 = vrot.slane %v2233, %v2246
      %v2248 = vcombine.low %v2183, %v2199
      %v2249 = vcombine.high %v2183, %v2199
      %v2251 = vunpack.c.l.s4 1934713408
      %v2252 = vunpack.c.0.s8 %v2251
      %v2253 = vlaneseq
      %v2254 = vshrl.u32 %v2253, 7
      %v2255 = vsub.s32 %v2252, %v2254
      %v2256 = vrot.slane %v2248, %v2255
      %v2258 = vunpack.c.l.s4 1934713408
      %v2259 = vunpack.c.0.s8 %v2258
      %v2260 = vlaneseq
      %v2261 = vshrl.u32 %v2260, 7
      %v2262 = vsub.s32 %v2259, %v2261
      %v2263 = vrot.slane %v2249, %v2262
      %v2264 = vcombine.low %v2208, %v2224
      %v2265 = vcombine.high %v2208, %v2224
      %v2267 = vunpack.c.l.s4 1934713408
      %v2268 = vunpack.c.0.s8 %v2267
      %v2269 = vlaneseq
      %v2270 = vshrl.u32 %v2269, 7
      %v2271 = vsub.s32 %v2268, %v2270
      %v2272 = vrot.slane %v2264, %v2271
      %v2274 = vunpack.c.l.s4 1934713408
      %v2275 = vunpack.c.0.s8 %v2274
      %v2276 = vlaneseq
      %v2277 = vshrl.u32 %v2276, 7
      %v2278 = vsub.s32 %v2275, %v2277
      %v2279 = vrot.slane %v2265, %v2278
      %v2280 = vcombine.low %v2215, %v2231
      %v2281 = vcombine.high %v2215, %v2231
      %v2283 = vunpack.c.l.s4 1934713408
      %v2284 = vunpack.c.0.s8 %v2283
      %v2285 = vlaneseq
      %v2286 = vshrl.u32 %v2285, 7
      %v2287 = vsub.s32 %v2284, %v2286
      %v2288 = vrot.slane %v2280, %v2287
      %v2290 = vunpack.c.l.s4 1934713408
      %v2291 = vunpack.c.0.s8 %v2290
      %v2292 = vlaneseq
      %v2293 = vshrl.u32 %v2292, 7
      %v2294 = vsub.s32 %v2291, %v2293
      %v2295 = vrot.slane %v2281, %v2294
      %v2296 = vcombine.low %v2240, %v2272
      %v2297 = vcombine.high %v2240, %v2272
      %v2298 = vcombine.low %v2247, %v2279
      %v2299 = vcombine.high %v2247, %v2279
      %v2300 = vcombine.low %v2256, %v2288
      %v2301 = vcombine.high %v2256, %v2288
      %v2302 = vcombine.low %v2263, %v2295
      %v2303 = vcombine.high %v2263, %v2295
      %v2304 = vcombine.low %v1291, %v1307
      %v2305 = vcombine.high %v1291, %v1307
      %v2307 = vunpack.c.l.s4 1983009808
      %v2308 = vunpack.c.0.s8 %v2307
      %v2309 = vlaneseq
      %v2310 = vshrl.u32 %v2309, 7
      %v2311 = vsub.s32 %v2308, %v2310
      %v2312 = vrot.slane %v2304, %v2311
      %v2314 = vunpack.c.l.s4 1983009808
      %v2315 = vunpack.c.0.s8 %v2314
      %v2316 = vlaneseq
      %v2317 = vshrl.u32 %v2316, 7
      %v2318 = vsub.s32 %v2315, %v2317
      %v2319 = vrot.slane %v2305, %v2318
      %v2320 = vcombine.low %v1299, %v1315
      %v2321 = vcombine.high %v1299, %v1315
      %v2323 = vunpack.c.l.s4 1983009808
      %v2324 = vunpack.c.0.s8 %v2323
      %v2325 = vlaneseq
      %v2326 = vshrl.u32 %v2325, 7
      %v2327 = vsub.s32 %v2324, %v2326
      %v2328 = vrot.slane %v2320, %v2327
      %v2330 = vunpack.c.l.s4 1983009808
      %v2331 = vunpack.c.0.s8 %v2330
      %v2332 = vlaneseq
      %v2333 = vshrl.u32 %v2332, 7
      %v2334 = vsub.s32 %v2331, %v2333
      %v2335 = vrot.slane %v2321, %v2334
      %v2336 = vcombine.low %v1323, %v1339
      %v2337 = vcombine.high %v1323, %v1339
      %v2339 = vunpack.c.l.s4 1983009808
      %v2340 = vunpack.c.0.s8 %v2339
      %v2341 = vlaneseq
      %v2342 = vshrl.u32 %v2341, 7
      %v2343 = vsub.s32 %v2340, %v2342
      %v2344 = vrot.slane %v2336, %v2343
      %v2346 = vunpack.c.l.s4 1983009808
      %v2347 = vunpack.c.0.s8 %v2346
      %v2348 = vlaneseq
      %v2349 = vshrl.u32 %v2348, 7
      %v2350 = vsub.s32 %v2347, %v2349
      %v2351 = vrot.slane %v2337, %v2350
      %v2352 = vcombine.low %v1331, %v1347
      %v2353 = vcombine.high %v1331, %v1347
      %v2355 = vunpack.c.l.s4 1983009808
      %v2356 = vunpack.c.0.s8 %v2355
      %v2357 = vlaneseq
      %v2358 = vshrl.u32 %v2357, 7
      %v2359 = vsub.s32 %v2356, %v2358
      %v2360 = vrot.slane %v2352, %v2359
      %v2362 = vunpack.c.l.s4 1983009808
      %v2363 = vunpack.c.0.s8 %v2362
      %v2364 = vlaneseq
      %v2365 = vshrl.u32 %v2364, 7
      %v2366 = vsub.s32 %v2363, %v2365
      %v2367 = vrot.slane %v2353, %v2366
      %v2368 = vcombine.low %v2312, %v2328
      %v2369 = vcombine.high %v2312, %v2328
      %v2371 = vunpack.c.l.s4 1934713408
      %v2372 = vunpack.c.0.s8 %v2371
      %v2373 = vlaneseq
      %v2374 = vshrl.u32 %v2373, 7
      %v2375 = vsub.s32 %v2372, %v2374
      %v2376 = vrot.slane %v2368, %v2375
      %v2378 = vunpack.c.l.s4 1934713408
      %v2379 = vunpack.c.0.s8 %v2378
      %v2380 = vlaneseq
      %v2381 = vshrl.u32 %v2380, 7
      %v2382 = vsub.s32 %v2379, %v2381
      %v2383 = vrot.slane %v2369, %v2382
      %v2384 = vcombine.low %v2319, %v2335
      %v2385 = vcombine.high %v2319, %v2335
      %v2387 = vunpack.c.l.s4 1934713408
      %v2388 = vunpack.c.0.s8 %v2387
      %v2389 = vlaneseq
      %v2390 = vshrl.u32 %v2389, 7
      %v2391 = vsub.s32 %v2388, %v2390
      %v2392 = vrot.slane %v2384, %v2391
      %v2394 = vunpack.c.l.s4 1934713408
      %v2395 = vunpack.c.0.s8 %v2394
      %v2396 = vlaneseq
      %v2397 = vshrl.u32 %v2396, 7
      %v2398 = vsub.s32 %v2395, %v2397
      %v2399 = vrot.slane %v2385, %v2398
      %v2400 = vcombine.low %v2344, %v2360
      %v2401 = vcombine.high %v2344, %v2360
      %v2403 = vunpack.c.l.s4 1934713408
      %v2404 = vunpack.c.0.s8 %v2403
      %v2405 = vlaneseq
      %v2406 = vshrl.u32 %v2405, 7
      %v2407 = vsub.s32 %v2404, %v2406
      %v2408 = vrot.slane %v2400, %v2407
      %v2410 = vunpack.c.l.s4 1934713408
      %v2411 = vunpack.c.0.s8 %v2410
      %v2412 = vlaneseq
      %v2413 = vshrl.u32 %v2412, 7
      %v2414 = vsub.s32 %v2411, %v2413
      %v2415 = vrot.slane %v2401, %v2414
      %v2416 = vcombine.low %v2351, %v2367
      %v2417 = vcombine.high %v2351, %v2367
      %v2419 = vunpack.c.l.s4 1934713408
      %v2420 = vunpack.c.0.s8 %v2419
      %v2421 = vlaneseq
      %v2422 = vshrl.u32 %v2421, 7
      %v2423 = vsub.s32 %v2420, %v2422
      %v2424 = vrot.slane %v2416, %v2423
      %v2426 = vunpack.c.l.s4 1934713408
      %v2427 = vunpack.c.0.s8 %v2426
      %v2428 = vlaneseq
      %v2429 = vshrl.u32 %v2428, 7
      %v2430 = vsub.s32 %v2427, %v2429
      %v2431 = vrot.slane %v2417, %v2430
      %v2432 = vcombine.low %v2376, %v2408
      %v2433 = vcombine.high %v2376, %v2408
      %v2434 = vcombine.low %v2383, %v2415
      %v2435 = vcombine.high %v2383, %v2415
      %v2436 = vcombine.low %v2392, %v2424
      %v2437 = vcombine.high %v2392, %v2424
      %v2438 = vcombine.low %v2399, %v2431
      %v2439 = vcombine.high %v2399, %v2431
      %v2440 = vcombine.low %v1228, %v1244
      %v2441 = vcombine.high %v1228, %v1244
      %v2443 = vunpack.c.l.s4 1983009808
      %v2444 = vunpack.c.0.s8 %v2443
      %v2445 = vlaneseq
      %v2446 = vshrl.u32 %v2445, 7
      %v2447 = vsub.s32 %v2444, %v2446
      %v2448 = vrot.slane %v2440, %v2447
      %v2450 = vunpack.c.l.s4 1983009808
      %v2451 = vunpack.c.0.s8 %v2450
      %v2452 = vlaneseq
      %v2453 = vshrl.u32 %v2452, 7
      %v2454 = vsub.s32 %v2451, %v2453
      %v2455 = vrot.slane %v2441, %v2454
      %v2456 = vcombine.low %v1236, %v1252
      %v2457 = vcombine.high %v1236, %v1252
      %v2459 = vunpack.c.l.s4 1983009808
      %v2460 = vunpack.c.0.s8 %v2459
      %v2461 = vlaneseq
      %v2462 = vshrl.u32 %v2461, 7
      %v2463 = vsub.s32 %v2460, %v2462
      %v2464 = vrot.slane %v2456, %v2463
      %v2466 = vunpack.c.l.s4 1983009808
      %v2467 = vunpack.c.0.s8 %v2466
      %v2468 = vlaneseq
      %v2469 = vshrl.u32 %v2468, 7
      %v2470 = vsub.s32 %v2467, %v2469
      %v2471 = vrot.slane %v2457, %v2470
      %v2472 = vcombine.low %v1260, %v1276
      %v2473 = vcombine.high %v1260, %v1276
      %v2475 = vunpack.c.l.s4 1983009808
      %v2476 = vunpack.c.0.s8 %v2475
      %v2477 = vlaneseq
      %v2478 = vshrl.u32 %v2477, 7
      %v2479 = vsub.s32 %v2476, %v2478
      %v2480 = vrot.slane %v2472, %v2479
      %v2482 = vunpack.c.l.s4 1983009808
      %v2483 = vunpack.c.0.s8 %v2482
      %v2484 = vlaneseq
      %v2485 = vshrl.u32 %v2484, 7
      %v2486 = vsub.s32 %v2483, %v2485
      %v2487 = vrot.slane %v2473, %v2486
      %v2488 = vcombine.low %v1268, %v1284
      %v2489 = vcombine.high %v1268, %v1284
      %v2491 = vunpack.c.l.s4 1983009808
      %v2492 = vunpack.c.0.s8 %v2491
      %v2493 = vlaneseq
      %v2494 = vshrl.u32 %v2493, 7
      %v2495 = vsub.s32 %v2492, %v2494
      %v2496 = vrot.slane %v2488, %v2495
      %v2498 = vunpack.c.l.s4 1983009808
      %v2499 = vunpack.c.0.s8 %v2498
      %v2500 = vlaneseq
      %v2501 = vshrl.u32 %v2500, 7
      %v2502 = vsub.s32 %v2499, %v2501
      %v2503 = vrot.slane %v2489, %v2502
      %v2504 = vcombine.low %v2448, %v2464
      %v2505 = vcombine.high %v2448, %v2464
      %v2507 = vunpack.c.l.s4 1934713408
      %v2508 = vunpack.c.0.s8 %v2507
      %v2509 = vlaneseq
      %v2510 = vshrl.u32 %v2509, 7
      %v2511 = vsub.s32 %v2508, %v2510
      %v2512 = vrot.slane %v2504, %v2511
      %v2514 = vunpack.c.l.s4 1934713408
      %v2515 = vunpack.c.0.s8 %v2514
      %v2516 = vlaneseq
      %v2517 = vshrl.u32 %v2516, 7
      %v2518 = vsub.s32 %v2515, %v2517
      %v2519 = vrot.slane %v2505, %v2518
      %v2520 = vcombine.low %v2455, %v2471
      %v2521 = vcombine.high %v2455, %v2471
      %v2523 = vunpack.c.l.s4 1934713408
      %v2524 = vunpack.c.0.s8 %v2523
      %v2525 = vlaneseq
      %v2526 = vshrl.u32 %v2525, 7
      %v2527 = vsub.s32 %v2524, %v2526
      %v2528 = vrot.slane %v2520, %v2527
      %v2530 = vunpack.c.l.s4 1934713408
      %v2531 = vunpack.c.0.s8 %v2530
      %v2532 = vlaneseq
      %v2533 = vshrl.u32 %v2532, 7
      %v2534 = vsub.s32 %v2531, %v2533
      %v2535 = vrot.slane %v2521, %v2534
      %v2536 = vcombine.low %v2480, %v2496
      %v2537 = vcombine.high %v2480, %v2496
      %v2539 = vunpack.c.l.s4 1934713408
      %v2540 = vunpack.c.0.s8 %v2539
      %v2541 = vlaneseq
      %v2542 = vshrl.u32 %v2541, 7
      %v2543 = vsub.s32 %v2540, %v2542
      %v2544 = vrot.slane %v2536, %v2543
      %v2546 = vunpack.c.l.s4 1934713408
      %v2547 = vunpack.c.0.s8 %v2546
      %v2548 = vlaneseq
      %v2549 = vshrl.u32 %v2548, 7
      %v2550 = vsub.s32 %v2547, %v2549
      %v2551 = vrot.slane %v2537, %v2550
      %v2552 = vcombine.low %v2487, %v2503
      %v2553 = vcombine.high %v2487, %v2503
      %v2555 = vunpack.c.l.s4 1934713408
      %v2556 = vunpack.c.0.s8 %v2555
      %v2557 = vlaneseq
      %v2558 = vshrl.u32 %v2557, 7
      %v2559 = vsub.s32 %v2556, %v2558
      %v2560 = vrot.slane %v2552, %v2559
      %v2562 = vunpack.c.l.s4 1934713408
      %v2563 = vunpack.c.0.s8 %v2562
      %v2564 = vlaneseq
      %v2565 = vshrl.u32 %v2564, 7
      %v2566 = vsub.s32 %v2563, %v2565
      %v2567 = vrot.slane %v2553, %v2566
      %v2568 = vcombine.low %v2512, %v2544
      %v2569 = vcombine.high %v2512, %v2544
      %v2570 = vcombine.low %v2519, %v2551
      %v2571 = vcombine.high %v2519, %v2551
      %v2572 = vcombine.low %v2528, %v2560
      %v2573 = vcombine.high %v2528, %v2560
      %v2574 = vcombine.low %v2535, %v2567
      %v2575 = vcombine.high %v2535, %v2567
      %v2576 = vcombine.low %v1292, %v1308
      %v2577 = vcombine.high %v1292, %v1308
      %v2579 = vunpack.c.l.s4 1983009808
      %v2580 = vunpack.c.0.s8 %v2579
      %v2581 = vlaneseq
      %v2582 = vshrl.u32 %v2581, 7
      %v2583 = vsub.s32 %v2580, %v2582
      %v2584 = vrot.slane %v2576, %v2583
      %v2586 = vunpack.c.l.s4 1983009808
      %v2587 = vunpack.c.0.s8 %v2586
      %v2588 = vlaneseq
      %v2589 = vshrl.u32 %v2588, 7
      %v2590 = vsub.s32 %v2587, %v2589
      %v2591 = vrot.slane %v2577, %v2590
      %v2592 = vcombine.low %v1300, %v1316
      %v2593 = vcombine.high %v1300, %v1316
      %v2595 = vunpack.c.l.s4 1983009808
      %v2596 = vunpack.c.0.s8 %v2595
      %v2597 = vlaneseq
      %v2598 = vshrl.u32 %v2597, 7
      %v2599 = vsub.s32 %v2596, %v2598
      %v2600 = vrot.slane %v2592, %v2599
      %v2602 = vunpack.c.l.s4 1983009808
      %v2603 = vunpack.c.0.s8 %v2602
      %v2604 = vlaneseq
      %v2605 = vshrl.u32 %v2604, 7
      %v2606 = vsub.s32 %v2603, %v2605
      %v2607 = vrot.slane %v2593, %v2606
      %v2608 = vcombine.low %v1324, %v1340
      %v2609 = vcombine.high %v1324, %v1340
      %v2611 = vunpack.c.l.s4 1983009808
      %v2612 = vunpack.c.0.s8 %v2611
      %v2613 = vlaneseq
      %v2614 = vshrl.u32 %v2613, 7
      %v2615 = vsub.s32 %v2612, %v2614
      %v2616 = vrot.slane %v2608, %v2615
      %v2618 = vunpack.c.l.s4 1983009808
      %v2619 = vunpack.c.0.s8 %v2618
      %v2620 = vlaneseq
      %v2621 = vshrl.u32 %v2620, 7
      %v2622 = vsub.s32 %v2619, %v2621
      %v2623 = vrot.slane %v2609, %v2622
      %v2624 = vcombine.low %v1332, %v1348
      %v2625 = vcombine.high %v1332, %v1348
      %v2627 = vunpack.c.l.s4 1983009808
      %v2628 = vunpack.c.0.s8 %v2627
      %v2629 = vlaneseq
      %v2630 = vshrl.u32 %v2629, 7
      %v2631 = vsub.s32 %v2628, %v2630
      %v2632 = vrot.slane %v2624, %v2631
      %v2634 = vunpack.c.l.s4 1983009808
      %v2635 = vunpack.c.0.s8 %v2634
      %v2636 = vlaneseq
      %v2637 = vshrl.u32 %v2636, 7
      %v2638 = vsub.s32 %v2635, %v2637
      %v2639 = vrot.slane %v2625, %v2638
      %v2640 = vcombine.low %v2584, %v2600
      %v2641 = vcombine.high %v2584, %v2600
      %v2643 = vunpack.c.l.s4 1934713408
      %v2644 = vunpack.c.0.s8 %v2643
      %v2645 = vlaneseq
      %v2646 = vshrl.u32 %v2645, 7
      %v2647 = vsub.s32 %v2644, %v2646
      %v2648 = vrot.slane %v2640, %v2647
      %v2650 = vunpack.c.l.s4 1934713408
      %v2651 = vunpack.c.0.s8 %v2650
      %v2652 = vlaneseq
      %v2653 = vshrl.u32 %v2652, 7
      %v2654 = vsub.s32 %v2651, %v2653
      %v2655 = vrot.slane %v2641, %v2654
      %v2656 = vcombine.low %v2591, %v2607
      %v2657 = vcombine.high %v2591, %v2607
      %v2659 = vunpack.c.l.s4 1934713408
      %v2660 = vunpack.c.0.s8 %v2659
      %v2661 = vlaneseq
      %v2662 = vshrl.u32 %v2661, 7
      %v2663 = vsub.s32 %v2660, %v2662
      %v2664 = vrot.slane %v2656, %v2663
      %v2666 = vunpack.c.l.s4 1934713408
      %v2667 = vunpack.c.0.s8 %v2666
      %v2668 = vlaneseq
      %v2669 = vshrl.u32 %v2668, 7
      %v2670 = vsub.s32 %v2667, %v2669
      %v2671 = vrot.slane %v2657, %v2670
      %v2672 = vcombine.low %v2616, %v2632
      %v2673 = vcombine.high %v2616, %v2632
      %v2675 = vunpack.c.l.s4 1934713408
      %v2676 = vunpack.c.0.s8 %v2675
      %v2677 = vlaneseq
      %v2678 = vshrl.u32 %v2677, 7
      %v2679 = vsub.s32 %v2676, %v2678
      %v2680 = vrot.slane %v2672, %v2679
      %v2682 = vunpack.c.l.s4 1934713408
      %v2683 = vunpack.c.0.s8 %v2682
      %v2684 = vlaneseq
      %v2685 = vshrl.u32 %v2684, 7
      %v2686 = vsub.s32 %v2683, %v2685
      %v2687 = vrot.slane %v2673, %v2686
      %v2688 = vcombine.low %v2623, %v2639
      %v2689 = vcombine.high %v2623, %v2639
      %v2691 = vunpack.c.l.s4 1934713408
      %v2692 = vunpack.c.0.s8 %v2691
      %v2693 = vlaneseq
      %v2694 = vshrl.u32 %v2693, 7
      %v2695 = vsub.s32 %v2692, %v2694
      %v2696 = vrot.slane %v2688, %v2695
      %v2698 = vunpack.c.l.s4 1934713408
      %v2699 = vunpack.c.0.s8 %v2698
      %v2700 = vlaneseq
      %v2701 = vshrl.u32 %v2700, 7
      %v2702 = vsub.s32 %v2699, %v2701
      %v2703 = vrot.slane %v2689, %v2702
      %v2704 = vcombine.low %v2648, %v2680
      %v2705 = vcombine.high %v2648, %v2680
      %v2706 = vcombine.low %v2655, %v2687
      %v2707 = vcombine.high %v2655, %v2687
      %v2708 = vcombine.low %v2664, %v2696
      %v2709 = vcombine.high %v2664, %v2696
      %v2710 = vcombine.low %v2671, %v2703
      %v2711 = vcombine.high %v2671, %v2703
      %v2712 = vcombine.low %v1229, %v1245
      %v2713 = vcombine.high %v1229, %v1245
      %v2715 = vunpack.c.l.s4 1983009808
      %v2716 = vunpack.c.0.s8 %v2715
      %v2717 = vlaneseq
      %v2718 = vshrl.u32 %v2717, 7
      %v2719 = vsub.s32 %v2716, %v2718
      %v2720 = vrot.slane %v2712, %v2719
      %v2722 = vunpack.c.l.s4 1983009808
      %v2723 = vunpack.c.0.s8 %v2722
      %v2724 = vlaneseq
      %v2725 = vshrl.u32 %v2724, 7
      %v2726 = vsub.s32 %v2723, %v2725
      %v2727 = vrot.slane %v2713, %v2726
      %v2728 = vcombine.low %v1237, %v1253
      %v2729 = vcombine.high %v1237, %v1253
      %v2731 = vunpack.c.l.s4 1983009808
      %v2732 = vunpack.c.0.s8 %v2731
      %v2733 = vlaneseq
      %v2734 = vshrl.u32 %v2733, 7
      %v2735 = vsub.s32 %v2732, %v2734
      %v2736 = vrot.slane %v2728, %v2735
      %v2738 = vunpack.c.l.s4 1983009808
      %v2739 = vunpack.c.0.s8 %v2738
      %v2740 = vlaneseq
      %v2741 = vshrl.u32 %v2740, 7
      %v2742 = vsub.s32 %v2739, %v2741
      %v2743 = vrot.slane %v2729, %v2742
      %v2744 = vcombine.low %v1261, %v1277
      %v2745 = vcombine.high %v1261, %v1277
      %v2747 = vunpack.c.l.s4 1983009808
      %v2748 = vunpack.c.0.s8 %v2747
      %v2749 = vlaneseq
      %v2750 = vshrl.u32 %v2749, 7
      %v2751 = vsub.s32 %v2748, %v2750
      %v2752 = vrot.slane %v2744, %v2751
      %v2754 = vunpack.c.l.s4 1983009808
      %v2755 = vunpack.c.0.s8 %v2754
      %v2756 = vlaneseq
      %v2757 = vshrl.u32 %v2756, 7
      %v2758 = vsub.s32 %v2755, %v2757
      %v2759 = vrot.slane %v2745, %v2758
      %v2760 = vcombine.low %v1269, %v1285
      %v2761 = vcombine.high %v1269, %v1285
      %v2763 = vunpack.c.l.s4 1983009808
      %v2764 = vunpack.c.0.s8 %v2763
      %v2765 = vlaneseq
      %v2766 = vshrl.u32 %v2765, 7
      %v2767 = vsub.s32 %v2764, %v2766
      %v2768 = vrot.slane %v2760, %v2767
      %v2770 = vunpack.c.l.s4 1983009808
      %v2771 = vunpack.c.0.s8 %v2770
      %v2772 = vlaneseq
      %v2773 = vshrl.u32 %v2772, 7
      %v2774 = vsub.s32 %v2771, %v2773
      %v2775 = vrot.slane %v2761, %v2774
      %v2776 = vcombine.low %v2720, %v2736
      %v2777 = vcombine.high %v2720, %v2736
      %v2779 = vunpack.c.l.s4 1934713408
      %v2780 = vunpack.c.0.s8 %v2779
      %v2781 = vlaneseq
      %v2782 = vshrl.u32 %v2781, 7
      %v2783 = vsub.s32 %v2780, %v2782
      %v2784 = vrot.slane %v2776, %v2783
      %v2786 = vunpack.c.l.s4 1934713408
      %v2787 = vunpack.c.0.s8 %v2786
      %v2788 = vlaneseq
      %v2789 = vshrl.u32 %v2788, 7
      %v2790 = vsub.s32 %v2787, %v2789
      %v2791 = vrot.slane %v2777, %v2790
      %v2792 = vcombine.low %v2727, %v2743
      %v2793 = vcombine.high %v2727, %v2743
      %v2795 = vunpack.c.l.s4 1934713408
      %v2796 = vunpack.c.0.s8 %v2795
      %v2797 = vlaneseq
      %v2798 = vshrl.u32 %v2797, 7
      %v2799 = vsub.s32 %v2796, %v2798
      %v2800 = vrot.slane %v2792, %v2799
      %v2802 = vunpack.c.l.s4 1934713408
      %v2803 = vunpack.c.0.s8 %v2802
      %v2804 = vlaneseq
      %v2805 = vshrl.u32 %v2804, 7
      %v2806 = vsub.s32 %v2803, %v2805
      %v2807 = vrot.slane %v2793, %v2806
      %v2808 = vcombine.low %v2752, %v2768
      %v2809 = vcombine.high %v2752, %v2768
      %v2811 = vunpack.c.l.s4 1934713408
      %v2812 = vunpack.c.0.s8 %v2811
      %v2813 = vlaneseq
      %v2814 = vshrl.u32 %v2813, 7
      %v2815 = vsub.s32 %v2812, %v2814
      %v2816 = vrot.slane %v2808, %v2815
      %v2818 = vunpack.c.l.s4 1934713408
      %v2819 = vunpack.c.0.s8 %v2818
      %v2820 = vlaneseq
      %v2821 = vshrl.u32 %v2820, 7
      %v2822 = vsub.s32 %v2819, %v2821
      %v2823 = vrot.slane %v2809, %v2822
      %v2824 = vcombine.low %v2759, %v2775
      %v2825 = vcombine.high %v2759, %v2775
      %v2827 = vunpack.c.l.s4 1934713408
      %v2828 = vunpack.c.0.s8 %v2827
      %v2829 = vlaneseq
      %v2830 = vshrl.u32 %v2829, 7
      %v2831 = vsub.s32 %v2828, %v2830
      %v2832 = vrot.slane %v2824, %v2831
      %v2834 = vunpack.c.l.s4 1934713408
      %v2835 = vunpack.c.0.s8 %v2834
      %v2836 = vlaneseq
      %v2837 = vshrl.u32 %v2836, 7
      %v2838 = vsub.s32 %v2835, %v2837
      %v2839 = vrot.slane %v2825, %v2838
      %v2840 = vcombine.low %v2784, %v2816
      %v2841 = vcombine.high %v2784, %v2816
      %v2842 = vcombine.low %v2791, %v2823
      %v2843 = vcombine.high %v2791, %v2823
      %v2844 = vcombine.low %v2800, %v2832
      %v2845 = vcombine.high %v2800, %v2832
      %v2846 = vcombine.low %v2807, %v2839
      %v2847 = vcombine.high %v2807, %v2839
      %v2848 = vcombine.low %v1293, %v1309
      %v2849 = vcombine.high %v1293, %v1309
      %v2851 = vunpack.c.l.s4 1983009808
      %v2852 = vunpack.c.0.s8 %v2851
      %v2853 = vlaneseq
      %v2854 = vshrl.u32 %v2853, 7
      %v2855 = vsub.s32 %v2852, %v2854
      %v2856 = vrot.slane %v2848, %v2855
      %v2858 = vunpack.c.l.s4 1983009808
      %v2859 = vunpack.c.0.s8 %v2858
      %v2860 = vlaneseq
      %v2861 = vshrl.u32 %v2860, 7
      %v2862 = vsub.s32 %v2859, %v2861
      %v2863 = vrot.slane %v2849, %v2862
      %v2864 = vcombine.low %v1301, %v1317
      %v2865 = vcombine.high %v1301, %v1317
      %v2867 = vunpack.c.l.s4 1983009808
      %v2868 = vunpack.c.0.s8 %v2867
      %v2869 = vlaneseq
      %v2870 = vshrl.u32 %v2869, 7
      %v2871 = vsub.s32 %v2868, %v2870
      %v2872 = vrot.slane %v2864, %v2871
      %v2874 = vunpack.c.l.s4 1983009808
      %v2875 = vunpack.c.0.s8 %v2874
      %v2876 = vlaneseq
      %v2877 = vshrl.u32 %v2876, 7
      %v2878 = vsub.s32 %v2875, %v2877
      %v2879 = vrot.slane %v2865, %v2878
      %v2880 = vcombine.low %v1325, %v1341
      %v2881 = vcombine.high %v1325, %v1341
      %v2883 = vunpack.c.l.s4 1983009808
      %v2884 = vunpack.c.0.s8 %v2883
      %v2885 = vlaneseq
      %v2886 = vshrl.u32 %v2885, 7
      %v2887 = vsub.s32 %v2884, %v2886
      %v2888 = vrot.slane %v2880, %v2887
      %v2890 = vunpack.c.l.s4 1983009808
      %v2891 = vunpack.c.0.s8 %v2890
      %v2892 = vlaneseq
      %v2893 = vshrl.u32 %v2892, 7
      %v2894 = vsub.s32 %v2891, %v2893
      %v2895 = vrot.slane %v2881, %v2894
      %v2896 = vcombine.low %v1333, %v1349
      %v2897 = vcombine.high %v1333, %v1349
      %v2899 = vunpack.c.l.s4 1983009808
      %v2900 = vunpack.c.0.s8 %v2899
      %v2901 = vlaneseq
      %v2902 = vshrl.u32 %v2901, 7
      %v2903 = vsub.s32 %v2900, %v2902
      %v2904 = vrot.slane %v2896, %v2903
      %v2906 = vunpack.c.l.s4 1983009808
      %v2907 = vunpack.c.0.s8 %v2906
      %v2908 = vlaneseq
      %v2909 = vshrl.u32 %v2908, 7
      %v2910 = vsub.s32 %v2907, %v2909
      %v2911 = vrot.slane %v2897, %v2910
      %v2912 = vcombine.low %v2856, %v2872
      %v2913 = vcombine.high %v2856, %v2872
      %v2915 = vunpack.c.l.s4 1934713408
      %v2916 = vunpack.c.0.s8 %v2915
      %v2917 = vlaneseq
      %v2918 = vshrl.u32 %v2917, 7
      %v2919 = vsub.s32 %v2916, %v2918
      %v2920 = vrot.slane %v2912, %v2919
      %v2922 = vunpack.c.l.s4 1934713408
      %v2923 = vunpack.c.0.s8 %v2922
      %v2924 = vlaneseq
      %v2925 = vshrl.u32 %v2924, 7
      %v2926 = vsub.s32 %v2923, %v2925
      %v2927 = vrot.slane %v2913, %v2926
      %v2928 = vcombine.low %v2863, %v2879
      %v2929 = vcombine.high %v2863, %v2879
      %v2931 = vunpack.c.l.s4 1934713408
      %v2932 = vunpack.c.0.s8 %v2931
      %v2933 = vlaneseq
      %v2934 = vshrl.u32 %v2933, 7
      %v2935 = vsub.s32 %v2932, %v2934
      %v2936 = vrot.slane %v2928, %v2935
      %v2938 = vunpack.c.l.s4 1934713408
      %v2939 = vunpack.c.0.s8 %v2938
      %v2940 = vlaneseq
      %v2941 = vshrl.u32 %v2940, 7
      %v2942 = vsub.s32 %v2939, %v2941
      %v2943 = vrot.slane %v2929, %v2942
      %v2944 = vcombine.low %v2888, %v2904
      %v2945 = vcombine.high %v2888, %v2904
      %v2947 = vunpack.c.l.s4 1934713408
      %v2948 = vunpack.c.0.s8 %v2947
      %v2949 = vlaneseq
      %v2950 = vshrl.u32 %v2949, 7
      %v2951 = vsub.s32 %v2948, %v2950
      %v2952 = vrot.slane %v2944, %v2951
      %v2954 = vunpack.c.l.s4 1934713408
      %v2955 = vunpack.c.0.s8 %v2954
      %v2956 = vlaneseq
      %v2957 = vshrl.u32 %v2956, 7
      %v2958 = vsub.s32 %v2955, %v2957
      %v2959 = vrot.slane %v2945, %v2958
      %v2960 = vcombine.low %v2895, %v2911
      %v2961 = vcombine.high %v2895, %v2911
      %v2963 = vunpack.c.l.s4 1934713408
      %v2964 = vunpack.c.0.s8 %v2963
      %v2965 = vlaneseq
      %v2966 = vshrl.u32 %v2965, 7
      %v2967 = vsub.s32 %v2964, %v2966
      %v2968 = vrot.slane %v2960, %v2967
      %v2970 = vunpack.c.l.s4 1934713408
      %v2971 = vunpack.c.0.s8 %v2970
      %v2972 = vlaneseq
      %v2973 = vshrl.u32 %v2972, 7
      %v2974 = vsub.s32 %v2971, %v2973
      %v2975 = vrot.slane %v2961, %v2974
      %v2976 = vcombine.low %v2920, %v2952
      %v2977 = vcombine.high %v2920, %v2952
      %v2978 = vcombine.low %v2927, %v2959
      %v2979 = vcombine.high %v2927, %v2959
      %v2980 = vcombine.low %v2936, %v2968
      %v2981 = vcombine.high %v2936, %v2968
      %v2982 = vcombine.low %v2943, %v2975
      %v2983 = vcombine.high %v2943, %v2975
      %v2984 = vcombine.low %v1230, %v1246
      %v2985 = vcombine.high %v1230, %v1246
      %v2987 = vunpack.c.l.s4 1983009808
      %v2988 = vunpack.c.0.s8 %v2987
      %v2989 = vlaneseq
      %v2990 = vshrl.u32 %v2989, 7
      %v2991 = vsub.s32 %v2988, %v2990
      %v2992 = vrot.slane %v2984, %v2991
      %v2994 = vunpack.c.l.s4 1983009808
      %v2995 = vunpack.c.0.s8 %v2994
      %v2996 = vlaneseq
      %v2997 = vshrl.u32 %v2996, 7
      %v2998 = vsub.s32 %v2995, %v2997
      %v2999 = vrot.slane %v2985, %v2998
      %v3000 = vcombine.low %v1238, %v1254
      %v3001 = vcombine.high %v1238, %v1254
      %v3003 = vunpack.c.l.s4 1983009808
      %v3004 = vunpack.c.0.s8 %v3003
      %v3005 = vlaneseq
      %v3006 = vshrl.u32 %v3005, 7
      %v3007 = vsub.s32 %v3004, %v3006
      %v3008 = vrot.slane %v3000, %v3007
      %v3010 = vunpack.c.l.s4 1983009808
      %v3011 = vunpack.c.0.s8 %v3010
      %v3012 = vlaneseq
      %v3013 = vshrl.u32 %v3012, 7
      %v3014 = vsub.s32 %v3011, %v3013
      %v3015 = vrot.slane %v3001, %v3014
      %v3016 = vcombine.low %v1262, %v1278
      %v3017 = vcombine.high %v1262, %v1278
      %v3019 = vunpack.c.l.s4 1983009808
      %v3020 = vunpack.c.0.s8 %v3019
      %v3021 = vlaneseq
      %v3022 = vshrl.u32 %v3021, 7
      %v3023 = vsub.s32 %v3020, %v3022
      %v3024 = vrot.slane %v3016, %v3023
      %v3026 = vunpack.c.l.s4 1983009808
      %v3027 = vunpack.c.0.s8 %v3026
      %v3028 = vlaneseq
      %v3029 = vshrl.u32 %v3028, 7
      %v3030 = vsub.s32 %v3027, %v3029
      %v3031 = vrot.slane %v3017, %v3030
      %v3032 = vcombine.low %v1270, %v1286
      %v3033 = vcombine.high %v1270, %v1286
      %v3035 = vunpack.c.l.s4 1983009808
      %v3036 = vunpack.c.0.s8 %v3035
      %v3037 = vlaneseq
      %v3038 = vshrl.u32 %v3037, 7
      %v3039 = vsub.s32 %v3036, %v3038
      %v3040 = vrot.slane %v3032, %v3039
      %v3042 = vunpack.c.l.s4 1983009808
      %v3043 = vunpack.c.0.s8 %v3042
      %v3044 = vlaneseq
      %v3045 = vshrl.u32 %v3044, 7
      %v3046 = vsub.s32 %v3043, %v3045
      %v3047 = vrot.slane %v3033, %v3046
      %v3048 = vcombine.low %v2992, %v3008
      %v3049 = vcombine.high %v2992, %v3008
      %v3051 = vunpack.c.l.s4 1934713408
      %v3052 = vunpack.c.0.s8 %v3051
      %v3053 = vlaneseq
      %v3054 = vshrl.u32 %v3053, 7
      %v3055 = vsub.s32 %v3052, %v3054
      %v3056 = vrot.slane %v3048, %v3055
      %v3058 = vunpack.c.l.s4 1934713408
      %v3059 = vunpack.c.0.s8 %v3058
      %v3060 = vlaneseq
      %v3061 = vshrl.u32 %v3060, 7
      %v3062 = vsub.s32 %v3059, %v3061
      %v3063 = vrot.slane %v3049, %v3062
      %v3064 = vcombine.low %v2999, %v3015
      %v3065 = vcombine.high %v2999, %v3015
      %v3067 = vunpack.c.l.s4 1934713408
      %v3068 = vunpack.c.0.s8 %v3067
      %v3069 = vlaneseq
      %v3070 = vshrl.u32 %v3069, 7
      %v3071 = vsub.s32 %v3068, %v3070
      %v3072 = vrot.slane %v3064, %v3071
      %v3074 = vunpack.c.l.s4 1934713408
      %v3075 = vunpack.c.0.s8 %v3074
      %v3076 = vlaneseq
      %v3077 = vshrl.u32 %v3076, 7
      %v3078 = vsub.s32 %v3075, %v3077
      %v3079 = vrot.slane %v3065, %v3078
      %v3080 = vcombine.low %v3024, %v3040
      %v3081 = vcombine.high %v3024, %v3040
      %v3083 = vunpack.c.l.s4 1934713408
      %v3084 = vunpack.c.0.s8 %v3083
      %v3085 = vlaneseq
      %v3086 = vshrl.u32 %v3085, 7
      %v3087 = vsub.s32 %v3084, %v3086
      %v3088 = vrot.slane %v3080, %v3087
      %v3090 = vunpack.c.l.s4 1934713408
      %v3091 = vunpack.c.0.s8 %v3090
      %v3092 = vlaneseq
      %v3093 = vshrl.u32 %v3092, 7
      %v3094 = vsub.s32 %v3091, %v3093
      %v3095 = vrot.slane %v3081, %v3094
      %v3096 = vcombine.low %v3031, %v3047
      %v3097 = vcombine.high %v3031, %v3047
      %v3099 = vunpack.c.l.s4 1934713408
      %v3100 = vunpack.c.0.s8 %v3099
      %v3101 = vlaneseq
      %v3102 = vshrl.u32 %v3101, 7
      %v3103 = vsub.s32 %v3100, %v3102
      %v3104 = vrot.slane %v3096, %v3103
      %v3106 = vunpack.c.l.s4 1934713408
      %v3107 = vunpack.c.0.s8 %v3106
      %v3108 = vlaneseq
      %v3109 = vshrl.u32 %v3108, 7
      %v3110 = vsub.s32 %v3107, %v3109
      %v3111 = vrot.slane %v3097, %v3110
      %v3112 = vcombine.low %v3056, %v3088
      %v3113 = vcombine.high %v3056, %v3088
      %v3114 = vcombine.low %v3063, %v3095
      %v3115 = vcombine.high %v3063, %v3095
      %v3116 = vcombine.low %v3072, %v3104
      %v3117 = vcombine.high %v3072, %v3104
      %v3118 = vcombine.low %v3079, %v3111
      %v3119 = vcombine.high %v3079, %v3111
      %v3120 = vcombine.low %v1294, %v1310
      %v3121 = vcombine.high %v1294, %v1310
      %v3123 = vunpack.c.l.s4 1983009808
      %v3124 = vunpack.c.0.s8 %v3123
      %v3125 = vlaneseq
      %v3126 = vshrl.u32 %v3125, 7
      %v3127 = vsub.s32 %v3124, %v3126
      %v3128 = vrot.slane %v3120, %v3127
      %v3130 = vunpack.c.l.s4 1983009808
      %v3131 = vunpack.c.0.s8 %v3130
      %v3132 = vlaneseq
      %v3133 = vshrl.u32 %v3132, 7
      %v3134 = vsub.s32 %v3131, %v3133
      %v3135 = vrot.slane %v3121, %v3134
      %v3136 = vcombine.low %v1302, %v1318
      %v3137 = vcombine.high %v1302, %v1318
      %v3139 = vunpack.c.l.s4 1983009808
      %v3140 = vunpack.c.0.s8 %v3139
      %v3141 = vlaneseq
      %v3142 = vshrl.u32 %v3141, 7
      %v3143 = vsub.s32 %v3140, %v3142
      %v3144 = vrot.slane %v3136, %v3143
      %v3146 = vunpack.c.l.s4 1983009808
      %v3147 = vunpack.c.0.s8 %v3146
      %v3148 = vlaneseq
      %v3149 = vshrl.u32 %v3148, 7
      %v3150 = vsub.s32 %v3147, %v3149
      %v3151 = vrot.slane %v3137, %v3150
      %v3152 = vcombine.low %v1326, %v1342
      %v3153 = vcombine.high %v1326, %v1342
      %v3155 = vunpack.c.l.s4 1983009808
      %v3156 = vunpack.c.0.s8 %v3155
      %v3157 = vlaneseq
      %v3158 = vshrl.u32 %v3157, 7
      %v3159 = vsub.s32 %v3156, %v3158
      %v3160 = vrot.slane %v3152, %v3159
      %v3162 = vunpack.c.l.s4 1983009808
      %v3163 = vunpack.c.0.s8 %v3162
      %v3164 = vlaneseq
      %v3165 = vshrl.u32 %v3164, 7
      %v3166 = vsub.s32 %v3163, %v3165
      %v3167 = vrot.slane %v3153, %v3166
      %v3168 = vcombine.low %v1334, %v1350
      %v3169 = vcombine.high %v1334, %v1350
      %v3171 = vunpack.c.l.s4 1983009808
      %v3172 = vunpack.c.0.s8 %v3171
      %v3173 = vlaneseq
      %v3174 = vshrl.u32 %v3173, 7
      %v3175 = vsub.s32 %v3172, %v3174
      %v3176 = vrot.slane %v3168, %v3175
      %v3178 = vunpack.c.l.s4 1983009808
      %v3179 = vunpack.c.0.s8 %v3178
      %v3180 = vlaneseq
      %v3181 = vshrl.u32 %v3180, 7
      %v3182 = vsub.s32 %v3179, %v3181
      %v3183 = vrot.slane %v3169, %v3182
      %v3184 = vcombine.low %v3128, %v3144
      %v3185 = vcombine.high %v3128, %v3144
      %v3187 = vunpack.c.l.s4 1934713408
      %v3188 = vunpack.c.0.s8 %v3187
      %v3189 = vlaneseq
      %v3190 = vshrl.u32 %v3189, 7
      %v3191 = vsub.s32 %v3188, %v3190
      %v3192 = vrot.slane %v3184, %v3191
      %v3194 = vunpack.c.l.s4 1934713408
      %v3195 = vunpack.c.0.s8 %v3194
      %v3196 = vlaneseq
      %v3197 = vshrl.u32 %v3196, 7
      %v3198 = vsub.s32 %v3195, %v3197
      %v3199 = vrot.slane %v3185, %v3198
      %v3200 = vcombine.low %v3135, %v3151
      %v3201 = vcombine.high %v3135, %v3151
      %v3203 = vunpack.c.l.s4 1934713408
      %v3204 = vunpack.c.0.s8 %v3203
      %v3205 = vlaneseq
      %v3206 = vshrl.u32 %v3205, 7
      %v3207 = vsub.s32 %v3204, %v3206
      %v3208 = vrot.slane %v3200, %v3207
      %v3210 = vunpack.c.l.s4 1934713408
      %v3211 = vunpack.c.0.s8 %v3210
      %v3212 = vlaneseq
      %v3213 = vshrl.u32 %v3212, 7
      %v3214 = vsub.s32 %v3211, %v3213
      %v3215 = vrot.slane %v3201, %v3214
      %v3216 = vcombine.low %v3160, %v3176
      %v3217 = vcombine.high %v3160, %v3176
      %v3219 = vunpack.c.l.s4 1934713408
      %v3220 = vunpack.c.0.s8 %v3219
      %v3221 = vlaneseq
      %v3222 = vshrl.u32 %v3221, 7
      %v3223 = vsub.s32 %v3220, %v3222
      %v3224 = vrot.slane %v3216, %v3223
      %v3226 = vunpack.c.l.s4 1934713408
      %v3227 = vunpack.c.0.s8 %v3226
      %v3228 = vlaneseq
      %v3229 = vshrl.u32 %v3228, 7
      %v3230 = vsub.s32 %v3227, %v3229
      %v3231 = vrot.slane %v3217, %v3230
      %v3232 = vcombine.low %v3167, %v3183
      %v3233 = vcombine.high %v3167, %v3183
      %v3235 = vunpack.c.l.s4 1934713408
      %v3236 = vunpack.c.0.s8 %v3235
      %v3237 = vlaneseq
      %v3238 = vshrl.u32 %v3237, 7
      %v3239 = vsub.s32 %v3236, %v3238
      %v3240 = vrot.slane %v3232, %v3239
      %v3242 = vunpack.c.l.s4 1934713408
      %v3243 = vunpack.c.0.s8 %v3242
      %v3244 = vlaneseq
      %v3245 = vshrl.u32 %v3244, 7
      %v3246 = vsub.s32 %v3243, %v3245
      %v3247 = vrot.slane %v3233, %v3246
      %v3248 = vcombine.low %v3192, %v3224
      %v3249 = vcombine.high %v3192, %v3224
      %v3250 = vcombine.low %v3199, %v3231
      %v3251 = vcombine.high %v3199, %v3231
      %v3252 = vcombine.low %v3208, %v3240
      %v3253 = vcombine.high %v3208, %v3240
      %v3254 = vcombine.low %v3215, %v3247
      %v3255 = vcombine.high %v3215, %v3247
      %v3256 = vcombine.low %v1231, %v1247
      %v3257 = vcombine.high %v1231, %v1247
      %v3259 = vunpack.c.l.s4 1983009808
      %v3260 = vunpack.c.0.s8 %v3259
      %v3261 = vlaneseq
      %v3262 = vshrl.u32 %v3261, 7
      %v3263 = vsub.s32 %v3260, %v3262
      %v3264 = vrot.slane %v3256, %v3263
      %v3266 = vunpack.c.l.s4 1983009808
      %v3267 = vunpack.c.0.s8 %v3266
      %v3268 = vlaneseq
      %v3269 = vshrl.u32 %v3268, 7
      %v3270 = vsub.s32 %v3267, %v3269
      %v3271 = vrot.slane %v3257, %v3270
      %v3272 = vcombine.low %v1239, %v1255
      %v3273 = vcombine.high %v1239, %v1255
      %v3275 = vunpack.c.l.s4 1983009808
      %v3276 = vunpack.c.0.s8 %v3275
      %v3277 = vlaneseq
      %v3278 = vshrl.u32 %v3277, 7
      %v3279 = vsub.s32 %v3276, %v3278
      %v3280 = vrot.slane %v3272, %v3279
      %v3282 = vunpack.c.l.s4 1983009808
      %v3283 = vunpack.c.0.s8 %v3282
      %v3284 = vlaneseq
      %v3285 = vshrl.u32 %v3284, 7
      %v3286 = vsub.s32 %v3283, %v3285
      %v3287 = vrot.slane %v3273, %v3286
      %v3288 = vcombine.low %v1263, %v1279
      %v3289 = vcombine.high %v1263, %v1279
      %v3291 = vunpack.c.l.s4 1983009808
      %v3292 = vunpack.c.0.s8 %v3291
      %v3293 = vlaneseq
      %v3294 = vshrl.u32 %v3293, 7
      %v3295 = vsub.s32 %v3292, %v3294
      %v3296 = vrot.slane %v3288, %v3295
      %v3298 = vunpack.c.l.s4 1983009808
      %v3299 = vunpack.c.0.s8 %v3298
      %v3300 = vlaneseq
      %v3301 = vshrl.u32 %v3300, 7
      %v3302 = vsub.s32 %v3299, %v3301
      %v3303 = vrot.slane %v3289, %v3302
      %v3304 = vcombine.low %v1271, %v1287
      %v3305 = vcombine.high %v1271, %v1287
      %v3307 = vunpack.c.l.s4 1983009808
      %v3308 = vunpack.c.0.s8 %v3307
      %v3309 = vlaneseq
      %v3310 = vshrl.u32 %v3309, 7
      %v3311 = vsub.s32 %v3308, %v3310
      %v3312 = vrot.slane %v3304, %v3311
      %v3314 = vunpack.c.l.s4 1983009808
      %v3315 = vunpack.c.0.s8 %v3314
      %v3316 = vlaneseq
      %v3317 = vshrl.u32 %v3316, 7
      %v3318 = vsub.s32 %v3315, %v3317
      %v3319 = vrot.slane %v3305, %v3318
      %v3320 = vcombine.low %v3264, %v3280
      %v3321 = vcombine.high %v3264, %v3280
      %v3323 = vunpack.c.l.s4 1934713408
      %v3324 = vunpack.c.0.s8 %v3323
      %v3325 = vlaneseq
      %v3326 = vshrl.u32 %v3325, 7
      %v3327 = vsub.s32 %v3324, %v3326
      %v3328 = vrot.slane %v3320, %v3327
      %v3330 = vunpack.c.l.s4 1934713408
      %v3331 = vunpack.c.0.s8 %v3330
      %v3332 = vlaneseq
      %v3333 = vshrl.u32 %v3332, 7
      %v3334 = vsub.s32 %v3331, %v3333
      %v3335 = vrot.slane %v3321, %v3334
      %v3336 = vcombine.low %v3271, %v3287
      %v3337 = vcombine.high %v3271, %v3287
      %v3339 = vunpack.c.l.s4 1934713408
      %v3340 = vunpack.c.0.s8 %v3339
      %v3341 = vlaneseq
      %v3342 = vshrl.u32 %v3341, 7
      %v3343 = vsub.s32 %v3340, %v3342
      %v3344 = vrot.slane %v3336, %v3343
      %v3346 = vunpack.c.l.s4 1934713408
      %v3347 = vunpack.c.0.s8 %v3346
      %v3348 = vlaneseq
      %v3349 = vshrl.u32 %v3348, 7
      %v3350 = vsub.s32 %v3347, %v3349
      %v3351 = vrot.slane %v3337, %v3350
      %v3352 = vcombine.low %v3296, %v3312
      %v3353 = vcombine.high %v3296, %v3312
      %v3355 = vunpack.c.l.s4 1934713408
      %v3356 = vunpack.c.0.s8 %v3355
      %v3357 = vlaneseq
      %v3358 = vshrl.u32 %v3357, 7
      %v3359 = vsub.s32 %v3356, %v3358
      %v3360 = vrot.slane %v3352, %v3359
      %v3362 = vunpack.c.l.s4 1934713408
      %v3363 = vunpack.c.0.s8 %v3362
      %v3364 = vlaneseq
      %v3365 = vshrl.u32 %v3364, 7
      %v3366 = vsub.s32 %v3363, %v3365
      %v3367 = vrot.slane %v3353, %v3366
      %v3368 = vcombine.low %v3303, %v3319
      %v3369 = vcombine.high %v3303, %v3319
      %v3371 = vunpack.c.l.s4 1934713408
      %v3372 = vunpack.c.0.s8 %v3371
      %v3373 = vlaneseq
      %v3374 = vshrl.u32 %v3373, 7
      %v3375 = vsub.s32 %v3372, %v3374
      %v3376 = vrot.slane %v3368, %v3375
      %v3378 = vunpack.c.l.s4 1934713408
      %v3379 = vunpack.c.0.s8 %v3378
      %v3380 = vlaneseq
      %v3381 = vshrl.u32 %v3380, 7
      %v3382 = vsub.s32 %v3379, %v3381
      %v3383 = vrot.slane %v3369, %v3382
      %v3384 = vcombine.low %v3328, %v3360
      %v3385 = vcombine.high %v3328, %v3360
      %v3386 = vcombine.low %v3335, %v3367
      %v3387 = vcombine.high %v3335, %v3367
      %v3388 = vcombine.low %v3344, %v3376
      %v3389 = vcombine.high %v3344, %v3376
      %v3390 = vcombine.low %v3351, %v3383
      %v3391 = vcombine.high %v3351, %v3383
      %v3392 = vcombine.low %v1295, %v1311
      %v3393 = vcombine.high %v1295, %v1311
      %v3395 = vunpack.c.l.s4 1983009808
      %v3396 = vunpack.c.0.s8 %v3395
      %v3397 = vlaneseq
      %v3398 = vshrl.u32 %v3397, 7
      %v3399 = vsub.s32 %v3396, %v3398
      %v3400 = vrot.slane %v3392, %v3399
      %v3402 = vunpack.c.l.s4 1983009808
      %v3403 = vunpack.c.0.s8 %v3402
      %v3404 = vlaneseq
      %v3405 = vshrl.u32 %v3404, 7
      %v3406 = vsub.s32 %v3403, %v3405
      %v3407 = vrot.slane %v3393, %v3406
      %v3408 = vcombine.low %v1303, %v1319
      %v3409 = vcombine.high %v1303, %v1319
      %v3411 = vunpack.c.l.s4 1983009808
      %v3412 = vunpack.c.0.s8 %v3411
      %v3413 = vlaneseq
      %v3414 = vshrl.u32 %v3413, 7
      %v3415 = vsub.s32 %v3412, %v3414
      %v3416 = vrot.slane %v3408, %v3415
      %v3418 = vunpack.c.l.s4 1983009808
      %v3419 = vunpack.c.0.s8 %v3418
      %v3420 = vlaneseq
      %v3421 = vshrl.u32 %v3420, 7
      %v3422 = vsub.s32 %v3419, %v3421
      %v3423 = vrot.slane %v3409, %v3422
      %v3424 = vcombine.low %v1327, %v1343
      %v3425 = vcombine.high %v1327, %v1343
      %v3427 = vunpack.c.l.s4 1983009808
      %v3428 = vunpack.c.0.s8 %v3427
      %v3429 = vlaneseq
      %v3430 = vshrl.u32 %v3429, 7
      %v3431 = vsub.s32 %v3428, %v3430
      %v3432 = vrot.slane %v3424, %v3431
      %v3434 = vunpack.c.l.s4 1983009808
      %v3435 = vunpack.c.0.s8 %v3434
      %v3436 = vlaneseq
      %v3437 = vshrl.u32 %v3436, 7
      %v3438 = vsub.s32 %v3435, %v3437
      %v3439 = vrot.slane %v3425, %v3438
      %v3440 = vcombine.low %v1335, %v1351
      %v3441 = vcombine.high %v1335, %v1351
      %v3443 = vunpack.c.l.s4 1983009808
      %v3444 = vunpack.c.0.s8 %v3443
      %v3445 = vlaneseq
      %v3446 = vshrl.u32 %v3445, 7
      %v3447 = vsub.s32 %v3444, %v3446
      %v3448 = vrot.slane %v3440, %v3447
      %v3450 = vunpack.c.l.s4 1983009808
      %v3451 = vunpack.c.0.s8 %v3450
      %v3452 = vlaneseq
      %v3453 = vshrl.u32 %v3452, 7
      %v3454 = vsub.s32 %v3451, %v3453
      %v3455 = vrot.slane %v3441, %v3454
      %v3456 = vcombine.low %v3400, %v3416
      %v3457 = vcombine.high %v3400, %v3416
      %v3459 = vunpack.c.l.s4 1934713408
      %v3460 = vunpack.c.0.s8 %v3459
      %v3461 = vlaneseq
      %v3462 = vshrl.u32 %v3461, 7
      %v3463 = vsub.s32 %v3460, %v3462
      %v3464 = vrot.slane %v3456, %v3463
      %v3466 = vunpack.c.l.s4 1934713408
      %v3467 = vunpack.c.0.s8 %v3466
      %v3468 = vlaneseq
      %v3469 = vshrl.u32 %v3468, 7
      %v3470 = vsub.s32 %v3467, %v3469
      %v3471 = vrot.slane %v3457, %v3470
      %v3472 = vcombine.low %v3407, %v3423
      %v3473 = vcombine.high %v3407, %v3423
      %v3475 = vunpack.c.l.s4 1934713408
      %v3476 = vunpack.c.0.s8 %v3475
      %v3477 = vlaneseq
      %v3478 = vshrl.u32 %v3477, 7
      %v3479 = vsub.s32 %v3476, %v3478
      %v3480 = vrot.slane %v3472, %v3479
      %v3482 = vunpack.c.l.s4 1934713408
      %v3483 = vunpack.c.0.s8 %v3482
      %v3484 = vlaneseq
      %v3485 = vshrl.u32 %v3484, 7
      %v3486 = vsub.s32 %v3483, %v3485
      %v3487 = vrot.slane %v3473, %v3486
      %v3488 = vcombine.low %v3432, %v3448
      %v3489 = vcombine.high %v3432, %v3448
      %v3491 = vunpack.c.l.s4 1934713408
      %v3492 = vunpack.c.0.s8 %v3491
      %v3493 = vlaneseq
      %v3494 = vshrl.u32 %v3493, 7
      %v3495 = vsub.s32 %v3492, %v3494
      %v3496 = vrot.slane %v3488, %v3495
      %v3498 = vunpack.c.l.s4 1934713408
      %v3499 = vunpack.c.0.s8 %v3498
      %v3500 = vlaneseq
      %v3501 = vshrl.u32 %v3500, 7
      %v3502 = vsub.s32 %v3499, %v3501
      %v3503 = vrot.slane %v3489, %v3502
      %v3504 = vcombine.low %v3439, %v3455
      %v3505 = vcombine.high %v3439, %v3455
      %v3507 = vunpack.c.l.s4 1934713408
      %v3508 = vunpack.c.0.s8 %v3507
      %v3509 = vlaneseq
      %v3510 = vshrl.u32 %v3509, 7
      %v3511 = vsub.s32 %v3508, %v3510
      %v3512 = vrot.slane %v3504, %v3511
      %v3514 = vunpack.c.l.s4 1934713408
      %v3515 = vunpack.c.0.s8 %v3514
      %v3516 = vlaneseq
      %v3517 = vshrl.u32 %v3516, 7
      %v3518 = vsub.s32 %v3515, %v3517
      %v3519 = vrot.slane %v3505, %v3518
      %v3520 = vcombine.low %v3464, %v3496
      %v3521 = vcombine.high %v3464, %v3496
      %v3522 = vcombine.low %v3471, %v3503
      %v3523 = vcombine.high %v3471, %v3503
      %v3524 = vcombine.low %v3480, %v3512
      %v3525 = vcombine.high %v3480, %v3512
      %v3526 = vcombine.low %v3487, %v3519
      %v3527 = vcombine.high %v3487, %v3519
      %3530 = vrot.lane.b32.xlu0 %v1481, 16
      %v3531 = vpop.permute.xlu0 %3530
      %3532 = vrot.lane.b32.xlu0 %v1617, 16
      %v3533 = vpop.permute.xlu0 %3532
      %3538 = vrot.lane.b32.xlu0 %v1482, 32
      %v3539 = vpop.permute.xlu0 %3538
      %3540 = vrot.lane.b32.xlu0 %v1618, 32
      %v3541 = vpop.permute.xlu0 %3540
      %3546 = vrot.lane.b32.xlu0 %v1483, 48
      %v3547 = vpop.permute.xlu0 %3546
      %3548 = vrot.lane.b32.xlu0 %v1619, 48
      %v3549 = vpop.permute.xlu0 %3548
      %3554 = vrot.lane.b32.xlu0 %v1484, 64
      %v3555 = vpop.permute.xlu0 %3554
      %3556 = vrot.lane.b32.xlu0 %v1620, 64
      %v3557 = vpop.permute.xlu0 %3556
      %3562 = vrot.lane.b32.xlu0 %v1485, 80
      %v3563 = vpop.permute.xlu0 %3562
      %3564 = vrot.lane.b32.xlu0 %v1621, 80
      %v3565 = vpop.permute.xlu0 %3564
      %3570 = vrot.lane.b32.xlu0 %v1486, 96
      %v3571 = vpop.permute.xlu0 %3570
      %3572 = vrot.lane.b32.xlu0 %v1622, 96
      %v3573 = vpop.permute.xlu0 %3572
      %3578 = vrot.lane.b32.xlu0 %v1487, 112
      %v3579 = vpop.permute.xlu0 %3578
      %3580 = vrot.lane.b32.xlu0 %v1623, 112
      %v3581 = vpop.permute.xlu0 %3580
      %3586 = vrot.lane.b32.xlu0 %v1753, 16
      %v3587 = vpop.permute.xlu0 %3586
      %3588 = vrot.lane.b32.xlu0 %v1889, 16
      %v3589 = vpop.permute.xlu0 %3588
      %3594 = vrot.lane.b32.xlu0 %v1754, 32
      %v3595 = vpop.permute.xlu0 %3594
      %3596 = vrot.lane.b32.xlu0 %v1890, 32
      %v3597 = vpop.permute.xlu0 %3596
      %3602 = vrot.lane.b32.xlu0 %v1755, 48
      %v3603 = vpop.permute.xlu0 %3602
      %3604 = vrot.lane.b32.xlu0 %v1891, 48
      %v3605 = vpop.permute.xlu0 %3604
      %3610 = vrot.lane.b32.xlu0 %v1756, 64
      %v3611 = vpop.permute.xlu0 %3610
      %3612 = vrot.lane.b32.xlu0 %v1892, 64
      %v3613 = vpop.permute.xlu0 %3612
      %3618 = vrot.lane.b32.xlu0 %v1757, 80
      %v3619 = vpop.permute.xlu0 %3618
      %3620 = vrot.lane.b32.xlu0 %v1893, 80
      %v3621 = vpop.permute.xlu0 %3620
      %3626 = vrot.lane.b32.xlu0 %v1758, 96
      %v3627 = vpop.permute.xlu0 %3626
      %3628 = vrot.lane.b32.xlu0 %v1894, 96
      %v3629 = vpop.permute.xlu0 %3628
      %3634 = vrot.lane.b32.xlu0 %v1759, 112
      %v3635 = vpop.permute.xlu0 %3634
      %3636 = vrot.lane.b32.xlu0 %v1895, 112
      %v3637 = vpop.permute.xlu0 %3636
      %3642 = vrot.lane.b32.xlu0 %v2025, 16
      %v3643 = vpop.permute.xlu0 %3642
      %3644 = vrot.lane.b32.xlu0 %v2161, 16
      %v3645 = vpop.permute.xlu0 %3644
      %3650 = vrot.lane.b32.xlu0 %v2026, 32
      %v3651 = vpop.permute.xlu0 %3650
      %3652 = vrot.lane.b32.xlu0 %v2162, 32
      %v3653 = vpop.permute.xlu0 %3652
      %3658 = vrot.lane.b32.xlu0 %v2027, 48
      %v3659 = vpop.permute.xlu0 %3658
      %3660 = vrot.lane.b32.xlu0 %v2163, 48
      %v3661 = vpop.permute.xlu0 %3660
      %3666 = vrot.lane.b32.xlu0 %v2028, 64
      %v3667 = vpop.permute.xlu0 %3666
      %3668 = vrot.lane.b32.xlu0 %v2164, 64
      %v3669 = vpop.permute.xlu0 %3668
      %3674 = vrot.lane.b32.xlu0 %v2029, 80
      %v3675 = vpop.permute.xlu0 %3674
      %3676 = vrot.lane.b32.xlu0 %v2165, 80
      %v3677 = vpop.permute.xlu0 %3676
      %3682 = vrot.lane.b32.xlu0 %v2030, 96
      %v3683 = vpop.permute.xlu0 %3682
      %3684 = vrot.lane.b32.xlu0 %v2166, 96
      %v3685 = vpop.permute.xlu0 %3684
      %3690 = vrot.lane.b32.xlu0 %v2031, 112
      %v3691 = vpop.permute.xlu0 %3690
      %3692 = vrot.lane.b32.xlu0 %v2167, 112
      %v3693 = vpop.permute.xlu0 %3692
      %3698 = vrot.lane.b32.xlu0 %v2297, 16
      %v3699 = vpop.permute.xlu0 %3698
      %3700 = vrot.lane.b32.xlu0 %v2433, 16
      %v3701 = vpop.permute.xlu0 %3700
      %3706 = vrot.lane.b32.xlu0 %v2298, 32
      %v3707 = vpop.permute.xlu0 %3706
      %3708 = vrot.lane.b32.xlu0 %v2434, 32
      %v3709 = vpop.permute.xlu0 %3708
      %3714 = vrot.lane.b32.xlu0 %v2299, 48
      %v3715 = vpop.permute.xlu0 %3714
      %3716 = vrot.lane.b32.xlu0 %v2435, 48
      %v3717 = vpop.permute.xlu0 %3716
      %3722 = vrot.lane.b32.xlu0 %v2300, 64
      %v3723 = vpop.permute.xlu0 %3722
      %3724 = vrot.lane.b32.xlu0 %v2436, 64
      %v3725 = vpop.permute.xlu0 %3724
      %3730 = vrot.lane.b32.xlu0 %v2301, 80
      %v3731 = vpop.permute.xlu0 %3730
      %3732 = vrot.lane.b32.xlu0 %v2437, 80
      %v3733 = vpop.permute.xlu0 %3732
      %3738 = vrot.lane.b32.xlu0 %v2302, 96
      %v3739 = vpop.permute.xlu0 %3738
      %3740 = vrot.lane.b32.xlu0 %v2438, 96
      %v3741 = vpop.permute.xlu0 %3740
      %3746 = vrot.lane.b32.xlu0 %v2303, 112
      %v3747 = vpop.permute.xlu0 %3746
      %3748 = vrot.lane.b32.xlu0 %v2439, 112
      %v3749 = vpop.permute.xlu0 %3748
      %3754 = vrot.lane.b32.xlu0 %v2569, 16
      %v3755 = vpop.permute.xlu0 %3754
      %3756 = vrot.lane.b32.xlu0 %v2705, 16
      %v3757 = vpop.permute.xlu0 %3756
      %3762 = vrot.lane.b32.xlu0 %v2570, 32
      %v3763 = vpop.permute.xlu0 %3762
      %3764 = vrot.lane.b32.xlu0 %v2706, 32
      %v3765 = vpop.permute.xlu0 %3764
      %3770 = vrot.lane.b32.xlu0 %v2571, 48
      %v3771 = vpop.permute.xlu0 %3770
      %3772 = vrot.lane.b32.xlu0 %v2707, 48
      %v3773 = vpop.permute.xlu0 %3772
      %3778 = vrot.lane.b32.xlu0 %v2572, 64
      %v3779 = vpop.permute.xlu0 %3778
      %3780 = vrot.lane.b32.xlu0 %v2708, 64
      %v3781 = vpop.permute.xlu0 %3780
      %3786 = vrot.lane.b32.xlu0 %v2573, 80
      %v3787 = vpop.permute.xlu0 %3786
      %3788 = vrot.lane.b32.xlu0 %v2709, 80
      %v3789 = vpop.permute.xlu0 %3788
      %3794 = vrot.lane.b32.xlu0 %v2574, 96
      %v3795 = vpop.permute.xlu0 %3794
      %3796 = vrot.lane.b32.xlu0 %v2710, 96
      %v3797 = vpop.permute.xlu0 %3796
      %3802 = vrot.lane.b32.xlu0 %v2575, 112
      %v3803 = vpop.permute.xlu0 %3802
      %3804 = vrot.lane.b32.xlu0 %v2711, 112
      %v3805 = vpop.permute.xlu0 %3804
      %3810 = vrot.lane.b32.xlu0 %v2841, 16
      %v3811 = vpop.permute.xlu0 %3810
      %3812 = vrot.lane.b32.xlu0 %v2977, 16
      %v3813 = vpop.permute.xlu0 %3812
      %3818 = vrot.lane.b32.xlu0 %v2842, 32
      %v3819 = vpop.permute.xlu0 %3818
      %3820 = vrot.lane.b32.xlu0 %v2978, 32
      %v3821 = vpop.permute.xlu0 %3820
      %3826 = vrot.lane.b32.xlu0 %v2843, 48
      %v3827 = vpop.permute.xlu0 %3826
      %3828 = vrot.lane.b32.xlu0 %v2979, 48
      %v3829 = vpop.permute.xlu0 %3828
      %3834 = vrot.lane.b32.xlu0 %v2844, 64
      %v3835 = vpop.permute.xlu0 %3834
      %3836 = vrot.lane.b32.xlu0 %v2980, 64
      %v3837 = vpop.permute.xlu0 %3836
      %3842 = vrot.lane.b32.xlu0 %v2845, 80
      %v3843 = vpop.permute.xlu0 %3842
      %3844 = vrot.lane.b32.xlu0 %v2981, 80
      %v3845 = vpop.permute.xlu0 %3844
      %3850 = vrot.lane.b32.xlu0 %v2846, 96
      %v3851 = vpop.permute.xlu0 %3850
      %3852 = vrot.lane.b32.xlu0 %v2982, 96
      %v3853 = vpop.permute.xlu0 %3852
      %3858 = vrot.lane.b32.xlu0 %v2847, 112
      %v3859 = vpop.permute.xlu0 %3858
      %3860 = vrot.lane.b32.xlu0 %v2983, 112
      %v3861 = vpop.permute.xlu0 %3860
      %3866 = vrot.lane.b32.xlu0 %v3113, 16
      %v3867 = vpop.permute.xlu0 %3866
      %3868 = vrot.lane.b32.xlu0 %v3249, 16
      %v3869 = vpop.permute.xlu0 %3868
      %3874 = vrot.lane.b32.xlu0 %v3114, 32
      %v3875 = vpop.permute.xlu0 %3874
      %3876 = vrot.lane.b32.xlu0 %v3250, 32
      %v3877 = vpop.permute.xlu0 %3876
      %3882 = vrot.lane.b32.xlu0 %v3115, 48
      %v3883 = vpop.permute.xlu0 %3882
      %3884 = vrot.lane.b32.xlu0 %v3251, 48
      %v3885 = vpop.permute.xlu0 %3884
      %3890 = vrot.lane.b32.xlu0 %v3116, 64
      %v3891 = vpop.permute.xlu0 %3890
      %3892 = vrot.lane.b32.xlu0 %v3252, 64
      %v3893 = vpop.permute.xlu0 %3892
      %3898 = vrot.lane.b32.xlu0 %v3117, 80
      %v3899 = vpop.permute.xlu0 %3898
      %3900 = vrot.lane.b32.xlu0 %v3253, 80
      %v3901 = vpop.permute.xlu0 %3900
      %3906 = vrot.lane.b32.xlu0 %v3118, 96
      %v3907 = vpop.permute.xlu0 %3906
      %3908 = vrot.lane.b32.xlu0 %v3254, 96
      %v3909 = vpop.permute.xlu0 %3908
      %3914 = vrot.lane.b32.xlu0 %v3119, 112
      %v3915 = vpop.permute.xlu0 %3914
      %3916 = vrot.lane.b32.xlu0 %v3255, 112
      %v3917 = vpop.permute.xlu0 %3916
      %3922 = vrot.lane.b32.xlu0 %v3385, 16
      %v3923 = vpop.permute.xlu0 %3922
      %3924 = vrot.lane.b32.xlu0 %v3521, 16
      %v3925 = vpop.permute.xlu0 %3924
      %3930 = vrot.lane.b32.xlu0 %v3386, 32
      %v3931 = vpop.permute.xlu0 %3930
      %3932 = vrot.lane.b32.xlu0 %v3522, 32
      %v3933 = vpop.permute.xlu0 %3932
      %3938 = vrot.lane.b32.xlu0 %v3387, 48
      %v3939 = vpop.permute.xlu0 %3938
      %3940 = vrot.lane.b32.xlu0 %v3523, 48
      %v3941 = vpop.permute.xlu0 %3940
      %3946 = vrot.lane.b32.xlu0 %v3388, 64
      %v3947 = vpop.permute.xlu0 %3946
      %3948 = vrot.lane.b32.xlu0 %v3524, 64
      %v3949 = vpop.permute.xlu0 %3948
      %3954 = vrot.lane.b32.xlu0 %v3389, 80
      %v3955 = vpop.permute.xlu0 %3954
      %3956 = vrot.lane.b32.xlu0 %v3525, 80
      %v3957 = vpop.permute.xlu0 %3956
      %3962 = vrot.lane.b32.xlu0 %v3390, 96
      %v3963 = vpop.permute.xlu0 %3962
      %3964 = vrot.lane.b32.xlu0 %v3526, 96
      %v3965 = vpop.permute.xlu0 %3964
      %3970 = vrot.lane.b32.xlu0 %v3391, 112
      %v3971 = vpop.permute.xlu0 %3970
      %3972 = vrot.lane.b32.xlu0 %v3527, 112
      %v3973 = vpop.permute.xlu0 %3972
      %vm3976 = vcmask 130048
      %v3977 = vsel %vm3976, %v1480, %v3531
      %v3978 = vsel %vm3976, %v1616, %v3533
      %vm3979 = vcmask 261120
      %v3980 = vsel %vm3979, %v3977, %v3539
      %v3981 = vsel %vm3979, %v3978, %v3541
      %vm3982 = vcmask 392192
      %v3983 = vsel %vm3982, %v3980, %v3547
      %v3984 = vsel %vm3982, %v3981, %v3549
      %vm3985 = vcmask 523264
      %v3986 = vsel %vm3985, %v3983, %v3555
      %v3987 = vsel %vm3985, %v3984, %v3557
      %vm3988 = vcmask 654336
      %v3989 = vsel %vm3988, %v3986, %v3563
      %v3990 = vsel %vm3988, %v3987, %v3565
      %vm3991 = vcmask 785408
      %v3992 = vsel %vm3991, %v3989, %v3571
      %v3993 = vsel %vm3991, %v3990, %v3573
      %vm3994 = vcmask 916480
      %v3995 = vsel %vm3994, %v3992, %v3579
      %v3996 = vsel %vm3994, %v3993, %v3581
      %v3997 = vsel %vm3976, %v1752, %v3587
      %v3998 = vsel %vm3976, %v1888, %v3589
      %v3999 = vsel %vm3979, %v3997, %v3595
      %v4000 = vsel %vm3979, %v3998, %v3597
      %v4001 = vsel %vm3982, %v3999, %v3603
      %v4002 = vsel %vm3982, %v4000, %v3605
      %v4003 = vsel %vm3985, %v4001, %v3611
      %v4004 = vsel %vm3985, %v4002, %v3613
      %v4005 = vsel %vm3988, %v4003, %v3619
      %v4006 = vsel %vm3988, %v4004, %v3621
      %v4007 = vsel %vm3991, %v4005, %v3627
      %v4008 = vsel %vm3991, %v4006, %v3629
      %v4009 = vsel %vm3994, %v4007, %v3635
      %v4010 = vsel %vm3994, %v4008, %v3637
      %v4011 = vsel %vm3976, %v2024, %v3643
      %v4012 = vsel %vm3976, %v2160, %v3645
      %v4013 = vsel %vm3979, %v4011, %v3651
      %v4014 = vsel %vm3979, %v4012, %v3653
      %v4015 = vsel %vm3982, %v4013, %v3659
      %v4016 = vsel %vm3982, %v4014, %v3661
      %v4017 = vsel %vm3985, %v4015, %v3667
      %v4018 = vsel %vm3985, %v4016, %v3669
      %v4019 = vsel %vm3988, %v4017, %v3675
      %v4020 = vsel %vm3988, %v4018, %v3677
      %v4021 = vsel %vm3991, %v4019, %v3683
      %v4022 = vsel %vm3991, %v4020, %v3685
      %v4023 = vsel %vm3994, %v4021, %v3691
      %v4024 = vsel %vm3994, %v4022, %v3693
      %v4025 = vsel %vm3976, %v2296, %v3699
      %v4026 = vsel %vm3976, %v2432, %v3701
      %v4027 = vsel %vm3979, %v4025, %v3707
      %v4028 = vsel %vm3979, %v4026, %v3709
      %v4029 = vsel %vm3982, %v4027, %v3715
      %v4030 = vsel %vm3982, %v4028, %v3717
      %v4031 = vsel %vm3985, %v4029, %v3723
      %v4032 = vsel %vm3985, %v4030, %v3725
      %v4033 = vsel %vm3988, %v4031, %v3731
      %v4034 = vsel %vm3988, %v4032, %v3733
      %v4035 = vsel %vm3991, %v4033, %v3739
      %v4036 = vsel %vm3991, %v4034, %v3741
      %v4037 = vsel %vm3994, %v4035, %v3747
      %v4038 = vsel %vm3994, %v4036, %v3749
      %v4039 = vsel %vm3976, %v2568, %v3755
      %v4040 = vsel %vm3976, %v2704, %v3757
      %v4041 = vsel %vm3979, %v4039, %v3763
      %v4042 = vsel %vm3979, %v4040, %v3765
      %v4043 = vsel %vm3982, %v4041, %v3771
      %v4044 = vsel %vm3982, %v4042, %v3773
      %v4045 = vsel %vm3985, %v4043, %v3779
      %v4046 = vsel %vm3985, %v4044, %v3781
      %v4047 = vsel %vm3988, %v4045, %v3787
      %v4048 = vsel %vm3988, %v4046, %v3789
      %v4049 = vsel %vm3991, %v4047, %v3795
      %v4050 = vsel %vm3991, %v4048, %v3797
      %v4051 = vsel %vm3994, %v4049, %v3803
      %v4052 = vsel %vm3994, %v4050, %v3805
      %v4053 = vsel %vm3976, %v2840, %v3811
      %v4054 = vsel %vm3976, %v2976, %v3813
      %v4055 = vsel %vm3979, %v4053, %v3819
      %v4056 = vsel %vm3979, %v4054, %v3821
      %v4057 = vsel %vm3982, %v4055, %v3827
      %v4058 = vsel %vm3982, %v4056, %v3829
      %v4059 = vsel %vm3985, %v4057, %v3835
      %v4060 = vsel %vm3985, %v4058, %v3837
      %v4061 = vsel %vm3988, %v4059, %v3843
      %v4062 = vsel %vm3988, %v4060, %v3845
      %v4063 = vsel %vm3991, %v4061, %v3851
      %v4064 = vsel %vm3991, %v4062, %v3853
      %v4065 = vsel %vm3994, %v4063, %v3859
      %v4066 = vsel %vm3994, %v4064, %v3861
      %v4067 = vsel %vm3976, %v3112, %v3867
      %v4068 = vsel %vm3976, %v3248, %v3869
      %v4069 = vsel %vm3979, %v4067, %v3875
      %v4070 = vsel %vm3979, %v4068, %v3877
      %v4071 = vsel %vm3982, %v4069, %v3883
      %v4072 = vsel %vm3982, %v4070, %v3885
      %v4073 = vsel %vm3985, %v4071, %v3891
      %v4074 = vsel %vm3985, %v4072, %v3893
      %v4075 = vsel %vm3988, %v4073, %v3899
      %v4076 = vsel %vm3988, %v4074, %v3901
      %v4077 = vsel %vm3991, %v4075, %v3907
      %v4078 = vsel %vm3991, %v4076, %v3909
      %v4079 = vsel %vm3994, %v4077, %v3915
      %v4080 = vsel %vm3994, %v4078, %v3917
      %v4081 = vsel %vm3976, %v3384, %v3923
      %v4082 = vsel %vm3976, %v3520, %v3925
      %v4083 = vsel %vm3979, %v4081, %v3931
      %v4084 = vsel %vm3979, %v4082, %v3933
      %v4085 = vsel %vm3982, %v4083, %v3939
      %v4086 = vsel %vm3982, %v4084, %v3941
      %v4087 = vsel %vm3985, %v4085, %v3947
      %v4088 = vsel %vm3985, %v4086, %v3949
      %v4089 = vsel %vm3988, %v4087, %v3955
      %v4090 = vsel %vm3988, %v4088, %v3957
      %v4091 = vsel %vm3991, %v4089, %v3963
      %v4092 = vsel %vm3991, %v4090, %v3965
      %v4093 = vsel %vm3994, %v4091, %v3971
      %v4094 = vsel %vm3994, %v4092, %v3973
      %vm4095 = vcmp.ge.f32.partialorder %v3995, 0.0
      %vm4096 = vcmp.ge.f32.partialorder %v4009, 0.0
      %vm4097 = vcmp.ge.f32.partialorder %v4023, 0.0
      %vm4098 = vcmp.ge.f32.partialorder %v4037, 0.0
      %vm4099 = vcmp.ge.f32.partialorder %v4051, 0.0
      %vm4100 = vcmp.ge.f32.partialorder %v4065, 0.0
      %vm4101 = vcmp.ge.f32.partialorder %v4079, 0.0
      %vm4102 = vcmp.ge.f32.partialorder %v4093, 0.0
      %vm4103 = vcmp.ge.f32.partialorder %v3996, 0.0
      %vm4104 = vcmp.ge.f32.partialorder %v4010, 0.0
      %vm4105 = vcmp.ge.f32.partialorder %v4024, 0.0
      %vm4106 = vcmp.ge.f32.partialorder %v4038, 0.0
      %vm4107 = vcmp.ge.f32.partialorder %v4052, 0.0
      %vm4108 = vcmp.ge.f32.partialorder %v4066, 0.0
      %vm4109 = vcmp.ge.f32.partialorder %v4080, 0.0
      %vm4110 = vcmp.ge.f32.partialorder %v4094, 0.0
      %v4111 = vmul.f32 %v3995, 0.33
      %v4112 = vmul.f32 %v4009, 0.33
      %v4113 = vmul.f32 %v4023, 0.33
      %v4114 = vmul.f32 %v4037, 0.33
      %v4115 = vmul.f32 %v4051, 0.33
      %v4116 = vmul.f32 %v4065, 0.33
      %v4117 = vmul.f32 %v4079, 0.33
      %v4118 = vmul.f32 %v4093, 0.33
      %v4119 = vmul.f32 %v3996, 0.33
      %v4120 = vmul.f32 %v4010, 0.33
      %v4121 = vmul.f32 %v4024, 0.33
      %v4122 = vmul.f32 %v4038, 0.33
      %v4123 = vmul.f32 %v4052, 0.33
      %v4124 = vmul.f32 %v4066, 0.33
      %v4125 = vmul.f32 %v4080, 0.33
      %v4126 = vmul.f32 %v4094, 0.33
      %v4127 = vsel %vm4095, %v3995, %v4111
      %v4128 = vsel %vm4096, %v4009, %v4112
      %v4129 = vsel %vm4097, %v4023, %v4113
      %v4130 = vsel %vm4098, %v4037, %v4114
      %v4131 = vsel %vm4099, %v4051, %v4115
      %v4132 = vsel %vm4100, %v4065, %v4116
      %v4133 = vsel %vm4101, %v4079, %v4117
      %v4134 = vsel %vm4102, %v4093, %v4118
      %v4135 = vsel %vm4103, %v3996, %v4119
      %v4136 = vsel %vm4104, %v4010, %v4120
      %v4137 = vsel %vm4105, %v4024, %v4121
      %v4138 = vsel %vm4106, %v4038, %v4122
      %v4139 = vsel %vm4107, %v4052, %v4123
      %v4140 = vsel %vm4108, %v4066, %v4124
      %v4141 = vsel %vm4109, %v4080, %v4125
      %v4142 = vsel %vm4110, %v4094, %v4126
      %4143 = vst [vmem:[%s170] sm:$0xff] %v4127
      %4144 = vst [vmem:[%s170 + $0x8] sm:$0xff] %v4128
      %4145 = vst [vmem:[%s170 + $0x10] sm:$0xff] %v4129
      %4146 = vst [vmem:[%s170 + $0x18] sm:$0xff] %v4130
      %4147 = vst [vmem:[%s170 + $0x20] sm:$0xff] %v4131
      %4148 = vst [vmem:[%s170 + $0x28] sm:$0xff] %v4132
      %4149 = vst [vmem:[%s170 + $0x30] sm:$0xff] %v4133
      %4150 = vst [vmem:[%s170 + $0x38] sm:$0xff] %v4134
      %4151 = vst [vmem:[%s170 + $0x40] sm:$0xff] %v4135
      %4152 = vst [vmem:[%s170 + $0x48] sm:$0xff] %v4136
      %4153 = vst [vmem:[%s170 + $0x50] sm:$0xff] %v4137
      %4154 = vst [vmem:[%s170 + $0x58] sm:$0xff] %v4138
      %4155 = vst [vmem:[%s170 + $0x60] sm:$0xff] %v4139
      %4156 = vst [vmem:[%s170 + $0x68] sm:$0xff] %v4140
      %4157 = vst [vmem:[%s170 + $0x70] sm:$0xff] %v4141
      %4158 = vst [vmem:[%s170 + $0x78] sm:$0xff] %v4142
      %p4159 = scmp.lt.s32.totalorder %s14, 1
      %s4160 = scalar_select %p4159, %s14, 1
      %s4161 = smul.addr %s4160, 16
      %s4162 = smul.addr %s4161, 8
      %s4163 = scalar_lea.vmem %s3, %s4162
      // Predicated region
      $region33: #{brainnetcnn_forward.4} parent=31 // pred_check
        %p4164 = pneg %p100
      $region34: #{brainnetcnn_forward.4} parent=31 // pred_check_branch
        %4166 = sbr.rel (%p4164) target = $region36
      $region35: #{brainnetcnn_forward.4} parent=31 // pred_region
        _
      $region36: #{brainnetcnn_forward.4} parent=31 // pred_fallthru
        _
    $region32: #{brainnetcnn_forward.4} parent=5 // pred_fallthru
      _
    %p4167 = scmp.le.s32.totalorder 2, %s9
    // Predicated region
    $region37: #{brainnetcnn_forward.4} parent=5 // pred_check
      %p4168 = pneg %p4167
    $region38: #{brainnetcnn_forward.4} parent=5 // pred_check_branch
      %4170 = sbr.rel (%p4168) target = $region40
    $region39: #{brainnetcnn_forward.4} parent=5 // pred_region
      %s4171 = ssub.s32 %s9, 2
      // Predicated region
      $region41: #{brainnetcnn_forward.4} parent=39 // pred_check
        %p4172 = pneg %p106
      $region42: #{brainnetcnn_forward.4} parent=39 // pred_check_branch
        %4174 = sbr.rel (%p4172) target = $region44
      $region43: #{brainnetcnn_forward.4} parent=39 // pred_region
        %p4175 = scmp.lt.s32.totalorder %s15, 1
        %s4176 = scalar_select %p4175, %s15, 1
        %s4177 = smul.addr %s4176, 16
        %s4178 = smul.addr %s4177, 8
        %s4179 = scalar_lea.vmem %s3, %s4178
      $region44: #{brainnetcnn_forward.4} parent=39 // pred_fallthru
        _
    $region40: #{brainnetcnn_forward.4} parent=5 // pred_fallthru
      _
  $region6: #{brainnetcnn_forward.4} parent=0 // loop_footer
    %s13 = sadd.s32 1, %s9
  $region7: #{brainnetcnn_forward.4} parent=0 // loop_footer_branch
    %8 = sbr.rel target = $region3
  $region8: #{brainnetcnn_forward.4} parent=0 // loop_exit
    _

// kernel: brainnetcnn_forward.3
$region0: #{brainnetcnn_forward.3}
  #allocation0 [shape = 'u32[]', space=smem, size = 0x4, offset = 0x4, fixed_abs, tag = 'smem constant byte address 0x4 - core index']
  #allocation1 [shape = 'u32[144,128]{1,0:T(1,128)}', space=vmem, size = 0x12000, scoped, tag = 'internal scratch']
  %s0 = inlined_call_operand.vmem [shape: f32[2,16,32], index: 0, kind: input, shape index: {}]
  %s1 = inlined_call_operand.vmem [shape: f32[32,64], index: 1, kind: input, shape index: {}]
  %s2 = inlined_call_operand.vmem [shape: f32[1,32], index: 2, kind: input, shape index: {}]
  %s3 = inlined_call_operand.vmem [shape: f32[2,16,1024], index: 3, kind: output, shape index: {}]
  %s4 = sld [smem:[#allocation0]]
  $region45: #{brainnetcnn_forward.3} parent=0
    _
  %s6 = ssub.s32 1, %s4
  %s7 = scalar_select 0, %s6, %s4
  loop: start=0, step=1, limit=4
  $region2: #{brainnetcnn_forward.3} parent=0 // loop_pre_header
    _
  $region3: #{brainnetcnn_forward.3} parent=0 // loop_header
    %s9 = sphi 0, %s13
    %p10 = scmp.ge.s32.totalorder %s9, 4
    %s19 = sphi 0, %s21
    %s22 = sphi 0, %s19
    %s23 = sphi 0, %s22
    %s39 = sphi 0, %s23
    %s43 = sphi 0, %s43
    %s45 = sphi 0, %s43
    %s46 = sphi 0, %s45
    %s60 = sphi 0, %s46
    %s64 = sphi 0, %s64
    %s66 = sphi 0, %s64
    %s67 = sphi 0, %s66
    %s81 = sphi 0, %s67
    %s87 = sphi 0, %s89
    %s90 = sphi 0, %s87
    %s91 = sphi 0, %s90
    %s107 = sphi 0, %s91
  $region4: #{brainnetcnn_forward.3} parent=0 // loop_header_branch
    %12 = sbr.rel (%p10) target = $region8
  $region5: #{brainnetcnn_forward.3} parent=0 // loop_body
    %s14 = ssub.s32 %s9, 1
    %s15 = ssub.s32 %s9, 2
    %s16 = sadd.s32 %s9, 1
    %s17 = ssub.s32 %s9, %s16
    %p18 = scmp.eq.s32.totalorder %s17, 0
    %s20 = sadd.s32 %s19, 1
    %s21 = scalar_select %p18, %s19, %s20
    %p24 = pneg %p18
    %p25 = scmp.eq.s32.totalorder %s9, 1
    %p26 = por %p24, %p25
    %p27 = scmp.ne.s32.totalorder %s19, %s22
    %p28 = scmp.eq.s32.totalorder %s9, 0
    %p29 = por %p27, %p28
    %p30 = scmp.ne.s32.totalorder %s19, %s22
    %p31 = scmp.eq.s32.totalorder %s14, 1
    %p32 = por %p30, %p31
    %p33 = scmp.ne.s32.totalorder %s22, %s23
    %p34 = scmp.eq.s32.totalorder %s14, 0
    %p35 = por %p33, %p34
    %p36 = scmp.ne.s32.totalorder %s22, %s23
    %p37 = scmp.eq.s32.totalorder %s15, 1
    %p38 = por %p36, %p37
    %p40 = scmp.ne.s32.totalorder %s23, %s39
    %p41 = scmp.eq.s32.totalorder %s15, 0
    %p42 = por %p40, %p41
    %s44 = sadd.s32 %s43, 1
    %p47 = scmp.eq.s32.totalorder %s9, 1
    %p48 = scmp.ne.s32.totalorder %s43, %s45
    %p49 = scmp.eq.s32.totalorder %s9, 0
    %p50 = por %p48, %p49
    %p51 = scmp.ne.s32.totalorder %s43, %s45
    %p52 = scmp.eq.s32.totalorder %s14, 1
    %p53 = por %p51, %p52
    %p54 = scmp.ne.s32.totalorder %s45, %s46
    %p55 = scmp.eq.s32.totalorder %s14, 0
    %p56 = por %p54, %p55
    %p57 = scmp.ne.s32.totalorder %s45, %s46
    %p58 = scmp.eq.s32.totalorder %s15, 1
    %p59 = por %p57, %p58
    %p61 = scmp.ne.s32.totalorder %s46, %s60
    %p62 = scmp.eq.s32.totalorder %s15, 0
    %p63 = por %p61, %p62
    %s65 = sadd.s32 %s64, 1
    %p68 = scmp.eq.s32.totalorder %s9, 1
    %p69 = scmp.ne.s32.totalorder %s64, %s66
    %p70 = scmp.eq.s32.totalorder %s9, 0
    %p71 = por %p69, %p70
    %p72 = scmp.ne.s32.totalorder %s64, %s66
    %p73 = scmp.eq.s32.totalorder %s14, 1
    %p74 = por %p72, %p73
    %p75 = scmp.ne.s32.totalorder %s66, %s67
    %p76 = scmp.eq.s32.totalorder %s14, 0
    %p77 = por %p75, %p76
    %p78 = scmp.ne.s32.totalorder %s66, %s67
    %p79 = scmp.eq.s32.totalorder %s15, 1
    %p80 = por %p78, %p79
    %p82 = scmp.ne.s32.totalorder %s67, %s81
    %p83 = scmp.eq.s32.totalorder %s15, 0
    %p84 = por %p82, %p83
    %s85 = ssub.s32 %s9, %s16
    %p86 = scmp.eq.s32.totalorder %s85, 0
    %s88 = sadd.s32 %s87, 1
    %s89 = scalar_select %p86, %s87, %s88
    %p92 = pneg %p86
    %p93 = scmp.eq.s32.totalorder %s9, 1
    %p94 = por %p92, %p93
    %p95 = scmp.ne.s32.totalorder %s87, %s90
    %p96 = scmp.eq.s32.totalorder %s9, 0
    %p97 = por %p95, %p96
    %p98 = scmp.ne.s32.totalorder %s87, %s90
    %p99 = scmp.eq.s32.totalorder %s14, 1
    %p100 = por %p98, %p99
    %p101 = scmp.ne.s32.totalorder %s90, %s91
    %p102 = scmp.eq.s32.totalorder %s14, 0
    %p103 = por %p101, %p102
    %p104 = scmp.ne.s32.totalorder %s90, %s91
    %p105 = scmp.eq.s32.totalorder %s15, 1
    %p106 = por %p104, %p105
    %p108 = scmp.ne.s32.totalorder %s91, %s107
    %p109 = scmp.eq.s32.totalorder %s15, 0
    %p110 = por %p108, %p109
    %p111 = scmp.le.s32.totalorder 1, %s9
    %p112 = scmp.lt.s32.totalorder %s9, 3
    %p113 = pnand %p111, %p112
    %p114 = pneg %p113
    // Predicated region
    $region9: #{brainnetcnn_forward.3} parent=5 // pred_check
      _
    $region10: #{brainnetcnn_forward.3} parent=5 // pred_check_branch
      %116 = sbr.rel (%p113) target = $region12
    $region11: #{brainnetcnn_forward.3} parent=5 // pred_region
      %s117 = ssub.s32 %s9, 1
      // Predicated region
      $region13: #{brainnetcnn_forward.3} parent=11 // pred_check
        %p118 = pneg %p56
      $region14: #{brainnetcnn_forward.3} parent=11 // pred_check_branch
        %120 = sbr.rel (%p118) target = $region16
      $region15: #{brainnetcnn_forward.3} parent=11 // pred_region
        _
      $region16: #{brainnetcnn_forward.3} parent=11 // pred_fallthru
        _
      // Predicated region
      $region17: #{brainnetcnn_forward.3} parent=11 // pred_check
        %p121 = pneg %p77
      $region18: #{brainnetcnn_forward.3} parent=11 // pred_check_branch
        %123 = sbr.rel (%p121) target = $region20
      $region19: #{brainnetcnn_forward.3} parent=11 // pred_region
        _
      $region20: #{brainnetcnn_forward.3} parent=11 // pred_fallthru
        _
    $region12: #{brainnetcnn_forward.3} parent=5 // pred_fallthru
      _
    %p124 = scmp.lt.s32.totalorder %s9, 2
    // Predicated region
    $region21: #{brainnetcnn_forward.3} parent=5 // pred_check
      %p125 = pneg %p124
    $region22: #{brainnetcnn_forward.3} parent=5 // pred_check_branch
      %127 = sbr.rel (%p125) target = $region24
    $region23: #{brainnetcnn_forward.3} parent=5 // pred_region
      // Predicated region
      $region25: #{brainnetcnn_forward.3} parent=23 // pred_check
        %p128 = pneg %p29
      $region26: #{brainnetcnn_forward.3} parent=23 // pred_check_branch
        %130 = sbr.rel (%p128) target = $region28
      $region27: #{brainnetcnn_forward.3} parent=23 // pred_region
        %p131 = scmp.lt.s32.totalorder %s9, 1
        %s132 = scalar_select %p131, %s9, 1
        %s133 = smul.addr %s132, 2
        %s134 = smul.addr %s133, 8
        %s135 = scalar_lea.vmem %s0, %s134
      $region28: #{brainnetcnn_forward.3} parent=23 // pred_fallthru
        _
    $region24: #{brainnetcnn_forward.3} parent=5 // pred_fallthru
      _
    %p136 = scmp.le.s32.totalorder 1, %s9
    %p137 = scmp.lt.s32.totalorder %s9, 3
    %p138 = pnand %p136, %p137
    %p139 = pneg %p138
    // Predicated region
    $region29: #{brainnetcnn_forward.3} parent=5 // pred_check
      _
    $region30: #{brainnetcnn_forward.3} parent=5 // pred_check_branch
      %141 = sbr.rel (%p138) target = $region32
    $region31: #{brainnetcnn_forward.3} parent=5 // pred_region
      %s142 = ssub.s32 %s9, 1
      %p143 = scmp.lt.s32.totalorder %s14, 1
      %s144 = scalar_select %p143, %s14, 1
      %s145 = smul.addr %s144, 2
      %s146 = smul.addr %s145, 8
      %s147 = scalar_lea.vmem %s0, %s146
      %p148 = pneg %p35
      %p149 = pneg %p32
      %p150 = pneg %p56
      %p151 = pneg %p53
      %p152 = pneg %p77
      %p153 = pneg %p74
      %p154 = pneg %p103
      %p155 = pneg %p100
      %p156 = scmp.lt.s32.totalorder %s14, 1
      %s157 = scalar_select %p156, %s14, 1
      %s158 = smul.addr %s157, 16
      %s159 = smul.addr %s158, 8
      %s160 = scalar_lea.vmem %s3, %s159
      %p161 = scmp.lt.s32.totalorder %s14, 1
      %s162 = scalar_select %p161, %s14, 1
      %s163 = smul.addr %s162, 2
      %s164 = smul.addr %s163, 8
      %s165 = scalar_lea.vmem %s0, %s164
      %p166 = scmp.lt.s32.totalorder %s14, 1
      %s167 = scalar_select %p166, %s14, 1
      %s168 = smul.addr %s167, 16
      %s169 = smul.addr %s168, 8
      %s170 = scalar_lea.vmem %s3, %s169
      %v171 = vld [vmem:[%s165] sm:$0xff]
      %v172 = vld [vmem:[%s165 + $0x8] sm:$0xff]
      %v173 = vld [vmem:[%s1] sm:$0xff]
      %v174 = vld [vmem:[%s1 + $0x8] sm:$0xff]
      %v175 = vld [vmem:[%s1 + $0x10] sm:$0xff]
      %v176 = vld [vmem:[%s1 + $0x18] sm:$0xff]
      %vm177 = vcmask 261120
      %v179 = vsel %vm177, %v171, 0
      %v182 = vsel %vm177, %v172, 0
      %184 = vmatprep.subr.mxu0 0.0
      %185 = vmatpush1.msra.mxu0 0.0
      %186 = vmatprep.subr.mxu0 0.0
      %187 = vmatpush1.msra.mxu0 0.0
      %188 = vmatprep.subr.mxu0 0.0
      %189 = vmatpush1.msra.mxu0 0.0
      %190 = vmatprep.subr.mxu0 0.0
      %191 = vmatpush1.msra.mxu0 0.0
      %192 = vmatprep.subr.mxu0 0.0
      %193 = vmatpush1.msra.mxu0 0.0
      %194 = vmatprep.subr.mxu0 0.0
      %195 = vmatpush1.msra.mxu0 0.0
      %196 = vmatprep.subr.mxu0 0.0
      %197 = vmatpush1.msra.mxu0 0.0
      %198 = vmatprep.subr.mxu0 0.0
      %199 = vmatpush1.msra.mxu0 0.0
      %200 = vmatprep.subr.mxu0 0.0
      %201 = vmatpush1.msra.mxu0 0.0
      %202 = vmatprep.subr.mxu0 0.0
      %203 = vmatpush1.msra.mxu0 0.0
      %204 = vmatprep.subr.mxu0 0.0
      %205 = vmatpush1.msra.mxu0 0.0
      %206 = vmatprep.subr.mxu0 0.0
      %207 = vmatpush1.msra.mxu0 0.0
      %208 = vmatprep.subr.mxu0 0.0
      %209 = vmatpush1.msra.mxu0 %v176
      %210 = vmatprep.subr.mxu0 0.0
      %211 = vmatpush1.msra.mxu0 %v175
      %212 = vmatprep.subr.mxu0 0.0
      %213 = vmatpush1.msra.mxu0 %v174
      %214 = vmatprep.subr.mxu0 0.0
      %215 = vmatpush1.msra.mxu0 %v173
      %216 = vmatprep.subr.mxu0 0.0
      %217 = vmatpush2.msra.mxu0 0.0
      %218 = vmatprep.subr.mxu0 0.0
      %219 = vmatpush2.msra.mxu0 0.0
      %220 = vmatprep.subr.mxu0 0.0
      %221 = vmatpush2.msra.mxu0 0.0
      %222 = vmatprep.subr.mxu0 0.0
      %223 = vmatpush2.msra.mxu0 0.0
      %224 = vmatprep.subr.mxu0 0.0
      %225 = vmatpush2.msra.mxu0 0.0
      %226 = vmatprep.subr.mxu0 0.0
      %227 = vmatpush2.msra.mxu0 0.0
      %228 = vmatprep.subr.mxu0 0.0
      %229 = vmatpush2.msra.mxu0 0.0
      %230 = vmatprep.subr.mxu0 0.0
      %231 = vmatpush2.msra.mxu0 0.0
      %232 = vmatprep.subr.mxu0 0.0
      %233 = vmatpush2.msra.mxu0 0.0
      %234 = vmatprep.subr.mxu0 0.0
      %235 = vmatpush2.msra.mxu0 0.0
      %236 = vmatprep.subr.mxu0 0.0
      %237 = vmatpush2.msra.mxu0 0.0
      %238 = vmatprep.subr.mxu0 0.0
      %239 = vmatpush2.msra.mxu0 0.0
      %240 = vmatprep.subr.mxu0 0.0
      %241 = vmatpush2.msra.mxu0 0.0
      %242 = vmatprep.subr.mxu0 0.0
      %243 = vmatpush2.msra.mxu0 0.0
      %244 = vmatprep.subr.mxu0 0.0
      %245 = vmatpush2.msra.mxu0 0.0
      %246 = vmatprep.subr.mxu0 0.0
      %247 = vmatpush2.msra.mxu0 0.0
      %248 = vmatprep.mubr.f32.mxu0 0.0
      %249 = vmatmul.mubr.f32.gmra.mxu0 %v179
      %v250 = vpop.f32.mrf.mxu0
      %v251 = vadd.f32 0.0, %v250
      %v252 = vpop.f32.mrf.mxu0
      %253 = vmatprep.mubr.f32.mxu0 0.0
      %254 = vmatmul.mubr.f32.gmra.mxu0 %v182
      %v255 = vpop.f32.mrf.mxu0
      %v256 = vadd.f32 0.0, %v255
      %v257 = vpop.f32.mrf.mxu0
      %258 = vdwg.mxu0
      %v259 = vld [vmem:[%s2] sm:$0x1]
      %v261 = vlaneseq
      %v262 = vshrl.u32 %v261, 7
      %v263 = vsub.s32 0, %v262
      %v264 = vrot.slane %v259, %v263
      %v266 = vadd.f32 %v251, %v264
      %v267 = vadd.f32 %v256, %v264
      %270 = vrot.lane.b32.xlu0 %v251, 96
      %v271 = vpop.permute.xlu0 %270
      %272 = vrot.lane.b32.xlu0 %v256, 96
      %v273 = vpop.permute.xlu0 %272
      %276 = vxpose.xlu0.b32.start [1/16] %v271, 128
      %277 = vxpose.xlu0.b32.cont [2/16] %v273, 128
      %278 = vxpose.xlu0.b32.cont [3/16] 0.0, 128
      %279 = vxpose.xlu0.b32.cont [4/16] 0.0, 128
      %280 = vxpose.xlu0.b32.cont [5/16] 0.0, 128
      %281 = vxpose.xlu0.b32.cont [6/16] 0.0, 128
      %282 = vxpose.xlu0.b32.cont [7/16] 0.0, 128
      %283 = vxpose.xlu0.b32.cont [8/16] 0.0, 128
      %284 = vxpose.xlu0.b32.cont [9/16] 0.0, 128
      %285 = vxpose.xlu0.b32.cont [10/16] 0.0, 128
      %286 = vxpose.xlu0.b32.cont [11/16] 0.0, 128
      %287 = vxpose.xlu0.b32.cont [12/16] 0.0, 128
      %288 = vxpose.xlu0.b32.cont [13/16] 0.0, 128
      %289 = vxpose.xlu0.b32.cont [14/16] 0.0, 128
      %290 = vxpose.xlu0.b32.cont [15/16] 0.0, 128
      %291 = vxpose.xlu0.b32.end [16/16] 0.0, 128
      %v292 = vpop.trf.xlu0
      %v293 = vpop.trf.xlu0
      %v294 = vpop.trf.xlu0
      %v295 = vpop.trf.xlu0
      %v296 = vpop.trf.xlu0
      %v297 = vpop.trf.xlu0
      %v298 = vpop.trf.xlu0
      %v299 = vpop.trf.xlu0
      %v300 = vpop.trf.xlu0
      %v301 = vpop.trf.xlu0
      %v302 = vpop.trf.xlu0
      %v303 = vpop.trf.xlu0
      %v304 = vpop.trf.xlu0
      %v305 = vpop.trf.xlu0
      %v306 = vpop.trf.xlu0
      %v307 = vpop.trf.xlu0
      %v308 = vlaneseq
      %v309 = vshrl.u32 %v308, 7
      %v310 = vsub.s32 0, %v309
      %v311 = vrot.slane %v266, %v310
      %313 = vbcast.lane.b32.xlu0 %v311, 256
      %v314 = vpop.permute.xlu0 %313
      %s316 = sor.u32 256, 8
      %317 = vbcast.lane.b32.xlu0 %v311, %s316
      %v318 = vpop.permute.xlu0 %317
      %s320 = sor.u32 256, 16
      %321 = vbcast.lane.b32.xlu0 %v311, %s320
      %v322 = vpop.permute.xlu0 %321
      %s324 = sor.u32 256, 24
      %325 = vbcast.lane.b32.xlu0 %v311, %s324
      %v326 = vpop.permute.xlu0 %325
      %v327 = vlaneseq
      %v328 = vshrl.u32 %v327, 7
      %v329 = vsub.s32 1, %v328
      %v330 = vrot.slane %v266, %v329
      %332 = vbcast.lane.b32.xlu0 %v330, 256
      %v333 = vpop.permute.xlu0 %332
      %s335 = sor.u32 256, 8
      %336 = vbcast.lane.b32.xlu0 %v330, %s335
      %v337 = vpop.permute.xlu0 %336
      %s339 = sor.u32 256, 16
      %340 = vbcast.lane.b32.xlu0 %v330, %s339
      %v341 = vpop.permute.xlu0 %340
      %s343 = sor.u32 256, 24
      %344 = vbcast.lane.b32.xlu0 %v330, %s343
      %v345 = vpop.permute.xlu0 %344
      %v346 = vlaneseq
      %v347 = vshrl.u32 %v346, 7
      %v348 = vsub.s32 2, %v347
      %v349 = vrot.slane %v266, %v348
      %351 = vbcast.lane.b32.xlu0 %v349, 256
      %v352 = vpop.permute.xlu0 %351
      %s354 = sor.u32 256, 8
      %355 = vbcast.lane.b32.xlu0 %v349, %s354
      %v356 = vpop.permute.xlu0 %355
      %s358 = sor.u32 256, 16
      %359 = vbcast.lane.b32.xlu0 %v349, %s358
      %v360 = vpop.permute.xlu0 %359
      %s362 = sor.u32 256, 24
      %363 = vbcast.lane.b32.xlu0 %v349, %s362
      %v364 = vpop.permute.xlu0 %363
      %v365 = vlaneseq
      %v366 = vshrl.u32 %v365, 7
      %v367 = vsub.s32 3, %v366
      %v368 = vrot.slane %v266, %v367
      %370 = vbcast.lane.b32.xlu0 %v368, 256
      %v371 = vpop.permute.xlu0 %370
      %s373 = sor.u32 256, 8
      %374 = vbcast.lane.b32.xlu0 %v368, %s373
      %v375 = vpop.permute.xlu0 %374
      %s377 = sor.u32 256, 16
      %378 = vbcast.lane.b32.xlu0 %v368, %s377
      %v379 = vpop.permute.xlu0 %378
      %s381 = sor.u32 256, 24
      %382 = vbcast.lane.b32.xlu0 %v368, %s381
      %v383 = vpop.permute.xlu0 %382
      %v384 = vlaneseq
      %v385 = vshrl.u32 %v384, 7
      %v386 = vsub.s32 4, %v385
      %v387 = vrot.slane %v266, %v386
      %389 = vbcast.lane.b32.xlu0 %v387, 256
      %v390 = vpop.permute.xlu0 %389
      %s392 = sor.u32 256, 8
      %393 = vbcast.lane.b32.xlu0 %v387, %s392
      %v394 = vpop.permute.xlu0 %393
      %s396 = sor.u32 256, 16
      %397 = vbcast.lane.b32.xlu0 %v387, %s396
      %v398 = vpop.permute.xlu0 %397
      %s400 = sor.u32 256, 24
      %401 = vbcast.lane.b32.xlu0 %v387, %s400
      %v402 = vpop.permute.xlu0 %401
      %v403 = vlaneseq
      %v404 = vshrl.u32 %v403, 7
      %v405 = vsub.s32 5, %v404
      %v406 = vrot.slane %v266, %v405
      %408 = vbcast.lane.b32.xlu0 %v406, 256
      %v409 = vpop.permute.xlu0 %408
      %s411 = sor.u32 256, 8
      %412 = vbcast.lane.b32.xlu0 %v406, %s411
      %v413 = vpop.permute.xlu0 %412
      %s415 = sor.u32 256, 16
      %416 = vbcast.lane.b32.xlu0 %v406, %s415
      %v417 = vpop.permute.xlu0 %416
      %s419 = sor.u32 256, 24
      %420 = vbcast.lane.b32.xlu0 %v406, %s419
      %v421 = vpop.permute.xlu0 %420
      %v422 = vlaneseq
      %v423 = vshrl.u32 %v422, 7
      %v424 = vsub.s32 6, %v423
      %v425 = vrot.slane %v266, %v424
      %427 = vbcast.lane.b32.xlu0 %v425, 256
      %v428 = vpop.permute.xlu0 %427
      %s430 = sor.u32 256, 8
      %431 = vbcast.lane.b32.xlu0 %v425, %s430
      %v432 = vpop.permute.xlu0 %431
      %s434 = sor.u32 256, 16
      %435 = vbcast.lane.b32.xlu0 %v425, %s434
      %v436 = vpop.permute.xlu0 %435
      %s438 = sor.u32 256, 24
      %439 = vbcast.lane.b32.xlu0 %v425, %s438
      %v440 = vpop.permute.xlu0 %439
      %v441 = vlaneseq
      %v442 = vshrl.u32 %v441, 7
      %v443 = vsub.s32 7, %v442
      %v444 = vrot.slane %v266, %v443
      %446 = vbcast.lane.b32.xlu0 %v444, 256
      %v447 = vpop.permute.xlu0 %446
      %s449 = sor.u32 256, 8
      %450 = vbcast.lane.b32.xlu0 %v444, %s449
      %v451 = vpop.permute.xlu0 %450
      %s453 = sor.u32 256, 16
      %454 = vbcast.lane.b32.xlu0 %v444, %s453
      %v455 = vpop.permute.xlu0 %454
      %s457 = sor.u32 256, 24
      %458 = vbcast.lane.b32.xlu0 %v444, %s457
      %v459 = vpop.permute.xlu0 %458
      %v460 = vlaneseq
      %v461 = vshrl.u32 %v460, 7
      %v462 = vsub.s32 0, %v461
      %v463 = vrot.slane %v267, %v462
      %465 = vbcast.lane.b32.xlu0 %v463, 256
      %v466 = vpop.permute.xlu0 %465
      %s468 = sor.u32 256, 8
      %469 = vbcast.lane.b32.xlu0 %v463, %s468
      %v470 = vpop.permute.xlu0 %469
      %s472 = sor.u32 256, 16
      %473 = vbcast.lane.b32.xlu0 %v463, %s472
      %v474 = vpop.permute.xlu0 %473
      %s476 = sor.u32 256, 24
      %477 = vbcast.lane.b32.xlu0 %v463, %s476
      %v478 = vpop.permute.xlu0 %477
      %v479 = vlaneseq
      %v480 = vshrl.u32 %v479, 7
      %v481 = vsub.s32 1, %v480
      %v482 = vrot.slane %v267, %v481
      %484 = vbcast.lane.b32.xlu0 %v482, 256
      %v485 = vpop.permute.xlu0 %484
      %s487 = sor.u32 256, 8
      %488 = vbcast.lane.b32.xlu0 %v482, %s487
      %v489 = vpop.permute.xlu0 %488
      %s491 = sor.u32 256, 16
      %492 = vbcast.lane.b32.xlu0 %v482, %s491
      %v493 = vpop.permute.xlu0 %492
      %s495 = sor.u32 256, 24
      %496 = vbcast.lane.b32.xlu0 %v482, %s495
      %v497 = vpop.permute.xlu0 %496
      %v498 = vlaneseq
      %v499 = vshrl.u32 %v498, 7
      %v500 = vsub.s32 2, %v499
      %v501 = vrot.slane %v267, %v500
      %503 = vbcast.lane.b32.xlu0 %v501, 256
      %v504 = vpop.permute.xlu0 %503
      %s506 = sor.u32 256, 8
      %507 = vbcast.lane.b32.xlu0 %v501, %s506
      %v508 = vpop.permute.xlu0 %507
      %s510 = sor.u32 256, 16
      %511 = vbcast.lane.b32.xlu0 %v501, %s510
      %v512 = vpop.permute.xlu0 %511
      %s514 = sor.u32 256, 24
      %515 = vbcast.lane.b32.xlu0 %v501, %s514
      %v516 = vpop.permute.xlu0 %515
      %v517 = vlaneseq
      %v518 = vshrl.u32 %v517, 7
      %v519 = vsub.s32 3, %v518
      %v520 = vrot.slane %v267, %v519
      %522 = vbcast.lane.b32.xlu0 %v520, 256
      %v523 = vpop.permute.xlu0 %522
      %s525 = sor.u32 256, 8
      %526 = vbcast.lane.b32.xlu0 %v520, %s525
      %v527 = vpop.permute.xlu0 %526
      %s529 = sor.u32 256, 16
      %530 = vbcast.lane.b32.xlu0 %v520, %s529
      %v531 = vpop.permute.xlu0 %530
      %s533 = sor.u32 256, 24
      %534 = vbcast.lane.b32.xlu0 %v520, %s533
      %v535 = vpop.permute.xlu0 %534
      %v536 = vlaneseq
      %v537 = vshrl.u32 %v536, 7
      %v538 = vsub.s32 4, %v537
      %v539 = vrot.slane %v267, %v538
      %541 = vbcast.lane.b32.xlu0 %v539, 256
      %v542 = vpop.permute.xlu0 %541
      %s544 = sor.u32 256, 8
      %545 = vbcast.lane.b32.xlu0 %v539, %s544
      %v546 = vpop.permute.xlu0 %545
      %s548 = sor.u32 256, 16
      %549 = vbcast.lane.b32.xlu0 %v539, %s548
      %v550 = vpop.permute.xlu0 %549
      %s552 = sor.u32 256, 24
      %553 = vbcast.lane.b32.xlu0 %v539, %s552
      %v554 = vpop.permute.xlu0 %553
      %v555 = vlaneseq
      %v556 = vshrl.u32 %v555, 7
      %v557 = vsub.s32 5, %v556
      %v558 = vrot.slane %v267, %v557
      %560 = vbcast.lane.b32.xlu0 %v558, 256
      %v561 = vpop.permute.xlu0 %560
      %s563 = sor.u32 256, 8
      %564 = vbcast.lane.b32.xlu0 %v558, %s563
      %v565 = vpop.permute.xlu0 %564
      %s567 = sor.u32 256, 16
      %568 = vbcast.lane.b32.xlu0 %v558, %s567
      %v569 = vpop.permute.xlu0 %568
      %s571 = sor.u32 256, 24
      %572 = vbcast.lane.b32.xlu0 %v558, %s571
      %v573 = vpop.permute.xlu0 %572
      %v574 = vlaneseq
      %v575 = vshrl.u32 %v574, 7
      %v576 = vsub.s32 6, %v575
      %v577 = vrot.slane %v267, %v576
      %579 = vbcast.lane.b32.xlu0 %v577, 256
      %v580 = vpop.permute.xlu0 %579
      %s582 = sor.u32 256, 8
      %583 = vbcast.lane.b32.xlu0 %v577, %s582
      %v584 = vpop.permute.xlu0 %583
      %s586 = sor.u32 256, 16
      %587 = vbcast.lane.b32.xlu0 %v577, %s586
      %v588 = vpop.permute.xlu0 %587
      %s590 = sor.u32 256, 24
      %591 = vbcast.lane.b32.xlu0 %v577, %s590
      %v592 = vpop.permute.xlu0 %591
      %v593 = vlaneseq
      %v594 = vshrl.u32 %v593, 7
      %v595 = vsub.s32 7, %v594
      %v596 = vrot.slane %v267, %v595
      %598 = vbcast.lane.b32.xlu0 %v596, 256
      %v599 = vpop.permute.xlu0 %598
      %s601 = sor.u32 256, 8
      %602 = vbcast.lane.b32.xlu0 %v596, %s601
      %v603 = vpop.permute.xlu0 %602
      %s605 = sor.u32 256, 16
      %606 = vbcast.lane.b32.xlu0 %v596, %s605
      %v607 = vpop.permute.xlu0 %606
      %s609 = sor.u32 256, 24
      %610 = vbcast.lane.b32.xlu0 %v596, %s609
      %v611 = vpop.permute.xlu0 %610
      %v612 = vadd.f32 %v314, %v292
      %v613 = vadd.f32 %v318, %v293
      %v614 = vadd.f32 %v322, %v294
      %v615 = vadd.f32 %v326, %v295
      %v616 = vadd.f32 %v333, %v292
      %v617 = vadd.f32 %v337, %v293
      %v618 = vadd.f32 %v341, %v294
      %v619 = vadd.f32 %v345, %v295
      %v620 = vadd.f32 %v352, %v292
      %v621 = vadd.f32 %v356, %v293
      %v622 = vadd.f32 %v360, %v294
      %v623 = vadd.f32 %v364, %v295
      %v624 = vadd.f32 %v371, %v292
      %v625 = vadd.f32 %v375, %v293
      %v626 = vadd.f32 %v379, %v294
      %v627 = vadd.f32 %v383, %v295
      %v628 = vadd.f32 %v390, %v292
      %v629 = vadd.f32 %v394, %v293
      %v630 = vadd.f32 %v398, %v294
      %v631 = vadd.f32 %v402, %v295
      %v632 = vadd.f32 %v409, %v292
      %v633 = vadd.f32 %v413, %v293
      %v634 = vadd.f32 %v417, %v294
      %v635 = vadd.f32 %v421, %v295
      %v636 = vadd.f32 %v428, %v292
      %v637 = vadd.f32 %v432, %v293
      %v638 = vadd.f32 %v436, %v294
      %v639 = vadd.f32 %v440, %v295
      %v640 = vadd.f32 %v447, %v292
      %v641 = vadd.f32 %v451, %v293
      %v642 = vadd.f32 %v455, %v294
      %v643 = vadd.f32 %v459, %v295
      %v644 = vadd.f32 %v466, %v292
      %v645 = vadd.f32 %v470, %v293
      %v646 = vadd.f32 %v474, %v294
      %v647 = vadd.f32 %v478, %v295
      %v648 = vadd.f32 %v485, %v292
      %v649 = vadd.f32 %v489, %v293
      %v650 = vadd.f32 %v493, %v294
      %v651 = vadd.f32 %v497, %v295
      %v652 = vadd.f32 %v504, %v292
      %v653 = vadd.f32 %v508, %v293
      %v654 = vadd.f32 %v512, %v294
      %v655 = vadd.f32 %v516, %v295
      %v656 = vadd.f32 %v523, %v292
      %v657 = vadd.f32 %v527, %v293
      %v658 = vadd.f32 %v531, %v294
      %v659 = vadd.f32 %v535, %v295
      %v660 = vadd.f32 %v542, %v292
      %v661 = vadd.f32 %v546, %v293
      %v662 = vadd.f32 %v550, %v294
      %v663 = vadd.f32 %v554, %v295
      %v664 = vadd.f32 %v561, %v292
      %v665 = vadd.f32 %v565, %v293
      %v666 = vadd.f32 %v569, %v294
      %v667 = vadd.f32 %v573, %v295
      %v668 = vadd.f32 %v580, %v292
      %v669 = vadd.f32 %v584, %v293
      %v670 = vadd.f32 %v588, %v294
      %v671 = vadd.f32 %v592, %v295
      %v672 = vadd.f32 %v599, %v292
      %v673 = vadd.f32 %v603, %v293
      %v674 = vadd.f32 %v607, %v294
      %v675 = vadd.f32 %v611, %v295
      %v676 = vcombine.low %v612, %v620
      %v677 = vcombine.high %v612, %v620
      %v679 = vunpack.c.l.s4 1983009808
      %v680 = vunpack.c.0.s8 %v679
      %v681 = vlaneseq
      %v682 = vshrl.u32 %v681, 7
      %v683 = vsub.s32 %v680, %v682
      %v684 = vrot.slane %v676, %v683
      %v686 = vunpack.c.l.s4 1983009808
      %v687 = vunpack.c.0.s8 %v686
      %v688 = vlaneseq
      %v689 = vshrl.u32 %v688, 7
      %v690 = vsub.s32 %v687, %v689
      %v691 = vrot.slane %v677, %v690
      %v692 = vcombine.low %v616, %v624
      %v693 = vcombine.high %v616, %v624
      %v695 = vunpack.c.l.s4 1983009808
      %v696 = vunpack.c.0.s8 %v695
      %v697 = vlaneseq
      %v698 = vshrl.u32 %v697, 7
      %v699 = vsub.s32 %v696, %v698
      %v700 = vrot.slane %v692, %v699
      %v702 = vunpack.c.l.s4 1983009808
      %v703 = vunpack.c.0.s8 %v702
      %v704 = vlaneseq
      %v705 = vshrl.u32 %v704, 7
      %v706 = vsub.s32 %v703, %v705
      %v707 = vrot.slane %v693, %v706
      %v708 = vcombine.low %v628, %v636
      %v709 = vcombine.high %v628, %v636
      %v711 = vunpack.c.l.s4 1983009808
      %v712 = vunpack.c.0.s8 %v711
      %v713 = vlaneseq
      %v714 = vshrl.u32 %v713, 7
      %v715 = vsub.s32 %v712, %v714
      %v716 = vrot.slane %v708, %v715
      %v718 = vunpack.c.l.s4 1983009808
      %v719 = vunpack.c.0.s8 %v718
      %v720 = vlaneseq
      %v721 = vshrl.u32 %v720, 7
      %v722 = vsub.s32 %v719, %v721
      %v723 = vrot.slane %v709, %v722
      %v724 = vcombine.low %v632, %v640
      %v725 = vcombine.high %v632, %v640
      %v727 = vunpack.c.l.s4 1983009808
      %v728 = vunpack.c.0.s8 %v727
      %v729 = vlaneseq
      %v730 = vshrl.u32 %v729, 7
      %v731 = vsub.s32 %v728, %v730
      %v732 = vrot.slane %v724, %v731
      %v734 = vunpack.c.l.s4 1983009808
      %v735 = vunpack.c.0.s8 %v734
      %v736 = vlaneseq
      %v737 = vshrl.u32 %v736, 7
      %v738 = vsub.s32 %v735, %v737
      %v739 = vrot.slane %v725, %v738
      %v740 = vcombine.low %v684, %v700
      %v741 = vcombine.high %v684, %v700
      %v743 = vunpack.c.l.s4 1934713408
      %v744 = vunpack.c.0.s8 %v743
      %v745 = vlaneseq
      %v746 = vshrl.u32 %v745, 7
      %v747 = vsub.s32 %v744, %v746
      %v748 = vrot.slane %v740, %v747
      %v750 = vunpack.c.l.s4 1934713408
      %v751 = vunpack.c.0.s8 %v750
      %v752 = vlaneseq
      %v753 = vshrl.u32 %v752, 7
      %v754 = vsub.s32 %v751, %v753
      %v755 = vrot.slane %v741, %v754
      %v756 = vcombine.low %v691, %v707
      %v757 = vcombine.high %v691, %v707
      %v759 = vunpack.c.l.s4 1934713408
      %v760 = vunpack.c.0.s8 %v759
      %v761 = vlaneseq
      %v762 = vshrl.u32 %v761, 7
      %v763 = vsub.s32 %v760, %v762
      %v764 = vrot.slane %v756, %v763
      %v766 = vunpack.c.l.s4 1934713408
      %v767 = vunpack.c.0.s8 %v766
      %v768 = vlaneseq
      %v769 = vshrl.u32 %v768, 7
      %v770 = vsub.s32 %v767, %v769
      %v771 = vrot.slane %v757, %v770
      %v772 = vcombine.low %v716, %v732
      %v773 = vcombine.high %v716, %v732
      %v775 = vunpack.c.l.s4 1934713408
      %v776 = vunpack.c.0.s8 %v775
      %v777 = vlaneseq
      %v778 = vshrl.u32 %v777, 7
      %v779 = vsub.s32 %v776, %v778
      %v780 = vrot.slane %v772, %v779
      %v782 = vunpack.c.l.s4 1934713408
      %v783 = vunpack.c.0.s8 %v782
      %v784 = vlaneseq
      %v785 = vshrl.u32 %v784, 7
      %v786 = vsub.s32 %v783, %v785
      %v787 = vrot.slane %v773, %v786
      %v788 = vcombine.low %v723, %v739
      %v789 = vcombine.high %v723, %v739
      %v791 = vunpack.c.l.s4 1934713408
      %v792 = vunpack.c.0.s8 %v791
      %v793 = vlaneseq
      %v794 = vshrl.u32 %v793, 7
      %v795 = vsub.s32 %v792, %v794
      %v796 = vrot.slane %v788, %v795
      %v798 = vunpack.c.l.s4 1934713408
      %v799 = vunpack.c.0.s8 %v798
      %v800 = vlaneseq
      %v801 = vshrl.u32 %v800, 7
      %v802 = vsub.s32 %v799, %v801
      %v803 = vrot.slane %v789, %v802
      %v804 = vcombine.low %v748, %v780
      %v805 = vcombine.high %v748, %v780
      %v806 = vcombine.low %v755, %v787
      %v807 = vcombine.high %v755, %v787
      %v808 = vcombine.low %v764, %v796
      %v809 = vcombine.high %v764, %v796
      %v810 = vcombine.low %v771, %v803
      %v811 = vcombine.high %v771, %v803
      %v812 = vcombine.low %v644, %v652
      %v813 = vcombine.high %v644, %v652
      %v815 = vunpack.c.l.s4 1983009808
      %v816 = vunpack.c.0.s8 %v815
      %v817 = vlaneseq
      %v818 = vshrl.u32 %v817, 7
      %v819 = vsub.s32 %v816, %v818
      %v820 = vrot.slane %v812, %v819
      %v822 = vunpack.c.l.s4 1983009808
      %v823 = vunpack.c.0.s8 %v822
      %v824 = vlaneseq
      %v825 = vshrl.u32 %v824, 7
      %v826 = vsub.s32 %v823, %v825
      %v827 = vrot.slane %v813, %v826
      %v828 = vcombine.low %v648, %v656
      %v829 = vcombine.high %v648, %v656
      %v831 = vunpack.c.l.s4 1983009808
      %v832 = vunpack.c.0.s8 %v831
      %v833 = vlaneseq
      %v834 = vshrl.u32 %v833, 7
      %v835 = vsub.s32 %v832, %v834
      %v836 = vrot.slane %v828, %v835
      %v838 = vunpack.c.l.s4 1983009808
      %v839 = vunpack.c.0.s8 %v838
      %v840 = vlaneseq
      %v841 = vshrl.u32 %v840, 7
      %v842 = vsub.s32 %v839, %v841
      %v843 = vrot.slane %v829, %v842
      %v844 = vcombine.low %v660, %v668
      %v845 = vcombine.high %v660, %v668
      %v847 = vunpack.c.l.s4 1983009808
      %v848 = vunpack.c.0.s8 %v847
      %v849 = vlaneseq
      %v850 = vshrl.u32 %v849, 7
      %v851 = vsub.s32 %v848, %v850
      %v852 = vrot.slane %v844, %v851
      %v854 = vunpack.c.l.s4 1983009808
      %v855 = vunpack.c.0.s8 %v854
      %v856 = vlaneseq
      %v857 = vshrl.u32 %v856, 7
      %v858 = vsub.s32 %v855, %v857
      %v859 = vrot.slane %v845, %v858
      %v860 = vcombine.low %v664, %v672
      %v861 = vcombine.high %v664, %v672
      %v863 = vunpack.c.l.s4 1983009808
      %v864 = vunpack.c.0.s8 %v863
      %v865 = vlaneseq
      %v866 = vshrl.u32 %v865, 7
      %v867 = vsub.s32 %v864, %v866
      %v868 = vrot.slane %v860, %v867
      %v870 = vunpack.c.l.s4 1983009808
      %v871 = vunpack.c.0.s8 %v870
      %v872 = vlaneseq
      %v873 = vshrl.u32 %v872, 7
      %v874 = vsub.s32 %v871, %v873
      %v875 = vrot.slane %v861, %v874
      %v876 = vcombine.low %v820, %v836
      %v877 = vcombine.high %v820, %v836
      %v879 = vunpack.c.l.s4 1934713408
      %v880 = vunpack.c.0.s8 %v879
      %v881 = vlaneseq
      %v882 = vshrl.u32 %v881, 7
      %v883 = vsub.s32 %v880, %v882
      %v884 = vrot.slane %v876, %v883
      %v886 = vunpack.c.l.s4 1934713408
      %v887 = vunpack.c.0.s8 %v886
      %v888 = vlaneseq
      %v889 = vshrl.u32 %v888, 7
      %v890 = vsub.s32 %v887, %v889
      %v891 = vrot.slane %v877, %v890
      %v892 = vcombine.low %v827, %v843
      %v893 = vcombine.high %v827, %v843
      %v895 = vunpack.c.l.s4 1934713408
      %v896 = vunpack.c.0.s8 %v895
      %v897 = vlaneseq
      %v898 = vshrl.u32 %v897, 7
      %v899 = vsub.s32 %v896, %v898
      %v900 = vrot.slane %v892, %v899
      %v902 = vunpack.c.l.s4 1934713408
      %v903 = vunpack.c.0.s8 %v902
      %v904 = vlaneseq
      %v905 = vshrl.u32 %v904, 7
      %v906 = vsub.s32 %v903, %v905
      %v907 = vrot.slane %v893, %v906
      %v908 = vcombine.low %v852, %v868
      %v909 = vcombine.high %v852, %v868
      %v911 = vunpack.c.l.s4 1934713408
      %v912 = vunpack.c.0.s8 %v911
      %v913 = vlaneseq
      %v914 = vshrl.u32 %v913, 7
      %v915 = vsub.s32 %v912, %v914
      %v916 = vrot.slane %v908, %v915
      %v918 = vunpack.c.l.s4 1934713408
      %v919 = vunpack.c.0.s8 %v918
      %v920 = vlaneseq
      %v921 = vshrl.u32 %v920, 7
      %v922 = vsub.s32 %v919, %v921
      %v923 = vrot.slane %v909, %v922
      %v924 = vcombine.low %v859, %v875
      %v925 = vcombine.high %v859, %v875
      %v927 = vunpack.c.l.s4 1934713408
      %v928 = vunpack.c.0.s8 %v927
      %v929 = vlaneseq
      %v930 = vshrl.u32 %v929, 7
      %v931 = vsub.s32 %v928, %v930
      %v932 = vrot.slane %v924, %v931
      %v934 = vunpack.c.l.s4 1934713408
      %v935 = vunpack.c.0.s8 %v934
      %v936 = vlaneseq
      %v937 = vshrl.u32 %v936, 7
      %v938 = vsub.s32 %v935, %v937
      %v939 = vrot.slane %v925, %v938
      %v940 = vcombine.low %v884, %v916
      %v941 = vcombine.high %v884, %v916
      %v942 = vcombine.low %v891, %v923
      %v943 = vcombine.high %v891, %v923
      %v944 = vcombine.low %v900, %v932
      %v945 = vcombine.high %v900, %v932
      %v946 = vcombine.low %v907, %v939
      %v947 = vcombine.high %v907, %v939
      %v948 = vcombine.low %v613, %v621
      %v949 = vcombine.high %v613, %v621
      %v951 = vunpack.c.l.s4 1983009808
      %v952 = vunpack.c.0.s8 %v951
      %v953 = vlaneseq
      %v954 = vshrl.u32 %v953, 7
      %v955 = vsub.s32 %v952, %v954
      %v956 = vrot.slane %v948, %v955
      %v958 = vunpack.c.l.s4 1983009808
      %v959 = vunpack.c.0.s8 %v958
      %v960 = vlaneseq
      %v961 = vshrl.u32 %v960, 7
      %v962 = vsub.s32 %v959, %v961
      %v963 = vrot.slane %v949, %v962
      %v964 = vcombine.low %v617, %v625
      %v965 = vcombine.high %v617, %v625
      %v967 = vunpack.c.l.s4 1983009808
      %v968 = vunpack.c.0.s8 %v967
      %v969 = vlaneseq
      %v970 = vshrl.u32 %v969, 7
      %v971 = vsub.s32 %v968, %v970
      %v972 = vrot.slane %v964, %v971
      %v974 = vunpack.c.l.s4 1983009808
      %v975 = vunpack.c.0.s8 %v974
      %v976 = vlaneseq
      %v977 = vshrl.u32 %v976, 7
      %v978 = vsub.s32 %v975, %v977
      %v979 = vrot.slane %v965, %v978
      %v980 = vcombine.low %v629, %v637
      %v981 = vcombine.high %v629, %v637
      %v983 = vunpack.c.l.s4 1983009808
      %v984 = vunpack.c.0.s8 %v983
      %v985 = vlaneseq
      %v986 = vshrl.u32 %v985, 7
      %v987 = vsub.s32 %v984, %v986
      %v988 = vrot.slane %v980, %v987
      %v990 = vunpack.c.l.s4 1983009808
      %v991 = vunpack.c.0.s8 %v990
      %v992 = vlaneseq
      %v993 = vshrl.u32 %v992, 7
      %v994 = vsub.s32 %v991, %v993
      %v995 = vrot.slane %v981, %v994
      %v996 = vcombine.low %v633, %v641
      %v997 = vcombine.high %v633, %v641
      %v999 = vunpack.c.l.s4 1983009808
      %v1000 = vunpack.c.0.s8 %v999
      %v1001 = vlaneseq
      %v1002 = vshrl.u32 %v1001, 7
      %v1003 = vsub.s32 %v1000, %v1002
      %v1004 = vrot.slane %v996, %v1003
      %v1006 = vunpack.c.l.s4 1983009808
      %v1007 = vunpack.c.0.s8 %v1006
      %v1008 = vlaneseq
      %v1009 = vshrl.u32 %v1008, 7
      %v1010 = vsub.s32 %v1007, %v1009
      %v1011 = vrot.slane %v997, %v1010
      %v1012 = vcombine.low %v956, %v972
      %v1013 = vcombine.high %v956, %v972
      %v1015 = vunpack.c.l.s4 1934713408
      %v1016 = vunpack.c.0.s8 %v1015
      %v1017 = vlaneseq
      %v1018 = vshrl.u32 %v1017, 7
      %v1019 = vsub.s32 %v1016, %v1018
      %v1020 = vrot.slane %v1012, %v1019
      %v1022 = vunpack.c.l.s4 1934713408
      %v1023 = vunpack.c.0.s8 %v1022
      %v1024 = vlaneseq
      %v1025 = vshrl.u32 %v1024, 7
      %v1026 = vsub.s32 %v1023, %v1025
      %v1027 = vrot.slane %v1013, %v1026
      %v1028 = vcombine.low %v963, %v979
      %v1029 = vcombine.high %v963, %v979
      %v1031 = vunpack.c.l.s4 1934713408
      %v1032 = vunpack.c.0.s8 %v1031
      %v1033 = vlaneseq
      %v1034 = vshrl.u32 %v1033, 7
      %v1035 = vsub.s32 %v1032, %v1034
      %v1036 = vrot.slane %v1028, %v1035
      %v1038 = vunpack.c.l.s4 1934713408
      %v1039 = vunpack.c.0.s8 %v1038
      %v1040 = vlaneseq
      %v1041 = vshrl.u32 %v1040, 7
      %v1042 = vsub.s32 %v1039, %v1041
      %v1043 = vrot.slane %v1029, %v1042
      %v1044 = vcombine.low %v988, %v1004
      %v1045 = vcombine.high %v988, %v1004
      %v1047 = vunpack.c.l.s4 1934713408
      %v1048 = vunpack.c.0.s8 %v1047
      %v1049 = vlaneseq
      %v1050 = vshrl.u32 %v1049, 7
      %v1051 = vsub.s32 %v1048, %v1050
      %v1052 = vrot.slane %v1044, %v1051
      %v1054 = vunpack.c.l.s4 1934713408
      %v1055 = vunpack.c.0.s8 %v1054
      %v1056 = vlaneseq
      %v1057 = vshrl.u32 %v1056, 7
      %v1058 = vsub.s32 %v1055, %v1057
      %v1059 = vrot.slane %v1045, %v1058
      %v1060 = vcombine.low %v995, %v1011
      %v1061 = vcombine.high %v995, %v1011
      %v1063 = vunpack.c.l.s4 1934713408
      %v1064 = vunpack.c.0.s8 %v1063
      %v1065 = vlaneseq
      %v1066 = vshrl.u32 %v1065, 7
      %v1067 = vsub.s32 %v1064, %v1066
      %v1068 = vrot.slane %v1060, %v1067
      %v1070 = vunpack.c.l.s4 1934713408
      %v1071 = vunpack.c.0.s8 %v1070
      %v1072 = vlaneseq
      %v1073 = vshrl.u32 %v1072, 7
      %v1074 = vsub.s32 %v1071, %v1073
      %v1075 = vrot.slane %v1061, %v1074
      %v1076 = vcombine.low %v1020, %v1052
      %v1077 = vcombine.high %v1020, %v1052
      %v1078 = vcombine.low %v1027, %v1059
      %v1079 = vcombine.high %v1027, %v1059
      %v1080 = vcombine.low %v1036, %v1068
      %v1081 = vcombine.high %v1036, %v1068
      %v1082 = vcombine.low %v1043, %v1075
      %v1083 = vcombine.high %v1043, %v1075
      %v1084 = vcombine.low %v645, %v653
      %v1085 = vcombine.high %v645, %v653
      %v1087 = vunpack.c.l.s4 1983009808
      %v1088 = vunpack.c.0.s8 %v1087
      %v1089 = vlaneseq
      %v1090 = vshrl.u32 %v1089, 7
      %v1091 = vsub.s32 %v1088, %v1090
      %v1092 = vrot.slane %v1084, %v1091
      %v1094 = vunpack.c.l.s4 1983009808
      %v1095 = vunpack.c.0.s8 %v1094
      %v1096 = vlaneseq
      %v1097 = vshrl.u32 %v1096, 7
      %v1098 = vsub.s32 %v1095, %v1097
      %v1099 = vrot.slane %v1085, %v1098
      %v1100 = vcombine.low %v649, %v657
      %v1101 = vcombine.high %v649, %v657
      %v1103 = vunpack.c.l.s4 1983009808
      %v1104 = vunpack.c.0.s8 %v1103
      %v1105 = vlaneseq
      %v1106 = vshrl.u32 %v1105, 7
      %v1107 = vsub.s32 %v1104, %v1106
      %v1108 = vrot.slane %v1100, %v1107
      %v1110 = vunpack.c.l.s4 1983009808
      %v1111 = vunpack.c.0.s8 %v1110
      %v1112 = vlaneseq
      %v1113 = vshrl.u32 %v1112, 7
      %v1114 = vsub.s32 %v1111, %v1113
      %v1115 = vrot.slane %v1101, %v1114
      %v1116 = vcombine.low %v661, %v669
      %v1117 = vcombine.high %v661, %v669
      %v1119 = vunpack.c.l.s4 1983009808
      %v1120 = vunpack.c.0.s8 %v1119
      %v1121 = vlaneseq
      %v1122 = vshrl.u32 %v1121, 7
      %v1123 = vsub.s32 %v1120, %v1122
      %v1124 = vrot.slane %v1116, %v1123
      %v1126 = vunpack.c.l.s4 1983009808
      %v1127 = vunpack.c.0.s8 %v1126
      %v1128 = vlaneseq
      %v1129 = vshrl.u32 %v1128, 7
      %v1130 = vsub.s32 %v1127, %v1129
      %v1131 = vrot.slane %v1117, %v1130
      %v1132 = vcombine.low %v665, %v673
      %v1133 = vcombine.high %v665, %v673
      %v1135 = vunpack.c.l.s4 1983009808
      %v1136 = vunpack.c.0.s8 %v1135
      %v1137 = vlaneseq
      %v1138 = vshrl.u32 %v1137, 7
      %v1139 = vsub.s32 %v1136, %v1138
      %v1140 = vrot.slane %v1132, %v1139
      %v1142 = vunpack.c.l.s4 1983009808
      %v1143 = vunpack.c.0.s8 %v1142
      %v1144 = vlaneseq
      %v1145 = vshrl.u32 %v1144, 7
      %v1146 = vsub.s32 %v1143, %v1145
      %v1147 = vrot.slane %v1133, %v1146
      %v1148 = vcombine.low %v1092, %v1108
      %v1149 = vcombine.high %v1092, %v1108
      %v1151 = vunpack.c.l.s4 1934713408
      %v1152 = vunpack.c.0.s8 %v1151
      %v1153 = vlaneseq
      %v1154 = vshrl.u32 %v1153, 7
      %v1155 = vsub.s32 %v1152, %v1154
      %v1156 = vrot.slane %v1148, %v1155
      %v1158 = vunpack.c.l.s4 1934713408
      %v1159 = vunpack.c.0.s8 %v1158
      %v1160 = vlaneseq
      %v1161 = vshrl.u32 %v1160, 7
      %v1162 = vsub.s32 %v1159, %v1161
      %v1163 = vrot.slane %v1149, %v1162
      %v1164 = vcombine.low %v1099, %v1115
      %v1165 = vcombine.high %v1099, %v1115
      %v1167 = vunpack.c.l.s4 1934713408
      %v1168 = vunpack.c.0.s8 %v1167
      %v1169 = vlaneseq
      %v1170 = vshrl.u32 %v1169, 7
      %v1171 = vsub.s32 %v1168, %v1170
      %v1172 = vrot.slane %v1164, %v1171
      %v1174 = vunpack.c.l.s4 1934713408
      %v1175 = vunpack.c.0.s8 %v1174
      %v1176 = vlaneseq
      %v1177 = vshrl.u32 %v1176, 7
      %v1178 = vsub.s32 %v1175, %v1177
      %v1179 = vrot.slane %v1165, %v1178
      %v1180 = vcombine.low %v1124, %v1140
      %v1181 = vcombine.high %v1124, %v1140
      %v1183 = vunpack.c.l.s4 1934713408
      %v1184 = vunpack.c.0.s8 %v1183
      %v1185 = vlaneseq
      %v1186 = vshrl.u32 %v1185, 7
      %v1187 = vsub.s32 %v1184, %v1186
      %v1188 = vrot.slane %v1180, %v1187
      %v1190 = vunpack.c.l.s4 1934713408
      %v1191 = vunpack.c.0.s8 %v1190
      %v1192 = vlaneseq
      %v1193 = vshrl.u32 %v1192, 7
      %v1194 = vsub.s32 %v1191, %v1193
      %v1195 = vrot.slane %v1181, %v1194
      %v1196 = vcombine.low %v1131, %v1147
      %v1197 = vcombine.high %v1131, %v1147
      %v1199 = vunpack.c.l.s4 1934713408
      %v1200 = vunpack.c.0.s8 %v1199
      %v1201 = vlaneseq
      %v1202 = vshrl.u32 %v1201, 7
      %v1203 = vsub.s32 %v1200, %v1202
      %v1204 = vrot.slane %v1196, %v1203
      %v1206 = vunpack.c.l.s4 1934713408
      %v1207 = vunpack.c.0.s8 %v1206
      %v1208 = vlaneseq
      %v1209 = vshrl.u32 %v1208, 7
      %v1210 = vsub.s32 %v1207, %v1209
      %v1211 = vrot.slane %v1197, %v1210
      %v1212 = vcombine.low %v1156, %v1188
      %v1213 = vcombine.high %v1156, %v1188
      %v1214 = vcombine.low %v1163, %v1195
      %v1215 = vcombine.high %v1163, %v1195
      %v1216 = vcombine.low %v1172, %v1204
      %v1217 = vcombine.high %v1172, %v1204
      %v1218 = vcombine.low %v1179, %v1211
      %v1219 = vcombine.high %v1179, %v1211
      %v1220 = vcombine.low %v614, %v622
      %v1221 = vcombine.high %v614, %v622
      %v1223 = vunpack.c.l.s4 1983009808
      %v1224 = vunpack.c.0.s8 %v1223
      %v1225 = vlaneseq
      %v1226 = vshrl.u32 %v1225, 7
      %v1227 = vsub.s32 %v1224, %v1226
      %v1228 = vrot.slane %v1220, %v1227
      %v1230 = vunpack.c.l.s4 1983009808
      %v1231 = vunpack.c.0.s8 %v1230
      %v1232 = vlaneseq
      %v1233 = vshrl.u32 %v1232, 7
      %v1234 = vsub.s32 %v1231, %v1233
      %v1235 = vrot.slane %v1221, %v1234
      %v1236 = vcombine.low %v618, %v626
      %v1237 = vcombine.high %v618, %v626
      %v1239 = vunpack.c.l.s4 1983009808
      %v1240 = vunpack.c.0.s8 %v1239
      %v1241 = vlaneseq
      %v1242 = vshrl.u32 %v1241, 7
      %v1243 = vsub.s32 %v1240, %v1242
      %v1244 = vrot.slane %v1236, %v1243
      %v1246 = vunpack.c.l.s4 1983009808
      %v1247 = vunpack.c.0.s8 %v1246
      %v1248 = vlaneseq
      %v1249 = vshrl.u32 %v1248, 7
      %v1250 = vsub.s32 %v1247, %v1249
      %v1251 = vrot.slane %v1237, %v1250
      %v1252 = vcombine.low %v630, %v638
      %v1253 = vcombine.high %v630, %v638
      %v1255 = vunpack.c.l.s4 1983009808
      %v1256 = vunpack.c.0.s8 %v1255
      %v1257 = vlaneseq
      %v1258 = vshrl.u32 %v1257, 7
      %v1259 = vsub.s32 %v1256, %v1258
      %v1260 = vrot.slane %v1252, %v1259
      %v1262 = vunpack.c.l.s4 1983009808
      %v1263 = vunpack.c.0.s8 %v1262
      %v1264 = vlaneseq
      %v1265 = vshrl.u32 %v1264, 7
      %v1266 = vsub.s32 %v1263, %v1265
      %v1267 = vrot.slane %v1253, %v1266
      %v1268 = vcombine.low %v634, %v642
      %v1269 = vcombine.high %v634, %v642
      %v1271 = vunpack.c.l.s4 1983009808
      %v1272 = vunpack.c.0.s8 %v1271
      %v1273 = vlaneseq
      %v1274 = vshrl.u32 %v1273, 7
      %v1275 = vsub.s32 %v1272, %v1274
      %v1276 = vrot.slane %v1268, %v1275
      %v1278 = vunpack.c.l.s4 1983009808
      %v1279 = vunpack.c.0.s8 %v1278
      %v1280 = vlaneseq
      %v1281 = vshrl.u32 %v1280, 7
      %v1282 = vsub.s32 %v1279, %v1281
      %v1283 = vrot.slane %v1269, %v1282
      %v1284 = vcombine.low %v1228, %v1244
      %v1285 = vcombine.high %v1228, %v1244
      %v1287 = vunpack.c.l.s4 1934713408
      %v1288 = vunpack.c.0.s8 %v1287
      %v1289 = vlaneseq
      %v1290 = vshrl.u32 %v1289, 7
      %v1291 = vsub.s32 %v1288, %v1290
      %v1292 = vrot.slane %v1284, %v1291
      %v1294 = vunpack.c.l.s4 1934713408
      %v1295 = vunpack.c.0.s8 %v1294
      %v1296 = vlaneseq
      %v1297 = vshrl.u32 %v1296, 7
      %v1298 = vsub.s32 %v1295, %v1297
      %v1299 = vrot.slane %v1285, %v1298
      %v1300 = vcombine.low %v1235, %v1251
      %v1301 = vcombine.high %v1235, %v1251
      %v1303 = vunpack.c.l.s4 1934713408
      %v1304 = vunpack.c.0.s8 %v1303
      %v1305 = vlaneseq
      %v1306 = vshrl.u32 %v1305, 7
      %v1307 = vsub.s32 %v1304, %v1306
      %v1308 = vrot.slane %v1300, %v1307
      %v1310 = vunpack.c.l.s4 1934713408
      %v1311 = vunpack.c.0.s8 %v1310
      %v1312 = vlaneseq
      %v1313 = vshrl.u32 %v1312, 7
      %v1314 = vsub.s32 %v1311, %v1313
      %v1315 = vrot.slane %v1301, %v1314
      %v1316 = vcombine.low %v1260, %v1276
      %v1317 = vcombine.high %v1260, %v1276
      %v1319 = vunpack.c.l.s4 1934713408
      %v1320 = vunpack.c.0.s8 %v1319
      %v1321 = vlaneseq
      %v1322 = vshrl.u32 %v1321, 7
      %v1323 = vsub.s32 %v1320, %v1322
      %v1324 = vrot.slane %v1316, %v1323
      %v1326 = vunpack.c.l.s4 1934713408
      %v1327 = vunpack.c.0.s8 %v1326
      %v1328 = vlaneseq
      %v1329 = vshrl.u32 %v1328, 7
      %v1330 = vsub.s32 %v1327, %v1329
      %v1331 = vrot.slane %v1317, %v1330
      %v1332 = vcombine.low %v1267, %v1283
      %v1333 = vcombine.high %v1267, %v1283
      %v1335 = vunpack.c.l.s4 1934713408
      %v1336 = vunpack.c.0.s8 %v1335
      %v1337 = vlaneseq
      %v1338 = vshrl.u32 %v1337, 7
      %v1339 = vsub.s32 %v1336, %v1338
      %v1340 = vrot.slane %v1332, %v1339
      %v1342 = vunpack.c.l.s4 1934713408
      %v1343 = vunpack.c.0.s8 %v1342
      %v1344 = vlaneseq
      %v1345 = vshrl.u32 %v1344, 7
      %v1346 = vsub.s32 %v1343, %v1345
      %v1347 = vrot.slane %v1333, %v1346
      %v1348 = vcombine.low %v1292, %v1324
      %v1349 = vcombine.high %v1292, %v1324
      %v1350 = vcombine.low %v1299, %v1331
      %v1351 = vcombine.high %v1299, %v1331
      %v1352 = vcombine.low %v1308, %v1340
      %v1353 = vcombine.high %v1308, %v1340
      %v1354 = vcombine.low %v1315, %v1347
      %v1355 = vcombine.high %v1315, %v1347
      %v1356 = vcombine.low %v646, %v654
      %v1357 = vcombine.high %v646, %v654
      %v1359 = vunpack.c.l.s4 1983009808
      %v1360 = vunpack.c.0.s8 %v1359
      %v1361 = vlaneseq
      %v1362 = vshrl.u32 %v1361, 7
      %v1363 = vsub.s32 %v1360, %v1362
      %v1364 = vrot.slane %v1356, %v1363
      %v1366 = vunpack.c.l.s4 1983009808
      %v1367 = vunpack.c.0.s8 %v1366
      %v1368 = vlaneseq
      %v1369 = vshrl.u32 %v1368, 7
      %v1370 = vsub.s32 %v1367, %v1369
      %v1371 = vrot.slane %v1357, %v1370
      %v1372 = vcombine.low %v650, %v658
      %v1373 = vcombine.high %v650, %v658
      %v1375 = vunpack.c.l.s4 1983009808
      %v1376 = vunpack.c.0.s8 %v1375
      %v1377 = vlaneseq
      %v1378 = vshrl.u32 %v1377, 7
      %v1379 = vsub.s32 %v1376, %v1378
      %v1380 = vrot.slane %v1372, %v1379
      %v1382 = vunpack.c.l.s4 1983009808
      %v1383 = vunpack.c.0.s8 %v1382
      %v1384 = vlaneseq
      %v1385 = vshrl.u32 %v1384, 7
      %v1386 = vsub.s32 %v1383, %v1385
      %v1387 = vrot.slane %v1373, %v1386
      %v1388 = vcombine.low %v662, %v670
      %v1389 = vcombine.high %v662, %v670
      %v1391 = vunpack.c.l.s4 1983009808
      %v1392 = vunpack.c.0.s8 %v1391
      %v1393 = vlaneseq
      %v1394 = vshrl.u32 %v1393, 7
      %v1395 = vsub.s32 %v1392, %v1394
      %v1396 = vrot.slane %v1388, %v1395
      %v1398 = vunpack.c.l.s4 1983009808
      %v1399 = vunpack.c.0.s8 %v1398
      %v1400 = vlaneseq
      %v1401 = vshrl.u32 %v1400, 7
      %v1402 = vsub.s32 %v1399, %v1401
      %v1403 = vrot.slane %v1389, %v1402
      %v1404 = vcombine.low %v666, %v674
      %v1405 = vcombine.high %v666, %v674
      %v1407 = vunpack.c.l.s4 1983009808
      %v1408 = vunpack.c.0.s8 %v1407
      %v1409 = vlaneseq
      %v1410 = vshrl.u32 %v1409, 7
      %v1411 = vsub.s32 %v1408, %v1410
      %v1412 = vrot.slane %v1404, %v1411
      %v1414 = vunpack.c.l.s4 1983009808
      %v1415 = vunpack.c.0.s8 %v1414
      %v1416 = vlaneseq
      %v1417 = vshrl.u32 %v1416, 7
      %v1418 = vsub.s32 %v1415, %v1417
      %v1419 = vrot.slane %v1405, %v1418
      %v1420 = vcombine.low %v1364, %v1380
      %v1421 = vcombine.high %v1364, %v1380
      %v1423 = vunpack.c.l.s4 1934713408
      %v1424 = vunpack.c.0.s8 %v1423
      %v1425 = vlaneseq
      %v1426 = vshrl.u32 %v1425, 7
      %v1427 = vsub.s32 %v1424, %v1426
      %v1428 = vrot.slane %v1420, %v1427
      %v1430 = vunpack.c.l.s4 1934713408
      %v1431 = vunpack.c.0.s8 %v1430
      %v1432 = vlaneseq
      %v1433 = vshrl.u32 %v1432, 7
      %v1434 = vsub.s32 %v1431, %v1433
      %v1435 = vrot.slane %v1421, %v1434
      %v1436 = vcombine.low %v1371, %v1387
      %v1437 = vcombine.high %v1371, %v1387
      %v1439 = vunpack.c.l.s4 1934713408
      %v1440 = vunpack.c.0.s8 %v1439
      %v1441 = vlaneseq
      %v1442 = vshrl.u32 %v1441, 7
      %v1443 = vsub.s32 %v1440, %v1442
      %v1444 = vrot.slane %v1436, %v1443
      %v1446 = vunpack.c.l.s4 1934713408
      %v1447 = vunpack.c.0.s8 %v1446
      %v1448 = vlaneseq
      %v1449 = vshrl.u32 %v1448, 7
      %v1450 = vsub.s32 %v1447, %v1449
      %v1451 = vrot.slane %v1437, %v1450
      %v1452 = vcombine.low %v1396, %v1412
      %v1453 = vcombine.high %v1396, %v1412
      %v1455 = vunpack.c.l.s4 1934713408
      %v1456 = vunpack.c.0.s8 %v1455
      %v1457 = vlaneseq
      %v1458 = vshrl.u32 %v1457, 7
      %v1459 = vsub.s32 %v1456, %v1458
      %v1460 = vrot.slane %v1452, %v1459
      %v1462 = vunpack.c.l.s4 1934713408
      %v1463 = vunpack.c.0.s8 %v1462
      %v1464 = vlaneseq
      %v1465 = vshrl.u32 %v1464, 7
      %v1466 = vsub.s32 %v1463, %v1465
      %v1467 = vrot.slane %v1453, %v1466
      %v1468 = vcombine.low %v1403, %v1419
      %v1469 = vcombine.high %v1403, %v1419
      %v1471 = vunpack.c.l.s4 1934713408
      %v1472 = vunpack.c.0.s8 %v1471
      %v1473 = vlaneseq
      %v1474 = vshrl.u32 %v1473, 7
      %v1475 = vsub.s32 %v1472, %v1474
      %v1476 = vrot.slane %v1468, %v1475
      %v1478 = vunpack.c.l.s4 1934713408
      %v1479 = vunpack.c.0.s8 %v1478
      %v1480 = vlaneseq
      %v1481 = vshrl.u32 %v1480, 7
      %v1482 = vsub.s32 %v1479, %v1481
      %v1483 = vrot.slane %v1469, %v1482
      %v1484 = vcombine.low %v1428, %v1460
      %v1485 = vcombine.high %v1428, %v1460
      %v1486 = vcombine.low %v1435, %v1467
      %v1487 = vcombine.high %v1435, %v1467
      %v1488 = vcombine.low %v1444, %v1476
      %v1489 = vcombine.high %v1444, %v1476
      %v1490 = vcombine.low %v1451, %v1483
      %v1491 = vcombine.high %v1451, %v1483
      %v1492 = vcombine.low %v615, %v623
      %v1493 = vcombine.high %v615, %v623
      %v1495 = vunpack.c.l.s4 1983009808
      %v1496 = vunpack.c.0.s8 %v1495
      %v1497 = vlaneseq
      %v1498 = vshrl.u32 %v1497, 7
      %v1499 = vsub.s32 %v1496, %v1498
      %v1500 = vrot.slane %v1492, %v1499
      %v1502 = vunpack.c.l.s4 1983009808
      %v1503 = vunpack.c.0.s8 %v1502
      %v1504 = vlaneseq
      %v1505 = vshrl.u32 %v1504, 7
      %v1506 = vsub.s32 %v1503, %v1505
      %v1507 = vrot.slane %v1493, %v1506
      %v1508 = vcombine.low %v619, %v627
      %v1509 = vcombine.high %v619, %v627
      %v1511 = vunpack.c.l.s4 1983009808
      %v1512 = vunpack.c.0.s8 %v1511
      %v1513 = vlaneseq
      %v1514 = vshrl.u32 %v1513, 7
      %v1515 = vsub.s32 %v1512, %v1514
      %v1516 = vrot.slane %v1508, %v1515
      %v1518 = vunpack.c.l.s4 1983009808
      %v1519 = vunpack.c.0.s8 %v1518
      %v1520 = vlaneseq
      %v1521 = vshrl.u32 %v1520, 7
      %v1522 = vsub.s32 %v1519, %v1521
      %v1523 = vrot.slane %v1509, %v1522
      %v1524 = vcombine.low %v631, %v639
      %v1525 = vcombine.high %v631, %v639
      %v1527 = vunpack.c.l.s4 1983009808
      %v1528 = vunpack.c.0.s8 %v1527
      %v1529 = vlaneseq
      %v1530 = vshrl.u32 %v1529, 7
      %v1531 = vsub.s32 %v1528, %v1530
      %v1532 = vrot.slane %v1524, %v1531
      %v1534 = vunpack.c.l.s4 1983009808
      %v1535 = vunpack.c.0.s8 %v1534
      %v1536 = vlaneseq
      %v1537 = vshrl.u32 %v1536, 7
      %v1538 = vsub.s32 %v1535, %v1537
      %v1539 = vrot.slane %v1525, %v1538
      %v1540 = vcombine.low %v635, %v643
      %v1541 = vcombine.high %v635, %v643
      %v1543 = vunpack.c.l.s4 1983009808
      %v1544 = vunpack.c.0.s8 %v1543
      %v1545 = vlaneseq
      %v1546 = vshrl.u32 %v1545, 7
      %v1547 = vsub.s32 %v1544, %v1546
      %v1548 = vrot.slane %v1540, %v1547
      %v1550 = vunpack.c.l.s4 1983009808
      %v1551 = vunpack.c.0.s8 %v1550
      %v1552 = vlaneseq
      %v1553 = vshrl.u32 %v1552, 7
      %v1554 = vsub.s32 %v1551, %v1553
      %v1555 = vrot.slane %v1541, %v1554
      %v1556 = vcombine.low %v1500, %v1516
      %v1557 = vcombine.high %v1500, %v1516
      %v1559 = vunpack.c.l.s4 1934713408
      %v1560 = vunpack.c.0.s8 %v1559
      %v1561 = vlaneseq
      %v1562 = vshrl.u32 %v1561, 7
      %v1563 = vsub.s32 %v1560, %v1562
      %v1564 = vrot.slane %v1556, %v1563
      %v1566 = vunpack.c.l.s4 1934713408
      %v1567 = vunpack.c.0.s8 %v1566
      %v1568 = vlaneseq
      %v1569 = vshrl.u32 %v1568, 7
      %v1570 = vsub.s32 %v1567, %v1569
      %v1571 = vrot.slane %v1557, %v1570
      %v1572 = vcombine.low %v1507, %v1523
      %v1573 = vcombine.high %v1507, %v1523
      %v1575 = vunpack.c.l.s4 1934713408
      %v1576 = vunpack.c.0.s8 %v1575
      %v1577 = vlaneseq
      %v1578 = vshrl.u32 %v1577, 7
      %v1579 = vsub.s32 %v1576, %v1578
      %v1580 = vrot.slane %v1572, %v1579
      %v1582 = vunpack.c.l.s4 1934713408
      %v1583 = vunpack.c.0.s8 %v1582
      %v1584 = vlaneseq
      %v1585 = vshrl.u32 %v1584, 7
      %v1586 = vsub.s32 %v1583, %v1585
      %v1587 = vrot.slane %v1573, %v1586
      %v1588 = vcombine.low %v1532, %v1548
      %v1589 = vcombine.high %v1532, %v1548
      %v1591 = vunpack.c.l.s4 1934713408
      %v1592 = vunpack.c.0.s8 %v1591
      %v1593 = vlaneseq
      %v1594 = vshrl.u32 %v1593, 7
      %v1595 = vsub.s32 %v1592, %v1594
      %v1596 = vrot.slane %v1588, %v1595
      %v1598 = vunpack.c.l.s4 1934713408
      %v1599 = vunpack.c.0.s8 %v1598
      %v1600 = vlaneseq
      %v1601 = vshrl.u32 %v1600, 7
      %v1602 = vsub.s32 %v1599, %v1601
      %v1603 = vrot.slane %v1589, %v1602
      %v1604 = vcombine.low %v1539, %v1555
      %v1605 = vcombine.high %v1539, %v1555
      %v1607 = vunpack.c.l.s4 1934713408
      %v1608 = vunpack.c.0.s8 %v1607
      %v1609 = vlaneseq
      %v1610 = vshrl.u32 %v1609, 7
      %v1611 = vsub.s32 %v1608, %v1610
      %v1612 = vrot.slane %v1604, %v1611
      %v1614 = vunpack.c.l.s4 1934713408
      %v1615 = vunpack.c.0.s8 %v1614
      %v1616 = vlaneseq
      %v1617 = vshrl.u32 %v1616, 7
      %v1618 = vsub.s32 %v1615, %v1617
      %v1619 = vrot.slane %v1605, %v1618
      %v1620 = vcombine.low %v1564, %v1596
      %v1621 = vcombine.high %v1564, %v1596
      %v1622 = vcombine.low %v1571, %v1603
      %v1623 = vcombine.high %v1571, %v1603
      %v1624 = vcombine.low %v1580, %v1612
      %v1625 = vcombine.high %v1580, %v1612
      %v1626 = vcombine.low %v1587, %v1619
      %v1627 = vcombine.high %v1587, %v1619
      %v1628 = vcombine.low %v647, %v655
      %v1629 = vcombine.high %v647, %v655
      %v1631 = vunpack.c.l.s4 1983009808
      %v1632 = vunpack.c.0.s8 %v1631
      %v1633 = vlaneseq
      %v1634 = vshrl.u32 %v1633, 7
      %v1635 = vsub.s32 %v1632, %v1634
      %v1636 = vrot.slane %v1628, %v1635
      %v1638 = vunpack.c.l.s4 1983009808
      %v1639 = vunpack.c.0.s8 %v1638
      %v1640 = vlaneseq
      %v1641 = vshrl.u32 %v1640, 7
      %v1642 = vsub.s32 %v1639, %v1641
      %v1643 = vrot.slane %v1629, %v1642
      %v1644 = vcombine.low %v651, %v659
      %v1645 = vcombine.high %v651, %v659
      %v1647 = vunpack.c.l.s4 1983009808
      %v1648 = vunpack.c.0.s8 %v1647
      %v1649 = vlaneseq
      %v1650 = vshrl.u32 %v1649, 7
      %v1651 = vsub.s32 %v1648, %v1650
      %v1652 = vrot.slane %v1644, %v1651
      %v1654 = vunpack.c.l.s4 1983009808
      %v1655 = vunpack.c.0.s8 %v1654
      %v1656 = vlaneseq
      %v1657 = vshrl.u32 %v1656, 7
      %v1658 = vsub.s32 %v1655, %v1657
      %v1659 = vrot.slane %v1645, %v1658
      %v1660 = vcombine.low %v663, %v671
      %v1661 = vcombine.high %v663, %v671
      %v1663 = vunpack.c.l.s4 1983009808
      %v1664 = vunpack.c.0.s8 %v1663
      %v1665 = vlaneseq
      %v1666 = vshrl.u32 %v1665, 7
      %v1667 = vsub.s32 %v1664, %v1666
      %v1668 = vrot.slane %v1660, %v1667
      %v1670 = vunpack.c.l.s4 1983009808
      %v1671 = vunpack.c.0.s8 %v1670
      %v1672 = vlaneseq
      %v1673 = vshrl.u32 %v1672, 7
      %v1674 = vsub.s32 %v1671, %v1673
      %v1675 = vrot.slane %v1661, %v1674
      %v1676 = vcombine.low %v667, %v675
      %v1677 = vcombine.high %v667, %v675
      %v1679 = vunpack.c.l.s4 1983009808
      %v1680 = vunpack.c.0.s8 %v1679
      %v1681 = vlaneseq
      %v1682 = vshrl.u32 %v1681, 7
      %v1683 = vsub.s32 %v1680, %v1682
      %v1684 = vrot.slane %v1676, %v1683
      %v1686 = vunpack.c.l.s4 1983009808
      %v1687 = vunpack.c.0.s8 %v1686
      %v1688 = vlaneseq
      %v1689 = vshrl.u32 %v1688, 7
      %v1690 = vsub.s32 %v1687, %v1689
      %v1691 = vrot.slane %v1677, %v1690
      %v1692 = vcombine.low %v1636, %v1652
      %v1693 = vcombine.high %v1636, %v1652
      %v1695 = vunpack.c.l.s4 1934713408
      %v1696 = vunpack.c.0.s8 %v1695
      %v1697 = vlaneseq
      %v1698 = vshrl.u32 %v1697, 7
      %v1699 = vsub.s32 %v1696, %v1698
      %v1700 = vrot.slane %v1692, %v1699
      %v1702 = vunpack.c.l.s4 1934713408
      %v1703 = vunpack.c.0.s8 %v1702
      %v1704 = vlaneseq
      %v1705 = vshrl.u32 %v1704, 7
      %v1706 = vsub.s32 %v1703, %v1705
      %v1707 = vrot.slane %v1693, %v1706
      %v1708 = vcombine.low %v1643, %v1659
      %v1709 = vcombine.high %v1643, %v1659
      %v1711 = vunpack.c.l.s4 1934713408
      %v1712 = vunpack.c.0.s8 %v1711
      %v1713 = vlaneseq
      %v1714 = vshrl.u32 %v1713, 7
      %v1715 = vsub.s32 %v1712, %v1714
      %v1716 = vrot.slane %v1708, %v1715
      %v1718 = vunpack.c.l.s4 1934713408
      %v1719 = vunpack.c.0.s8 %v1718
      %v1720 = vlaneseq
      %v1721 = vshrl.u32 %v1720, 7
      %v1722 = vsub.s32 %v1719, %v1721
      %v1723 = vrot.slane %v1709, %v1722
      %v1724 = vcombine.low %v1668, %v1684
      %v1725 = vcombine.high %v1668, %v1684
      %v1727 = vunpack.c.l.s4 1934713408
      %v1728 = vunpack.c.0.s8 %v1727
      %v1729 = vlaneseq
      %v1730 = vshrl.u32 %v1729, 7
      %v1731 = vsub.s32 %v1728, %v1730
      %v1732 = vrot.slane %v1724, %v1731
      %v1734 = vunpack.c.l.s4 1934713408
      %v1735 = vunpack.c.0.s8 %v1734
      %v1736 = vlaneseq
      %v1737 = vshrl.u32 %v1736, 7
      %v1738 = vsub.s32 %v1735, %v1737
      %v1739 = vrot.slane %v1725, %v1738
      %v1740 = vcombine.low %v1675, %v1691
      %v1741 = vcombine.high %v1675, %v1691
      %v1743 = vunpack.c.l.s4 1934713408
      %v1744 = vunpack.c.0.s8 %v1743
      %v1745 = vlaneseq
      %v1746 = vshrl.u32 %v1745, 7
      %v1747 = vsub.s32 %v1744, %v1746
      %v1748 = vrot.slane %v1740, %v1747
      %v1750 = vunpack.c.l.s4 1934713408
      %v1751 = vunpack.c.0.s8 %v1750
      %v1752 = vlaneseq
      %v1753 = vshrl.u32 %v1752, 7
      %v1754 = vsub.s32 %v1751, %v1753
      %v1755 = vrot.slane %v1741, %v1754
      %v1756 = vcombine.low %v1700, %v1732
      %v1757 = vcombine.high %v1700, %v1732
      %v1758 = vcombine.low %v1707, %v1739
      %v1759 = vcombine.high %v1707, %v1739
      %v1760 = vcombine.low %v1716, %v1748
      %v1761 = vcombine.high %v1716, %v1748
      %v1762 = vcombine.low %v1723, %v1755
      %v1763 = vcombine.high %v1723, %v1755
      %1766 = vrot.lane.b32.xlu0 %v805, 16
      %v1767 = vpop.permute.xlu0 %1766
      %1768 = vrot.lane.b32.xlu0 %v941, 16
      %v1769 = vpop.permute.xlu0 %1768
      %1774 = vrot.lane.b32.xlu0 %v806, 32
      %v1775 = vpop.permute.xlu0 %1774
      %1776 = vrot.lane.b32.xlu0 %v942, 32
      %v1777 = vpop.permute.xlu0 %1776
      %1782 = vrot.lane.b32.xlu0 %v807, 48
      %v1783 = vpop.permute.xlu0 %1782
      %1784 = vrot.lane.b32.xlu0 %v943, 48
      %v1785 = vpop.permute.xlu0 %1784
      %1790 = vrot.lane.b32.xlu0 %v808, 64
      %v1791 = vpop.permute.xlu0 %1790
      %1792 = vrot.lane.b32.xlu0 %v944, 64
      %v1793 = vpop.permute.xlu0 %1792
      %1798 = vrot.lane.b32.xlu0 %v809, 80
      %v1799 = vpop.permute.xlu0 %1798
      %1800 = vrot.lane.b32.xlu0 %v945, 80
      %v1801 = vpop.permute.xlu0 %1800
      %1806 = vrot.lane.b32.xlu0 %v810, 96
      %v1807 = vpop.permute.xlu0 %1806
      %1808 = vrot.lane.b32.xlu0 %v946, 96
      %v1809 = vpop.permute.xlu0 %1808
      %1814 = vrot.lane.b32.xlu0 %v811, 112
      %v1815 = vpop.permute.xlu0 %1814
      %1816 = vrot.lane.b32.xlu0 %v947, 112
      %v1817 = vpop.permute.xlu0 %1816
      %1822 = vrot.lane.b32.xlu0 %v1077, 16
      %v1823 = vpop.permute.xlu0 %1822
      %1824 = vrot.lane.b32.xlu0 %v1213, 16
      %v1825 = vpop.permute.xlu0 %1824
      %1830 = vrot.lane.b32.xlu0 %v1078, 32
      %v1831 = vpop.permute.xlu0 %1830
      %1832 = vrot.lane.b32.xlu0 %v1214, 32
      %v1833 = vpop.permute.xlu0 %1832
      %1838 = vrot.lane.b32.xlu0 %v1079, 48
      %v1839 = vpop.permute.xlu0 %1838
      %1840 = vrot.lane.b32.xlu0 %v1215, 48
      %v1841 = vpop.permute.xlu0 %1840
      %1846 = vrot.lane.b32.xlu0 %v1080, 64
      %v1847 = vpop.permute.xlu0 %1846
      %1848 = vrot.lane.b32.xlu0 %v1216, 64
      %v1849 = vpop.permute.xlu0 %1848
      %1854 = vrot.lane.b32.xlu0 %v1081, 80
      %v1855 = vpop.permute.xlu0 %1854
      %1856 = vrot.lane.b32.xlu0 %v1217, 80
      %v1857 = vpop.permute.xlu0 %1856
      %1862 = vrot.lane.b32.xlu0 %v1082, 96
      %v1863 = vpop.permute.xlu0 %1862
      %1864 = vrot.lane.b32.xlu0 %v1218, 96
      %v1865 = vpop.permute.xlu0 %1864
      %1870 = vrot.lane.b32.xlu0 %v1083, 112
      %v1871 = vpop.permute.xlu0 %1870
      %1872 = vrot.lane.b32.xlu0 %v1219, 112
      %v1873 = vpop.permute.xlu0 %1872
      %1878 = vrot.lane.b32.xlu0 %v1349, 16
      %v1879 = vpop.permute.xlu0 %1878
      %1880 = vrot.lane.b32.xlu0 %v1485, 16
      %v1881 = vpop.permute.xlu0 %1880
      %1886 = vrot.lane.b32.xlu0 %v1350, 32
      %v1887 = vpop.permute.xlu0 %1886
      %1888 = vrot.lane.b32.xlu0 %v1486, 32
      %v1889 = vpop.permute.xlu0 %1888
      %1894 = vrot.lane.b32.xlu0 %v1351, 48
      %v1895 = vpop.permute.xlu0 %1894
      %1896 = vrot.lane.b32.xlu0 %v1487, 48
      %v1897 = vpop.permute.xlu0 %1896
      %1902 = vrot.lane.b32.xlu0 %v1352, 64
      %v1903 = vpop.permute.xlu0 %1902
      %1904 = vrot.lane.b32.xlu0 %v1488, 64
      %v1905 = vpop.permute.xlu0 %1904
      %1910 = vrot.lane.b32.xlu0 %v1353, 80
      %v1911 = vpop.permute.xlu0 %1910
      %1912 = vrot.lane.b32.xlu0 %v1489, 80
      %v1913 = vpop.permute.xlu0 %1912
      %1918 = vrot.lane.b32.xlu0 %v1354, 96
      %v1919 = vpop.permute.xlu0 %1918
      %1920 = vrot.lane.b32.xlu0 %v1490, 96
      %v1921 = vpop.permute.xlu0 %1920
      %1926 = vrot.lane.b32.xlu0 %v1355, 112
      %v1927 = vpop.permute.xlu0 %1926
      %1928 = vrot.lane.b32.xlu0 %v1491, 112
      %v1929 = vpop.permute.xlu0 %1928
      %1934 = vrot.lane.b32.xlu0 %v1621, 16
      %v1935 = vpop.permute.xlu0 %1934
      %1936 = vrot.lane.b32.xlu0 %v1757, 16
      %v1937 = vpop.permute.xlu0 %1936
      %1942 = vrot.lane.b32.xlu0 %v1622, 32
      %v1943 = vpop.permute.xlu0 %1942
      %1944 = vrot.lane.b32.xlu0 %v1758, 32
      %v1945 = vpop.permute.xlu0 %1944
      %1950 = vrot.lane.b32.xlu0 %v1623, 48
      %v1951 = vpop.permute.xlu0 %1950
      %1952 = vrot.lane.b32.xlu0 %v1759, 48
      %v1953 = vpop.permute.xlu0 %1952
      %1958 = vrot.lane.b32.xlu0 %v1624, 64
      %v1959 = vpop.permute.xlu0 %1958
      %1960 = vrot.lane.b32.xlu0 %v1760, 64
      %v1961 = vpop.permute.xlu0 %1960
      %1966 = vrot.lane.b32.xlu0 %v1625, 80
      %v1967 = vpop.permute.xlu0 %1966
      %1968 = vrot.lane.b32.xlu0 %v1761, 80
      %v1969 = vpop.permute.xlu0 %1968
      %1974 = vrot.lane.b32.xlu0 %v1626, 96
      %v1975 = vpop.permute.xlu0 %1974
      %1976 = vrot.lane.b32.xlu0 %v1762, 96
      %v1977 = vpop.permute.xlu0 %1976
      %1982 = vrot.lane.b32.xlu0 %v1627, 112
      %v1983 = vpop.permute.xlu0 %1982
      %1984 = vrot.lane.b32.xlu0 %v1763, 112
      %v1985 = vpop.permute.xlu0 %1984
      %vm1988 = vcmask 130048
      %v1989 = vsel %vm1988, %v804, %v1767
      %v1990 = vsel %vm1988, %v940, %v1769
      %v1991 = vsel %vm177, %v1989, %v1775
      %v1992 = vsel %vm177, %v1990, %v1777
      %vm1993 = vcmask 392192
      %v1994 = vsel %vm1993, %v1991, %v1783
      %v1995 = vsel %vm1993, %v1992, %v1785
      %vm1996 = vcmask 523264
      %v1997 = vsel %vm1996, %v1994, %v1791
      %v1998 = vsel %vm1996, %v1995, %v1793
      %vm1999 = vcmask 654336
      %v2000 = vsel %vm1999, %v1997, %v1799
      %v2001 = vsel %vm1999, %v1998, %v1801
      %vm2002 = vcmask 785408
      %v2003 = vsel %vm2002, %v2000, %v1807
      %v2004 = vsel %vm2002, %v2001, %v1809
      %vm2005 = vcmask 916480
      %v2006 = vsel %vm2005, %v2003, %v1815
      %v2007 = vsel %vm2005, %v2004, %v1817
      %v2008 = vsel %vm1988, %v1076, %v1823
      %v2009 = vsel %vm1988, %v1212, %v1825
      %v2010 = vsel %vm177, %v2008, %v1831
      %v2011 = vsel %vm177, %v2009, %v1833
      %v2012 = vsel %vm1993, %v2010, %v1839
      %v2013 = vsel %vm1993, %v2011, %v1841
      %v2014 = vsel %vm1996, %v2012, %v1847
      %v2015 = vsel %vm1996, %v2013, %v1849
      %v2016 = vsel %vm1999, %v2014, %v1855
      %v2017 = vsel %vm1999, %v2015, %v1857
      %v2018 = vsel %vm2002, %v2016, %v1863
      %v2019 = vsel %vm2002, %v2017, %v1865
      %v2020 = vsel %vm2005, %v2018, %v1871
      %v2021 = vsel %vm2005, %v2019, %v1873
      %v2022 = vsel %vm1988, %v1348, %v1879
      %v2023 = vsel %vm1988, %v1484, %v1881
      %v2024 = vsel %vm177, %v2022, %v1887
      %v2025 = vsel %vm177, %v2023, %v1889
      %v2026 = vsel %vm1993, %v2024, %v1895
      %v2027 = vsel %vm1993, %v2025, %v1897
      %v2028 = vsel %vm1996, %v2026, %v1903
      %v2029 = vsel %vm1996, %v2027, %v1905
      %v2030 = vsel %vm1999, %v2028, %v1911
      %v2031 = vsel %vm1999, %v2029, %v1913
      %v2032 = vsel %vm2002, %v2030, %v1919
      %v2033 = vsel %vm2002, %v2031, %v1921
      %v2034 = vsel %vm2005, %v2032, %v1927
      %v2035 = vsel %vm2005, %v2033, %v1929
      %v2036 = vsel %vm1988, %v1620, %v1935
      %v2037 = vsel %vm1988, %v1756, %v1937
      %v2038 = vsel %vm177, %v2036, %v1943
      %v2039 = vsel %vm177, %v2037, %v1945
      %v2040 = vsel %vm1993, %v2038, %v1951
      %v2041 = vsel %vm1993, %v2039, %v1953
      %v2042 = vsel %vm1996, %v2040, %v1959
      %v2043 = vsel %vm1996, %v2041, %v1961
      %v2044 = vsel %vm1999, %v2042, %v1967
      %v2045 = vsel %vm1999, %v2043, %v1969
      %v2046 = vsel %vm2002, %v2044, %v1975
      %v2047 = vsel %vm2002, %v2045, %v1977
      %v2048 = vsel %vm2005, %v2046, %v1983
      %v2049 = vsel %vm2005, %v2047, %v1985
      %vm2050 = vcmp.ge.f32.partialorder %v2006, 0.0
      %vm2051 = vcmp.ge.f32.partialorder %v2020, 0.0
      %vm2052 = vcmp.ge.f32.partialorder %v2034, 0.0
      %vm2053 = vcmp.ge.f32.partialorder %v2048, 0.0
      %vm2054 = vcmp.ge.f32.partialorder %v2007, 0.0
      %vm2055 = vcmp.ge.f32.partialorder %v2021, 0.0
      %vm2056 = vcmp.ge.f32.partialorder %v2035, 0.0
      %vm2057 = vcmp.ge.f32.partialorder %v2049, 0.0
      %v2058 = vmul.f32 %v2006, 0.33
      %v2059 = vmul.f32 %v2020, 0.33
      %v2060 = vmul.f32 %v2034, 0.33
      %v2061 = vmul.f32 %v2048, 0.33
      %v2062 = vmul.f32 %v2007, 0.33
      %v2063 = vmul.f32 %v2021, 0.33
      %v2064 = vmul.f32 %v2035, 0.33
      %v2065 = vmul.f32 %v2049, 0.33
      %v2066 = vsel %vm2050, %v2006, %v2058
      %v2067 = vsel %vm2051, %v2020, %v2059
      %v2068 = vsel %vm2052, %v2034, %v2060
      %v2069 = vsel %vm2053, %v2048, %v2061
      %v2070 = vsel %vm2054, %v2007, %v2062
      %v2071 = vsel %vm2055, %v2021, %v2063
      %v2072 = vsel %vm2056, %v2035, %v2064
      %v2073 = vsel %vm2057, %v2049, %v2065
      %2074 = vxpose.xlu0.b32.start [1/16] %v266, 128
      %2075 = vxpose.xlu0.b32.cont [2/16] %v267, 128
      %2076 = vxpose.xlu0.b32.cont [3/16] 0.0, 128
      %2077 = vxpose.xlu0.b32.cont [4/16] 0.0, 128
      %2078 = vxpose.xlu0.b32.cont [5/16] 0.0, 128
      %2079 = vxpose.xlu0.b32.cont [6/16] 0.0, 128
      %2080 = vxpose.xlu0.b32.cont [7/16] 0.0, 128
      %2081 = vxpose.xlu0.b32.cont [8/16] 0.0, 128
      %2082 = vxpose.xlu0.b32.cont [9/16] 0.0, 128
      %2083 = vxpose.xlu0.b32.cont [10/16] 0.0, 128
      %2084 = vxpose.xlu0.b32.cont [11/16] 0.0, 128
      %2085 = vxpose.xlu0.b32.cont [12/16] 0.0, 128
      %2086 = vxpose.xlu0.b32.cont [13/16] 0.0, 128
      %2087 = vxpose.xlu0.b32.cont [14/16] 0.0, 128
      %2088 = vxpose.xlu0.b32.cont [15/16] 0.0, 128
      %2089 = vxpose.xlu0.b32.end [16/16] 0.0, 128
      %v2090 = vpop.trf.xlu0
      %v2091 = vpop.trf.xlu0
      %v2092 = vpop.trf.xlu0
      %v2093 = vpop.trf.xlu0
      %v2094 = vpop.trf.xlu0
      %v2095 = vpop.trf.xlu0
      %v2096 = vpop.trf.xlu0
      %v2097 = vpop.trf.xlu0
      %v2098 = vpop.trf.xlu0
      %v2099 = vpop.trf.xlu0
      %v2100 = vpop.trf.xlu0
      %v2101 = vpop.trf.xlu0
      %v2102 = vpop.trf.xlu0
      %v2103 = vpop.trf.xlu0
      %v2104 = vpop.trf.xlu0
      %v2105 = vpop.trf.xlu0
      %v2106 = vlaneseq
      %v2107 = vshrl.u32 %v2106, 7
      %v2108 = vsub.s32 0, %v2107
      %v2109 = vrot.slane %v251, %v2108
      %s2111 = sor.u32 256, 32
      %2112 = vbcast.lane.b32.xlu0 %v2109, %s2111
      %v2113 = vpop.permute.xlu0 %2112
      %s2115 = sor.u32 256, 40
      %2116 = vbcast.lane.b32.xlu0 %v2109, %s2115
      %v2117 = vpop.permute.xlu0 %2116
      %s2119 = sor.u32 256, 48
      %2120 = vbcast.lane.b32.xlu0 %v2109, %s2119
      %v2121 = vpop.permute.xlu0 %2120
      %s2123 = sor.u32 256, 56
      %2124 = vbcast.lane.b32.xlu0 %v2109, %s2123
      %v2125 = vpop.permute.xlu0 %2124
      %v2126 = vlaneseq
      %v2127 = vshrl.u32 %v2126, 7
      %v2128 = vsub.s32 1, %v2127
      %v2129 = vrot.slane %v251, %v2128
      %s2131 = sor.u32 256, 32
      %2132 = vbcast.lane.b32.xlu0 %v2129, %s2131
      %v2133 = vpop.permute.xlu0 %2132
      %s2135 = sor.u32 256, 40
      %2136 = vbcast.lane.b32.xlu0 %v2129, %s2135
      %v2137 = vpop.permute.xlu0 %2136
      %s2139 = sor.u32 256, 48
      %2140 = vbcast.lane.b32.xlu0 %v2129, %s2139
      %v2141 = vpop.permute.xlu0 %2140
      %s2143 = sor.u32 256, 56
      %2144 = vbcast.lane.b32.xlu0 %v2129, %s2143
      %v2145 = vpop.permute.xlu0 %2144
      %v2146 = vlaneseq
      %v2147 = vshrl.u32 %v2146, 7
      %v2148 = vsub.s32 2, %v2147
      %v2149 = vrot.slane %v251, %v2148
      %s2151 = sor.u32 256, 32
      %2152 = vbcast.lane.b32.xlu0 %v2149, %s2151
      %v2153 = vpop.permute.xlu0 %2152
      %s2155 = sor.u32 256, 40
      %2156 = vbcast.lane.b32.xlu0 %v2149, %s2155
      %v2157 = vpop.permute.xlu0 %2156
      %s2159 = sor.u32 256, 48
      %2160 = vbcast.lane.b32.xlu0 %v2149, %s2159
      %v2161 = vpop.permute.xlu0 %2160
      %s2163 = sor.u32 256, 56
      %2164 = vbcast.lane.b32.xlu0 %v2149, %s2163
      %v2165 = vpop.permute.xlu0 %2164
      %v2166 = vlaneseq
      %v2167 = vshrl.u32 %v2166, 7
      %v2168 = vsub.s32 3, %v2167
      %v2169 = vrot.slane %v251, %v2168
      %s2171 = sor.u32 256, 32
      %2172 = vbcast.lane.b32.xlu0 %v2169, %s2171
      %v2173 = vpop.permute.xlu0 %2172
      %s2175 = sor.u32 256, 40
      %2176 = vbcast.lane.b32.xlu0 %v2169, %s2175
      %v2177 = vpop.permute.xlu0 %2176
      %s2179 = sor.u32 256, 48
      %2180 = vbcast.lane.b32.xlu0 %v2169, %s2179
      %v2181 = vpop.permute.xlu0 %2180
      %s2183 = sor.u32 256, 56
      %2184 = vbcast.lane.b32.xlu0 %v2169, %s2183
      %v2185 = vpop.permute.xlu0 %2184
      %v2186 = vlaneseq
      %v2187 = vshrl.u32 %v2186, 7
      %v2188 = vsub.s32 4, %v2187
      %v2189 = vrot.slane %v251, %v2188
      %s2191 = sor.u32 256, 32
      %2192 = vbcast.lane.b32.xlu0 %v2189, %s2191
      %v2193 = vpop.permute.xlu0 %2192
      %s2195 = sor.u32 256, 40
      %2196 = vbcast.lane.b32.xlu0 %v2189, %s2195
      %v2197 = vpop.permute.xlu0 %2196
      %s2199 = sor.u32 256, 48
      %2200 = vbcast.lane.b32.xlu0 %v2189, %s2199
      %v2201 = vpop.permute.xlu0 %2200
      %s2203 = sor.u32 256, 56
      %2204 = vbcast.lane.b32.xlu0 %v2189, %s2203
      %v2205 = vpop.permute.xlu0 %2204
      %v2206 = vlaneseq
      %v2207 = vshrl.u32 %v2206, 7
      %v2208 = vsub.s32 5, %v2207
      %v2209 = vrot.slane %v251, %v2208
      %s2211 = sor.u32 256, 32
      %2212 = vbcast.lane.b32.xlu0 %v2209, %s2211
      %v2213 = vpop.permute.xlu0 %2212
      %s2215 = sor.u32 256, 40
      %2216 = vbcast.lane.b32.xlu0 %v2209, %s2215
      %v2217 = vpop.permute.xlu0 %2216
      %s2219 = sor.u32 256, 48
      %2220 = vbcast.lane.b32.xlu0 %v2209, %s2219
      %v2221 = vpop.permute.xlu0 %2220
      %s2223 = sor.u32 256, 56
      %2224 = vbcast.lane.b32.xlu0 %v2209, %s2223
      %v2225 = vpop.permute.xlu0 %2224
      %v2226 = vlaneseq
      %v2227 = vshrl.u32 %v2226, 7
      %v2228 = vsub.s32 6, %v2227
      %v2229 = vrot.slane %v251, %v2228
      %s2231 = sor.u32 256, 32
      %2232 = vbcast.lane.b32.xlu0 %v2229, %s2231
      %v2233 = vpop.permute.xlu0 %2232
      %s2235 = sor.u32 256, 40
      %2236 = vbcast.lane.b32.xlu0 %v2229, %s2235
      %v2237 = vpop.permute.xlu0 %2236
      %s2239 = sor.u32 256, 48
      %2240 = vbcast.lane.b32.xlu0 %v2229, %s2239
      %v2241 = vpop.permute.xlu0 %2240
      %s2243 = sor.u32 256, 56
      %2244 = vbcast.lane.b32.xlu0 %v2229, %s2243
      %v2245 = vpop.permute.xlu0 %2244
      %v2246 = vlaneseq
      %v2247 = vshrl.u32 %v2246, 7
      %v2248 = vsub.s32 7, %v2247
      %v2249 = vrot.slane %v251, %v2248
      %s2251 = sor.u32 256, 32
      %2252 = vbcast.lane.b32.xlu0 %v2249, %s2251
      %v2253 = vpop.permute.xlu0 %2252
      %s2255 = sor.u32 256, 40
      %2256 = vbcast.lane.b32.xlu0 %v2249, %s2255
      %v2257 = vpop.permute.xlu0 %2256
      %s2259 = sor.u32 256, 48
      %2260 = vbcast.lane.b32.xlu0 %v2249, %s2259
      %v2261 = vpop.permute.xlu0 %2260
      %s2263 = sor.u32 256, 56
      %2264 = vbcast.lane.b32.xlu0 %v2249, %s2263
      %v2265 = vpop.permute.xlu0 %2264
      %v2266 = vlaneseq
      %v2267 = vshrl.u32 %v2266, 7
      %v2268 = vsub.s32 0, %v2267
      %v2269 = vrot.slane %v256, %v2268
      %s2271 = sor.u32 256, 32
      %2272 = vbcast.lane.b32.xlu0 %v2269, %s2271
      %v2273 = vpop.permute.xlu0 %2272
      %s2275 = sor.u32 256, 40
      %2276 = vbcast.lane.b32.xlu0 %v2269, %s2275
      %v2277 = vpop.permute.xlu0 %2276
      %s2279 = sor.u32 256, 48
      %2280 = vbcast.lane.b32.xlu0 %v2269, %s2279
      %v2281 = vpop.permute.xlu0 %2280
      %s2283 = sor.u32 256, 56
      %2284 = vbcast.lane.b32.xlu0 %v2269, %s2283
      %v2285 = vpop.permute.xlu0 %2284
      %v2286 = vlaneseq
      %v2287 = vshrl.u32 %v2286, 7
      %v2288 = vsub.s32 1, %v2287
      %v2289 = vrot.slane %v256, %v2288
      %s2291 = sor.u32 256, 32
      %2292 = vbcast.lane.b32.xlu0 %v2289, %s2291
      %v2293 = vpop.permute.xlu0 %2292
      %s2295 = sor.u32 256, 40
      %2296 = vbcast.lane.b32.xlu0 %v2289, %s2295
      %v2297 = vpop.permute.xlu0 %2296
      %s2299 = sor.u32 256, 48
      %2300 = vbcast.lane.b32.xlu0 %v2289, %s2299
      %v2301 = vpop.permute.xlu0 %2300
      %s2303 = sor.u32 256, 56
      %2304 = vbcast.lane.b32.xlu0 %v2289, %s2303
      %v2305 = vpop.permute.xlu0 %2304
      %v2306 = vlaneseq
      %v2307 = vshrl.u32 %v2306, 7
      %v2308 = vsub.s32 2, %v2307
      %v2309 = vrot.slane %v256, %v2308
      %s2311 = sor.u32 256, 32
      %2312 = vbcast.lane.b32.xlu0 %v2309, %s2311
      %v2313 = vpop.permute.xlu0 %2312
      %s2315 = sor.u32 256, 40
      %2316 = vbcast.lane.b32.xlu0 %v2309, %s2315
      %v2317 = vpop.permute.xlu0 %2316
      %s2319 = sor.u32 256, 48
      %2320 = vbcast.lane.b32.xlu0 %v2309, %s2319
      %v2321 = vpop.permute.xlu0 %2320
      %s2323 = sor.u32 256, 56
      %2324 = vbcast.lane.b32.xlu0 %v2309, %s2323
      %v2325 = vpop.permute.xlu0 %2324
      %v2326 = vlaneseq
      %v2327 = vshrl.u32 %v2326, 7
      %v2328 = vsub.s32 3, %v2327
      %v2329 = vrot.slane %v256, %v2328
      %s2331 = sor.u32 256, 32
      %2332 = vbcast.lane.b32.xlu0 %v2329, %s2331
      %v2333 = vpop.permute.xlu0 %2332
      %s2335 = sor.u32 256, 40
      %2336 = vbcast.lane.b32.xlu0 %v2329, %s2335
      %v2337 = vpop.permute.xlu0 %2336
      %s2339 = sor.u32 256, 48
      %2340 = vbcast.lane.b32.xlu0 %v2329, %s2339
      %v2341 = vpop.permute.xlu0 %2340
      %s2343 = sor.u32 256, 56
      %2344 = vbcast.lane.b32.xlu0 %v2329, %s2343
      %v2345 = vpop.permute.xlu0 %2344
      %v2346 = vlaneseq
      %v2347 = vshrl.u32 %v2346, 7
      %v2348 = vsub.s32 4, %v2347
      %v2349 = vrot.slane %v256, %v2348
      %s2351 = sor.u32 256, 32
      %2352 = vbcast.lane.b32.xlu0 %v2349, %s2351
      %v2353 = vpop.permute.xlu0 %2352
      %s2355 = sor.u32 256, 40
      %2356 = vbcast.lane.b32.xlu0 %v2349, %s2355
      %v2357 = vpop.permute.xlu0 %2356
      %s2359 = sor.u32 256, 48
      %2360 = vbcast.lane.b32.xlu0 %v2349, %s2359
      %v2361 = vpop.permute.xlu0 %2360
      %s2363 = sor.u32 256, 56
      %2364 = vbcast.lane.b32.xlu0 %v2349, %s2363
      %v2365 = vpop.permute.xlu0 %2364
      %v2366 = vlaneseq
      %v2367 = vshrl.u32 %v2366, 7
      %v2368 = vsub.s32 5, %v2367
      %v2369 = vrot.slane %v256, %v2368
      %s2371 = sor.u32 256, 32
      %2372 = vbcast.lane.b32.xlu0 %v2369, %s2371
      %v2373 = vpop.permute.xlu0 %2372
      %s2375 = sor.u32 256, 40
      %2376 = vbcast.lane.b32.xlu0 %v2369, %s2375
      %v2377 = vpop.permute.xlu0 %2376
      %s2379 = sor.u32 256, 48
      %2380 = vbcast.lane.b32.xlu0 %v2369, %s2379
      %v2381 = vpop.permute.xlu0 %2380
      %s2383 = sor.u32 256, 56
      %2384 = vbcast.lane.b32.xlu0 %v2369, %s2383
      %v2385 = vpop.permute.xlu0 %2384
      %v2386 = vlaneseq
      %v2387 = vshrl.u32 %v2386, 7
      %v2388 = vsub.s32 6, %v2387
      %v2389 = vrot.slane %v256, %v2388
      %s2391 = sor.u32 256, 32
      %2392 = vbcast.lane.b32.xlu0 %v2389, %s2391
      %v2393 = vpop.permute.xlu0 %2392
      %s2395 = sor.u32 256, 40
      %2396 = vbcast.lane.b32.xlu0 %v2389, %s2395
      %v2397 = vpop.permute.xlu0 %2396
      %s2399 = sor.u32 256, 48
      %2400 = vbcast.lane.b32.xlu0 %v2389, %s2399
      %v2401 = vpop.permute.xlu0 %2400
      %s2403 = sor.u32 256, 56
      %2404 = vbcast.lane.b32.xlu0 %v2389, %s2403
      %v2405 = vpop.permute.xlu0 %2404
      %v2406 = vlaneseq
      %v2407 = vshrl.u32 %v2406, 7
      %v2408 = vsub.s32 7, %v2407
      %v2409 = vrot.slane %v256, %v2408
      %s2411 = sor.u32 256, 32
      %2412 = vbcast.lane.b32.xlu0 %v2409, %s2411
      %v2413 = vpop.permute.xlu0 %2412
      %s2415 = sor.u32 256, 40
      %2416 = vbcast.lane.b32.xlu0 %v2409, %s2415
      %v2417 = vpop.permute.xlu0 %2416
      %s2419 = sor.u32 256, 48
      %2420 = vbcast.lane.b32.xlu0 %v2409, %s2419
      %v2421 = vpop.permute.xlu0 %2420
      %s2423 = sor.u32 256, 56
      %2424 = vbcast.lane.b32.xlu0 %v2409, %s2423
      %v2425 = vpop.permute.xlu0 %2424
      %v2426 = vadd.f32 %v2113, %v2090
      %v2427 = vadd.f32 %v2117, %v2091
      %v2428 = vadd.f32 %v2121, %v2092
      %v2429 = vadd.f32 %v2125, %v2093
      %v2430 = vadd.f32 %v2133, %v2090
      %v2431 = vadd.f32 %v2137, %v2091
      %v2432 = vadd.f32 %v2141, %v2092
      %v2433 = vadd.f32 %v2145, %v2093
      %v2434 = vadd.f32 %v2153, %v2090
      %v2435 = vadd.f32 %v2157, %v2091
      %v2436 = vadd.f32 %v2161, %v2092
      %v2437 = vadd.f32 %v2165, %v2093
      %v2438 = vadd.f32 %v2173, %v2090
      %v2439 = vadd.f32 %v2177, %v2091
      %v2440 = vadd.f32 %v2181, %v2092
      %v2441 = vadd.f32 %v2185, %v2093
      %v2442 = vadd.f32 %v2193, %v2090
      %v2443 = vadd.f32 %v2197, %v2091
      %v2444 = vadd.f32 %v2201, %v2092
      %v2445 = vadd.f32 %v2205, %v2093
      %v2446 = vadd.f32 %v2213, %v2090
      %v2447 = vadd.f32 %v2217, %v2091
      %v2448 = vadd.f32 %v2221, %v2092
      %v2449 = vadd.f32 %v2225, %v2093
      %v2450 = vadd.f32 %v2233, %v2090
      %v2451 = vadd.f32 %v2237, %v2091
      %v2452 = vadd.f32 %v2241, %v2092
      %v2453 = vadd.f32 %v2245, %v2093
      %v2454 = vadd.f32 %v2253, %v2090
      %v2455 = vadd.f32 %v2257, %v2091
      %v2456 = vadd.f32 %v2261, %v2092
      %v2457 = vadd.f32 %v2265, %v2093
      %v2458 = vadd.f32 %v2273, %v2090
      %v2459 = vadd.f32 %v2277, %v2091
      %v2460 = vadd.f32 %v2281, %v2092
      %v2461 = vadd.f32 %v2285, %v2093
      %v2462 = vadd.f32 %v2293, %v2090
      %v2463 = vadd.f32 %v2297, %v2091
      %v2464 = vadd.f32 %v2301, %v2092
      %v2465 = vadd.f32 %v2305, %v2093
      %v2466 = vadd.f32 %v2313, %v2090
      %v2467 = vadd.f32 %v2317, %v2091
      %v2468 = vadd.f32 %v2321, %v2092
      %v2469 = vadd.f32 %v2325, %v2093
      %v2470 = vadd.f32 %v2333, %v2090
      %v2471 = vadd.f32 %v2337, %v2091
      %v2472 = vadd.f32 %v2341, %v2092
      %v2473 = vadd.f32 %v2345, %v2093
      %v2474 = vadd.f32 %v2353, %v2090
      %v2475 = vadd.f32 %v2357, %v2091
      %v2476 = vadd.f32 %v2361, %v2092
      %v2477 = vadd.f32 %v2365, %v2093
      %v2478 = vadd.f32 %v2373, %v2090
      %v2479 = vadd.f32 %v2377, %v2091
      %v2480 = vadd.f32 %v2381, %v2092
      %v2481 = vadd.f32 %v2385, %v2093
      %v2482 = vadd.f32 %v2393, %v2090
      %v2483 = vadd.f32 %v2397, %v2091
      %v2484 = vadd.f32 %v2401, %v2092
      %v2485 = vadd.f32 %v2405, %v2093
      %v2486 = vadd.f32 %v2413, %v2090
      %v2487 = vadd.f32 %v2417, %v2091
      %v2488 = vadd.f32 %v2421, %v2092
      %v2489 = vadd.f32 %v2425, %v2093
      %v2490 = vcombine.low %v2426, %v2434
      %v2491 = vcombine.high %v2426, %v2434
      %v2493 = vunpack.c.l.s4 1983009808
      %v2494 = vunpack.c.0.s8 %v2493
      %v2495 = vlaneseq
      %v2496 = vshrl.u32 %v2495, 7
      %v2497 = vsub.s32 %v2494, %v2496
      %v2498 = vrot.slane %v2490, %v2497
      %v2500 = vunpack.c.l.s4 1983009808
      %v2501 = vunpack.c.0.s8 %v2500
      %v2502 = vlaneseq
      %v2503 = vshrl.u32 %v2502, 7
      %v2504 = vsub.s32 %v2501, %v2503
      %v2505 = vrot.slane %v2491, %v2504
      %v2506 = vcombine.low %v2430, %v2438
      %v2507 = vcombine.high %v2430, %v2438
      %v2509 = vunpack.c.l.s4 1983009808
      %v2510 = vunpack.c.0.s8 %v2509
      %v2511 = vlaneseq
      %v2512 = vshrl.u32 %v2511, 7
      %v2513 = vsub.s32 %v2510, %v2512
      %v2514 = vrot.slane %v2506, %v2513
      %v2516 = vunpack.c.l.s4 1983009808
      %v2517 = vunpack.c.0.s8 %v2516
      %v2518 = vlaneseq
      %v2519 = vshrl.u32 %v2518, 7
      %v2520 = vsub.s32 %v2517, %v2519
      %v2521 = vrot.slane %v2507, %v2520
      %v2522 = vcombine.low %v2442, %v2450
      %v2523 = vcombine.high %v2442, %v2450
      %v2525 = vunpack.c.l.s4 1983009808
      %v2526 = vunpack.c.0.s8 %v2525
      %v2527 = vlaneseq
      %v2528 = vshrl.u32 %v2527, 7
      %v2529 = vsub.s32 %v2526, %v2528
      %v2530 = vrot.slane %v2522, %v2529
      %v2532 = vunpack.c.l.s4 1983009808
      %v2533 = vunpack.c.0.s8 %v2532
      %v2534 = vlaneseq
      %v2535 = vshrl.u32 %v2534, 7
      %v2536 = vsub.s32 %v2533, %v2535
      %v2537 = vrot.slane %v2523, %v2536
      %v2538 = vcombine.low %v2446, %v2454
      %v2539 = vcombine.high %v2446, %v2454
      %v2541 = vunpack.c.l.s4 1983009808
      %v2542 = vunpack.c.0.s8 %v2541
      %v2543 = vlaneseq
      %v2544 = vshrl.u32 %v2543, 7
      %v2545 = vsub.s32 %v2542, %v2544
      %v2546 = vrot.slane %v2538, %v2545
      %v2548 = vunpack.c.l.s4 1983009808
      %v2549 = vunpack.c.0.s8 %v2548
      %v2550 = vlaneseq
      %v2551 = vshrl.u32 %v2550, 7
      %v2552 = vsub.s32 %v2549, %v2551
      %v2553 = vrot.slane %v2539, %v2552
      %v2554 = vcombine.low %v2498, %v2514
      %v2555 = vcombine.high %v2498, %v2514
      %v2557 = vunpack.c.l.s4 1934713408
      %v2558 = vunpack.c.0.s8 %v2557
      %v2559 = vlaneseq
      %v2560 = vshrl.u32 %v2559, 7
      %v2561 = vsub.s32 %v2558, %v2560
      %v2562 = vrot.slane %v2554, %v2561
      %v2564 = vunpack.c.l.s4 1934713408
      %v2565 = vunpack.c.0.s8 %v2564
      %v2566 = vlaneseq
      %v2567 = vshrl.u32 %v2566, 7
      %v2568 = vsub.s32 %v2565, %v2567
      %v2569 = vrot.slane %v2555, %v2568
      %v2570 = vcombine.low %v2505, %v2521
      %v2571 = vcombine.high %v2505, %v2521
      %v2573 = vunpack.c.l.s4 1934713408
      %v2574 = vunpack.c.0.s8 %v2573
      %v2575 = vlaneseq
      %v2576 = vshrl.u32 %v2575, 7
      %v2577 = vsub.s32 %v2574, %v2576
      %v2578 = vrot.slane %v2570, %v2577
      %v2580 = vunpack.c.l.s4 1934713408
      %v2581 = vunpack.c.0.s8 %v2580
      %v2582 = vlaneseq
      %v2583 = vshrl.u32 %v2582, 7
      %v2584 = vsub.s32 %v2581, %v2583
      %v2585 = vrot.slane %v2571, %v2584
      %v2586 = vcombine.low %v2530, %v2546
      %v2587 = vcombine.high %v2530, %v2546
      %v2589 = vunpack.c.l.s4 1934713408
      %v2590 = vunpack.c.0.s8 %v2589
      %v2591 = vlaneseq
      %v2592 = vshrl.u32 %v2591, 7
      %v2593 = vsub.s32 %v2590, %v2592
      %v2594 = vrot.slane %v2586, %v2593
      %v2596 = vunpack.c.l.s4 1934713408
      %v2597 = vunpack.c.0.s8 %v2596
      %v2598 = vlaneseq
      %v2599 = vshrl.u32 %v2598, 7
      %v2600 = vsub.s32 %v2597, %v2599
      %v2601 = vrot.slane %v2587, %v2600
      %v2602 = vcombine.low %v2537, %v2553
      %v2603 = vcombine.high %v2537, %v2553
      %v2605 = vunpack.c.l.s4 1934713408
      %v2606 = vunpack.c.0.s8 %v2605
      %v2607 = vlaneseq
      %v2608 = vshrl.u32 %v2607, 7
      %v2609 = vsub.s32 %v2606, %v2608
      %v2610 = vrot.slane %v2602, %v2609
      %v2612 = vunpack.c.l.s4 1934713408
      %v2613 = vunpack.c.0.s8 %v2612
      %v2614 = vlaneseq
      %v2615 = vshrl.u32 %v2614, 7
      %v2616 = vsub.s32 %v2613, %v2615
      %v2617 = vrot.slane %v2603, %v2616
      %v2618 = vcombine.low %v2562, %v2594
      %v2619 = vcombine.high %v2562, %v2594
      %v2620 = vcombine.low %v2569, %v2601
      %v2621 = vcombine.high %v2569, %v2601
      %v2622 = vcombine.low %v2578, %v2610
      %v2623 = vcombine.high %v2578, %v2610
      %v2624 = vcombine.low %v2585, %v2617
      %v2625 = vcombine.high %v2585, %v2617
      %v2626 = vcombine.low %v2458, %v2466
      %v2627 = vcombine.high %v2458, %v2466
      %v2629 = vunpack.c.l.s4 1983009808
      %v2630 = vunpack.c.0.s8 %v2629
      %v2631 = vlaneseq
      %v2632 = vshrl.u32 %v2631, 7
      %v2633 = vsub.s32 %v2630, %v2632
      %v2634 = vrot.slane %v2626, %v2633
      %v2636 = vunpack.c.l.s4 1983009808
      %v2637 = vunpack.c.0.s8 %v2636
      %v2638 = vlaneseq
      %v2639 = vshrl.u32 %v2638, 7
      %v2640 = vsub.s32 %v2637, %v2639
      %v2641 = vrot.slane %v2627, %v2640
      %v2642 = vcombine.low %v2462, %v2470
      %v2643 = vcombine.high %v2462, %v2470
      %v2645 = vunpack.c.l.s4 1983009808
      %v2646 = vunpack.c.0.s8 %v2645
      %v2647 = vlaneseq
      %v2648 = vshrl.u32 %v2647, 7
      %v2649 = vsub.s32 %v2646, %v2648
      %v2650 = vrot.slane %v2642, %v2649
      %v2652 = vunpack.c.l.s4 1983009808
      %v2653 = vunpack.c.0.s8 %v2652
      %v2654 = vlaneseq
      %v2655 = vshrl.u32 %v2654, 7
      %v2656 = vsub.s32 %v2653, %v2655
      %v2657 = vrot.slane %v2643, %v2656
      %v2658 = vcombine.low %v2474, %v2482
      %v2659 = vcombine.high %v2474, %v2482
      %v2661 = vunpack.c.l.s4 1983009808
      %v2662 = vunpack.c.0.s8 %v2661
      %v2663 = vlaneseq
      %v2664 = vshrl.u32 %v2663, 7
      %v2665 = vsub.s32 %v2662, %v2664
      %v2666 = vrot.slane %v2658, %v2665
      %v2668 = vunpack.c.l.s4 1983009808
      %v2669 = vunpack.c.0.s8 %v2668
      %v2670 = vlaneseq
      %v2671 = vshrl.u32 %v2670, 7
      %v2672 = vsub.s32 %v2669, %v2671
      %v2673 = vrot.slane %v2659, %v2672
      %v2674 = vcombine.low %v2478, %v2486
      %v2675 = vcombine.high %v2478, %v2486
      %v2677 = vunpack.c.l.s4 1983009808
      %v2678 = vunpack.c.0.s8 %v2677
      %v2679 = vlaneseq
      %v2680 = vshrl.u32 %v2679, 7
      %v2681 = vsub.s32 %v2678, %v2680
      %v2682 = vrot.slane %v2674, %v2681
      %v2684 = vunpack.c.l.s4 1983009808
      %v2685 = vunpack.c.0.s8 %v2684
      %v2686 = vlaneseq
      %v2687 = vshrl.u32 %v2686, 7
      %v2688 = vsub.s32 %v2685, %v2687
      %v2689 = vrot.slane %v2675, %v2688
      %v2690 = vcombine.low %v2634, %v2650
      %v2691 = vcombine.high %v2634, %v2650
      %v2693 = vunpack.c.l.s4 1934713408
      %v2694 = vunpack.c.0.s8 %v2693
      %v2695 = vlaneseq
      %v2696 = vshrl.u32 %v2695, 7
      %v2697 = vsub.s32 %v2694, %v2696
      %v2698 = vrot.slane %v2690, %v2697
      %v2700 = vunpack.c.l.s4 1934713408
      %v2701 = vunpack.c.0.s8 %v2700
      %v2702 = vlaneseq
      %v2703 = vshrl.u32 %v2702, 7
      %v2704 = vsub.s32 %v2701, %v2703
      %v2705 = vrot.slane %v2691, %v2704
      %v2706 = vcombine.low %v2641, %v2657
      %v2707 = vcombine.high %v2641, %v2657
      %v2709 = vunpack.c.l.s4 1934713408
      %v2710 = vunpack.c.0.s8 %v2709
      %v2711 = vlaneseq
      %v2712 = vshrl.u32 %v2711, 7
      %v2713 = vsub.s32 %v2710, %v2712
      %v2714 = vrot.slane %v2706, %v2713
      %v2716 = vunpack.c.l.s4 1934713408
      %v2717 = vunpack.c.0.s8 %v2716
      %v2718 = vlaneseq
      %v2719 = vshrl.u32 %v2718, 7
      %v2720 = vsub.s32 %v2717, %v2719
      %v2721 = vrot.slane %v2707, %v2720
      %v2722 = vcombine.low %v2666, %v2682
      %v2723 = vcombine.high %v2666, %v2682
      %v2725 = vunpack.c.l.s4 1934713408
      %v2726 = vunpack.c.0.s8 %v2725
      %v2727 = vlaneseq
      %v2728 = vshrl.u32 %v2727, 7
      %v2729 = vsub.s32 %v2726, %v2728
      %v2730 = vrot.slane %v2722, %v2729
      %v2732 = vunpack.c.l.s4 1934713408
      %v2733 = vunpack.c.0.s8 %v2732
      %v2734 = vlaneseq
      %v2735 = vshrl.u32 %v2734, 7
      %v2736 = vsub.s32 %v2733, %v2735
      %v2737 = vrot.slane %v2723, %v2736
      %v2738 = vcombine.low %v2673, %v2689
      %v2739 = vcombine.high %v2673, %v2689
      %v2741 = vunpack.c.l.s4 1934713408
      %v2742 = vunpack.c.0.s8 %v2741
      %v2743 = vlaneseq
      %v2744 = vshrl.u32 %v2743, 7
      %v2745 = vsub.s32 %v2742, %v2744
      %v2746 = vrot.slane %v2738, %v2745
      %v2748 = vunpack.c.l.s4 1934713408
      %v2749 = vunpack.c.0.s8 %v2748
      %v2750 = vlaneseq
      %v2751 = vshrl.u32 %v2750, 7
      %v2752 = vsub.s32 %v2749, %v2751
      %v2753 = vrot.slane %v2739, %v2752
      %v2754 = vcombine.low %v2698, %v2730
      %v2755 = vcombine.high %v2698, %v2730
      %v2756 = vcombine.low %v2705, %v2737
      %v2757 = vcombine.high %v2705, %v2737
      %v2758 = vcombine.low %v2714, %v2746
      %v2759 = vcombine.high %v2714, %v2746
      %v2760 = vcombine.low %v2721, %v2753
      %v2761 = vcombine.high %v2721, %v2753
      %v2762 = vcombine.low %v2427, %v2435
      %v2763 = vcombine.high %v2427, %v2435
      %v2765 = vunpack.c.l.s4 1983009808
      %v2766 = vunpack.c.0.s8 %v2765
      %v2767 = vlaneseq
      %v2768 = vshrl.u32 %v2767, 7
      %v2769 = vsub.s32 %v2766, %v2768
      %v2770 = vrot.slane %v2762, %v2769
      %v2772 = vunpack.c.l.s4 1983009808
      %v2773 = vunpack.c.0.s8 %v2772
      %v2774 = vlaneseq
      %v2775 = vshrl.u32 %v2774, 7
      %v2776 = vsub.s32 %v2773, %v2775
      %v2777 = vrot.slane %v2763, %v2776
      %v2778 = vcombine.low %v2431, %v2439
      %v2779 = vcombine.high %v2431, %v2439
      %v2781 = vunpack.c.l.s4 1983009808
      %v2782 = vunpack.c.0.s8 %v2781
      %v2783 = vlaneseq
      %v2784 = vshrl.u32 %v2783, 7
      %v2785 = vsub.s32 %v2782, %v2784
      %v2786 = vrot.slane %v2778, %v2785
      %v2788 = vunpack.c.l.s4 1983009808
      %v2789 = vunpack.c.0.s8 %v2788
      %v2790 = vlaneseq
      %v2791 = vshrl.u32 %v2790, 7
      %v2792 = vsub.s32 %v2789, %v2791
      %v2793 = vrot.slane %v2779, %v2792
      %v2794 = vcombine.low %v2443, %v2451
      %v2795 = vcombine.high %v2443, %v2451
      %v2797 = vunpack.c.l.s4 1983009808
      %v2798 = vunpack.c.0.s8 %v2797
      %v2799 = vlaneseq
      %v2800 = vshrl.u32 %v2799, 7
      %v2801 = vsub.s32 %v2798, %v2800
      %v2802 = vrot.slane %v2794, %v2801
      %v2804 = vunpack.c.l.s4 1983009808
      %v2805 = vunpack.c.0.s8 %v2804
      %v2806 = vlaneseq
      %v2807 = vshrl.u32 %v2806, 7
      %v2808 = vsub.s32 %v2805, %v2807
      %v2809 = vrot.slane %v2795, %v2808
      %v2810 = vcombine.low %v2447, %v2455
      %v2811 = vcombine.high %v2447, %v2455
      %v2813 = vunpack.c.l.s4 1983009808
      %v2814 = vunpack.c.0.s8 %v2813
      %v2815 = vlaneseq
      %v2816 = vshrl.u32 %v2815, 7
      %v2817 = vsub.s32 %v2814, %v2816
      %v2818 = vrot.slane %v2810, %v2817
      %v2820 = vunpack.c.l.s4 1983009808
      %v2821 = vunpack.c.0.s8 %v2820
      %v2822 = vlaneseq
      %v2823 = vshrl.u32 %v2822, 7
      %v2824 = vsub.s32 %v2821, %v2823
      %v2825 = vrot.slane %v2811, %v2824
      %v2826 = vcombine.low %v2770, %v2786
      %v2827 = vcombine.high %v2770, %v2786
      %v2829 = vunpack.c.l.s4 1934713408
      %v2830 = vunpack.c.0.s8 %v2829
      %v2831 = vlaneseq
      %v2832 = vshrl.u32 %v2831, 7
      %v2833 = vsub.s32 %v2830, %v2832
      %v2834 = vrot.slane %v2826, %v2833
      %v2836 = vunpack.c.l.s4 1934713408
      %v2837 = vunpack.c.0.s8 %v2836
      %v2838 = vlaneseq
      %v2839 = vshrl.u32 %v2838, 7
      %v2840 = vsub.s32 %v2837, %v2839
      %v2841 = vrot.slane %v2827, %v2840
      %v2842 = vcombine.low %v2777, %v2793
      %v2843 = vcombine.high %v2777, %v2793
      %v2845 = vunpack.c.l.s4 1934713408
      %v2846 = vunpack.c.0.s8 %v2845
      %v2847 = vlaneseq
      %v2848 = vshrl.u32 %v2847, 7
      %v2849 = vsub.s32 %v2846, %v2848
      %v2850 = vrot.slane %v2842, %v2849
      %v2852 = vunpack.c.l.s4 1934713408
      %v2853 = vunpack.c.0.s8 %v2852
      %v2854 = vlaneseq
      %v2855 = vshrl.u32 %v2854, 7
      %v2856 = vsub.s32 %v2853, %v2855
      %v2857 = vrot.slane %v2843, %v2856
      %v2858 = vcombine.low %v2802, %v2818
      %v2859 = vcombine.high %v2802, %v2818
      %v2861 = vunpack.c.l.s4 1934713408
      %v2862 = vunpack.c.0.s8 %v2861
      %v2863 = vlaneseq
      %v2864 = vshrl.u32 %v2863, 7
      %v2865 = vsub.s32 %v2862, %v2864
      %v2866 = vrot.slane %v2858, %v2865
      %v2868 = vunpack.c.l.s4 1934713408
      %v2869 = vunpack.c.0.s8 %v2868
      %v2870 = vlaneseq
      %v2871 = vshrl.u32 %v2870, 7
      %v2872 = vsub.s32 %v2869, %v2871
      %v2873 = vrot.slane %v2859, %v2872
      %v2874 = vcombine.low %v2809, %v2825
      %v2875 = vcombine.high %v2809, %v2825
      %v2877 = vunpack.c.l.s4 1934713408
      %v2878 = vunpack.c.0.s8 %v2877
      %v2879 = vlaneseq
      %v2880 = vshrl.u32 %v2879, 7
      %v2881 = vsub.s32 %v2878, %v2880
      %v2882 = vrot.slane %v2874, %v2881
      %v2884 = vunpack.c.l.s4 1934713408
      %v2885 = vunpack.c.0.s8 %v2884
      %v2886 = vlaneseq
      %v2887 = vshrl.u32 %v2886, 7
      %v2888 = vsub.s32 %v2885, %v2887
      %v2889 = vrot.slane %v2875, %v2888
      %v2890 = vcombine.low %v2834, %v2866
      %v2891 = vcombine.high %v2834, %v2866
      %v2892 = vcombine.low %v2841, %v2873
      %v2893 = vcombine.high %v2841, %v2873
      %v2894 = vcombine.low %v2850, %v2882
      %v2895 = vcombine.high %v2850, %v2882
      %v2896 = vcombine.low %v2857, %v2889
      %v2897 = vcombine.high %v2857, %v2889
      %v2898 = vcombine.low %v2459, %v2467
      %v2899 = vcombine.high %v2459, %v2467
      %v2901 = vunpack.c.l.s4 1983009808
      %v2902 = vunpack.c.0.s8 %v2901
      %v2903 = vlaneseq
      %v2904 = vshrl.u32 %v2903, 7
      %v2905 = vsub.s32 %v2902, %v2904
      %v2906 = vrot.slane %v2898, %v2905
      %v2908 = vunpack.c.l.s4 1983009808
      %v2909 = vunpack.c.0.s8 %v2908
      %v2910 = vlaneseq
      %v2911 = vshrl.u32 %v2910, 7
      %v2912 = vsub.s32 %v2909, %v2911
      %v2913 = vrot.slane %v2899, %v2912
      %v2914 = vcombine.low %v2463, %v2471
      %v2915 = vcombine.high %v2463, %v2471
      %v2917 = vunpack.c.l.s4 1983009808
      %v2918 = vunpack.c.0.s8 %v2917
      %v2919 = vlaneseq
      %v2920 = vshrl.u32 %v2919, 7
      %v2921 = vsub.s32 %v2918, %v2920
      %v2922 = vrot.slane %v2914, %v2921
      %v2924 = vunpack.c.l.s4 1983009808
      %v2925 = vunpack.c.0.s8 %v2924
      %v2926 = vlaneseq
      %v2927 = vshrl.u32 %v2926, 7
      %v2928 = vsub.s32 %v2925, %v2927
      %v2929 = vrot.slane %v2915, %v2928
      %v2930 = vcombine.low %v2475, %v2483
      %v2931 = vcombine.high %v2475, %v2483
      %v2933 = vunpack.c.l.s4 1983009808
      %v2934 = vunpack.c.0.s8 %v2933
      %v2935 = vlaneseq
      %v2936 = vshrl.u32 %v2935, 7
      %v2937 = vsub.s32 %v2934, %v2936
      %v2938 = vrot.slane %v2930, %v2937
      %v2940 = vunpack.c.l.s4 1983009808
      %v2941 = vunpack.c.0.s8 %v2940
      %v2942 = vlaneseq
      %v2943 = vshrl.u32 %v2942, 7
      %v2944 = vsub.s32 %v2941, %v2943
      %v2945 = vrot.slane %v2931, %v2944
      %v2946 = vcombine.low %v2479, %v2487
      %v2947 = vcombine.high %v2479, %v2487
      %v2949 = vunpack.c.l.s4 1983009808
      %v2950 = vunpack.c.0.s8 %v2949
      %v2951 = vlaneseq
      %v2952 = vshrl.u32 %v2951, 7
      %v2953 = vsub.s32 %v2950, %v2952
      %v2954 = vrot.slane %v2946, %v2953
      %v2956 = vunpack.c.l.s4 1983009808
      %v2957 = vunpack.c.0.s8 %v2956
      %v2958 = vlaneseq
      %v2959 = vshrl.u32 %v2958, 7
      %v2960 = vsub.s32 %v2957, %v2959
      %v2961 = vrot.slane %v2947, %v2960
      %v2962 = vcombine.low %v2906, %v2922
      %v2963 = vcombine.high %v2906, %v2922
      %v2965 = vunpack.c.l.s4 1934713408
      %v2966 = vunpack.c.0.s8 %v2965
      %v2967 = vlaneseq
      %v2968 = vshrl.u32 %v2967, 7
      %v2969 = vsub.s32 %v2966, %v2968
      %v2970 = vrot.slane %v2962, %v2969
      %v2972 = vunpack.c.l.s4 1934713408
      %v2973 = vunpack.c.0.s8 %v2972
      %v2974 = vlaneseq
      %v2975 = vshrl.u32 %v2974, 7
      %v2976 = vsub.s32 %v2973, %v2975
      %v2977 = vrot.slane %v2963, %v2976
      %v2978 = vcombine.low %v2913, %v2929
      %v2979 = vcombine.high %v2913, %v2929
      %v2981 = vunpack.c.l.s4 1934713408
      %v2982 = vunpack.c.0.s8 %v2981
      %v2983 = vlaneseq
      %v2984 = vshrl.u32 %v2983, 7
      %v2985 = vsub.s32 %v2982, %v2984
      %v2986 = vrot.slane %v2978, %v2985
      %v2988 = vunpack.c.l.s4 1934713408
      %v2989 = vunpack.c.0.s8 %v2988
      %v2990 = vlaneseq
      %v2991 = vshrl.u32 %v2990, 7
      %v2992 = vsub.s32 %v2989, %v2991
      %v2993 = vrot.slane %v2979, %v2992
      %v2994 = vcombine.low %v2938, %v2954
      %v2995 = vcombine.high %v2938, %v2954
      %v2997 = vunpack.c.l.s4 1934713408
      %v2998 = vunpack.c.0.s8 %v2997
      %v2999 = vlaneseq
      %v3000 = vshrl.u32 %v2999, 7
      %v3001 = vsub.s32 %v2998, %v3000
      %v3002 = vrot.slane %v2994, %v3001
      %v3004 = vunpack.c.l.s4 1934713408
      %v3005 = vunpack.c.0.s8 %v3004
      %v3006 = vlaneseq
      %v3007 = vshrl.u32 %v3006, 7
      %v3008 = vsub.s32 %v3005, %v3007
      %v3009 = vrot.slane %v2995, %v3008
      %v3010 = vcombine.low %v2945, %v2961
      %v3011 = vcombine.high %v2945, %v2961
      %v3013 = vunpack.c.l.s4 1934713408
      %v3014 = vunpack.c.0.s8 %v3013
      %v3015 = vlaneseq
      %v3016 = vshrl.u32 %v3015, 7
      %v3017 = vsub.s32 %v3014, %v3016
      %v3018 = vrot.slane %v3010, %v3017
      %v3020 = vunpack.c.l.s4 1934713408
      %v3021 = vunpack.c.0.s8 %v3020
      %v3022 = vlaneseq
      %v3023 = vshrl.u32 %v3022, 7
      %v3024 = vsub.s32 %v3021, %v3023
      %v3025 = vrot.slane %v3011, %v3024
      %v3026 = vcombine.low %v2970, %v3002
      %v3027 = vcombine.high %v2970, %v3002
      %v3028 = vcombine.low %v2977, %v3009
      %v3029 = vcombine.high %v2977, %v3009
      %v3030 = vcombine.low %v2986, %v3018
      %v3031 = vcombine.high %v2986, %v3018
      %v3032 = vcombine.low %v2993, %v3025
      %v3033 = vcombine.high %v2993, %v3025
      %v3034 = vcombine.low %v2428, %v2436
      %v3035 = vcombine.high %v2428, %v2436
      %v3037 = vunpack.c.l.s4 1983009808
      %v3038 = vunpack.c.0.s8 %v3037
      %v3039 = vlaneseq
      %v3040 = vshrl.u32 %v3039, 7
      %v3041 = vsub.s32 %v3038, %v3040
      %v3042 = vrot.slane %v3034, %v3041
      %v3044 = vunpack.c.l.s4 1983009808
      %v3045 = vunpack.c.0.s8 %v3044
      %v3046 = vlaneseq
      %v3047 = vshrl.u32 %v3046, 7
      %v3048 = vsub.s32 %v3045, %v3047
      %v3049 = vrot.slane %v3035, %v3048
      %v3050 = vcombine.low %v2432, %v2440
      %v3051 = vcombine.high %v2432, %v2440
      %v3053 = vunpack.c.l.s4 1983009808
      %v3054 = vunpack.c.0.s8 %v3053
      %v3055 = vlaneseq
      %v3056 = vshrl.u32 %v3055, 7
      %v3057 = vsub.s32 %v3054, %v3056
      %v3058 = vrot.slane %v3050, %v3057
      %v3060 = vunpack.c.l.s4 1983009808
      %v3061 = vunpack.c.0.s8 %v3060
      %v3062 = vlaneseq
      %v3063 = vshrl.u32 %v3062, 7
      %v3064 = vsub.s32 %v3061, %v3063
      %v3065 = vrot.slane %v3051, %v3064
      %v3066 = vcombine.low %v2444, %v2452
      %v3067 = vcombine.high %v2444, %v2452
      %v3069 = vunpack.c.l.s4 1983009808
      %v3070 = vunpack.c.0.s8 %v3069
      %v3071 = vlaneseq
      %v3072 = vshrl.u32 %v3071, 7
      %v3073 = vsub.s32 %v3070, %v3072
      %v3074 = vrot.slane %v3066, %v3073
      %v3076 = vunpack.c.l.s4 1983009808
      %v3077 = vunpack.c.0.s8 %v3076
      %v3078 = vlaneseq
      %v3079 = vshrl.u32 %v3078, 7
      %v3080 = vsub.s32 %v3077, %v3079
      %v3081 = vrot.slane %v3067, %v3080
      %v3082 = vcombine.low %v2448, %v2456
      %v3083 = vcombine.high %v2448, %v2456
      %v3085 = vunpack.c.l.s4 1983009808
      %v3086 = vunpack.c.0.s8 %v3085
      %v3087 = vlaneseq
      %v3088 = vshrl.u32 %v3087, 7
      %v3089 = vsub.s32 %v3086, %v3088
      %v3090 = vrot.slane %v3082, %v3089
      %v3092 = vunpack.c.l.s4 1983009808
      %v3093 = vunpack.c.0.s8 %v3092
      %v3094 = vlaneseq
      %v3095 = vshrl.u32 %v3094, 7
      %v3096 = vsub.s32 %v3093, %v3095
      %v3097 = vrot.slane %v3083, %v3096
      %v3098 = vcombine.low %v3042, %v3058
      %v3099 = vcombine.high %v3042, %v3058
      %v3101 = vunpack.c.l.s4 1934713408
      %v3102 = vunpack.c.0.s8 %v3101
      %v3103 = vlaneseq
      %v3104 = vshrl.u32 %v3103, 7
      %v3105 = vsub.s32 %v3102, %v3104
      %v3106 = vrot.slane %v3098, %v3105
      %v3108 = vunpack.c.l.s4 1934713408
      %v3109 = vunpack.c.0.s8 %v3108
      %v3110 = vlaneseq
      %v3111 = vshrl.u32 %v3110, 7
      %v3112 = vsub.s32 %v3109, %v3111
      %v3113 = vrot.slane %v3099, %v3112
      %v3114 = vcombine.low %v3049, %v3065
      %v3115 = vcombine.high %v3049, %v3065
      %v3117 = vunpack.c.l.s4 1934713408
      %v3118 = vunpack.c.0.s8 %v3117
      %v3119 = vlaneseq
      %v3120 = vshrl.u32 %v3119, 7
      %v3121 = vsub.s32 %v3118, %v3120
      %v3122 = vrot.slane %v3114, %v3121
      %v3124 = vunpack.c.l.s4 1934713408
      %v3125 = vunpack.c.0.s8 %v3124
      %v3126 = vlaneseq
      %v3127 = vshrl.u32 %v3126, 7
      %v3128 = vsub.s32 %v3125, %v3127
      %v3129 = vrot.slane %v3115, %v3128
      %v3130 = vcombine.low %v3074, %v3090
      %v3131 = vcombine.high %v3074, %v3090
      %v3133 = vunpack.c.l.s4 1934713408
      %v3134 = vunpack.c.0.s8 %v3133
      %v3135 = vlaneseq
      %v3136 = vshrl.u32 %v3135, 7
      %v3137 = vsub.s32 %v3134, %v3136
      %v3138 = vrot.slane %v3130, %v3137
      %v3140 = vunpack.c.l.s4 1934713408
      %v3141 = vunpack.c.0.s8 %v3140
      %v3142 = vlaneseq
      %v3143 = vshrl.u32 %v3142, 7
      %v3144 = vsub.s32 %v3141, %v3143
      %v3145 = vrot.slane %v3131, %v3144
      %v3146 = vcombine.low %v3081, %v3097
      %v3147 = vcombine.high %v3081, %v3097
      %v3149 = vunpack.c.l.s4 1934713408
      %v3150 = vunpack.c.0.s8 %v3149
      %v3151 = vlaneseq
      %v3152 = vshrl.u32 %v3151, 7
      %v3153 = vsub.s32 %v3150, %v3152
      %v3154 = vrot.slane %v3146, %v3153
      %v3156 = vunpack.c.l.s4 1934713408
      %v3157 = vunpack.c.0.s8 %v3156
      %v3158 = vlaneseq
      %v3159 = vshrl.u32 %v3158, 7
      %v3160 = vsub.s32 %v3157, %v3159
      %v3161 = vrot.slane %v3147, %v3160
      %v3162 = vcombine.low %v3106, %v3138
      %v3163 = vcombine.high %v3106, %v3138
      %v3164 = vcombine.low %v3113, %v3145
      %v3165 = vcombine.high %v3113, %v3145
      %v3166 = vcombine.low %v3122, %v3154
      %v3167 = vcombine.high %v3122, %v3154
      %v3168 = vcombine.low %v3129, %v3161
      %v3169 = vcombine.high %v3129, %v3161
      %v3170 = vcombine.low %v2460, %v2468
      %v3171 = vcombine.high %v2460, %v2468
      %v3173 = vunpack.c.l.s4 1983009808
      %v3174 = vunpack.c.0.s8 %v3173
      %v3175 = vlaneseq
      %v3176 = vshrl.u32 %v3175, 7
      %v3177 = vsub.s32 %v3174, %v3176
      %v3178 = vrot.slane %v3170, %v3177
      %v3180 = vunpack.c.l.s4 1983009808
      %v3181 = vunpack.c.0.s8 %v3180
      %v3182 = vlaneseq
      %v3183 = vshrl.u32 %v3182, 7
      %v3184 = vsub.s32 %v3181, %v3183
      %v3185 = vrot.slane %v3171, %v3184
      %v3186 = vcombine.low %v2464, %v2472
      %v3187 = vcombine.high %v2464, %v2472
      %v3189 = vunpack.c.l.s4 1983009808
      %v3190 = vunpack.c.0.s8 %v3189
      %v3191 = vlaneseq
      %v3192 = vshrl.u32 %v3191, 7
      %v3193 = vsub.s32 %v3190, %v3192
      %v3194 = vrot.slane %v3186, %v3193
      %v3196 = vunpack.c.l.s4 1983009808
      %v3197 = vunpack.c.0.s8 %v3196
      %v3198 = vlaneseq
      %v3199 = vshrl.u32 %v3198, 7
      %v3200 = vsub.s32 %v3197, %v3199
      %v3201 = vrot.slane %v3187, %v3200
      %v3202 = vcombine.low %v2476, %v2484
      %v3203 = vcombine.high %v2476, %v2484
      %v3205 = vunpack.c.l.s4 1983009808
      %v3206 = vunpack.c.0.s8 %v3205
      %v3207 = vlaneseq
      %v3208 = vshrl.u32 %v3207, 7
      %v3209 = vsub.s32 %v3206, %v3208
      %v3210 = vrot.slane %v3202, %v3209
      %v3212 = vunpack.c.l.s4 1983009808
      %v3213 = vunpack.c.0.s8 %v3212
      %v3214 = vlaneseq
      %v3215 = vshrl.u32 %v3214, 7
      %v3216 = vsub.s32 %v3213, %v3215
      %v3217 = vrot.slane %v3203, %v3216
      %v3218 = vcombine.low %v2480, %v2488
      %v3219 = vcombine.high %v2480, %v2488
      %v3221 = vunpack.c.l.s4 1983009808
      %v3222 = vunpack.c.0.s8 %v3221
      %v3223 = vlaneseq
      %v3224 = vshrl.u32 %v3223, 7
      %v3225 = vsub.s32 %v3222, %v3224
      %v3226 = vrot.slane %v3218, %v3225
      %v3228 = vunpack.c.l.s4 1983009808
      %v3229 = vunpack.c.0.s8 %v3228
      %v3230 = vlaneseq
      %v3231 = vshrl.u32 %v3230, 7
      %v3232 = vsub.s32 %v3229, %v3231
      %v3233 = vrot.slane %v3219, %v3232
      %v3234 = vcombine.low %v3178, %v3194
      %v3235 = vcombine.high %v3178, %v3194
      %v3237 = vunpack.c.l.s4 1934713408
      %v3238 = vunpack.c.0.s8 %v3237
      %v3239 = vlaneseq
      %v3240 = vshrl.u32 %v3239, 7
      %v3241 = vsub.s32 %v3238, %v3240
      %v3242 = vrot.slane %v3234, %v3241
      %v3244 = vunpack.c.l.s4 1934713408
      %v3245 = vunpack.c.0.s8 %v3244
      %v3246 = vlaneseq
      %v3247 = vshrl.u32 %v3246, 7
      %v3248 = vsub.s32 %v3245, %v3247
      %v3249 = vrot.slane %v3235, %v3248
      %v3250 = vcombine.low %v3185, %v3201
      %v3251 = vcombine.high %v3185, %v3201
      %v3253 = vunpack.c.l.s4 1934713408
      %v3254 = vunpack.c.0.s8 %v3253
      %v3255 = vlaneseq
      %v3256 = vshrl.u32 %v3255, 7
      %v3257 = vsub.s32 %v3254, %v3256
      %v3258 = vrot.slane %v3250, %v3257
      %v3260 = vunpack.c.l.s4 1934713408
      %v3261 = vunpack.c.0.s8 %v3260
      %v3262 = vlaneseq
      %v3263 = vshrl.u32 %v3262, 7
      %v3264 = vsub.s32 %v3261, %v3263
      %v3265 = vrot.slane %v3251, %v3264
      %v3266 = vcombine.low %v3210, %v3226
      %v3267 = vcombine.high %v3210, %v3226
      %v3269 = vunpack.c.l.s4 1934713408
      %v3270 = vunpack.c.0.s8 %v3269
      %v3271 = vlaneseq
      %v3272 = vshrl.u32 %v3271, 7
      %v3273 = vsub.s32 %v3270, %v3272
      %v3274 = vrot.slane %v3266, %v3273
      %v3276 = vunpack.c.l.s4 1934713408
      %v3277 = vunpack.c.0.s8 %v3276
      %v3278 = vlaneseq
      %v3279 = vshrl.u32 %v3278, 7
      %v3280 = vsub.s32 %v3277, %v3279
      %v3281 = vrot.slane %v3267, %v3280
      %v3282 = vcombine.low %v3217, %v3233
      %v3283 = vcombine.high %v3217, %v3233
      %v3285 = vunpack.c.l.s4 1934713408
      %v3286 = vunpack.c.0.s8 %v3285
      %v3287 = vlaneseq
      %v3288 = vshrl.u32 %v3287, 7
      %v3289 = vsub.s32 %v3286, %v3288
      %v3290 = vrot.slane %v3282, %v3289
      %v3292 = vunpack.c.l.s4 1934713408
      %v3293 = vunpack.c.0.s8 %v3292
      %v3294 = vlaneseq
      %v3295 = vshrl.u32 %v3294, 7
      %v3296 = vsub.s32 %v3293, %v3295
      %v3297 = vrot.slane %v3283, %v3296
      %v3298 = vcombine.low %v3242, %v3274
      %v3299 = vcombine.high %v3242, %v3274
      %v3300 = vcombine.low %v3249, %v3281
      %v3301 = vcombine.high %v3249, %v3281
      %v3302 = vcombine.low %v3258, %v3290
      %v3303 = vcombine.high %v3258, %v3290
      %v3304 = vcombine.low %v3265, %v3297
      %v3305 = vcombine.high %v3265, %v3297
      %v3306 = vcombine.low %v2429, %v2437
      %v3307 = vcombine.high %v2429, %v2437
      %v3309 = vunpack.c.l.s4 1983009808
      %v3310 = vunpack.c.0.s8 %v3309
      %v3311 = vlaneseq
      %v3312 = vshrl.u32 %v3311, 7
      %v3313 = vsub.s32 %v3310, %v3312
      %v3314 = vrot.slane %v3306, %v3313
      %v3316 = vunpack.c.l.s4 1983009808
      %v3317 = vunpack.c.0.s8 %v3316
      %v3318 = vlaneseq
      %v3319 = vshrl.u32 %v3318, 7
      %v3320 = vsub.s32 %v3317, %v3319
      %v3321 = vrot.slane %v3307, %v3320
      %v3322 = vcombine.low %v2433, %v2441
      %v3323 = vcombine.high %v2433, %v2441
      %v3325 = vunpack.c.l.s4 1983009808
      %v3326 = vunpack.c.0.s8 %v3325
      %v3327 = vlaneseq
      %v3328 = vshrl.u32 %v3327, 7
      %v3329 = vsub.s32 %v3326, %v3328
      %v3330 = vrot.slane %v3322, %v3329
      %v3332 = vunpack.c.l.s4 1983009808
      %v3333 = vunpack.c.0.s8 %v3332
      %v3334 = vlaneseq
      %v3335 = vshrl.u32 %v3334, 7
      %v3336 = vsub.s32 %v3333, %v3335
      %v3337 = vrot.slane %v3323, %v3336
      %v3338 = vcombine.low %v2445, %v2453
      %v3339 = vcombine.high %v2445, %v2453
      %v3341 = vunpack.c.l.s4 1983009808
      %v3342 = vunpack.c.0.s8 %v3341
      %v3343 = vlaneseq
      %v3344 = vshrl.u32 %v3343, 7
      %v3345 = vsub.s32 %v3342, %v3344
      %v3346 = vrot.slane %v3338, %v3345
      %v3348 = vunpack.c.l.s4 1983009808
      %v3349 = vunpack.c.0.s8 %v3348
      %v3350 = vlaneseq
      %v3351 = vshrl.u32 %v3350, 7
      %v3352 = vsub.s32 %v3349, %v3351
      %v3353 = vrot.slane %v3339, %v3352
      %v3354 = vcombine.low %v2449, %v2457
      %v3355 = vcombine.high %v2449, %v2457
      %v3357 = vunpack.c.l.s4 1983009808
      %v3358 = vunpack.c.0.s8 %v3357
      %v3359 = vlaneseq
      %v3360 = vshrl.u32 %v3359, 7
      %v3361 = vsub.s32 %v3358, %v3360
      %v3362 = vrot.slane %v3354, %v3361
      %v3364 = vunpack.c.l.s4 1983009808
      %v3365 = vunpack.c.0.s8 %v3364
      %v3366 = vlaneseq
      %v3367 = vshrl.u32 %v3366, 7
      %v3368 = vsub.s32 %v3365, %v3367
      %v3369 = vrot.slane %v3355, %v3368
      %v3370 = vcombine.low %v3314, %v3330
      %v3371 = vcombine.high %v3314, %v3330
      %v3373 = vunpack.c.l.s4 1934713408
      %v3374 = vunpack.c.0.s8 %v3373
      %v3375 = vlaneseq
      %v3376 = vshrl.u32 %v3375, 7
      %v3377 = vsub.s32 %v3374, %v3376
      %v3378 = vrot.slane %v3370, %v3377
      %v3380 = vunpack.c.l.s4 1934713408
      %v3381 = vunpack.c.0.s8 %v3380
      %v3382 = vlaneseq
      %v3383 = vshrl.u32 %v3382, 7
      %v3384 = vsub.s32 %v3381, %v3383
      %v3385 = vrot.slane %v3371, %v3384
      %v3386 = vcombine.low %v3321, %v3337
      %v3387 = vcombine.high %v3321, %v3337
      %v3389 = vunpack.c.l.s4 1934713408
      %v3390 = vunpack.c.0.s8 %v3389
      %v3391 = vlaneseq
      %v3392 = vshrl.u32 %v3391, 7
      %v3393 = vsub.s32 %v3390, %v3392
      %v3394 = vrot.slane %v3386, %v3393
      %v3396 = vunpack.c.l.s4 1934713408
      %v3397 = vunpack.c.0.s8 %v3396
      %v3398 = vlaneseq
      %v3399 = vshrl.u32 %v3398, 7
      %v3400 = vsub.s32 %v3397, %v3399
      %v3401 = vrot.slane %v3387, %v3400
      %v3402 = vcombine.low %v3346, %v3362
      %v3403 = vcombine.high %v3346, %v3362
      %v3405 = vunpack.c.l.s4 1934713408
      %v3406 = vunpack.c.0.s8 %v3405
      %v3407 = vlaneseq
      %v3408 = vshrl.u32 %v3407, 7
      %v3409 = vsub.s32 %v3406, %v3408
      %v3410 = vrot.slane %v3402, %v3409
      %v3412 = vunpack.c.l.s4 1934713408
      %v3413 = vunpack.c.0.s8 %v3412
      %v3414 = vlaneseq
      %v3415 = vshrl.u32 %v3414, 7
      %v3416 = vsub.s32 %v3413, %v3415
      %v3417 = vrot.slane %v3403, %v3416
      %v3418 = vcombine.low %v3353, %v3369
      %v3419 = vcombine.high %v3353, %v3369
      %v3421 = vunpack.c.l.s4 1934713408
      %v3422 = vunpack.c.0.s8 %v3421
      %v3423 = vlaneseq
      %v3424 = vshrl.u32 %v3423, 7
      %v3425 = vsub.s32 %v3422, %v3424
      %v3426 = vrot.slane %v3418, %v3425
      %v3428 = vunpack.c.l.s4 1934713408
      %v3429 = vunpack.c.0.s8 %v3428
      %v3430 = vlaneseq
      %v3431 = vshrl.u32 %v3430, 7
      %v3432 = vsub.s32 %v3429, %v3431
      %v3433 = vrot.slane %v3419, %v3432
      %v3434 = vcombine.low %v3378, %v3410
      %v3435 = vcombine.high %v3378, %v3410
      %v3436 = vcombine.low %v3385, %v3417
      %v3437 = vcombine.high %v3385, %v3417
      %v3438 = vcombine.low %v3394, %v3426
      %v3439 = vcombine.high %v3394, %v3426
      %v3440 = vcombine.low %v3401, %v3433
      %v3441 = vcombine.high %v3401, %v3433
      %v3442 = vcombine.low %v2461, %v2469
      %v3443 = vcombine.high %v2461, %v2469
      %v3445 = vunpack.c.l.s4 1983009808
      %v3446 = vunpack.c.0.s8 %v3445
      %v3447 = vlaneseq
      %v3448 = vshrl.u32 %v3447, 7
      %v3449 = vsub.s32 %v3446, %v3448
      %v3450 = vrot.slane %v3442, %v3449
      %v3452 = vunpack.c.l.s4 1983009808
      %v3453 = vunpack.c.0.s8 %v3452
      %v3454 = vlaneseq
      %v3455 = vshrl.u32 %v3454, 7
      %v3456 = vsub.s32 %v3453, %v3455
      %v3457 = vrot.slane %v3443, %v3456
      %v3458 = vcombine.low %v2465, %v2473
      %v3459 = vcombine.high %v2465, %v2473
      %v3461 = vunpack.c.l.s4 1983009808
      %v3462 = vunpack.c.0.s8 %v3461
      %v3463 = vlaneseq
      %v3464 = vshrl.u32 %v3463, 7
      %v3465 = vsub.s32 %v3462, %v3464
      %v3466 = vrot.slane %v3458, %v3465
      %v3468 = vunpack.c.l.s4 1983009808
      %v3469 = vunpack.c.0.s8 %v3468
      %v3470 = vlaneseq
      %v3471 = vshrl.u32 %v3470, 7
      %v3472 = vsub.s32 %v3469, %v3471
      %v3473 = vrot.slane %v3459, %v3472
      %v3474 = vcombine.low %v2477, %v2485
      %v3475 = vcombine.high %v2477, %v2485
      %v3477 = vunpack.c.l.s4 1983009808
      %v3478 = vunpack.c.0.s8 %v3477
      %v3479 = vlaneseq
      %v3480 = vshrl.u32 %v3479, 7
      %v3481 = vsub.s32 %v3478, %v3480
      %v3482 = vrot.slane %v3474, %v3481
      %v3484 = vunpack.c.l.s4 1983009808
      %v3485 = vunpack.c.0.s8 %v3484
      %v3486 = vlaneseq
      %v3487 = vshrl.u32 %v3486, 7
      %v3488 = vsub.s32 %v3485, %v3487
      %v3489 = vrot.slane %v3475, %v3488
      %v3490 = vcombine.low %v2481, %v2489
      %v3491 = vcombine.high %v2481, %v2489
      %v3493 = vunpack.c.l.s4 1983009808
      %v3494 = vunpack.c.0.s8 %v3493
      %v3495 = vlaneseq
      %v3496 = vshrl.u32 %v3495, 7
      %v3497 = vsub.s32 %v3494, %v3496
      %v3498 = vrot.slane %v3490, %v3497
      %v3500 = vunpack.c.l.s4 1983009808
      %v3501 = vunpack.c.0.s8 %v3500
      %v3502 = vlaneseq
      %v3503 = vshrl.u32 %v3502, 7
      %v3504 = vsub.s32 %v3501, %v3503
      %v3505 = vrot.slane %v3491, %v3504
      %v3506 = vcombine.low %v3450, %v3466
      %v3507 = vcombine.high %v3450, %v3466
      %v3509 = vunpack.c.l.s4 1934713408
      %v3510 = vunpack.c.0.s8 %v3509
      %v3511 = vlaneseq
      %v3512 = vshrl.u32 %v3511, 7
      %v3513 = vsub.s32 %v3510, %v3512
      %v3514 = vrot.slane %v3506, %v3513
      %v3516 = vunpack.c.l.s4 1934713408
      %v3517 = vunpack.c.0.s8 %v3516
      %v3518 = vlaneseq
      %v3519 = vshrl.u32 %v3518, 7
      %v3520 = vsub.s32 %v3517, %v3519
      %v3521 = vrot.slane %v3507, %v3520
      %v3522 = vcombine.low %v3457, %v3473
      %v3523 = vcombine.high %v3457, %v3473
      %v3525 = vunpack.c.l.s4 1934713408
      %v3526 = vunpack.c.0.s8 %v3525
      %v3527 = vlaneseq
      %v3528 = vshrl.u32 %v3527, 7
      %v3529 = vsub.s32 %v3526, %v3528
      %v3530 = vrot.slane %v3522, %v3529
      %v3532 = vunpack.c.l.s4 1934713408
      %v3533 = vunpack.c.0.s8 %v3532
      %v3534 = vlaneseq
      %v3535 = vshrl.u32 %v3534, 7
      %v3536 = vsub.s32 %v3533, %v3535
      %v3537 = vrot.slane %v3523, %v3536
      %v3538 = vcombine.low %v3482, %v3498
      %v3539 = vcombine.high %v3482, %v3498
      %v3541 = vunpack.c.l.s4 1934713408
      %v3542 = vunpack.c.0.s8 %v3541
      %v3543 = vlaneseq
      %v3544 = vshrl.u32 %v3543, 7
      %v3545 = vsub.s32 %v3542, %v3544
      %v3546 = vrot.slane %v3538, %v3545
      %v3548 = vunpack.c.l.s4 1934713408
      %v3549 = vunpack.c.0.s8 %v3548
      %v3550 = vlaneseq
      %v3551 = vshrl.u32 %v3550, 7
      %v3552 = vsub.s32 %v3549, %v3551
      %v3553 = vrot.slane %v3539, %v3552
      %v3554 = vcombine.low %v3489, %v3505
      %v3555 = vcombine.high %v3489, %v3505
      %v3557 = vunpack.c.l.s4 1934713408
      %v3558 = vunpack.c.0.s8 %v3557
      %v3559 = vlaneseq
      %v3560 = vshrl.u32 %v3559, 7
      %v3561 = vsub.s32 %v3558, %v3560
      %v3562 = vrot.slane %v3554, %v3561
      %v3564 = vunpack.c.l.s4 1934713408
      %v3565 = vunpack.c.0.s8 %v3564
      %v3566 = vlaneseq
      %v3567 = vshrl.u32 %v3566, 7
      %v3568 = vsub.s32 %v3565, %v3567
      %v3569 = vrot.slane %v3555, %v3568
      %v3570 = vcombine.low %v3514, %v3546
      %v3571 = vcombine.high %v3514, %v3546
      %v3572 = vcombine.low %v3521, %v3553
      %v3573 = vcombine.high %v3521, %v3553
      %v3574 = vcombine.low %v3530, %v3562
      %v3575 = vcombine.high %v3530, %v3562
      %v3576 = vcombine.low %v3537, %v3569
      %v3577 = vcombine.high %v3537, %v3569
      %3580 = vrot.lane.b32.xlu0 %v2619, 16
      %v3581 = vpop.permute.xlu0 %3580
      %3582 = vrot.lane.b32.xlu0 %v2755, 16
      %v3583 = vpop.permute.xlu0 %3582
      %3588 = vrot.lane.b32.xlu0 %v2620, 32
      %v3589 = vpop.permute.xlu0 %3588
      %3590 = vrot.lane.b32.xlu0 %v2756, 32
      %v3591 = vpop.permute.xlu0 %3590
      %3596 = vrot.lane.b32.xlu0 %v2621, 48
      %v3597 = vpop.permute.xlu0 %3596
      %3598 = vrot.lane.b32.xlu0 %v2757, 48
      %v3599 = vpop.permute.xlu0 %3598
      %3604 = vrot.lane.b32.xlu0 %v2622, 64
      %v3605 = vpop.permute.xlu0 %3604
      %3606 = vrot.lane.b32.xlu0 %v2758, 64
      %v3607 = vpop.permute.xlu0 %3606
      %3612 = vrot.lane.b32.xlu0 %v2623, 80
      %v3613 = vpop.permute.xlu0 %3612
      %3614 = vrot.lane.b32.xlu0 %v2759, 80
      %v3615 = vpop.permute.xlu0 %3614
      %3620 = vrot.lane.b32.xlu0 %v2624, 96
      %v3621 = vpop.permute.xlu0 %3620
      %3622 = vrot.lane.b32.xlu0 %v2760, 96
      %v3623 = vpop.permute.xlu0 %3622
      %3628 = vrot.lane.b32.xlu0 %v2625, 112
      %v3629 = vpop.permute.xlu0 %3628
      %3630 = vrot.lane.b32.xlu0 %v2761, 112
      %v3631 = vpop.permute.xlu0 %3630
      %3636 = vrot.lane.b32.xlu0 %v2891, 16
      %v3637 = vpop.permute.xlu0 %3636
      %3638 = vrot.lane.b32.xlu0 %v3027, 16
      %v3639 = vpop.permute.xlu0 %3638
      %3644 = vrot.lane.b32.xlu0 %v2892, 32
      %v3645 = vpop.permute.xlu0 %3644
      %3646 = vrot.lane.b32.xlu0 %v3028, 32
      %v3647 = vpop.permute.xlu0 %3646
      %3652 = vrot.lane.b32.xlu0 %v2893, 48
      %v3653 = vpop.permute.xlu0 %3652
      %3654 = vrot.lane.b32.xlu0 %v3029, 48
      %v3655 = vpop.permute.xlu0 %3654
      %3660 = vrot.lane.b32.xlu0 %v2894, 64
      %v3661 = vpop.permute.xlu0 %3660
      %3662 = vrot.lane.b32.xlu0 %v3030, 64
      %v3663 = vpop.permute.xlu0 %3662
      %3668 = vrot.lane.b32.xlu0 %v2895, 80
      %v3669 = vpop.permute.xlu0 %3668
      %3670 = vrot.lane.b32.xlu0 %v3031, 80
      %v3671 = vpop.permute.xlu0 %3670
      %3676 = vrot.lane.b32.xlu0 %v2896, 96
      %v3677 = vpop.permute.xlu0 %3676
      %3678 = vrot.lane.b32.xlu0 %v3032, 96
      %v3679 = vpop.permute.xlu0 %3678
      %3684 = vrot.lane.b32.xlu0 %v2897, 112
      %v3685 = vpop.permute.xlu0 %3684
      %3686 = vrot.lane.b32.xlu0 %v3033, 112
      %v3687 = vpop.permute.xlu0 %3686
      %3692 = vrot.lane.b32.xlu0 %v3163, 16
      %v3693 = vpop.permute.xlu0 %3692
      %3694 = vrot.lane.b32.xlu0 %v3299, 16
      %v3695 = vpop.permute.xlu0 %3694
      %3700 = vrot.lane.b32.xlu0 %v3164, 32
      %v3701 = vpop.permute.xlu0 %3700
      %3702 = vrot.lane.b32.xlu0 %v3300, 32
      %v3703 = vpop.permute.xlu0 %3702
      %3708 = vrot.lane.b32.xlu0 %v3165, 48
      %v3709 = vpop.permute.xlu0 %3708
      %3710 = vrot.lane.b32.xlu0 %v3301, 48
      %v3711 = vpop.permute.xlu0 %3710
      %3716 = vrot.lane.b32.xlu0 %v3166, 64
      %v3717 = vpop.permute.xlu0 %3716
      %3718 = vrot.lane.b32.xlu0 %v3302, 64
      %v3719 = vpop.permute.xlu0 %3718
      %3724 = vrot.lane.b32.xlu0 %v3167, 80
      %v3725 = vpop.permute.xlu0 %3724
      %3726 = vrot.lane.b32.xlu0 %v3303, 80
      %v3727 = vpop.permute.xlu0 %3726
      %3732 = vrot.lane.b32.xlu0 %v3168, 96
      %v3733 = vpop.permute.xlu0 %3732
      %3734 = vrot.lane.b32.xlu0 %v3304, 96
      %v3735 = vpop.permute.xlu0 %3734
      %3740 = vrot.lane.b32.xlu0 %v3169, 112
      %v3741 = vpop.permute.xlu0 %3740
      %3742 = vrot.lane.b32.xlu0 %v3305, 112
      %v3743 = vpop.permute.xlu0 %3742
      %3748 = vrot.lane.b32.xlu0 %v3435, 16
      %v3749 = vpop.permute.xlu0 %3748
      %3750 = vrot.lane.b32.xlu0 %v3571, 16
      %v3751 = vpop.permute.xlu0 %3750
      %3756 = vrot.lane.b32.xlu0 %v3436, 32
      %v3757 = vpop.permute.xlu0 %3756
      %3758 = vrot.lane.b32.xlu0 %v3572, 32
      %v3759 = vpop.permute.xlu0 %3758
      %3764 = vrot.lane.b32.xlu0 %v3437, 48
      %v3765 = vpop.permute.xlu0 %3764
      %3766 = vrot.lane.b32.xlu0 %v3573, 48
      %v3767 = vpop.permute.xlu0 %3766
      %3772 = vrot.lane.b32.xlu0 %v3438, 64
      %v3773 = vpop.permute.xlu0 %3772
      %3774 = vrot.lane.b32.xlu0 %v3574, 64
      %v3775 = vpop.permute.xlu0 %3774
      %3780 = vrot.lane.b32.xlu0 %v3439, 80
      %v3781 = vpop.permute.xlu0 %3780
      %3782 = vrot.lane.b32.xlu0 %v3575, 80
      %v3783 = vpop.permute.xlu0 %3782
      %3788 = vrot.lane.b32.xlu0 %v3440, 96
      %v3789 = vpop.permute.xlu0 %3788
      %3790 = vrot.lane.b32.xlu0 %v3576, 96
      %v3791 = vpop.permute.xlu0 %3790
      %3796 = vrot.lane.b32.xlu0 %v3441, 112
      %v3797 = vpop.permute.xlu0 %3796
      %3798 = vrot.lane.b32.xlu0 %v3577, 112
      %v3799 = vpop.permute.xlu0 %3798
      %v3802 = vsel %vm1988, %v2618, %v3581
      %v3803 = vsel %vm1988, %v2754, %v3583
      %v3804 = vsel %vm177, %v3802, %v3589
      %v3805 = vsel %vm177, %v3803, %v3591
      %v3806 = vsel %vm1993, %v3804, %v3597
      %v3807 = vsel %vm1993, %v3805, %v3599
      %v3808 = vsel %vm1996, %v3806, %v3605
      %v3809 = vsel %vm1996, %v3807, %v3607
      %v3810 = vsel %vm1999, %v3808, %v3613
      %v3811 = vsel %vm1999, %v3809, %v3615
      %v3812 = vsel %vm2002, %v3810, %v3621
      %v3813 = vsel %vm2002, %v3811, %v3623
      %v3814 = vsel %vm2005, %v3812, %v3629
      %v3815 = vsel %vm2005, %v3813, %v3631
      %v3816 = vsel %vm1988, %v2890, %v3637
      %v3817 = vsel %vm1988, %v3026, %v3639
      %v3818 = vsel %vm177, %v3816, %v3645
      %v3819 = vsel %vm177, %v3817, %v3647
      %v3820 = vsel %vm1993, %v3818, %v3653
      %v3821 = vsel %vm1993, %v3819, %v3655
      %v3822 = vsel %vm1996, %v3820, %v3661
      %v3823 = vsel %vm1996, %v3821, %v3663
      %v3824 = vsel %vm1999, %v3822, %v3669
      %v3825 = vsel %vm1999, %v3823, %v3671
      %v3826 = vsel %vm2002, %v3824, %v3677
      %v3827 = vsel %vm2002, %v3825, %v3679
      %v3828 = vsel %vm2005, %v3826, %v3685
      %v3829 = vsel %vm2005, %v3827, %v3687
      %v3830 = vsel %vm1988, %v3162, %v3693
      %v3831 = vsel %vm1988, %v3298, %v3695
      %v3832 = vsel %vm177, %v3830, %v3701
      %v3833 = vsel %vm177, %v3831, %v3703
      %v3834 = vsel %vm1993, %v3832, %v3709
      %v3835 = vsel %vm1993, %v3833, %v3711
      %v3836 = vsel %vm1996, %v3834, %v3717
      %v3837 = vsel %vm1996, %v3835, %v3719
      %v3838 = vsel %vm1999, %v3836, %v3725
      %v3839 = vsel %vm1999, %v3837, %v3727
      %v3840 = vsel %vm2002, %v3838, %v3733
      %v3841 = vsel %vm2002, %v3839, %v3735
      %v3842 = vsel %vm2005, %v3840, %v3741
      %v3843 = vsel %vm2005, %v3841, %v3743
      %v3844 = vsel %vm1988, %v3434, %v3749
      %v3845 = vsel %vm1988, %v3570, %v3751
      %v3846 = vsel %vm177, %v3844, %v3757
      %v3847 = vsel %vm177, %v3845, %v3759
      %v3848 = vsel %vm1993, %v3846, %v3765
      %v3849 = vsel %vm1993, %v3847, %v3767
      %v3850 = vsel %vm1996, %v3848, %v3773
      %v3851 = vsel %vm1996, %v3849, %v3775
      %v3852 = vsel %vm1999, %v3850, %v3781
      %v3853 = vsel %vm1999, %v3851, %v3783
      %v3854 = vsel %vm2002, %v3852, %v3789
      %v3855 = vsel %vm2002, %v3853, %v3791
      %v3856 = vsel %vm2005, %v3854, %v3797
      %v3857 = vsel %vm2005, %v3855, %v3799
      %vm3858 = vcmp.ge.f32.partialorder %v3814, 0.0
      %vm3859 = vcmp.ge.f32.partialorder %v3828, 0.0
      %vm3860 = vcmp.ge.f32.partialorder %v3842, 0.0
      %vm3861 = vcmp.ge.f32.partialorder %v3856, 0.0
      %vm3862 = vcmp.ge.f32.partialorder %v3815, 0.0
      %vm3863 = vcmp.ge.f32.partialorder %v3829, 0.0
      %vm3864 = vcmp.ge.f32.partialorder %v3843, 0.0
      %vm3865 = vcmp.ge.f32.partialorder %v3857, 0.0
      %v3866 = vmul.f32 %v3814, 0.33
      %v3867 = vmul.f32 %v3828, 0.33
      %v3868 = vmul.f32 %v3842, 0.33
      %v3869 = vmul.f32 %v3856, 0.33
      %v3870 = vmul.f32 %v3815, 0.33
      %v3871 = vmul.f32 %v3829, 0.33
      %v3872 = vmul.f32 %v3843, 0.33
      %v3873 = vmul.f32 %v3857, 0.33
      %v3874 = vsel %vm3858, %v3814, %v3866
      %v3875 = vsel %vm3859, %v3828, %v3867
      %v3876 = vsel %vm3860, %v3842, %v3868
      %v3877 = vsel %vm3861, %v3856, %v3869
      %v3878 = vsel %vm3862, %v3815, %v3870
      %v3879 = vsel %vm3863, %v3829, %v3871
      %v3880 = vsel %vm3864, %v3843, %v3872
      %v3881 = vsel %vm3865, %v3857, %v3873
      %3882 = vst [vmem:[%s170] sm:$0xff] %v2066
      %3883 = vst [vmem:[%s170 + $0x8] sm:$0xff] %v2067
      %3884 = vst [vmem:[%s170 + $0x10] sm:$0xff] %v2068
      %3885 = vst [vmem:[%s170 + $0x18] sm:$0xff] %v2069
      %3886 = vst [vmem:[%s170 + $0x20] sm:$0xff] %v3874
      %3887 = vst [vmem:[%s170 + $0x28] sm:$0xff] %v3875
      %3888 = vst [vmem:[%s170 + $0x30] sm:$0xff] %v3876
      %3889 = vst [vmem:[%s170 + $0x38] sm:$0xff] %v3877
      %3890 = vst [vmem:[%s170 + $0x40] sm:$0xff] %v2070
      %3891 = vst [vmem:[%s170 + $0x48] sm:$0xff] %v2071
      %3892 = vst [vmem:[%s170 + $0x50] sm:$0xff] %v2072
      %3893 = vst [vmem:[%s170 + $0x58] sm:$0xff] %v2073
      %3894 = vst [vmem:[%s170 + $0x60] sm:$0xff] %v3878
      %3895 = vst [vmem:[%s170 + $0x68] sm:$0xff] %v3879
      %3896 = vst [vmem:[%s170 + $0x70] sm:$0xff] %v3880
      %3897 = vst [vmem:[%s170 + $0x78] sm:$0xff] %v3881
      %p3898 = scmp.lt.s32.totalorder %s14, 1
      %s3899 = scalar_select %p3898, %s14, 1
      %s3900 = smul.addr %s3899, 16
      %s3901 = smul.addr %s3900, 8
      %s3902 = scalar_lea.vmem %s3, %s3901
      // Predicated region
      $region33: #{brainnetcnn_forward.3} parent=31 // pred_check
        %p3903 = pneg %p100
      $region34: #{brainnetcnn_forward.3} parent=31 // pred_check_branch
        %3905 = sbr.rel (%p3903) target = $region36
      $region35: #{brainnetcnn_forward.3} parent=31 // pred_region
        _
      $region36: #{brainnetcnn_forward.3} parent=31 // pred_fallthru
        _
    $region32: #{brainnetcnn_forward.3} parent=5 // pred_fallthru
      _
    %p3906 = scmp.le.s32.totalorder 2, %s9
    // Predicated region
    $region37: #{brainnetcnn_forward.3} parent=5 // pred_check
      %p3907 = pneg %p3906
    $region38: #{brainnetcnn_forward.3} parent=5 // pred_check_branch
      %3909 = sbr.rel (%p3907) target = $region40
    $region39: #{brainnetcnn_forward.3} parent=5 // pred_region
      %s3910 = ssub.s32 %s9, 2
      // Predicated region
      $region41: #{brainnetcnn_forward.3} parent=39 // pred_check
        %p3911 = pneg %p106
      $region42: #{brainnetcnn_forward.3} parent=39 // pred_check_branch
        %3913 = sbr.rel (%p3911) target = $region44
      $region43: #{brainnetcnn_forward.3} parent=39 // pred_region
        %p3914 = scmp.lt.s32.totalorder %s15, 1
        %s3915 = scalar_select %p3914, %s15, 1
        %s3916 = smul.addr %s3915, 16
        %s3917 = smul.addr %s3916, 8
        %s3918 = scalar_lea.vmem %s3, %s3917
      $region44: #{brainnetcnn_forward.3} parent=39 // pred_fallthru
        _
    $region40: #{brainnetcnn_forward.3} parent=5 // pred_fallthru
      _
  $region6: #{brainnetcnn_forward.3} parent=0 // loop_footer
    %s13 = sadd.s32 1, %s9
  $region7: #{brainnetcnn_forward.3} parent=0 // loop_footer_branch
    %8 = sbr.rel target = $region3
  $region8: #{brainnetcnn_forward.3} parent=0 // loop_exit
    _

// kernel: brainnetcnn_forward.5
$region0: #{brainnetcnn_forward.5}
  #allocation0 [shape = 'u32[]', space=smem, size = 0x4, offset = 0x4, fixed_abs, tag = 'smem constant byte address 0x4 - core index']
  #allocation1 [shape = 'u32[144,128]{1,0:T(1,128)}', space=vmem, size = 0x12000, scoped, tag = 'internal scratch']
  #allocation2 [shape = 'f32[1,1]{1,0:T(1,128)S(1)}', space=vmem, size = 0x200, scoped, tag = 'scoped memory for brainnetcnn_forward.5']
  %s0 = inlined_call_operand.vmem [shape: f32[2,16,1024], index: 0, kind: input, shape index: {}]
  %s1 = inlined_call_operand.vmem [shape: f32[1,1024], index: 1, kind: input, shape index: {}]
  %s2 = inlined_call_operand.<no memory space> [shape: f32[1,1], index: 2, kind: input, shape index: {}]
  %s3 = inlined_call_operand.vmem [shape: f32[16,256], index: 3, kind: input, shape index: {}]
  %s4 = inlined_call_operand.vmem [shape: f32[1,256], index: 4, kind: input, shape index: {}]
  %s5 = inlined_call_operand.vmem [shape: f32[256,128], index: 5, kind: input, shape index: {}]
  %s6 = inlined_call_operand.vmem [shape: f32[1,128], index: 6, kind: input, shape index: {}]
  %s7 = inlined_call_operand.vmem [shape: f32[128,30], index: 7, kind: input, shape index: {}]
  %s8 = inlined_call_operand.vmem [shape: f32[1,30], index: 8, kind: input, shape index: {}]
  %s9 = inlined_call_operand.vmem [shape: f32[30,2], index: 9, kind: input, shape index: {}]
  %s10 = inlined_call_operand.vmem [shape: f32[1,2], index: 10, kind: input, shape index: {}]
  %s11 = inlined_call_operand.hbm [shape: f32[2,2], index: 11, kind: output, shape index: {}]
  %s12 = sld [smem:[#allocation0]]
  $region54: #{brainnetcnn_forward.5} parent=0
    _
  %s14 = ssub.s32 1, %s12
  %s15 = scalar_select 0, %s14, %s12
  %v16 = vstv %s2
  %17 = vst [vmem:[#allocation2] sm:$0x1] %v16
  $region1: #{brainnetcnn_forward.5} parent=0
    #allocation3 [shape = 'u8[1024]{0}', space=vmem, size = 0x400, scoped, tag = 'output window, operand 0, single buffered']
    #allocation4 [shape = 's32[1]{0}', space=sflag, size = 0x4, scoped, tag = 'scoped memory for brainnetcnn_forward.5']
    %18 = vsyncpa [#allocation4], 0
    // Predicated region
    $region2: #{brainnetcnn_forward.5} parent=1 // pred_check
      _
    $region3: #{brainnetcnn_forward.5} parent=1 // pred_check_branch
      %20 = sbr.rel (0) target = $region5
    $region4: #{brainnetcnn_forward.5} parent=1 // pred_region
      _
    $region5: #{brainnetcnn_forward.5} parent=1 // pred_fallthru
      _
    // Predicated region
    $region6: #{brainnetcnn_forward.5} parent=1 // pred_check
      _
    $region7: #{brainnetcnn_forward.5} parent=1 // pred_check_branch
      %22 = sbr.rel (0) target = $region9
    $region8: #{brainnetcnn_forward.5} parent=1 // pred_region
      _
    $region9: #{brainnetcnn_forward.5} parent=1 // pred_fallthru
      _
    // Predicated region
    $region10: #{brainnetcnn_forward.5} parent=1 // pred_check
      _
    $region11: #{brainnetcnn_forward.5} parent=1 // pred_check_branch
      %24 = sbr.rel (0) target = $region13
    $region12: #{brainnetcnn_forward.5} parent=1 // pred_region
      _
    $region13: #{brainnetcnn_forward.5} parent=1 // pred_fallthru
      _
    // Predicated region
    $region14: #{brainnetcnn_forward.5} parent=1 // pred_check
      _
    $region15: #{brainnetcnn_forward.5} parent=1 // pred_check_branch
      %26 = sbr.rel (0) target = $region17
    $region16: #{brainnetcnn_forward.5} parent=1 // pred_region
      _
    $region17: #{brainnetcnn_forward.5} parent=1 // pred_fallthru
      _
    // Predicated region
    $region18: #{brainnetcnn_forward.5} parent=1 // pred_check
      _
    $region19: #{brainnetcnn_forward.5} parent=1 // pred_check_branch
      %28 = sbr.rel (0) target = $region21
    $region20: #{brainnetcnn_forward.5} parent=1 // pred_region
      _
    $region21: #{brainnetcnn_forward.5} parent=1 // pred_fallthru
      _
    // Predicated region
    $region22: #{brainnetcnn_forward.5} parent=1 // pred_check
      _
    $region23: #{brainnetcnn_forward.5} parent=1 // pred_check_branch
      %30 = sbr.rel (0) target = $region25
    $region24: #{brainnetcnn_forward.5} parent=1 // pred_region
      _
    $region25: #{brainnetcnn_forward.5} parent=1 // pred_fallthru
      _
    // Predicated region
    $region26: #{brainnetcnn_forward.5} parent=1 // pred_check
      _
    $region27: #{brainnetcnn_forward.5} parent=1 // pred_check_branch
      %32 = sbr.rel (0) target = $region29
    $region28: #{brainnetcnn_forward.5} parent=1 // pred_region
      _
    $region29: #{brainnetcnn_forward.5} parent=1 // pred_fallthru
      _
    // Predicated region
    $region30: #{brainnetcnn_forward.5} parent=1 // pred_check
      _
    $region31: #{brainnetcnn_forward.5} parent=1 // pred_check_branch
      %34 = sbr.rel (0) target = $region33
    $region32: #{brainnetcnn_forward.5} parent=1 // pred_region
      _
    $region33: #{brainnetcnn_forward.5} parent=1 // pred_fallthru
      _
    // Predicated region
    $region34: #{brainnetcnn_forward.5} parent=1 // pred_check
      _
    $region35: #{brainnetcnn_forward.5} parent=1 // pred_check_branch
      %36 = sbr.rel (0) target = $region37
    $region36: #{brainnetcnn_forward.5} parent=1 // pred_region
      _
    $region37: #{brainnetcnn_forward.5} parent=1 // pred_fallthru
      _
    // Predicated region
    $region38: #{brainnetcnn_forward.5} parent=1 // pred_check
      _
    $region39: #{brainnetcnn_forward.5} parent=1 // pred_check_branch
      %38 = sbr.rel (0) target = $region41
    $region40: #{brainnetcnn_forward.5} parent=1 // pred_region
      _
    $region41: #{brainnetcnn_forward.5} parent=1 // pred_fallthru
      _
    // Predicated region
    $region42: #{brainnetcnn_forward.5} parent=1 // pred_check
      _
    $region43: #{brainnetcnn_forward.5} parent=1 // pred_check_branch
      %40 = sbr.rel (0) target = $region45
    $region44: #{brainnetcnn_forward.5} parent=1 // pred_region
      _
    $region45: #{brainnetcnn_forward.5} parent=1 // pred_fallthru
      _
    %v41 = vld [vmem:[%s0] sm:$0xff]
    %v42 = vld [vmem:[%s0 + $0x8] sm:$0xff]
    %v43 = vld [vmem:[%s0 + $0x10] sm:$0xff]
    %v44 = vld [vmem:[%s0 + $0x18] sm:$0xff]
    %v45 = vld [vmem:[%s0 + $0x20] sm:$0xff]
    %v46 = vld [vmem:[%s0 + $0x28] sm:$0xff]
    %v47 = vld [vmem:[%s0 + $0x30] sm:$0xff]
    %v48 = vld [vmem:[%s0 + $0x38] sm:$0xff]
    %v49 = vld [vmem:[%s0 + $0x40] sm:$0xff]
    %v50 = vld [vmem:[%s0 + $0x48] sm:$0xff]
    %v51 = vld [vmem:[%s0 + $0x50] sm:$0xff]
    %v52 = vld [vmem:[%s0 + $0x58] sm:$0xff]
    %v53 = vld [vmem:[%s0 + $0x60] sm:$0xff]
    %v54 = vld [vmem:[%s0 + $0x68] sm:$0xff]
    %v55 = vld [vmem:[%s0 + $0x70] sm:$0xff]
    %v56 = vld [vmem:[%s0 + $0x78] sm:$0xff]
    %v57 = vld [vmem:[%s0 + $0x80] sm:$0xff]
    %v58 = vld [vmem:[%s0 + $0x88] sm:$0xff]
    %v59 = vld [vmem:[%s0 + $0x90] sm:$0xff]
    %v60 = vld [vmem:[%s0 + $0x98] sm:$0xff]
    %v61 = vld [vmem:[%s0 + $0xa0] sm:$0xff]
    %v62 = vld [vmem:[%s0 + $0xa8] sm:$0xff]
    %v63 = vld [vmem:[%s0 + $0xb0] sm:$0xff]
    %v64 = vld [vmem:[%s0 + $0xb8] sm:$0xff]
    %v65 = vld [vmem:[%s0 + $0xc0] sm:$0xff]
    %v66 = vld [vmem:[%s0 + $0xc8] sm:$0xff]
    %v67 = vld [vmem:[%s0 + $0xd0] sm:$0xff]
    %v68 = vld [vmem:[%s0 + $0xd8] sm:$0xff]
    %v69 = vld [vmem:[%s0 + $0xe0] sm:$0xff]
    %v70 = vld [vmem:[%s0 + $0xe8] sm:$0xff]
    %v71 = vld [vmem:[%s0 + $0xf0] sm:$0xff]
    %v72 = vld [vmem:[%s0 + $0xf8] sm:$0xff]
    %v73 = vld [vmem:[%s1] sm:$0xff]
    %v75 = vlaneseq
    %v76 = vshrl.u32 %v75, 7
    %v77 = vsub.s32 0, %v76
    %v78 = vrot.slane %v73, %v77
    %v79 = vlaneseq
    %v80 = vshrl.u32 %v79, 7
    %v81 = vsub.s32 1, %v80
    %v82 = vrot.slane %v73, %v81
    %v83 = vlaneseq
    %v84 = vshrl.u32 %v83, 7
    %v85 = vsub.s32 2, %v84
    %v86 = vrot.slane %v73, %v85
    %v87 = vlaneseq
    %v88 = vshrl.u32 %v87, 7
    %v89 = vsub.s32 3, %v88
    %v90 = vrot.slane %v73, %v89
    %v91 = vlaneseq
    %v92 = vshrl.u32 %v91, 7
    %v93 = vsub.s32 4, %v92
    %v94 = vrot.slane %v73, %v93
    %v95 = vlaneseq
    %v96 = vshrl.u32 %v95, 7
    %v97 = vsub.s32 5, %v96
    %v98 = vrot.slane %v73, %v97
    %v99 = vlaneseq
    %v100 = vshrl.u32 %v99, 7
    %v101 = vsub.s32 6, %v100
    %v102 = vrot.slane %v73, %v101
    %v103 = vlaneseq
    %v104 = vshrl.u32 %v103, 7
    %v105 = vsub.s32 7, %v104
    %v106 = vrot.slane %v73, %v105
    %v115 = vmul.f32 %v41, %v78
    %v116 = vmul.f32 %v42, %v82
    %v117 = vmul.f32 %v43, %v86
    %v118 = vmul.f32 %v44, %v90
    %v119 = vmul.f32 %v45, %v94
    %v120 = vmul.f32 %v46, %v98
    %v121 = vmul.f32 %v47, %v102
    %v122 = vmul.f32 %v48, %v106
    %v123 = vmul.f32 %v49, %v78
    %v124 = vmul.f32 %v50, %v82
    %v125 = vmul.f32 %v51, %v86
    %v126 = vmul.f32 %v52, %v90
    %v127 = vmul.f32 %v53, %v94
    %v128 = vmul.f32 %v54, %v98
    %v129 = vmul.f32 %v55, %v102
    %v130 = vmul.f32 %v56, %v106
    %v131 = vmul.f32 %v57, %v78
    %v132 = vmul.f32 %v58, %v82
    %v133 = vmul.f32 %v59, %v86
    %v134 = vmul.f32 %v60, %v90
    %v135 = vmul.f32 %v61, %v94
    %v136 = vmul.f32 %v62, %v98
    %v137 = vmul.f32 %v63, %v102
    %v138 = vmul.f32 %v64, %v106
    %v139 = vmul.f32 %v65, %v78
    %v140 = vmul.f32 %v66, %v82
    %v141 = vmul.f32 %v67, %v86
    %v142 = vmul.f32 %v68, %v90
    %v143 = vmul.f32 %v69, %v94
    %v144 = vmul.f32 %v70, %v98
    %v145 = vmul.f32 %v71, %v102
    %v146 = vmul.f32 %v72, %v106
    %v147 = vadd.f32 %v115, %v116
    %v148 = vadd.f32 %v147, %v117
    %v149 = vadd.f32 %v148, %v118
    %v150 = vadd.f32 %v149, %v119
    %v151 = vadd.f32 %v150, %v120
    %v152 = vadd.f32 %v151, %v121
    %v153 = vadd.f32 %v152, %v122
    %154 = vadd.xlane.f32.xlu0 %v153
    %v155 = vpop.xlane.xlu0 %154
    %v156 = vadd.f32 %v123, %v124
    %v157 = vadd.f32 %v156, %v125
    %v158 = vadd.f32 %v157, %v126
    %v159 = vadd.f32 %v158, %v127
    %v160 = vadd.f32 %v159, %v128
    %v161 = vadd.f32 %v160, %v129
    %v162 = vadd.f32 %v161, %v130
    %163 = vadd.xlane.f32.xlu0 %v162
    %v164 = vpop.xlane.xlu0 %163
    %v165 = vadd.f32 %v131, %v132
    %v166 = vadd.f32 %v165, %v133
    %v167 = vadd.f32 %v166, %v134
    %v168 = vadd.f32 %v167, %v135
    %v169 = vadd.f32 %v168, %v136
    %v170 = vadd.f32 %v169, %v137
    %v171 = vadd.f32 %v170, %v138
    %172 = vadd.xlane.f32.xlu0 %v171
    %v173 = vpop.xlane.xlu0 %172
    %v174 = vadd.f32 %v139, %v140
    %v175 = vadd.f32 %v174, %v141
    %v176 = vadd.f32 %v175, %v142
    %v177 = vadd.f32 %v176, %v143
    %v178 = vadd.f32 %v177, %v144
    %v179 = vadd.f32 %v178, %v145
    %v180 = vadd.f32 %v179, %v146
    %181 = vadd.xlane.f32.xlu0 %v180
    %v182 = vpop.xlane.xlu0 %181
    %v183 = vld [vmem:[#allocation2] sm:$0x1]
    %v185 = vlaneseq
    %v186 = vshrl.u32 %v185, 7
    %v187 = vsub.s32 0, %v186
    %v188 = vrot.slane %v183, %v187
    %189 = vset.pattern.permute.xlu0 0
    %190 = vperm.xlu0 %189, %v188
    %v191 = vpop.permute.xlu0 %190
    %v193 = vadd.f32 %v155, %v191
    %v194 = vadd.f32 %v164, %v191
    %v195 = vadd.f32 %v173, %v191
    %v196 = vadd.f32 %v182, %v191
    %vm197 = vcmp.ge.f32.partialorder %v193, 0.0
    %vm198 = vcmp.ge.f32.partialorder %v194, 0.0
    %vm199 = vcmp.ge.f32.partialorder %v195, 0.0
    %vm200 = vcmp.ge.f32.partialorder %v196, 0.0
    %v201 = vmul.f32 %v193, 0.33
    %v202 = vmul.f32 %v194, 0.33
    %v203 = vmul.f32 %v195, 0.33
    %v204 = vmul.f32 %v196, 0.33
    %v205 = vsel %vm197, %v193, %v201
    %v206 = vsel %vm198, %v194, %v202
    %v207 = vsel %vm199, %v195, %v203
    %v208 = vsel %vm200, %v196, %v204
    %v209 = vld [vmem:[%s3] sm:$0xff]
    %v210 = vld [vmem:[%s3 + $0x8] sm:$0xff]
    %v211 = vld [vmem:[%s3 + $0x10] sm:$0xff]
    %v212 = vld [vmem:[%s3 + $0x18] sm:$0xff]
    %v213 = vld [vmem:[%s4] sm:$0x3]
    %v215 = vlaneseq
    %v216 = vshrl.u32 %v215, 7
    %v217 = vsub.s32 0, %v216
    %v218 = vrot.slane %v213, %v217
    %v219 = vlaneseq
    %v220 = vshrl.u32 %v219, 7
    %v221 = vsub.s32 1, %v220
    %v222 = vrot.slane %v213, %v221
    %v229 = vlaneseq
    %v230 = vand.u32 %v229, 127
    %v231 = vlaneseq
    %v232 = vshrl.u32 %v231, 7
    %v233 = vsub.s32 %v230, %v232
    %v234 = vrot.slane %v205, %v233
    %v235 = vadd.s32 %v230, 4294967288
    %v236 = vlaneseq
    %v237 = vshrl.u32 %v236, 7
    %v238 = vsub.s32 %v235, %v237
    %v239 = vrot.slane %v206, %v238
    %vm240 = vcmask 130112
    %v241 = vsel %vm240, %v239, %v234
    %v242 = vlaneseq
    %v243 = vshrl.u32 %v242, 7
    %v244 = vsub.s32 %v230, %v243
    %v245 = vrot.slane %v207, %v244
    %v246 = vlaneseq
    %v247 = vshrl.u32 %v246, 7
    %v248 = vsub.s32 %v235, %v247
    %v249 = vrot.slane %v208, %v248
    %v250 = vsel %vm240, %v249, %v245
    %vm251 = vcmask 1041409
    %v252 = vsel %vm251, %v250, %v241
    %vm253 = vcmask 130048
    %v254 = vsel %vm253, %v252, 0
    %256 = vmatprep.subr.mxu0 0.0
    %257 = vmatpush1.msra.mxu0 0.0
    %258 = vmatprep.subr.mxu0 0.0
    %259 = vmatpush1.msra.mxu0 0.0
    %260 = vmatprep.subr.mxu0 0.0
    %261 = vmatpush1.msra.mxu0 0.0
    %262 = vmatprep.subr.mxu0 0.0
    %263 = vmatpush1.msra.mxu0 0.0
    %264 = vmatprep.subr.mxu0 0.0
    %265 = vmatpush1.msra.mxu0 0.0
    %266 = vmatprep.subr.mxu0 0.0
    %267 = vmatpush1.msra.mxu0 0.0
    %268 = vmatprep.subr.mxu0 0.0
    %269 = vmatpush1.msra.mxu0 0.0
    %270 = vmatprep.subr.mxu0 0.0
    %271 = vmatpush1.msra.mxu0 0.0
    %272 = vmatprep.subr.mxu0 0.0
    %273 = vmatpush1.msra.mxu0 0.0
    %274 = vmatprep.subr.mxu0 0.0
    %275 = vmatpush1.msra.mxu0 0.0
    %276 = vmatprep.subr.mxu0 0.0
    %277 = vmatpush1.msra.mxu0 0.0
    %278 = vmatprep.subr.mxu0 0.0
    %279 = vmatpush1.msra.mxu0 0.0
    %280 = vmatprep.subr.mxu0 0.0
    %281 = vmatpush1.msra.mxu0 0.0
    %282 = vmatprep.subr.mxu0 0.0
    %283 = vmatpush1.msra.mxu0 0.0
    %284 = vmatprep.subr.mxu0 %v212
    %285 = vmatpush1.msra.mxu0 %v211
    %286 = vmatprep.subr.mxu0 %v210
    %287 = vmatpush1.msra.mxu0 %v209
    %288 = vmatprep.subr.mxu0 0.0
    %289 = vmatpush2.msra.mxu0 0.0
    %290 = vmatprep.subr.mxu0 0.0
    %291 = vmatpush2.msra.mxu0 0.0
    %292 = vmatprep.subr.mxu0 0.0
    %293 = vmatpush2.msra.mxu0 0.0
    %294 = vmatprep.subr.mxu0 0.0
    %295 = vmatpush2.msra.mxu0 0.0
    %296 = vmatprep.subr.mxu0 0.0
    %297 = vmatpush2.msra.mxu0 0.0
    %298 = vmatprep.subr.mxu0 0.0
    %299 = vmatpush2.msra.mxu0 0.0
    %300 = vmatprep.subr.mxu0 0.0
    %301 = vmatpush2.msra.mxu0 0.0
    %302 = vmatprep.subr.mxu0 0.0
    %303 = vmatpush2.msra.mxu0 0.0
    %304 = vmatprep.subr.mxu0 0.0
    %305 = vmatpush2.msra.mxu0 0.0
    %306 = vmatprep.subr.mxu0 0.0
    %307 = vmatpush2.msra.mxu0 0.0
    %308 = vmatprep.subr.mxu0 0.0
    %309 = vmatpush2.msra.mxu0 0.0
    %310 = vmatprep.subr.mxu0 0.0
    %311 = vmatpush2.msra.mxu0 0.0
    %312 = vmatprep.subr.mxu0 0.0
    %313 = vmatpush2.msra.mxu0 0.0
    %314 = vmatprep.subr.mxu0 0.0
    %315 = vmatpush2.msra.mxu0 0.0
    %316 = vmatprep.subr.mxu0 0.0
    %317 = vmatpush2.msra.mxu0 0.0
    %318 = vmatprep.subr.mxu0 0.0
    %319 = vmatpush2.msra.mxu0 0.0
    %320 = vmatprep.mubr.f32.mxu0 0.0
    %321 = vmatmul.mubr.f32.gmra.mxu0 %v254
    %v322 = vpop.f32.mrf.mxu0
    %v323 = vadd.f32 %v218, %v322
    %v324 = vpop.f32.mrf.mxu0
    %v325 = vadd.f32 %v222, %v324
    %326 = vdwg.mxu0
    %vm327 = vcmp.ge.f32.partialorder %v323, 0.0
    %vm328 = vcmp.ge.f32.partialorder %v325, 0.0
    %v329 = vmul.f32 %v323, 0.33
    %v330 = vmul.f32 %v325, 0.33
    %v331 = vsel %vm327, %v323, %v329
    %v332 = vsel %vm328, %v325, %v330
    %v333 = vld [vmem:[%s5] sm:$0xff]
    %v334 = vld [vmem:[%s5 + $0x8] sm:$0xff]
    %v335 = vld [vmem:[%s5 + $0x10] sm:$0xff]
    %v336 = vld [vmem:[%s5 + $0x18] sm:$0xff]
    %v337 = vld [vmem:[%s5 + $0x20] sm:$0xff]
    %v338 = vld [vmem:[%s5 + $0x28] sm:$0xff]
    %v339 = vld [vmem:[%s5 + $0x30] sm:$0xff]
    %v340 = vld [vmem:[%s5 + $0x38] sm:$0xff]
    %v341 = vld [vmem:[%s5 + $0x40] sm:$0xff]
    %v342 = vld [vmem:[%s5 + $0x48] sm:$0xff]
    %v343 = vld [vmem:[%s5 + $0x50] sm:$0xff]
    %v344 = vld [vmem:[%s5 + $0x58] sm:$0xff]
    %v345 = vld [vmem:[%s5 + $0x60] sm:$0xff]
    %v346 = vld [vmem:[%s5 + $0x68] sm:$0xff]
    %v347 = vld [vmem:[%s5 + $0x70] sm:$0xff]
    %v348 = vld [vmem:[%s5 + $0x78] sm:$0xff]
    %v349 = vld [vmem:[%s5 + $0x80] sm:$0xff]
    %v350 = vld [vmem:[%s5 + $0x88] sm:$0xff]
    %v351 = vld [vmem:[%s5 + $0x90] sm:$0xff]
    %v352 = vld [vmem:[%s5 + $0x98] sm:$0xff]
    %v353 = vld [vmem:[%s5 + $0xa0] sm:$0xff]
    %v354 = vld [vmem:[%s5 + $0xa8] sm:$0xff]
    %v355 = vld [vmem:[%s5 + $0xb0] sm:$0xff]
    %v356 = vld [vmem:[%s5 + $0xb8] sm:$0xff]
    %v357 = vld [vmem:[%s5 + $0xc0] sm:$0xff]
    %v358 = vld [vmem:[%s5 + $0xc8] sm:$0xff]
    %v359 = vld [vmem:[%s5 + $0xd0] sm:$0xff]
    %v360 = vld [vmem:[%s5 + $0xd8] sm:$0xff]
    %v361 = vld [vmem:[%s5 + $0xe0] sm:$0xff]
    %v362 = vld [vmem:[%s5 + $0xe8] sm:$0xff]
    %v363 = vld [vmem:[%s5 + $0xf0] sm:$0xff]
    %v364 = vld [vmem:[%s5 + $0xf8] sm:$0xff]
    %v365 = vld [vmem:[%s6] sm:$0x1]
    %v367 = vlaneseq
    %v368 = vshrl.u32 %v367, 7
    %v369 = vsub.s32 0, %v368
    %v370 = vrot.slane %v365, %v369
    %372 = vmatprep.subr.mxu0 0.0
    %373 = vmatpush1.msra.mxu0 %v348
    %374 = vmatprep.subr.mxu0 0.0
    %375 = vmatpush1.msra.mxu0 %v347
    %376 = vmatprep.subr.mxu0 0.0
    %377 = vmatpush1.msra.mxu0 %v346
    %378 = vmatprep.subr.mxu0 0.0
    %379 = vmatpush1.msra.mxu0 %v345
    %380 = vmatprep.subr.mxu0 0.0
    %381 = vmatpush1.msra.mxu0 %v344
    %382 = vmatprep.subr.mxu0 0.0
    %383 = vmatpush1.msra.mxu0 %v343
    %384 = vmatprep.subr.mxu0 0.0
    %385 = vmatpush1.msra.mxu0 %v342
    %386 = vmatprep.subr.mxu0 0.0
    %387 = vmatpush1.msra.mxu0 %v341
    %388 = vmatprep.subr.mxu0 0.0
    %389 = vmatpush1.msra.mxu0 %v340
    %390 = vmatprep.subr.mxu0 0.0
    %391 = vmatpush1.msra.mxu0 %v339
    %392 = vmatprep.subr.mxu0 0.0
    %393 = vmatpush1.msra.mxu0 %v338
    %394 = vmatprep.subr.mxu0 0.0
    %395 = vmatpush1.msra.mxu0 %v337
    %396 = vmatprep.subr.mxu0 0.0
    %397 = vmatpush1.msra.mxu0 %v336
    %398 = vmatprep.subr.mxu0 0.0
    %399 = vmatpush1.msra.mxu0 %v335
    %400 = vmatprep.subr.mxu0 0.0
    %401 = vmatpush1.msra.mxu0 %v334
    %402 = vmatprep.subr.mxu0 0.0
    %403 = vmatpush1.msra.mxu0 %v333
    %404 = vmatprep.subr.mxu0 0.0
    %405 = vmatpush2.msra.mxu0 %v364
    %406 = vmatprep.subr.mxu0 0.0
    %407 = vmatpush2.msra.mxu0 %v363
    %408 = vmatprep.subr.mxu0 0.0
    %409 = vmatpush2.msra.mxu0 %v362
    %410 = vmatprep.subr.mxu0 0.0
    %411 = vmatpush2.msra.mxu0 %v361
    %412 = vmatprep.subr.mxu0 0.0
    %413 = vmatpush2.msra.mxu0 %v360
    %414 = vmatprep.subr.mxu0 0.0
    %415 = vmatpush2.msra.mxu0 %v359
    %416 = vmatprep.subr.mxu0 0.0
    %417 = vmatpush2.msra.mxu0 %v358
    %418 = vmatprep.subr.mxu0 0.0
    %419 = vmatpush2.msra.mxu0 %v357
    %420 = vmatprep.subr.mxu0 0.0
    %421 = vmatpush2.msra.mxu0 %v356
    %422 = vmatprep.subr.mxu0 0.0
    %423 = vmatpush2.msra.mxu0 %v355
    %424 = vmatprep.subr.mxu0 0.0
    %425 = vmatpush2.msra.mxu0 %v354
    %426 = vmatprep.subr.mxu0 0.0
    %427 = vmatpush2.msra.mxu0 %v353
    %428 = vmatprep.subr.mxu0 0.0
    %429 = vmatpush2.msra.mxu0 %v352
    %430 = vmatprep.subr.mxu0 0.0
    %431 = vmatpush2.msra.mxu0 %v351
    %432 = vmatprep.subr.mxu0 0.0
    %433 = vmatpush2.msra.mxu0 %v350
    %434 = vmatprep.subr.mxu0 0.0
    %435 = vmatpush2.msra.mxu0 %v349
    %436 = vmatprep.mubr.f32.mxu0 %v332
    %437 = vmatmul.mubr.f32.gmra.mxu0 %v331
    %v438 = vpop.f32.mrf.mxu0
    %v439 = vadd.f32 %v370, %v438
    %v440 = vpop.f32.mrf.mxu0
    %441 = vdwg.mxu0
    %vm442 = vcmp.ge.f32.partialorder %v439, 0.0
    %v443 = vmul.f32 %v439, 0.33
    %v444 = vsel %vm442, %v439, %v443
    %v445 = vld [vmem:[%s7] sm:$0xff]
    %v446 = vld [vmem:[%s7 + $0x8] sm:$0xff]
    %v447 = vld [vmem:[%s7 + $0x10] sm:$0xff]
    %v448 = vld [vmem:[%s7 + $0x18] sm:$0xff]
    %v449 = vld [vmem:[%s7 + $0x20] sm:$0xff]
    %v450 = vld [vmem:[%s7 + $0x28] sm:$0xff]
    %v451 = vld [vmem:[%s7 + $0x30] sm:$0xff]
    %v452 = vld [vmem:[%s7 + $0x38] sm:$0xff]
    %v453 = vld [vmem:[%s7 + $0x40] sm:$0xff]
    %v454 = vld [vmem:[%s7 + $0x48] sm:$0xff]
    %v455 = vld [vmem:[%s7 + $0x50] sm:$0xff]
    %v456 = vld [vmem:[%s7 + $0x58] sm:$0xff]
    %v457 = vld [vmem:[%s7 + $0x60] sm:$0xff]
    %v458 = vld [vmem:[%s7 + $0x68] sm:$0xff]
    %v459 = vld [vmem:[%s7 + $0x70] sm:$0xff]
    %v460 = vld [vmem:[%s7 + $0x78] sm:$0xff]
    %v461 = vld [vmem:[%s8] sm:$0x1]
    %v463 = vlaneseq
    %v464 = vshrl.u32 %v463, 7
    %v465 = vsub.s32 0, %v464
    %v466 = vrot.slane %v461, %v465
    %468 = vmatprep.subr.mxu0 0.0
    %469 = vmatpush1.msra.mxu0 %v460
    %470 = vmatprep.subr.mxu0 0.0
    %471 = vmatpush1.msra.mxu0 %v459
    %472 = vmatprep.subr.mxu0 0.0
    %473 = vmatpush1.msra.mxu0 %v458
    %474 = vmatprep.subr.mxu0 0.0
    %475 = vmatpush1.msra.mxu0 %v457
    %476 = vmatprep.subr.mxu0 0.0
    %477 = vmatpush1.msra.mxu0 %v456
    %478 = vmatprep.subr.mxu0 0.0
    %479 = vmatpush1.msra.mxu0 %v455
    %480 = vmatprep.subr.mxu0 0.0
    %481 = vmatpush1.msra.mxu0 %v454
    %482 = vmatprep.subr.mxu0 0.0
    %483 = vmatpush1.msra.mxu0 %v453
    %484 = vmatprep.subr.mxu0 0.0
    %485 = vmatpush1.msra.mxu0 %v452
    %486 = vmatprep.subr.mxu0 0.0
    %487 = vmatpush1.msra.mxu0 %v451
    %488 = vmatprep.subr.mxu0 0.0
    %489 = vmatpush1.msra.mxu0 %v450
    %490 = vmatprep.subr.mxu0 0.0
    %491 = vmatpush1.msra.mxu0 %v449
    %492 = vmatprep.subr.mxu0 0.0
    %493 = vmatpush1.msra.mxu0 %v448
    %494 = vmatprep.subr.mxu0 0.0
    %495 = vmatpush1.msra.mxu0 %v447
    %496 = vmatprep.subr.mxu0 0.0
    %497 = vmatpush1.msra.mxu0 %v446
    %498 = vmatprep.subr.mxu0 0.0
    %499 = vmatpush1.msra.mxu0 %v445
    %500 = vmatprep.subr.mxu0 0.0
    %501 = vmatpush2.msra.mxu0 0.0
    %502 = vmatprep.subr.mxu0 0.0
    %503 = vmatpush2.msra.mxu0 0.0
    %504 = vmatprep.subr.mxu0 0.0
    %505 = vmatpush2.msra.mxu0 0.0
    %506 = vmatprep.subr.mxu0 0.0
    %507 = vmatpush2.msra.mxu0 0.0
    %508 = vmatprep.subr.mxu0 0.0
    %509 = vmatpush2.msra.mxu0 0.0
    %510 = vmatprep.subr.mxu0 0.0
    %511 = vmatpush2.msra.mxu0 0.0
    %512 = vmatprep.subr.mxu0 0.0
    %513 = vmatpush2.msra.mxu0 0.0
    %514 = vmatprep.subr.mxu0 0.0
    %515 = vmatpush2.msra.mxu0 0.0
    %516 = vmatprep.subr.mxu0 0.0
    %517 = vmatpush2.msra.mxu0 0.0
    %518 = vmatprep.subr.mxu0 0.0
    %519 = vmatpush2.msra.mxu0 0.0
    %520 = vmatprep.subr.mxu0 0.0
    %521 = vmatpush2.msra.mxu0 0.0
    %522 = vmatprep.subr.mxu0 0.0
    %523 = vmatpush2.msra.mxu0 0.0
    %524 = vmatprep.subr.mxu0 0.0
    %525 = vmatpush2.msra.mxu0 0.0
    %526 = vmatprep.subr.mxu0 0.0
    %527 = vmatpush2.msra.mxu0 0.0
    %528 = vmatprep.subr.mxu0 0.0
    %529 = vmatpush2.msra.mxu0 0.0
    %530 = vmatprep.subr.mxu0 0.0
    %531 = vmatpush2.msra.mxu0 0.0
    %532 = vmatprep.mubr.f32.mxu0 0.0
    %533 = vmatmul.mubr.f32.gmra.mxu0 %v444
    %v534 = vpop.f32.mrf.mxu0
    %v535 = vadd.f32 %v466, %v534
    %v536 = vpop.f32.mrf.mxu0
    %537 = vdwg.mxu0
    %vm538 = vcmp.ge.f32.partialorder %v535, 0.0
    %v539 = vmul.f32 %v535, 0.33
    %v540 = vsel %vm538, %v535, %v539
    %v541 = vld [vmem:[%s9] sm:$0xff]
    %v542 = vld [vmem:[%s9 + $0x8] sm:$0xff]
    %v543 = vld [vmem:[%s9 + $0x10] sm:$0xff]
    %v544 = vld [vmem:[%s9 + $0x18] sm:$0x3f]
    %v545 = vld [vmem:[%s10] sm:$0x1]
    %v547 = vlaneseq
    %v548 = vshrl.u32 %v547, 7
    %v549 = vsub.s32 0, %v548
    %v550 = vrot.slane %v545, %v549
    %vm552 = vcmask 244736
    %v554 = vsel %vm552, %v540, 0
    %vm556 = vcmask 1045504
    %v558 = vsel %vm556, %v544, 0
    %560 = vmatprep.subr.mxu0 0.0
    %561 = vmatpush1.msra.mxu0 0.0
    %562 = vmatprep.subr.mxu0 0.0
    %563 = vmatpush1.msra.mxu0 0.0
    %564 = vmatprep.subr.mxu0 0.0
    %565 = vmatpush1.msra.mxu0 0.0
    %566 = vmatprep.subr.mxu0 0.0
    %567 = vmatpush1.msra.mxu0 0.0
    %568 = vmatprep.subr.mxu0 0.0
    %569 = vmatpush1.msra.mxu0 0.0
    %570 = vmatprep.subr.mxu0 0.0
    %571 = vmatpush1.msra.mxu0 0.0
    %572 = vmatprep.subr.mxu0 0.0
    %573 = vmatpush1.msra.mxu0 0.0
    %574 = vmatprep.subr.mxu0 0.0
    %575 = vmatpush1.msra.mxu0 0.0
    %576 = vmatprep.subr.mxu0 0.0
    %577 = vmatpush1.msra.mxu0 0.0
    %578 = vmatprep.subr.mxu0 0.0
    %579 = vmatpush1.msra.mxu0 0.0
    %580 = vmatprep.subr.mxu0 0.0
    %581 = vmatpush1.msra.mxu0 0.0
    %582 = vmatprep.subr.mxu0 0.0
    %583 = vmatpush1.msra.mxu0 0.0
    %584 = vmatprep.subr.mxu0 0.0
    %585 = vmatpush1.msra.mxu0 %v558
    %586 = vmatprep.subr.mxu0 0.0
    %587 = vmatpush1.msra.mxu0 %v543
    %588 = vmatprep.subr.mxu0 0.0
    %589 = vmatpush1.msra.mxu0 %v542
    %590 = vmatprep.subr.mxu0 0.0
    %591 = vmatpush1.msra.mxu0 %v541
    %592 = vmatprep.subr.mxu0 0.0
    %593 = vmatpush2.msra.mxu0 0.0
    %594 = vmatprep.subr.mxu0 0.0
    %595 = vmatpush2.msra.mxu0 0.0
    %596 = vmatprep.subr.mxu0 0.0
    %597 = vmatpush2.msra.mxu0 0.0
    %598 = vmatprep.subr.mxu0 0.0
    %599 = vmatpush2.msra.mxu0 0.0
    %600 = vmatprep.subr.mxu0 0.0
    %601 = vmatpush2.msra.mxu0 0.0
    %602 = vmatprep.subr.mxu0 0.0
    %603 = vmatpush2.msra.mxu0 0.0
    %604 = vmatprep.subr.mxu0 0.0
    %605 = vmatpush2.msra.mxu0 0.0
    %606 = vmatprep.subr.mxu0 0.0
    %607 = vmatpush2.msra.mxu0 0.0
    %608 = vmatprep.subr.mxu0 0.0
    %609 = vmatpush2.msra.mxu0 0.0
    %610 = vmatprep.subr.mxu0 0.0
    %611 = vmatpush2.msra.mxu0 0.0
    %612 = vmatprep.subr.mxu0 0.0
    %613 = vmatpush2.msra.mxu0 0.0
    %614 = vmatprep.subr.mxu0 0.0
    %615 = vmatpush2.msra.mxu0 0.0
    %616 = vmatprep.subr.mxu0 0.0
    %617 = vmatpush2.msra.mxu0 0.0
    %618 = vmatprep.subr.mxu0 0.0
    %619 = vmatpush2.msra.mxu0 0.0
    %620 = vmatprep.subr.mxu0 0.0
    %621 = vmatpush2.msra.mxu0 0.0
    %622 = vmatprep.subr.mxu0 0.0
    %623 = vmatpush2.msra.mxu0 0.0
    %624 = vmatprep.mubr.f32.mxu0 0.0
    %625 = vmatmul.mubr.f32.gmra.mxu0 %v554
    %v626 = vpop.f32.mrf.mxu0
    %v627 = vadd.f32 %v550, %v626
    %v628 = vpop.f32.mrf.mxu0
    %629 = vdwg.mxu0
    %vm630 = vcmp.ge.f32.partialorder %v627, 0.0
    %v631 = vmul.f32 %v627, 0.33
    %v632 = vsel %vm630, %v627, %v631
    %vm633 = vcmask 9216
    %634 = vst.msk [vmem:[#allocation3] sm:$0x3] %vm633, %v632
    // Predicated region
    $region46: #{brainnetcnn_forward.5} parent=1 // pred_check
      _
    $region47: #{brainnetcnn_forward.5} parent=1 // pred_check_branch
      %636 = sbr.rel (0) target = $region49
    $region48: #{brainnetcnn_forward.5} parent=1 // pred_region
      %s638 = ssub.s32 32, 32
      %639 = vsyncadd [#allocation4], %s638
      %s641 = sshll.u32 [#allocation3], 4
      %s642 = int_to_ptr.vmem [resolvable:$true] %s641
      %644 = dma.vmem_to_hbm [thread:$0]  %s642, 32, %s11, [#allocation4]
    $region49: #{brainnetcnn_forward.5} parent=1 // pred_fallthru
      _
    // Predicated region
    $region50: #{brainnetcnn_forward.5} parent=1 // pred_check
      _
    $region51: #{brainnetcnn_forward.5} parent=1 // pred_check_branch
      %646 = sbr.rel (0) target = $region53
    $region52: #{brainnetcnn_forward.5} parent=1 // pred_region
      %647 = dma.done [#allocation4], 32
    $region53: #{brainnetcnn_forward.5} parent=1 // pred_fallthru
      _
    %648 = vsyncpa [#allocation4], 1

</llo_original>
